<compile_context>
chip_gen: v6e
topology: v6e:2x2x1
jax: 0.10.0
libtpu: 0.0.40
codegen_flags: <defaults>
</compile_context>

<pallas_src>
import functools

import jax
import jax.numpy as jnp
import numpy as np
from jax.experimental import pallas as pl
from jax.experimental.pallas import tpu as pltpu

_LANE = 128


def _round_up(x, m):
    return (x + m - 1) // m * m


def _win(start, size, stride):
    """Window slice along one ref axis (strided only when stride > 1)."""
    return pl.ds(start, size) if stride == 1 else pl.ds(start, size, stride)


def _fold_bn(gamma, beta, mean, var, eps=1e-5):
    scale = gamma / jnp.sqrt(var + eps)
    bias = beta - mean * scale
    return scale, bias


def _basic_block_kernel(x_ref, w1_ref, b1_ref, w2_ref, b2_ref, res_ref, o_ref,
                        xpad_ref, hpad_ref, acc_ref, *,
                        H, W, Cin, Ho, Wo, stride, dilation):
    """Fused BasicBlock forward for one batch element.

    x_ref:    (1, H, W, Cin)        unpadded input (Cin = real inplanes)
    w1_ref:   (3, 3*Cp, Pp)  bf16   conv1 weights, BN1 scale folded, im2col-packed
    b1_ref:   (1, Pp)        f32    folded BN1 bias
    w2_ref:   (3, 3*Pp, Pp)  bf16   conv2 weights, BN2 scale folded, im2col-packed
    b2_ref:   (1, Pp)        f32    folded BN2 bias
    res_ref:  (1, Ho, Wo, Pp)       residual (channel-padded with zeros)
    o_ref:    (1, Ho, Wo, Pp)       output (channel-padded; wrapper slices)
    xpad_ref: (H+2d, W+2d, Cp) bf16 VMEM scratch: zero-padded conv1 input
    hpad_ref: (Ho+2, Wo+2, Pp) bf16 VMEM scratch: conv1 activation + 1px border
    acc_ref:  (Ho*Wo, Pp)      f32  VMEM scratch: matmul accumulator (reused)
    """
    pad = dilation
    Cp = xpad_ref.shape[-1]
    Pp = o_ref.shape[-1]

    # ---- build the zero-padded (spatial + channel) conv1 input in VMEM ----
    xpad_ref[...] = jnp.zeros_like(xpad_ref)
    xpad_ref[pad:pad + H, pad:pad + W, 0:Cin] = x_ref[0].astype(jnp.bfloat16)

    # ---- stage 1: conv1 (BN1 scale folded into w1) + bias1 + ReLU ----------
    acc_ref[...] = jnp.zeros_like(acc_ref)
    for kh in range(3):
        taps = [
            xpad_ref[_win(kh * dilation, Ho, stride),
                     _win(kw * dilation, Wo, stride), :]
            for kw in range(3)
        ]
        tap = jnp.concatenate(taps, axis=-1).reshape(Ho * Wo, 3 * Cp)
        acc_ref[...] += jnp.dot(tap, w1_ref[kh],
                                preferred_element_type=jnp.float32)
    h1 = jnp.maximum(acc_ref[...] + b1_ref[...], 0.0)

    # ---- keep the stage-1 activation in VMEM with a 1-px zero border -------
    hpad_ref[...] = jnp.zeros_like(hpad_ref)
    hpad_ref[1:1 + Ho, 1:1 + Wo, :] = h1.reshape(Ho, Wo, Pp).astype(jnp.bfloat16)

    # ---- stage 2: conv2 (BN2 scale folded) + bias2 + residual + ReLU -------
    acc_ref[...] = jnp.zeros_like(acc_ref)
    for kh in range(3):
        taps = [hpad_ref[kh:kh + Ho, kw:kw + Wo, :] for kw in range(3)]
        tap = jnp.concatenate(taps, axis=-1).reshape(Ho * Wo, 3 * Pp)
        acc_ref[...] += jnp.dot(tap, w2_ref[kh],
                                preferred_element_type=jnp.float32)

    out = (acc_ref[...] + b2_ref[...]).reshape(Ho, Wo, Pp)
    out = out + res_ref[0].astype(jnp.float32)
    o_ref[0] = jnp.maximum(out, 0.0).astype(o_ref.dtype)


def basic_block_fused(x_nhwc, res_nhwc, w1_packed, b1, w2_packed, b2, *,
                      stride, dilation):
    """Runs the fused BasicBlock kernel over the batch via the Pallas grid."""
    N, H, W, Cin = x_nhwc.shape
    Cp = w1_packed.shape[1] // 3
    Pp = w1_packed.shape[2]
    Ho = (H - 1) // stride + 1       # conv1 with padding == dilation
    Wo = (W - 1) // stride + 1
    assert res_nhwc.shape == (N, Ho, Wo, Pp)

    kernel = functools.partial(_basic_block_kernel, H=H, W=W, Cin=Cin,
                               Ho=Ho, Wo=Wo, stride=stride, dilation=dilation)

    return pl.pallas_call(
        kernel,
        out_shape=jax.ShapeDtypeStruct((N, Ho, Wo, Pp), x_nhwc.dtype),
        grid=(N,),
        in_specs=[
            pl.BlockSpec((1, H, W, Cin), lambda n: (n, 0, 0, 0)),
            pl.BlockSpec((3, 3 * Cp, Pp), lambda n: (0, 0, 0)),
            pl.BlockSpec((1, Pp), lambda n: (0, 0)),
            pl.BlockSpec((3, 3 * Pp, Pp), lambda n: (0, 0, 0)),
            pl.BlockSpec((1, Pp), lambda n: (0, 0)),
            pl.BlockSpec((1, Ho, Wo, Pp), lambda n: (n, 0, 0, 0)),
        ],
        out_specs=pl.BlockSpec((1, Ho, Wo, Pp), lambda n: (n, 0, 0, 0)),
        scratch_shapes=[
            pltpu.VMEM((H + 2 * dilation, W + 2 * dilation, Cp), jnp.bfloat16),
            pltpu.VMEM((Ho + 2, Wo + 2, Pp), jnp.bfloat16),
            pltpu.VMEM((Ho * Wo, Pp), jnp.float32),
        ],
        compiler_params=pltpu.CompilerParams(
            dimension_semantics=("parallel",)),
    )(x_nhwc, w1_packed, b1, w2_packed, b2, res_nhwc)


class BasicBlockPallas:
    """JAX/Pallas equivalent of the PyTorch DLA BasicBlock (inference BN)."""

    def __init__(self, inplanes, planes, stride=1, dilation=1,
                 key=jax.random.PRNGKey(0)):
        self.inplanes = inplanes
        self.planes = planes
        self.stride = stride
        self.dilation = dilation
        self.cin_p = _round_up(inplanes, _LANE)
        self.planes_p = _round_up(planes, _LANE)

        k = jax.random.split(key, 10)
        # conv weights in PyTorch OIHW (kept in f32 for the reference)
        self.w1_oihw = 0.1 * jax.random.normal(k[0], (planes, inplanes, 3, 3),
                                               jnp.float32)
        self.w2_oihw = 0.1 * jax.random.normal(k[1], (planes, planes, 3, 3),
                                               jnp.float32)
        # BN1 / BN2 params (deterministic, non-trivial values)
        self.g1 = 1.0 + 0.1 * jax.random.normal(k[2], (planes,), jnp.float32)
        self.b1 = 0.1 * jax.random.normal(k[3], (planes,), jnp.float32)
        self.m1 = 0.1 * jax.random.normal(k[4], (planes,), jnp.float32)
        self.v1 = 1.0 + 0.1 * jax.random.uniform(k[5], (planes,), jnp.float32)
        self.g2 = 1.0 + 0.1 * jax.random.normal(k[6], (planes,), jnp.float32)
        self.b2 = 0.1 * jax.random.normal(k[7], (planes,), jnp.float32)
        self.m2 = 0.1 * jax.random.normal(k[8], (planes,), jnp.float32)
        self.v2 = 1.0 + 0.1 * jax.random.uniform(k[9], (planes,), jnp.float32)
        self.scale1, self.bias1 = _fold_bn(self.g1, self.b1, self.m1, self.v1)
        self.scale2, self.bias2 = _fold_bn(self.g2, self.b2, self.m2, self.v2)

        # ---- host-side (one-time) packing of the kernel parameters ---------
        self.w1_packed = self._pack_weights(self.w1_oihw, self.scale1,
                                            inplanes, self.cin_p)
        self.w2_packed = self._pack_weights(self.w2_oihw, self.scale2,
                                            planes, self.planes_p)
        cpad = self.planes_p - planes
        self.bias1_p = jnp.pad(self.bias1, (0, cpad)).reshape(
            1, self.planes_p).astype(jnp.float32)
        self.bias2_p = jnp.pad(self.bias2, (0, cpad)).reshape(
            1, self.planes_p).astype(jnp.float32)

    def _pack_weights(self, w_oihw, scale, cin, cin_p):
        cout = w_oihw.shape[0]
        w = w_oihw * scale[:, None, None, None]          # fold BN scale
        w = jnp.transpose(w, (2, 3, 1, 0))               # OIHW -> HWIO
        w = jnp.pad(w, ((0, 0), (0, 0),
                        (0, cin_p - cin), (0, self.planes_p - cout)))
        # pack to (kh, kw*Cin_pad + ci, co): matches the in-kernel kw-concat
        return w.reshape(3, 3 * cin_p, self.planes_p).astype(jnp.bfloat16)

    def __call__(self, x_nchw, residual=None):
        if residual is None:
            residual = x_nchw
        N, Cin, H, W = x_nchw.shape
        assert Cin == self.inplanes
        Ho = (H - 1) // self.stride + 1
        Wo = (W - 1) // self.stride + 1

        x = jnp.transpose(x_nchw, (0, 2, 3, 1))              # NCHW -> NHWC
        res = jnp.transpose(residual, (0, 2, 3, 1))
        assert res.shape == (N, Ho, Wo, self.planes), (
            "residual must match the conv output shape (DLA supplies a "
            "projected residual when stride > 1 or inplanes != planes)")
        if self.planes_p != self.planes:                     # no-op when C%128==0
            res = jnp.pad(res, ((0, 0), (0, 0), (0, 0),
                                (0, self.planes_p - self.planes)))

        out = basic_block_fused(x, res, self.w1_packed, self.bias1_p,
                                self.w2_packed, self.bias2_p,
                                stride=self.stride, dilation=self.dilation)
        out = out[..., :self.planes]                         # drop channel pad
        return jnp.transpose(out, (0, 3, 1, 2))              # NHWC -> NCHW


def _reference_forward(block, x_nchw, residual=None):
    """Pure-JAX (lax.conv, f32) reference of the same forward, for validation."""
    if residual is None:
        residual = x_nchw

    def conv(x, w_oihw, stride, padding, dilation):
        return jax.lax.conv_general_dilated(
            x, w_oihw, window_strides=(stride, stride),
            padding=[(padding, padding), (padding, padding)],
            rhs_dilation=(dilation, dilation),
            dimension_numbers=('NCHW', 'OIHW', 'NCHW'))

    def bn(x, scale, bias):
        return x * scale[None, :, None, None] + bias[None, :, None, None]

    out = conv(x_nchw, block.w1_oihw, block.stride, block.dilation, block.dilation)
    out = jnp.maximum(bn(out, block.scale1, block.bias1), 0.0)
    out = conv(out, block.w2_oihw, 1, 1, 1)
    out = bn(out, block.scale2, block.bias2) + residual
    return jnp.maximum(out, 0.0)


if __name__ == "__main__":
    key = jax.random.PRNGKey(0)
    kx, kp = jax.random.split(key)

    N, C, H, W = 2, 8, 16, 16          # inplanes == planes, stride=1 -> residual = x
    x = jax.random.normal(kx, (N, C, H, W), jnp.float32)

    block = BasicBlockPallas(inplanes=C, planes=C, stride=1, dilation=1, key=kp)

    out = jax.block_until_ready(block(x))
    assert out.shape == (N, C, H, W)

    ref = _reference_forward(block, x)
    # bf16 MXU inputs (f32 accumulation) => relaxed tolerance vs the f32 reference.
    np.testing.assert_allclose(np.asarray(out), np.asarray(ref),
                               rtol=5e-2, atol=5e-2)

    print("KERNEL_OK")
</pallas_src>

<mosaic_0001>
module attributes {stable_mosaic.version = 11 : i64} {
  func.func @_basic_block_kernel(%arg0: i32, %arg1: memref<1x16x16x8xf32, #tpu.memory_space<vmem>>, %arg2: memref<3x384x128xbf16, #tpu.memory_space<vmem>>, %arg3: memref<1x128xf32, #tpu.memory_space<vmem>>, %arg4: memref<3x384x128xbf16, #tpu.memory_space<vmem>>, %arg5: memref<1x128xf32, #tpu.memory_space<vmem>>, %arg6: memref<1x16x16x128xf32, #tpu.memory_space<vmem>>, %arg7: memref<1x16x16x128xf32, #tpu.memory_space<vmem>>, %arg8: memref<18x18x128xbf16, #tpu.memory_space<vmem>>, %arg9: memref<18x18x128xbf16, #tpu.memory_space<vmem>>, %arg10: memref<256x128xf32, #tpu.memory_space<vmem>>) attributes {dimension_semantics = [#tpu.dimension_semantics<parallel>], iteration_bounds = array<i64: 2>, scalar_prefetch = 0 : i64, scratch_operands = 3 : i64, tpu.core_type = #tpu.core_type<tc>, window_params = [{transform_indices = @transform_0, window_bounds = array<i64: 1, 16, 16, 8>}, {pipeline_mode = #tpu.pipeline_mode<synchronous>, transform_indices = @transform_1, window_bounds = array<i64: 3, 384, 128>}, {pipeline_mode = #tpu.pipeline_mode<synchronous>, transform_indices = @transform_2, window_bounds = array<i64: 1, 128>}, {pipeline_mode = #tpu.pipeline_mode<synchronous>, transform_indices = @transform_3, window_bounds = array<i64: 3, 384, 128>}, {pipeline_mode = #tpu.pipeline_mode<synchronous>, transform_indices = @transform_4, window_bounds = array<i64: 1, 128>}, {transform_indices = @transform_5, window_bounds = array<i64: 1, 16, 16, 128>}, {transform_indices = @transform_6, window_bounds = array<i64: 1, 16, 16, 128>}]} {
    %cst = arith.constant 0.000000e+00 : bf16
    %0 = vector.broadcast %cst : bf16 to vector<18x18x128xbf16>
    %c0 = arith.constant 0 : index
    %c0_0 = arith.constant 0 : index
    %c0_1 = arith.constant 0 : index
    %1 = vector.load %arg8[%c0, %c0_0, %c0_1] : memref<18x18x128xbf16, #tpu.memory_space<vmem>>, vector<18x18x128xbf16>
    tpu.vector_store %arg8[%c0, %c0_0, %c0_1], %0 {strides = array<i32>} : memref<18x18x128xbf16, #tpu.memory_space<vmem>>, vector<18x18x128xbf16>,
    %c0_2 = arith.constant 0 : index
    %c0_3 = arith.constant 0 : index
    %c0_4 = arith.constant 0 : index
    %c0_5 = arith.constant 0 : index
    %2 = vector.load %arg1[%c0_2, %c0_3, %c0_4, %c0_5] : memref<1x16x16x8xf32, #tpu.memory_space<vmem>>, vector<1x16x16x8xf32>
    %3 = vector.shape_cast %2 : vector<1x16x16x8xf32> to vector<16x16x8xf32>
    %4 = arith.truncf %3 : vector<16x16x8xf32> to vector<16x16x8xbf16>
    %c1 = arith.constant 1 : index
    %c1_6 = arith.constant 1 : index
    %c0_7 = arith.constant 0 : index
    %5 = vector.load %arg8[%c1, %c1_6, %c0_7] : memref<18x18x128xbf16, #tpu.memory_space<vmem>>, vector<16x16x8xbf16>
    tpu.vector_store %arg8[%c1, %c1_6, %c0_7], %4 {strides = array<i32>} : memref<18x18x128xbf16, #tpu.memory_space<vmem>>, vector<16x16x8xbf16>,
    %cst_8 = arith.constant 0.000000e+00 : f32
    %6 = vector.broadcast %cst_8 : f32 to vector<256x128xf32>
    %c0_9 = arith.constant 0 : index
    %c0_10 = arith.constant 0 : index
    %7 = vector.load %arg10[%c0_9, %c0_10] : memref<256x128xf32, #tpu.memory_space<vmem>>, vector<256x128xf32>
    tpu.vector_store %arg10[%c0_9, %c0_10], %6 {strides = array<i32>} : memref<256x128xf32, #tpu.memory_space<vmem>>, vector<256x128xf32>,
    %c0_11 = arith.constant 0 : index
    %c0_12 = arith.constant 0 : index
    %c0_13 = arith.constant 0 : index
    %8 = vector.load %arg8[%c0_11, %c0_12, %c0_13] : memref<18x18x128xbf16, #tpu.memory_space<vmem>>, vector<16x16x128xbf16>
    %c0_14 = arith.constant 0 : index
    %c1_15 = arith.constant 1 : index
    %c0_16 = arith.constant 0 : index
    %9 = vector.load %arg8[%c0_14, %c1_15, %c0_16] : memref<18x18x128xbf16, #tpu.memory_space<vmem>>, vector<16x16x128xbf16>
    %c0_17 = arith.constant 0 : index
    %c2 = arith.constant 2 : index
    %c0_18 = arith.constant 0 : index
    %10 = vector.load %arg8[%c0_17, %c2, %c0_18] : memref<18x18x128xbf16, #tpu.memory_space<vmem>>, vector<16x16x128xbf16>
    %11 = tpu.concatenate %8, %9, %10 in 2 : vector<16x16x128xbf16>, vector<16x16x128xbf16>, vector<16x16x128xbf16> -> vector<16x16x384xbf16>
    %12 = vector.shape_cast %11 : vector<16x16x384xbf16> to vector<256x384xbf16>
    %c0_19 = arith.constant 0 : index
    %c0_20 = arith.constant 0 : index
    %13 = vector.load %arg10[%c0_19, %c0_20] : memref<256x128xf32, #tpu.memory_space<vmem>>, vector<256x128xf32>
    %c0_21 = arith.constant 0 : index
    %c0_22 = arith.constant 0 : index
    %c0_23 = arith.constant 0 : index
    %14 = vector.load %arg2[%c0_21, %c0_22, %c0_23] : memref<3x384x128xbf16, #tpu.memory_space<vmem>>, vector<1x384x128xbf16>
    %15 = vector.shape_cast %14 : vector<1x384x128xbf16> to vector<384x128xbf16>
    %cst_24 = arith.constant dense<0.000000e+00> : vector<256x128xf32>
    %16 = tpu.matmul %12, %15, %cst_24 {dimension_numbers = #tpu.dot_dimension_numbers<[1], [0], [0], [1], [0, 0, 1, 1], [], []>} : vector<256x384xbf16>, vector<384x128xbf16>, vector<256x128xf32> -> vector<256x128xf32>
    %17 = arith.addf %13, %16 : vector<256x128xf32>
    %c0_25 = arith.constant 0 : index
    %c0_26 = arith.constant 0 : index
    %18 = vector.load %arg10[%c0_25, %c0_26] : memref<256x128xf32, #tpu.memory_space<vmem>>, vector<256x128xf32>
    tpu.vector_store %arg10[%c0_25, %c0_26], %17 {strides = array<i32>} : memref<256x128xf32, #tpu.memory_space<vmem>>, vector<256x128xf32>,
    %c1_27 = arith.constant 1 : index
    %c0_28 = arith.constant 0 : index
    %c0_29 = arith.constant 0 : index
    %19 = vector.load %arg8[%c1_27, %c0_28, %c0_29] : memref<18x18x128xbf16, #tpu.memory_space<vmem>>, vector<16x16x128xbf16>
    %c1_30 = arith.constant 1 : index
    %c1_31 = arith.constant 1 : index
    %c0_32 = arith.constant 0 : index
    %20 = vector.load %arg8[%c1_30, %c1_31, %c0_32] : memref<18x18x128xbf16, #tpu.memory_space<vmem>>, vector<16x16x128xbf16>
    %c1_33 = arith.constant 1 : index
    %c2_34 = arith.constant 2 : index
    %c0_35 = arith.constant 0 : index
    %21 = vector.load %arg8[%c1_33, %c2_34, %c0_35] : memref<18x18x128xbf16, #tpu.memory_space<vmem>>, vector<16x16x128xbf16>
    %22 = tpu.concatenate %19, %20, %21 in 2 : vector<16x16x128xbf16>, vector<16x16x128xbf16>, vector<16x16x128xbf16> -> vector<16x16x384xbf16>
    %23 = vector.shape_cast %22 : vector<16x16x384xbf16> to vector<256x384xbf16>
    %c0_36 = arith.constant 0 : index
    %c0_37 = arith.constant 0 : index
    %24 = vector.load %arg10[%c0_36, %c0_37] : memref<256x128xf32, #tpu.memory_space<vmem>>, vector<256x128xf32>
    %c1_38 = arith.constant 1 : index
    %c0_39 = arith.constant 0 : index
    %c0_40 = arith.constant 0 : index
    %25 = vector.load %arg2[%c1_38, %c0_39, %c0_40] : memref<3x384x128xbf16, #tpu.memory_space<vmem>>, vector<1x384x128xbf16>
    %26 = vector.shape_cast %25 : vector<1x384x128xbf16> to vector<384x128xbf16>
    %cst_41 = arith.constant dense<0.000000e+00> : vector<256x128xf32>
    %27 = tpu.matmul %23, %26, %cst_41 {dimension_numbers = #tpu.dot_dimension_numbers<[1], [0], [0], [1], [0, 0, 1, 1], [], []>} : vector<256x384xbf16>, vector<384x128xbf16>, vector<256x128xf32> -> vector<256x128xf32>
    %28 = arith.addf %24, %27 : vector<256x128xf32>
    %c0_42 = arith.constant 0 : index
    %c0_43 = arith.constant 0 : index
    %29 = vector.load %arg10[%c0_42, %c0_43] : memref<256x128xf32, #tpu.memory_space<vmem>>, vector<256x128xf32>
    tpu.vector_store %arg10[%c0_42, %c0_43], %28 {strides = array<i32>} : memref<256x128xf32, #tpu.memory_space<vmem>>, vector<256x128xf32>,
    %c2_44 = arith.constant 2 : index
    %c0_45 = arith.constant 0 : index
    %c0_46 = arith.constant 0 : index
    %30 = vector.load %arg8[%c2_44, %c0_45, %c0_46] : memref<18x18x128xbf16, #tpu.memory_space<vmem>>, vector<16x16x128xbf16>
    %c2_47 = arith.constant 2 : index
    %c1_48 = arith.constant 1 : index
    %c0_49 = arith.constant 0 : index
    %31 = vector.load %arg8[%c2_47, %c1_48, %c0_49] : memref<18x18x128xbf16, #tpu.memory_space<vmem>>, vector<16x16x128xbf16>
    %c2_50 = arith.constant 2 : index
    %c2_51 = arith.constant 2 : index
    %c0_52 = arith.constant 0 : index
    %32 = vector.load %arg8[%c2_50, %c2_51, %c0_52] : memref<18x18x128xbf16, #tpu.memory_space<vmem>>, vector<16x16x128xbf16>
    %33 = tpu.concatenate %30, %31, %32 in 2 : vector<16x16x128xbf16>, vector<16x16x128xbf16>, vector<16x16x128xbf16> -> vector<16x16x384xbf16>
    %34 = vector.shape_cast %33 : vector<16x16x384xbf16> to vector<256x384xbf16>
    %c0_53 = arith.constant 0 : index
    %c0_54 = arith.constant 0 : index
    %35 = vector.load %arg10[%c0_53, %c0_54] : memref<256x128xf32, #tpu.memory_space<vmem>>, vector<256x128xf32>
    %c2_55 = arith.constant 2 : index
    %c0_56 = arith.constant 0 : index
    %c0_57 = arith.constant 0 : index
    %36 = vector.load %arg2[%c2_55, %c0_56, %c0_57] : memref<3x384x128xbf16, #tpu.memory_space<vmem>>, vector<1x384x128xbf16>
    %37 = vector.shape_cast %36 : vector<1x384x128xbf16> to vector<384x128xbf16>
    %cst_58 = arith.constant dense<0.000000e+00> : vector<256x128xf32>
    %38 = tpu.matmul %34, %37, %cst_58 {dimension_numbers = #tpu.dot_dimension_numbers<[1], [0], [0], [1], [0, 0, 1, 1], [], []>} : vector<256x384xbf16>, vector<384x128xbf16>, vector<256x128xf32> -> vector<256x128xf32>
    %39 = arith.addf %35, %38 : vector<256x128xf32>
    %c0_59 = arith.constant 0 : index
    %c0_60 = arith.constant 0 : index
    %40 = vector.load %arg10[%c0_59, %c0_60] : memref<256x128xf32, #tpu.memory_space<vmem>>, vector<256x128xf32>
    tpu.vector_store %arg10[%c0_59, %c0_60], %39 {strides = array<i32>} : memref<256x128xf32, #tpu.memory_space<vmem>>, vector<256x128xf32>,
    %c0_61 = arith.constant 0 : index
    %c0_62 = arith.constant 0 : index
    %41 = vector.load %arg10[%c0_61, %c0_62] : memref<256x128xf32, #tpu.memory_space<vmem>>, vector<256x128xf32>
    %c0_63 = arith.constant 0 : index
    %c0_64 = arith.constant 0 : index
    %42 = vector.load %arg3[%c0_63, %c0_64] : memref<1x128xf32, #tpu.memory_space<vmem>>, vector<1x128xf32>
    %43 = vector.broadcast %42 : vector<1x128xf32> to vector<256x128xf32>
    %44 = arith.addf %41, %43 : vector<256x128xf32>
    %cst_65 = arith.constant 0.000000e+00 : f32
    %45 = vector.broadcast %cst_65 : f32 to vector<256x128xf32>
    %46 = arith.maximumf %44, %45 : vector<256x128xf32>
    %cst_66 = arith.constant 0.000000e+00 : bf16
    %47 = vector.broadcast %cst_66 : bf16 to vector<18x18x128xbf16>
    %c0_67 = arith.constant 0 : index
    %c0_68 = arith.constant 0 : index
    %c0_69 = arith.constant 0 : index
    %48 = vector.load %arg9[%c0_67, %c0_68, %c0_69] : memref<18x18x128xbf16, #tpu.memory_space<vmem>>, vector<18x18x128xbf16>
    tpu.vector_store %arg9[%c0_67, %c0_68, %c0_69], %47 {strides = array<i32>} : memref<18x18x128xbf16, #tpu.memory_space<vmem>>, vector<18x18x128xbf16>,
    %49 = vector.shape_cast %46 : vector<256x128xf32> to vector<16x16x128xf32>
    %50 = arith.truncf %49 : vector<16x16x128xf32> to vector<16x16x128xbf16>
    %c1_70 = arith.constant 1 : index
    %c1_71 = arith.constant 1 : index
    %c0_72 = arith.constant 0 : index
    %51 = vector.load %arg9[%c1_70, %c1_71, %c0_72] : memref<18x18x128xbf16, #tpu.memory_space<vmem>>, vector<16x16x128xbf16>
    tpu.vector_store %arg9[%c1_70, %c1_71, %c0_72], %50 {strides = array<i32>} : memref<18x18x128xbf16, #tpu.memory_space<vmem>>, vector<16x16x128xbf16>,
    %cst_73 = arith.constant 0.000000e+00 : f32
    %52 = vector.broadcast %cst_73 : f32 to vector<256x128xf32>
    %c0_74 = arith.constant 0 : index
    %c0_75 = arith.constant 0 : index
    %53 = vector.load %arg10[%c0_74, %c0_75] : memref<256x128xf32, #tpu.memory_space<vmem>>, vector<256x128xf32>
    tpu.vector_store %arg10[%c0_74, %c0_75], %52 {strides = array<i32>} : memref<256x128xf32, #tpu.memory_space<vmem>>, vector<256x128xf32>,
    %c0_76 = arith.constant 0 : index
    %c0_77 = arith.constant 0 : index
    %c0_78 = arith.constant 0 : index
    %54 = vector.load %arg9[%c0_76, %c0_77, %c0_78] : memref<18x18x128xbf16, #tpu.memory_space<vmem>>, vector<16x16x128xbf16>
    %c0_79 = arith.constant 0 : index
    %c1_80 = arith.constant 1 : index
    %c0_81 = arith.constant 0 : index
    %55 = vector.load %arg9[%c0_79, %c1_80, %c0_81] : memref<18x18x128xbf16, #tpu.memory_space<vmem>>, vector<16x16x128xbf16>
    %c0_82 = arith.constant 0 : index
    %c2_83 = arith.constant 2 : index
    %c0_84 = arith.constant 0 : index
    %56 = vector.load %arg9[%c0_82, %c2_83, %c0_84] : memref<18x18x128xbf16, #tpu.memory_space<vmem>>, vector<16x16x128xbf16>
    %57 = tpu.concatenate %54, %55, %56 in 2 : vector<16x16x128xbf16>, vector<16x16x128xbf16>, vector<16x16x128xbf16> -> vector<16x16x384xbf16>
    %58 = vector.shape_cast %57 : vector<16x16x384xbf16> to vector<256x384xbf16>
    %c0_85 = arith.constant 0 : index
    %c0_86 = arith.constant 0 : index
    %59 = vector.load %arg10[%c0_85, %c0_86] : memref<256x128xf32, #tpu.memory_space<vmem>>, vector<256x128xf32>
    %c0_87 = arith.constant 0 : index
    %c0_88 = arith.constant 0 : index
    %c0_89 = arith.constant 0 : index
    %60 = vector.load %arg4[%c0_87, %c0_88, %c0_89] : memref<3x384x128xbf16, #tpu.memory_space<vmem>>, vector<1x384x128xbf16>
    %61 = vector.shape_cast %60 : vector<1x384x128xbf16> to vector<384x128xbf16>
    %cst_90 = arith.constant dense<0.000000e+00> : vector<256x128xf32>
    %62 = tpu.matmul %58, %61, %cst_90 {dimension_numbers = #tpu.dot_dimension_numbers<[1], [0], [0], [1], [0, 0, 1, 1], [], []>} : vector<256x384xbf16>, vector<384x128xbf16>, vector<256x128xf32> -> vector<256x128xf32>
    %63 = arith.addf %59, %62 : vector<256x128xf32>
    %c0_91 = arith.constant 0 : index
    %c0_92 = arith.constant 0 : index
    %64 = vector.load %arg10[%c0_91, %c0_92] : memref<256x128xf32, #tpu.memory_space<vmem>>, vector<256x128xf32>
    tpu.vector_store %arg10[%c0_91, %c0_92], %63 {strides = array<i32>} : memref<256x128xf32, #tpu.memory_space<vmem>>, vector<256x128xf32>,
    %c1_93 = arith.constant 1 : index
    %c0_94 = arith.constant 0 : index
    %c0_95 = arith.constant 0 : index
    %65 = vector.load %arg9[%c1_93, %c0_94, %c0_95] : memref<18x18x128xbf16, #tpu.memory_space<vmem>>, vector<16x16x128xbf16>
    %c1_96 = arith.constant 1 : index
    %c1_97 = arith.constant 1 : index
    %c0_98 = arith.constant 0 : index
    %66 = vector.load %arg9[%c1_96, %c1_97, %c0_98] : memref<18x18x128xbf16, #tpu.memory_space<vmem>>, vector<16x16x128xbf16>
    %c1_99 = arith.constant 1 : index
    %c2_100 = arith.constant 2 : index
    %c0_101 = arith.constant 0 : index
    %67 = vector.load %arg9[%c1_99, %c2_100, %c0_101] : memref<18x18x128xbf16, #tpu.memory_space<vmem>>, vector<16x16x128xbf16>
    %68 = tpu.concatenate %65, %66, %67 in 2 : vector<16x16x128xbf16>, vector<16x16x128xbf16>, vector<16x16x128xbf16> -> vector<16x16x384xbf16>
    %69 = vector.shape_cast %68 : vector<16x16x384xbf16> to vector<256x384xbf16>
    %c0_102 = arith.constant 0 : index
    %c0_103 = arith.constant 0 : index
    %70 = vector.load %arg10[%c0_102, %c0_103] : memref<256x128xf32, #tpu.memory_space<vmem>>, vector<256x128xf32>
    %c1_104 = arith.constant 1 : index
    %c0_105 = arith.constant 0 : index
    %c0_106 = arith.constant 0 : index
    %71 = vector.load %arg4[%c1_104, %c0_105, %c0_106] : memref<3x384x128xbf16, #tpu.memory_space<vmem>>, vector<1x384x128xbf16>
    %72 = vector.shape_cast %71 : vector<1x384x128xbf16> to vector<384x128xbf16>
    %cst_107 = arith.constant dense<0.000000e+00> : vector<256x128xf32>
    %73 = tpu.matmul %69, %72, %cst_107 {dimension_numbers = #tpu.dot_dimension_numbers<[1], [0], [0], [1], [0, 0, 1, 1], [], []>} : vector<256x384xbf16>, vector<384x128xbf16>, vector<256x128xf32> -> vector<256x128xf32>
    %74 = arith.addf %70, %73 : vector<256x128xf32>
    %c0_108 = arith.constant 0 : index
    %c0_109 = arith.constant 0 : index
    %75 = vector.load %arg10[%c0_108, %c0_109] : memref<256x128xf32, #tpu.memory_space<vmem>>, vector<256x128xf32>
    tpu.vector_store %arg10[%c0_108, %c0_109], %74 {strides = array<i32>} : memref<256x128xf32, #tpu.memory_space<vmem>>, vector<256x128xf32>,
    %c2_110 = arith.constant 2 : index
    %c0_111 = arith.constant 0 : index
    %c0_112 = arith.constant 0 : index
    %76 = vector.load %arg9[%c2_110, %c0_111, %c0_112] : memref<18x18x128xbf16, #tpu.memory_space<vmem>>, vector<16x16x128xbf16>
    %c2_113 = arith.constant 2 : index
    %c1_114 = arith.constant 1 : index
    %c0_115 = arith.constant 0 : index
    %77 = vector.load %arg9[%c2_113, %c1_114, %c0_115] : memref<18x18x128xbf16, #tpu.memory_space<vmem>>, vector<16x16x128xbf16>
    %c2_116 = arith.constant 2 : index
    %c2_117 = arith.constant 2 : index
    %c0_118 = arith.constant 0 : index
    %78 = vector.load %arg9[%c2_116, %c2_117, %c0_118] : memref<18x18x128xbf16, #tpu.memory_space<vmem>>, vector<16x16x128xbf16>
    %79 = tpu.concatenate %76, %77, %78 in 2 : vector<16x16x128xbf16>, vector<16x16x128xbf16>, vector<16x16x128xbf16> -> vector<16x16x384xbf16>
    %80 = vector.shape_cast %79 : vector<16x16x384xbf16> to vector<256x384xbf16>
    %c0_119 = arith.constant 0 : index
    %c0_120 = arith.constant 0 : index
    %81 = vector.load %arg10[%c0_119, %c0_120] : memref<256x128xf32, #tpu.memory_space<vmem>>, vector<256x128xf32>
    %c2_121 = arith.constant 2 : index
    %c0_122 = arith.constant 0 : index
    %c0_123 = arith.constant 0 : index
    %82 = vector.load %arg4[%c2_121, %c0_122, %c0_123] : memref<3x384x128xbf16, #tpu.memory_space<vmem>>, vector<1x384x128xbf16>
    %83 = vector.shape_cast %82 : vector<1x384x128xbf16> to vector<384x128xbf16>
    %cst_124 = arith.constant dense<0.000000e+00> : vector<256x128xf32>
    %84 = tpu.matmul %80, %83, %cst_124 {dimension_numbers = #tpu.dot_dimension_numbers<[1], [0], [0], [1], [0, 0, 1, 1], [], []>} : vector<256x384xbf16>, vector<384x128xbf16>, vector<256x128xf32> -> vector<256x128xf32>
    %85 = arith.addf %81, %84 : vector<256x128xf32>
    %c0_125 = arith.constant 0 : index
    %c0_126 = arith.constant 0 : index
    %86 = vector.load %arg10[%c0_125, %c0_126] : memref<256x128xf32, #tpu.memory_space<vmem>>, vector<256x128xf32>
    tpu.vector_store %arg10[%c0_125, %c0_126], %85 {strides = array<i32>} : memref<256x128xf32, #tpu.memory_space<vmem>>, vector<256x128xf32>,
    %c0_127 = arith.constant 0 : index
    %c0_128 = arith.constant 0 : index
    %87 = vector.load %arg10[%c0_127, %c0_128] : memref<256x128xf32, #tpu.memory_space<vmem>>, vector<256x128xf32>
    %c0_129 = arith.constant 0 : index
    %c0_130 = arith.constant 0 : index
    %88 = vector.load %arg5[%c0_129, %c0_130] : memref<1x128xf32, #tpu.memory_space<vmem>>, vector<1x128xf32>
    %89 = vector.broadcast %88 : vector<1x128xf32> to vector<256x128xf32>
    %90 = arith.addf %87, %89 : vector<256x128xf32>
    %91 = vector.shape_cast %90 : vector<256x128xf32> to vector<16x16x128xf32>
    %c0_131 = arith.constant 0 : index
    %c0_132 = arith.constant 0 : index
    %c0_133 = arith.constant 0 : index
    %c0_134 = arith.constant 0 : index
    %92 = vector.load %arg6[%c0_131, %c0_132, %c0_133, %c0_134] : memref<1x16x16x128xf32, #tpu.memory_space<vmem>>, vector<1x16x16x128xf32>
    %93 = vector.shape_cast %92 : vector<1x16x16x128xf32> to vector<16x16x128xf32>
    %94 = arith.addf %91, %93 : vector<16x16x128xf32>
    %cst_135 = arith.constant 0.000000e+00 : f32
    %95 = vector.broadcast %cst_135 : f32 to vector<16x16x128xf32>
    %96 = arith.maximumf %94, %95 : vector<16x16x128xf32>
    %c0_136 = arith.constant 0 : index
    %c0_137 = arith.constant 0 : index
    %c0_138 = arith.constant 0 : index
    %c0_139 = arith.constant 0 : index
    %97 = vector.load %arg7[%c0_136, %c0_137, %c0_138, %c0_139] : memref<1x16x16x128xf32, #tpu.memory_space<vmem>>, vector<1x16x16x128xf32>
    %98 = vector.shape_cast %97 : vector<1x16x16x128xf32> to vector<16x16x128xf32>
    %99 = vector.shape_cast %96 : vector<16x16x128xf32> to vector<1x16x16x128xf32>
    tpu.vector_store %arg7[%c0_136, %c0_137, %c0_138, %c0_139], %99 {strides = array<i32>} : memref<1x16x16x128xf32, #tpu.memory_space<vmem>>, vector<1x16x16x128xf32>,
    return
  }
  func.func @transform_0(%arg0: i32) -> (i32, i32, i32, i32) {
    %c0_i32 = arith.constant 0 : i32
    %c0_i32_0 = arith.constant 0 : i32
    %c0_i32_1 = arith.constant 0 : i32
    %c0_i32_2 = arith.constant 0 : i32
    return %arg0, %c0_i32, %c0_i32_0, %c0_i32_1 : i32, i32, i32, i32
  }
  func.func @transform_1(%arg0: i32) -> (i32, i32, i32) {
    %c0_i32 = arith.constant 0 : i32
    %c0_i32_0 = arith.constant 0 : i32
    %c0_i32_1 = arith.constant 0 : i32
    %c0_i32_2 = arith.constant 0 : i32
    return %c0_i32, %c0_i32_0, %c0_i32_1 : i32, i32, i32
  }
  func.func @transform_2(%arg0: i32) -> (i32, i32) {
    %c0_i32 = arith.constant 0 : i32
    %c0_i32_0 = arith.constant 0 : i32
    %c0_i32_1 = arith.constant 0 : i32
    return %c0_i32, %c0_i32_0 : i32, i32
  }
  func.func @transform_3(%arg0: i32) -> (i32, i32, i32) {
    %c0_i32 = arith.constant 0 : i32
    %c0_i32_0 = arith.constant 0 : i32
    %c0_i32_1 = arith.constant 0 : i32
    %c0_i32_2 = arith.constant 0 : i32
    return %c0_i32, %c0_i32_0, %c0_i32_1 : i32, i32, i32
  }
  func.func @transform_4(%arg0: i32) -> (i32, i32) {
    %c0_i32 = arith.constant 0 : i32
    %c0_i32_0 = arith.constant 0 : i32
    %c0_i32_1 = arith.constant 0 : i32
    return %c0_i32, %c0_i32_0 : i32, i32
  }
  func.func @transform_5(%arg0: i32) -> (i32, i32, i32, i32) {
    %c0_i32 = arith.constant 0 : i32
    %c0_i32_0 = arith.constant 0 : i32
    %c0_i32_1 = arith.constant 0 : i32
    %c0_i32_2 = arith.constant 0 : i32
    return %arg0, %c0_i32, %c0_i32_0, %c0_i32_1 : i32, i32, i32, i32
  }
  func.func @transform_6(%arg0: i32) -> (i32, i32, i32, i32) {
    %c0_i32 = arith.constant 0 : i32
    %c0_i32_0 = arith.constant 0 : i32
    %c0_i32_1 = arith.constant 0 : i32
    %c0_i32_2 = arith.constant 0 : i32
    return %arg0, %c0_i32, %c0_i32_0, %c0_i32_1 : i32, i32, i32, i32
  }
}

</mosaic_0001>

<llo_original>
// kernel: tpu_custom_call.1
$region0: #{tpu_custom_call.1}
  #allocation0 [shape = 'u32[]', space=smem, size = 0x4, offset = 0x4, fixed_abs, tag = 'smem constant byte address 0x4 - core index']
  #allocation1 [shape = 'u32[144,128]{1,0:T(1,128)}', space=vmem, size = 0x12000, scoped, tag = 'internal scratch']
  #allocation2 [shape = 'bf16[18,18,128]{2,1,0:T(8,128)(2,1)}', space=vmem, size = 0x1b000, scoped, tag = 'scratch operand']
  #allocation3 [shape = 'bf16[18,18,128]{2,1,0:T(8,128)(2,1)}', space=vmem, size = 0x1b000, scoped, tag = 'scratch operand']
  #allocation4 [shape = 'f32[256,128]{1,0:T(8,128)}', space=vmem, size = 0x20000, scoped, tag = 'scratch operand']
  %s0 = inlined_call_operand.vmem [shape: f32[2,16,16,8], index: 0, kind: input, shape index: {}]
  %s1 = inlined_call_operand.vmem [shape: bf16[3,384,128], index: 1, kind: input, shape index: {}]
  %s2 = inlined_call_operand.vmem [shape: f32[1,128], index: 2, kind: input, shape index: {}]
  %s3 = inlined_call_operand.hbm [shape: bf16[3,384,128], index: 3, kind: input, shape index: {}]
  %s4 = inlined_call_operand.vmem [shape: f32[1,128], index: 4, kind: input, shape index: {}]
  %s5 = inlined_call_operand.hbm [shape: f32[2,16,16,128], index: 5, kind: input, shape index: {}]
  %s6 = inlined_call_operand.hbm [shape: f32[2,16,16,128], index: 6, kind: output, shape index: {}]
  %s7 = sld [smem:[#allocation0]]
  $region65: #{tpu_custom_call.1} parent=0
    _
  %s9 = ssub.s32 1, %s7
  %s10 = scalar_select 0, %s9, %s7
  $region1: #{tpu_custom_call.1} parent=0
    #allocation5 [shape = 'u8[294912]{0}', space=vmem, size = 0x48000, scoped, tag = 'input window, operand 3, single buffered']
    #allocation6 [shape = 's32[2]{0}', space=sflag, size = 0x8, scoped, tag = 'scoped memory for tpu_custom_call.1']
    #allocation7 [shape = 's32[2]{0}', space=sflag, size = 0x8, scoped, tag = 'scoped memory for tpu_custom_call.1']
    #allocation8 [shape = 'u8[262144]{0}', space=vmem, size = 0x40000, scoped, tag = 'input window, operand 5']
    #allocation9 [shape = 's32[2]{0}', space=sflag, size = 0x8, scoped, tag = 'scoped memory for tpu_custom_call.1']
    #allocation10 [shape = 'u8[262144]{0}', space=vmem, size = 0x40000, scoped, tag = 'output window, operand 0']
    %11 = vsyncpa [#allocation6], 0
    %12 = vsyncpa [#allocation9], 0
    %s13 = scalar_lea.sflag [#allocation9], 1
    %14 = vsyncpa %s13, 0
    %15 = vsyncpa [#allocation7], 0
    %s16 = scalar_lea.sflag [#allocation7], 1
    %17 = vsyncpa %s16, 0
    loop: start=0, step=1, limit=4
    $region2: #{tpu_custom_call.1} parent=1 // loop_pre_header
      _
    $region3: #{tpu_custom_call.1} parent=1 // loop_header
      %s19 = sphi 0, %s23
      %p20 = scmp.ge.s32.totalorder %s19, 4
      %s29 = sphi 0, %s31
      %s32 = sphi 0, %s29
      %s33 = sphi 0, %s32
      %s49 = sphi 0, %s33
      %s53 = sphi 0, %s53
      %s55 = sphi 0, %s53
      %s56 = sphi 0, %s55
      %s70 = sphi 0, %s56
      %s74 = sphi 0, %s74
      %s76 = sphi 0, %s74
      %s77 = sphi 0, %s76
      %s91 = sphi 0, %s77
      %s95 = sphi 0, %s95
      %s97 = sphi 0, %s95
      %s98 = sphi 0, %s97
      %s112 = sphi 0, %s98
      %s116 = sphi 0, %s116
      %s118 = sphi 0, %s116
      %s119 = sphi 0, %s118
      %s133 = sphi 0, %s119
      %s139 = sphi 0, %s141
      %s142 = sphi 0, %s139
      %s143 = sphi 0, %s142
      %s159 = sphi 0, %s143
      %s165 = sphi 0, %s167
      %s168 = sphi 0, %s165
      %s169 = sphi 0, %s168
      %s185 = sphi 0, %s169
    $region4: #{tpu_custom_call.1} parent=1 // loop_header_branch
      %22 = sbr.rel (%p20) target = $region8
    $region5: #{tpu_custom_call.1} parent=1 // loop_body
      %s24 = ssub.s32 %s19, 1
      %s25 = ssub.s32 %s19, 2
      %s26 = sadd.s32 %s19, 1
      %s27 = ssub.s32 %s19, %s26
      %p28 = scmp.eq.s32.totalorder %s27, 0
      %s30 = sadd.s32 %s29, 1
      %s31 = scalar_select %p28, %s29, %s30
      %p34 = pneg %p28
      %p35 = scmp.eq.s32.totalorder %s19, 1
      %p36 = por %p34, %p35
      %p37 = scmp.ne.s32.totalorder %s29, %s32
      %p38 = scmp.eq.s32.totalorder %s19, 0
      %p39 = por %p37, %p38
      %p40 = scmp.ne.s32.totalorder %s29, %s32
      %p41 = scmp.eq.s32.totalorder %s24, 1
      %p42 = por %p40, %p41
      %p43 = scmp.ne.s32.totalorder %s32, %s33
      %p44 = scmp.eq.s32.totalorder %s24, 0
      %p45 = por %p43, %p44
      %p46 = scmp.ne.s32.totalorder %s32, %s33
      %p47 = scmp.eq.s32.totalorder %s25, 1
      %p48 = por %p46, %p47
      %p50 = scmp.ne.s32.totalorder %s33, %s49
      %p51 = scmp.eq.s32.totalorder %s25, 0
      %p52 = por %p50, %p51
      %s54 = sadd.s32 %s53, 1
      %p57 = scmp.eq.s32.totalorder %s19, 1
      %p58 = scmp.ne.s32.totalorder %s53, %s55
      %p59 = scmp.eq.s32.totalorder %s19, 0
      %p60 = por %p58, %p59
      %p61 = scmp.ne.s32.totalorder %s53, %s55
      %p62 = scmp.eq.s32.totalorder %s24, 1
      %p63 = por %p61, %p62
      %p64 = scmp.ne.s32.totalorder %s55, %s56
      %p65 = scmp.eq.s32.totalorder %s24, 0
      %p66 = por %p64, %p65
      %p67 = scmp.ne.s32.totalorder %s55, %s56
      %p68 = scmp.eq.s32.totalorder %s25, 1
      %p69 = por %p67, %p68
      %p71 = scmp.ne.s32.totalorder %s56, %s70
      %p72 = scmp.eq.s32.totalorder %s25, 0
      %p73 = por %p71, %p72
      %s75 = sadd.s32 %s74, 1
      %p78 = scmp.eq.s32.totalorder %s19, 1
      %p79 = scmp.ne.s32.totalorder %s74, %s76
      %p80 = scmp.eq.s32.totalorder %s19, 0
      %p81 = por %p79, %p80
      %p82 = scmp.ne.s32.totalorder %s74, %s76
      %p83 = scmp.eq.s32.totalorder %s24, 1
      %p84 = por %p82, %p83
      %p85 = scmp.ne.s32.totalorder %s76, %s77
      %p86 = scmp.eq.s32.totalorder %s24, 0
      %p87 = por %p85, %p86
      %p88 = scmp.ne.s32.totalorder %s76, %s77
      %p89 = scmp.eq.s32.totalorder %s25, 1
      %p90 = por %p88, %p89
      %p92 = scmp.ne.s32.totalorder %s77, %s91
      %p93 = scmp.eq.s32.totalorder %s25, 0
      %p94 = por %p92, %p93
      %s96 = sadd.s32 %s95, 1
      %p99 = scmp.eq.s32.totalorder %s19, 1
      %p100 = scmp.ne.s32.totalorder %s95, %s97
      %p101 = scmp.eq.s32.totalorder %s19, 0
      %p102 = por %p100, %p101
      %p103 = scmp.ne.s32.totalorder %s95, %s97
      %p104 = scmp.eq.s32.totalorder %s24, 1
      %p105 = por %p103, %p104
      %p106 = scmp.ne.s32.totalorder %s97, %s98
      %p107 = scmp.eq.s32.totalorder %s24, 0
      %p108 = por %p106, %p107
      %p109 = scmp.ne.s32.totalorder %s97, %s98
      %p110 = scmp.eq.s32.totalorder %s25, 1
      %p111 = por %p109, %p110
      %p113 = scmp.ne.s32.totalorder %s98, %s112
      %p114 = scmp.eq.s32.totalorder %s25, 0
      %p115 = por %p113, %p114
      %s117 = sadd.s32 %s116, 1
      %p120 = scmp.eq.s32.totalorder %s19, 1
      %p121 = scmp.ne.s32.totalorder %s116, %s118
      %p122 = scmp.eq.s32.totalorder %s19, 0
      %p123 = por %p121, %p122
      %p124 = scmp.ne.s32.totalorder %s116, %s118
      %p125 = scmp.eq.s32.totalorder %s24, 1
      %p126 = por %p124, %p125
      %p127 = scmp.ne.s32.totalorder %s118, %s119
      %p128 = scmp.eq.s32.totalorder %s24, 0
      %p129 = por %p127, %p128
      %p130 = scmp.ne.s32.totalorder %s118, %s119
      %p131 = scmp.eq.s32.totalorder %s25, 1
      %p132 = por %p130, %p131
      %p134 = scmp.ne.s32.totalorder %s119, %s133
      %p135 = scmp.eq.s32.totalorder %s25, 0
      %p136 = por %p134, %p135
      %s137 = ssub.s32 %s19, %s26
      %p138 = scmp.eq.s32.totalorder %s137, 0
      %s140 = sadd.s32 %s139, 1
      %s141 = scalar_select %p138, %s139, %s140
      %p144 = pneg %p138
      %p145 = scmp.eq.s32.totalorder %s19, 1
      %p146 = por %p144, %p145
      %p147 = scmp.ne.s32.totalorder %s139, %s142
      %p148 = scmp.eq.s32.totalorder %s19, 0
      %p149 = por %p147, %p148
      %p150 = scmp.ne.s32.totalorder %s139, %s142
      %p151 = scmp.eq.s32.totalorder %s24, 1
      %p152 = por %p150, %p151
      %p153 = scmp.ne.s32.totalorder %s142, %s143
      %p154 = scmp.eq.s32.totalorder %s24, 0
      %p155 = por %p153, %p154
      %p156 = scmp.ne.s32.totalorder %s142, %s143
      %p157 = scmp.eq.s32.totalorder %s25, 1
      %p158 = por %p156, %p157
      %p160 = scmp.ne.s32.totalorder %s143, %s159
      %p161 = scmp.eq.s32.totalorder %s25, 0
      %p162 = por %p160, %p161
      %s163 = ssub.s32 %s19, %s26
      %p164 = scmp.eq.s32.totalorder %s163, 0
      %s166 = sadd.s32 %s165, 1
      %s167 = scalar_select %p164, %s165, %s166
      %p170 = pneg %p164
      %p171 = scmp.eq.s32.totalorder %s19, 1
      %p172 = por %p170, %p171
      %p173 = scmp.ne.s32.totalorder %s165, %s168
      %p174 = scmp.eq.s32.totalorder %s19, 0
      %p175 = por %p173, %p174
      %p176 = scmp.ne.s32.totalorder %s165, %s168
      %p177 = scmp.eq.s32.totalorder %s24, 1
      %p178 = por %p176, %p177
      %p179 = scmp.ne.s32.totalorder %s168, %s169
      %p180 = scmp.eq.s32.totalorder %s24, 0
      %p181 = por %p179, %p180
      %p182 = scmp.ne.s32.totalorder %s168, %s169
      %p183 = scmp.eq.s32.totalorder %s25, 1
      %p184 = por %p182, %p183
      %p186 = scmp.ne.s32.totalorder %s169, %s185
      %p187 = scmp.eq.s32.totalorder %s25, 0
      %p188 = por %p186, %p187
      %p189 = scmp.le.s32.totalorder 1, %s19
      %p190 = scmp.lt.s32.totalorder %s19, 3
      %p191 = pnand %p189, %p190
      %p192 = pneg %p191
      // Predicated region
      $region9: #{tpu_custom_call.1} parent=5 // pred_check
        _
      $region10: #{tpu_custom_call.1} parent=5 // pred_check_branch
        %194 = sbr.rel (%p191) target = $region12
      $region11: #{tpu_custom_call.1} parent=5 // pred_region
        %s195 = ssub.s32 %s19, 1
        // Predicated region
        $region13: #{tpu_custom_call.1} parent=11 // pred_check
          %p196 = pneg %p66
        $region14: #{tpu_custom_call.1} parent=11 // pred_check_branch
          %198 = sbr.rel (%p196) target = $region16
        $region15: #{tpu_custom_call.1} parent=11 // pred_region
          _
        $region16: #{tpu_custom_call.1} parent=11 // pred_fallthru
          _
        // Predicated region
        $region17: #{tpu_custom_call.1} parent=11 // pred_check
          %p199 = pneg %p87
        $region18: #{tpu_custom_call.1} parent=11 // pred_check_branch
          %201 = sbr.rel (%p199) target = $region20
        $region19: #{tpu_custom_call.1} parent=11 // pred_region
          _
        $region20: #{tpu_custom_call.1} parent=11 // pred_fallthru
          _
        // Predicated region
        $region21: #{tpu_custom_call.1} parent=11 // pred_check
          %p202 = pneg %p108
        $region22: #{tpu_custom_call.1} parent=11 // pred_check_branch
          %204 = sbr.rel (%p202) target = $region24
        $region23: #{tpu_custom_call.1} parent=11 // pred_region
          %s206 = ssub.s32 9216, 9216
          %207 = vsyncadd [#allocation6], %s206
          %s208 = sshll.u32 [#allocation5], 4
          %s209 = int_to_ptr.vmem [resolvable:$true] %s208
          %214 = dma.hbm_to_vmem [thread:$0]  %s3, 9216, %s209, [#allocation6], 64, 64, 4
        $region24: #{tpu_custom_call.1} parent=11 // pred_fallthru
          _
        // Predicated region
        $region25: #{tpu_custom_call.1} parent=11 // pred_check
          %p215 = pneg %p129
        $region26: #{tpu_custom_call.1} parent=11 // pred_check_branch
          %217 = sbr.rel (%p215) target = $region28
        $region27: #{tpu_custom_call.1} parent=11 // pred_region
          _
        $region28: #{tpu_custom_call.1} parent=11 // pred_fallthru
          _
      $region12: #{tpu_custom_call.1} parent=5 // pred_fallthru
        _
      %p218 = scmp.lt.s32.totalorder %s19, 2
      // Predicated region
      $region29: #{tpu_custom_call.1} parent=5 // pred_check
        %p219 = pneg %p218
      $region30: #{tpu_custom_call.1} parent=5 // pred_check_branch
        %221 = sbr.rel (%p219) target = $region32
      $region31: #{tpu_custom_call.1} parent=5 // pred_region
        // Predicated region
        $region33: #{tpu_custom_call.1} parent=31 // pred_check
          %p222 = pneg %p39
        $region34: #{tpu_custom_call.1} parent=31 // pred_check_branch
          %224 = sbr.rel (%p222) target = $region36
        $region35: #{tpu_custom_call.1} parent=31 // pred_region
          %p225 = scmp.lt.s32.totalorder %s19, 1
          %s226 = scalar_select %p225, %s19, 1
          %s227 = smul.addr %s226, 32
          %s228 = smul.addr %s227, 8
          %s229 = scalar_lea.vmem %s0, %s228
        $region36: #{tpu_custom_call.1} parent=31 // pred_fallthru
          _
        // Predicated region
        $region37: #{tpu_custom_call.1} parent=31 // pred_check
          %p230 = pneg %p149
        $region38: #{tpu_custom_call.1} parent=31 // pred_check_branch
          %232 = sbr.rel (%p230) target = $region40
        $region39: #{tpu_custom_call.1} parent=31 // pred_region
          %s233 = sand.u32 %s139, 1
          %s234 = scalar_lea.sflag [#allocation9], %s233
          %s235 = sand.u32 %s139, 1
          %s236 = smul.addr %s235, 256
          %s237 = scalar_lea.vmem [#allocation8], %s236
          %s239 = ssub.s32 4096, 4096
          %240 = vsyncadd %s234, %s239
          %s241 = smul.addr %s19, 32
          %s242 = smul.addr %s241, 128
          %s243 = scalar_lea.hbm %s5, %s242
          %s244 = sshll.u32 %s237, 4
          %s245 = int_to_ptr.vmem [resolvable:$true] %s244
          %250 = dma.hbm_to_vmem [thread:$0]  %s243, 4096, %s245, %s234, 128, 128, 8
        $region40: #{tpu_custom_call.1} parent=31 // pred_fallthru
          _
      $region32: #{tpu_custom_call.1} parent=5 // pred_fallthru
        _
      %p251 = scmp.le.s32.totalorder 1, %s19
      %p252 = scmp.lt.s32.totalorder %s19, 3
      %p253 = pnand %p251, %p252
      %p254 = pneg %p253
      // Predicated region
      $region41: #{tpu_custom_call.1} parent=5 // pred_check
        _
      $region42: #{tpu_custom_call.1} parent=5 // pred_check_branch
        %256 = sbr.rel (%p253) target = $region44
      $region43: #{tpu_custom_call.1} parent=5 // pred_region
        %s257 = ssub.s32 %s19, 1
        // Predicated region
        $region45: #{tpu_custom_call.1} parent=43 // pred_check
          %p258 = pneg %p108
        $region46: #{tpu_custom_call.1} parent=43 // pred_check_branch
          %260 = sbr.rel (%p258) target = $region48
        $region47: #{tpu_custom_call.1} parent=43 // pred_region
          %261 = dma.done [#allocation6], 9216
        $region48: #{tpu_custom_call.1} parent=43 // pred_fallthru
          _
        %s262 = sand.u32 %s142, 1
        %s263 = scalar_lea.sflag [#allocation9], %s262
        %s264 = sand.u32 %s142, 1
        %s265 = smul.addr %s264, 256
        %s266 = scalar_lea.vmem [#allocation8], %s265
        // Predicated region
        $region49: #{tpu_custom_call.1} parent=43 // pred_check
          %p267 = pneg %p155
        $region50: #{tpu_custom_call.1} parent=43 // pred_check_branch
          %269 = sbr.rel (%p267) target = $region52
        $region51: #{tpu_custom_call.1} parent=43 // pred_region
          %270 = dma.done %s263, 4096
        $region52: #{tpu_custom_call.1} parent=43 // pred_fallthru
          _
        %p271 = scmp.lt.s32.totalorder %s24, 1
        %s272 = scalar_select %p271, %s24, 1
        %s273 = smul.addr %s272, 32
        %s274 = smul.addr %s273, 8
        %s275 = scalar_lea.vmem %s0, %s274
        %p276 = pneg %p45
        %p277 = pneg %p42
        %p278 = pneg %p66
        %p279 = pneg %p63
        %p280 = pneg %p87
        %p281 = pneg %p84
        %p282 = pneg %p108
        %p283 = pneg %p105
        %p284 = pneg %p129
        %p285 = pneg %p126
        %s286 = sand.u32 %s142, 1
        %s287 = scalar_lea.sflag [#allocation9], %s286
        %s288 = sand.u32 %s142, 1
        %s289 = smul.addr %s288, 256
        %s290 = scalar_lea.vmem [#allocation8], %s289
        %p291 = pneg %p155
        %p292 = pneg %p152
        %p293 = pneg %p181
        %p294 = pneg %p178
        %s295 = sand.u32 %s168, 1
        %s296 = scalar_lea.sflag [#allocation7], %s295
        %s297 = sand.u32 %s168, 1
        %s298 = smul.addr %s297, 256
        %s299 = scalar_lea.vmem [#allocation10], %s298
        %p300 = scmp.lt.s32.totalorder %s24, 1
        %s301 = scalar_select %p300, %s24, 1
        %s302 = smul.addr %s301, 32
        %s303 = smul.addr %s302, 8
        %s304 = scalar_lea.vmem %s0, %s303
        %306 = vst [vmem:[#allocation2] sm:$0xf] 0
        %307 = vst [vmem:[#allocation2 + $0x4] sm:$0xf] 0
        %308 = vst [vmem:[#allocation2 + $0x8] sm:$0x1] 0
        %309 = vst [vmem:[#allocation2 + $0xc] sm:$0xf] 0
        %310 = vst [vmem:[#allocation2 + $0x10] sm:$0xf] 0
        %311 = vst [vmem:[#allocation2 + $0x14] sm:$0x1] 0
        %312 = vst [vmem:[#allocation2 + $0x18] sm:$0xf] 0
        %313 = vst [vmem:[#allocation2 + $0x1c] sm:$0xf] 0
        %314 = vst [vmem:[#allocation2 + $0x20] sm:$0x1] 0
        %315 = vst [vmem:[#allocation2 + $0x24] sm:$0xf] 0
        %316 = vst [vmem:[#allocation2 + $0x28] sm:$0xf] 0
        %317 = vst [vmem:[#allocation2 + $0x2c] sm:$0x1] 0
        %318 = vst [vmem:[#allocation2 + $0x30] sm:$0xf] 0
        %319 = vst [vmem:[#allocation2 + $0x34] sm:$0xf] 0
        %320 = vst [vmem:[#allocation2 + $0x38] sm:$0x1] 0
        %321 = vst [vmem:[#allocation2 + $0x3c] sm:$0xf] 0
        %322 = vst [vmem:[#allocation2 + $0x40] sm:$0xf] 0
        %323 = vst [vmem:[#allocation2 + $0x44] sm:$0x1] 0
        %324 = vst [vmem:[#allocation2 + $0x48] sm:$0xf] 0
        %325 = vst [vmem:[#allocation2 + $0x4c] sm:$0xf] 0
        %326 = vst [vmem:[#allocation2 + $0x50] sm:$0x1] 0
        %327 = vst [vmem:[#allocation2 + $0x54] sm:$0xf] 0
        %328 = vst [vmem:[#allocation2 + $0x58] sm:$0xf] 0
        %329 = vst [vmem:[#allocation2 + $0x5c] sm:$0x1] 0
        %330 = vst [vmem:[#allocation2 + $0x60] sm:$0xf] 0
        %331 = vst [vmem:[#allocation2 + $0x64] sm:$0xf] 0
        %332 = vst [vmem:[#allocation2 + $0x68] sm:$0x1] 0
        %333 = vst [vmem:[#allocation2 + $0x6c] sm:$0xf] 0
        %334 = vst [vmem:[#allocation2 + $0x70] sm:$0xf] 0
        %335 = vst [vmem:[#allocation2 + $0x74] sm:$0x1] 0
        %336 = vst [vmem:[#allocation2 + $0x78] sm:$0xf] 0
        %337 = vst [vmem:[#allocation2 + $0x7c] sm:$0xf] 0
        %338 = vst [vmem:[#allocation2 + $0x80] sm:$0x1] 0
        %339 = vst [vmem:[#allocation2 + $0x84] sm:$0xf] 0
        %340 = vst [vmem:[#allocation2 + $0x88] sm:$0xf] 0
        %341 = vst [vmem:[#allocation2 + $0x8c] sm:$0x1] 0
        %342 = vst [vmem:[#allocation2 + $0x90] sm:$0xf] 0
        %343 = vst [vmem:[#allocation2 + $0x94] sm:$0xf] 0
        %344 = vst [vmem:[#allocation2 + $0x98] sm:$0x1] 0
        %345 = vst [vmem:[#allocation2 + $0x9c] sm:$0xf] 0
        %346 = vst [vmem:[#allocation2 + $0xa0] sm:$0xf] 0
        %347 = vst [vmem:[#allocation2 + $0xa4] sm:$0x1] 0
        %348 = vst [vmem:[#allocation2 + $0xa8] sm:$0xf] 0
        %349 = vst [vmem:[#allocation2 + $0xac] sm:$0xf] 0
        %350 = vst [vmem:[#allocation2 + $0xb0] sm:$0x1] 0
        %351 = vst [vmem:[#allocation2 + $0xb4] sm:$0xf] 0
        %352 = vst [vmem:[#allocation2 + $0xb8] sm:$0xf] 0
        %353 = vst [vmem:[#allocation2 + $0xbc] sm:$0x1] 0
        %354 = vst [vmem:[#allocation2 + $0xc0] sm:$0xf] 0
        %355 = vst [vmem:[#allocation2 + $0xc4] sm:$0xf] 0
        %356 = vst [vmem:[#allocation2 + $0xc8] sm:$0x1] 0
        %357 = vst [vmem:[#allocation2 + $0xcc] sm:$0xf] 0
        %358 = vst [vmem:[#allocation2 + $0xd0] sm:$0xf] 0
        %359 = vst [vmem:[#allocation2 + $0xd4] sm:$0x1] 0
        %v360 = vld [vmem:[%s304] sm:$0xff]
        %v361 = vld [vmem:[%s304 + $0x8] sm:$0xff]
        %v362 = vld [vmem:[%s304 + $0x10] sm:$0xff]
        %v363 = vld [vmem:[%s304 + $0x18] sm:$0xff]
        %v364 = vld [vmem:[%s304 + $0x20] sm:$0xff]
        %v365 = vld [vmem:[%s304 + $0x28] sm:$0xff]
        %v366 = vld [vmem:[%s304 + $0x30] sm:$0xff]
        %v367 = vld [vmem:[%s304 + $0x38] sm:$0xff]
        %v368 = vld [vmem:[%s304 + $0x40] sm:$0xff]
        %v369 = vld [vmem:[%s304 + $0x48] sm:$0xff]
        %v370 = vld [vmem:[%s304 + $0x50] sm:$0xff]
        %v371 = vld [vmem:[%s304 + $0x58] sm:$0xff]
        %v372 = vld [vmem:[%s304 + $0x60] sm:$0xff]
        %v373 = vld [vmem:[%s304 + $0x68] sm:$0xff]
        %v374 = vld [vmem:[%s304 + $0x70] sm:$0xff]
        %v375 = vld [vmem:[%s304 + $0x78] sm:$0xff]
        %v376 = vld [vmem:[%s304 + $0x80] sm:$0xff]
        %v377 = vld [vmem:[%s304 + $0x88] sm:$0xff]
        %v378 = vld [vmem:[%s304 + $0x90] sm:$0xff]
        %v379 = vld [vmem:[%s304 + $0x98] sm:$0xff]
        %v380 = vld [vmem:[%s304 + $0xa0] sm:$0xff]
        %v381 = vld [vmem:[%s304 + $0xa8] sm:$0xff]
        %v382 = vld [vmem:[%s304 + $0xb0] sm:$0xff]
        %v383 = vld [vmem:[%s304 + $0xb8] sm:$0xff]
        %v384 = vld [vmem:[%s304 + $0xc0] sm:$0xff]
        %v385 = vld [vmem:[%s304 + $0xc8] sm:$0xff]
        %v386 = vld [vmem:[%s304 + $0xd0] sm:$0xff]
        %v387 = vld [vmem:[%s304 + $0xd8] sm:$0xff]
        %v388 = vld [vmem:[%s304 + $0xe0] sm:$0xff]
        %v389 = vld [vmem:[%s304 + $0xe8] sm:$0xff]
        %v390 = vld [vmem:[%s304 + $0xf0] sm:$0xff]
        %v391 = vld [vmem:[%s304 + $0xf8] sm:$0xff]
        %v392 = vpack.c.bf16 %v361, %v360
        %v393 = vpack.c.bf16 %v363, %v362
        %v394 = vpack.c.bf16 %v365, %v364
        %v395 = vpack.c.bf16 %v367, %v366
        %v396 = vpack.c.bf16 %v369, %v368
        %v397 = vpack.c.bf16 %v371, %v370
        %v398 = vpack.c.bf16 %v373, %v372
        %v399 = vpack.c.bf16 %v375, %v374
        %v400 = vpack.c.bf16 %v377, %v376
        %v401 = vpack.c.bf16 %v379, %v378
        %v402 = vpack.c.bf16 %v381, %v380
        %v403 = vpack.c.bf16 %v383, %v382
        %v404 = vpack.c.bf16 %v385, %v384
        %v405 = vpack.c.bf16 %v387, %v386
        %v406 = vpack.c.bf16 %v389, %v388
        %v407 = vpack.c.bf16 %v391, %v390
        %v424 = vunpack.c.l.b16 %v392
        %v425 = vunpack.c.h.b16 %v392
        %v426 = vunpack.c.l.b16 %v393
        %v427 = vunpack.c.h.b16 %v393
        %v428 = vunpack.c.l.b16 %v394
        %v429 = vunpack.c.h.b16 %v394
        %v430 = vunpack.c.l.b16 %v395
        %v431 = vunpack.c.h.b16 %v395
        %v432 = vunpack.c.l.b16 %v396
        %v433 = vunpack.c.h.b16 %v396
        %v434 = vunpack.c.l.b16 %v397
        %v435 = vunpack.c.h.b16 %v397
        %v436 = vunpack.c.l.b16 %v398
        %v437 = vunpack.c.h.b16 %v398
        %v438 = vunpack.c.l.b16 %v399
        %v439 = vunpack.c.h.b16 %v399
        %v440 = vunpack.c.l.b16 %v400
        %v441 = vunpack.c.h.b16 %v400
        %v442 = vunpack.c.l.b16 %v401
        %v443 = vunpack.c.h.b16 %v401
        %v444 = vunpack.c.l.b16 %v402
        %v445 = vunpack.c.h.b16 %v402
        %v446 = vunpack.c.l.b16 %v403
        %v447 = vunpack.c.h.b16 %v403
        %v448 = vunpack.c.l.b16 %v404
        %v449 = vunpack.c.h.b16 %v404
        %v450 = vunpack.c.l.b16 %v405
        %v451 = vunpack.c.h.b16 %v405
        %v452 = vunpack.c.l.b16 %v406
        %v453 = vunpack.c.h.b16 %v406
        %v454 = vunpack.c.l.b16 %v407
        %v455 = vunpack.c.h.b16 %v407
        %v456 = vpack.c.b16 %v424, %v424
        %v457 = vpack.c.b16 %v425, %v425
        %v458 = vpack.c.b16 %v426, %v426
        %v459 = vpack.c.b16 %v427, %v427
        %v460 = vpack.c.b16 %v428, %v428
        %v461 = vpack.c.b16 %v429, %v429
        %v462 = vpack.c.b16 %v430, %v430
        %v463 = vpack.c.b16 %v431, %v431
        %v464 = vpack.c.b16 %v432, %v432
        %v465 = vpack.c.b16 %v433, %v433
        %v466 = vpack.c.b16 %v434, %v434
        %v467 = vpack.c.b16 %v435, %v435
        %v468 = vpack.c.b16 %v436, %v436
        %v469 = vpack.c.b16 %v437, %v437
        %v470 = vpack.c.b16 %v438, %v438
        %v471 = vpack.c.b16 %v439, %v439
        %v472 = vpack.c.b16 %v440, %v440
        %v473 = vpack.c.b16 %v441, %v441
        %v474 = vpack.c.b16 %v442, %v442
        %v475 = vpack.c.b16 %v443, %v443
        %v476 = vpack.c.b16 %v444, %v444
        %v477 = vpack.c.b16 %v445, %v445
        %v478 = vpack.c.b16 %v446, %v446
        %v479 = vpack.c.b16 %v447, %v447
        %v480 = vpack.c.b16 %v448, %v448
        %v481 = vpack.c.b16 %v449, %v449
        %v482 = vpack.c.b16 %v450, %v450
        %v483 = vpack.c.b16 %v451, %v451
        %v484 = vpack.c.b16 %v452, %v452
        %v485 = vpack.c.b16 %v453, %v453
        %v486 = vpack.c.b16 %v454, %v454
        %v487 = vpack.c.b16 %v455, %v455
        %vm488 = vsmask.f32 256
        %vm489 = vsmask.f32 4368
        %vm490 = vmor %vm488, %vm489
        %v492 = vshrl.u32 %v456, 16
        %v494 = vrot.slane %v492, 7
        %v495 = vshll.u32 %v456, 16
        %v497 = vor.u32 %v494, %v495
        %v498 = vrot.slane %v494, 4
        %v500 = vshrl.u32 %v457, 16
        %v502 = vrot.slane %v500, 7
        %v503 = vshll.u32 %v457, 16
        %v505 = vor.u32 %v502, %v503
        %v506 = vsel %vm490, %v498, %v505
        %v507 = vrot.slane %v502, 4
        %v509 = vshrl.u32 %v458, 16
        %v511 = vrot.slane %v509, 7
        %v512 = vshll.u32 %v458, 16
        %v514 = vor.u32 %v511, %v512
        %v515 = vrot.slane %v511, 4
        %v517 = vshrl.u32 %v459, 16
        %v519 = vrot.slane %v517, 7
        %v520 = vshll.u32 %v459, 16
        %v522 = vor.u32 %v519, %v520
        %v523 = vsel %vm490, %v515, %v522
        %v524 = vrot.slane %v519, 4
        %v526 = vshrl.u32 %v460, 16
        %v528 = vrot.slane %v526, 7
        %v529 = vshll.u32 %v460, 16
        %v531 = vor.u32 %v528, %v529
        %v532 = vrot.slane %v528, 4
        %v534 = vshrl.u32 %v461, 16
        %v536 = vrot.slane %v534, 7
        %v537 = vshll.u32 %v461, 16
        %v539 = vor.u32 %v536, %v537
        %v540 = vsel %vm490, %v532, %v539
        %v541 = vrot.slane %v536, 4
        %v543 = vshrl.u32 %v462, 16
        %v545 = vrot.slane %v543, 7
        %v546 = vshll.u32 %v462, 16
        %v548 = vor.u32 %v545, %v546
        %v549 = vrot.slane %v545, 4
        %v551 = vshrl.u32 %v463, 16
        %v553 = vrot.slane %v551, 7
        %v554 = vshll.u32 %v463, 16
        %v556 = vor.u32 %v553, %v554
        %v557 = vsel %vm490, %v549, %v556
        %v558 = vrot.slane %v553, 4
        %v560 = vshrl.u32 %v464, 16
        %v562 = vrot.slane %v560, 7
        %v563 = vshll.u32 %v464, 16
        %v565 = vor.u32 %v562, %v563
        %v566 = vrot.slane %v562, 4
        %v568 = vshrl.u32 %v465, 16
        %v570 = vrot.slane %v568, 7
        %v571 = vshll.u32 %v465, 16
        %v573 = vor.u32 %v570, %v571
        %v574 = vsel %vm490, %v566, %v573
        %v575 = vrot.slane %v570, 4
        %v577 = vshrl.u32 %v466, 16
        %v579 = vrot.slane %v577, 7
        %v580 = vshll.u32 %v466, 16
        %v582 = vor.u32 %v579, %v580
        %v583 = vrot.slane %v579, 4
        %v585 = vshrl.u32 %v467, 16
        %v587 = vrot.slane %v585, 7
        %v588 = vshll.u32 %v467, 16
        %v590 = vor.u32 %v587, %v588
        %v591 = vsel %vm490, %v583, %v590
        %v592 = vrot.slane %v587, 4
        %v594 = vshrl.u32 %v468, 16
        %v596 = vrot.slane %v594, 7
        %v597 = vshll.u32 %v468, 16
        %v599 = vor.u32 %v596, %v597
        %v600 = vrot.slane %v596, 4
        %v602 = vshrl.u32 %v469, 16
        %v604 = vrot.slane %v602, 7
        %v605 = vshll.u32 %v469, 16
        %v607 = vor.u32 %v604, %v605
        %v608 = vsel %vm490, %v600, %v607
        %v609 = vrot.slane %v604, 4
        %v611 = vshrl.u32 %v470, 16
        %v613 = vrot.slane %v611, 7
        %v614 = vshll.u32 %v470, 16
        %v616 = vor.u32 %v613, %v614
        %v617 = vrot.slane %v613, 4
        %v619 = vshrl.u32 %v471, 16
        %v621 = vrot.slane %v619, 7
        %v622 = vshll.u32 %v471, 16
        %v624 = vor.u32 %v621, %v622
        %v625 = vsel %vm490, %v617, %v624
        %v626 = vrot.slane %v621, 4
        %v628 = vshrl.u32 %v472, 16
        %v630 = vrot.slane %v628, 7
        %v631 = vshll.u32 %v472, 16
        %v633 = vor.u32 %v630, %v631
        %v634 = vrot.slane %v630, 4
        %v636 = vshrl.u32 %v473, 16
        %v638 = vrot.slane %v636, 7
        %v639 = vshll.u32 %v473, 16
        %v641 = vor.u32 %v638, %v639
        %v642 = vsel %vm490, %v634, %v641
        %v643 = vrot.slane %v638, 4
        %v645 = vshrl.u32 %v474, 16
        %v647 = vrot.slane %v645, 7
        %v648 = vshll.u32 %v474, 16
        %v650 = vor.u32 %v647, %v648
        %v651 = vrot.slane %v647, 4
        %v653 = vshrl.u32 %v475, 16
        %v655 = vrot.slane %v653, 7
        %v656 = vshll.u32 %v475, 16
        %v658 = vor.u32 %v655, %v656
        %v659 = vsel %vm490, %v651, %v658
        %v660 = vrot.slane %v655, 4
        %v662 = vshrl.u32 %v476, 16
        %v664 = vrot.slane %v662, 7
        %v665 = vshll.u32 %v476, 16
        %v667 = vor.u32 %v664, %v665
        %v668 = vrot.slane %v664, 4
        %v670 = vshrl.u32 %v477, 16
        %v672 = vrot.slane %v670, 7
        %v673 = vshll.u32 %v477, 16
        %v675 = vor.u32 %v672, %v673
        %v676 = vsel %vm490, %v668, %v675
        %v677 = vrot.slane %v672, 4
        %v679 = vshrl.u32 %v478, 16
        %v681 = vrot.slane %v679, 7
        %v682 = vshll.u32 %v478, 16
        %v684 = vor.u32 %v681, %v682
        %v685 = vrot.slane %v681, 4
        %v687 = vshrl.u32 %v479, 16
        %v689 = vrot.slane %v687, 7
        %v690 = vshll.u32 %v479, 16
        %v692 = vor.u32 %v689, %v690
        %v693 = vsel %vm490, %v685, %v692
        %v694 = vrot.slane %v689, 4
        %v696 = vshrl.u32 %v480, 16
        %v698 = vrot.slane %v696, 7
        %v699 = vshll.u32 %v480, 16
        %v701 = vor.u32 %v698, %v699
        %v702 = vrot.slane %v698, 4
        %v704 = vshrl.u32 %v481, 16
        %v706 = vrot.slane %v704, 7
        %v707 = vshll.u32 %v481, 16
        %v709 = vor.u32 %v706, %v707
        %v710 = vsel %vm490, %v702, %v709
        %v711 = vrot.slane %v706, 4
        %v713 = vshrl.u32 %v482, 16
        %v715 = vrot.slane %v713, 7
        %v716 = vshll.u32 %v482, 16
        %v718 = vor.u32 %v715, %v716
        %v719 = vrot.slane %v715, 4
        %v721 = vshrl.u32 %v483, 16
        %v723 = vrot.slane %v721, 7
        %v724 = vshll.u32 %v483, 16
        %v726 = vor.u32 %v723, %v724
        %v727 = vsel %vm490, %v719, %v726
        %v728 = vrot.slane %v723, 4
        %v730 = vshrl.u32 %v484, 16
        %v732 = vrot.slane %v730, 7
        %v733 = vshll.u32 %v484, 16
        %v735 = vor.u32 %v732, %v733
        %v736 = vrot.slane %v732, 4
        %v738 = vshrl.u32 %v485, 16
        %v740 = vrot.slane %v738, 7
        %v741 = vshll.u32 %v485, 16
        %v743 = vor.u32 %v740, %v741
        %v744 = vsel %vm490, %v736, %v743
        %v745 = vrot.slane %v740, 4
        %v747 = vshrl.u32 %v486, 16
        %v749 = vrot.slane %v747, 7
        %v750 = vshll.u32 %v486, 16
        %v752 = vor.u32 %v749, %v750
        %v753 = vrot.slane %v749, 4
        %v755 = vshrl.u32 %v487, 16
        %v757 = vrot.slane %v755, 7
        %v758 = vshll.u32 %v487, 16
        %v760 = vor.u32 %v757, %v758
        %v761 = vsel %vm490, %v753, %v760
        %v762 = vrot.slane %v757, 4
        %s811 = scalar_lea.vmem [#allocation2], 12
        %vm812 = vcmask 60416
        %vm813 = vsmask.f32 7938
        %vm814 = vmand %vm812, %vm813
        %v815 = vld [vmem:[%s811] sm:$0xf]
        %v816 = vsel %vm814, %v497, %v815
        %817 = vst [vmem:[%s811] sm:$0xf] %v816
        %vm818 = vcmask 60416
        %819 = vst.msk [vmem:[%s811 + $0x4] sm:$0xf] %vm818, %v506
        %vm820 = vcmask 57344
        %vm821 = vmand %vm820, %vm488
        %v822 = vld [vmem:[%s811 + $0x8] sm:$0x1]
        %v823 = vsel %vm821, %v507, %v822
        %824 = vst [vmem:[%s811 + $0x8] sm:$0x1] %v823
        %v825 = vld [vmem:[%s811 + $0xc] sm:$0xf]
        %v826 = vsel %vm814, %v514, %v825
        %827 = vst [vmem:[%s811 + $0xc] sm:$0xf] %v826
        %828 = vst.msk [vmem:[%s811 + $0x10] sm:$0xf] %vm818, %v523
        %v829 = vld [vmem:[%s811 + $0x14] sm:$0x1]
        %v830 = vsel %vm821, %v524, %v829
        %831 = vst [vmem:[%s811 + $0x14] sm:$0x1] %v830
        %v832 = vld [vmem:[%s811 + $0x18] sm:$0xf]
        %v833 = vsel %vm814, %v531, %v832
        %834 = vst [vmem:[%s811 + $0x18] sm:$0xf] %v833
        %835 = vst.msk [vmem:[%s811 + $0x1c] sm:$0xf] %vm818, %v540
        %v836 = vld [vmem:[%s811 + $0x20] sm:$0x1]
        %v837 = vsel %vm821, %v541, %v836
        %838 = vst [vmem:[%s811 + $0x20] sm:$0x1] %v837
        %v839 = vld [vmem:[%s811 + $0x24] sm:$0xf]
        %v840 = vsel %vm814, %v548, %v839
        %841 = vst [vmem:[%s811 + $0x24] sm:$0xf] %v840
        %842 = vst.msk [vmem:[%s811 + $0x28] sm:$0xf] %vm818, %v557
        %v843 = vld [vmem:[%s811 + $0x2c] sm:$0x1]
        %v844 = vsel %vm821, %v558, %v843
        %845 = vst [vmem:[%s811 + $0x2c] sm:$0x1] %v844
        %v846 = vld [vmem:[%s811 + $0x30] sm:$0xf]
        %v847 = vsel %vm814, %v565, %v846
        %848 = vst [vmem:[%s811 + $0x30] sm:$0xf] %v847
        %849 = vst.msk [vmem:[%s811 + $0x34] sm:$0xf] %vm818, %v574
        %v850 = vld [vmem:[%s811 + $0x38] sm:$0x1]
        %v851 = vsel %vm821, %v575, %v850
        %852 = vst [vmem:[%s811 + $0x38] sm:$0x1] %v851
        %v853 = vld [vmem:[%s811 + $0x3c] sm:$0xf]
        %v854 = vsel %vm814, %v582, %v853
        %855 = vst [vmem:[%s811 + $0x3c] sm:$0xf] %v854
        %856 = vst.msk [vmem:[%s811 + $0x40] sm:$0xf] %vm818, %v591
        %v857 = vld [vmem:[%s811 + $0x44] sm:$0x1]
        %v858 = vsel %vm821, %v592, %v857
        %859 = vst [vmem:[%s811 + $0x44] sm:$0x1] %v858
        %v860 = vld [vmem:[%s811 + $0x48] sm:$0xf]
        %v861 = vsel %vm814, %v599, %v860
        %862 = vst [vmem:[%s811 + $0x48] sm:$0xf] %v861
        %863 = vst.msk [vmem:[%s811 + $0x4c] sm:$0xf] %vm818, %v608
        %v864 = vld [vmem:[%s811 + $0x50] sm:$0x1]
        %v865 = vsel %vm821, %v609, %v864
        %866 = vst [vmem:[%s811 + $0x50] sm:$0x1] %v865
        %v867 = vld [vmem:[%s811 + $0x54] sm:$0xf]
        %v868 = vsel %vm814, %v616, %v867
        %869 = vst [vmem:[%s811 + $0x54] sm:$0xf] %v868
        %870 = vst.msk [vmem:[%s811 + $0x58] sm:$0xf] %vm818, %v625
        %v871 = vld [vmem:[%s811 + $0x5c] sm:$0x1]
        %v872 = vsel %vm821, %v626, %v871
        %873 = vst [vmem:[%s811 + $0x5c] sm:$0x1] %v872
        %v874 = vld [vmem:[%s811 + $0x60] sm:$0xf]
        %v875 = vsel %vm814, %v633, %v874
        %876 = vst [vmem:[%s811 + $0x60] sm:$0xf] %v875
        %877 = vst.msk [vmem:[%s811 + $0x64] sm:$0xf] %vm818, %v642
        %v878 = vld [vmem:[%s811 + $0x68] sm:$0x1]
        %v879 = vsel %vm821, %v643, %v878
        %880 = vst [vmem:[%s811 + $0x68] sm:$0x1] %v879
        %v881 = vld [vmem:[%s811 + $0x6c] sm:$0xf]
        %v882 = vsel %vm814, %v650, %v881
        %883 = vst [vmem:[%s811 + $0x6c] sm:$0xf] %v882
        %884 = vst.msk [vmem:[%s811 + $0x70] sm:$0xf] %vm818, %v659
        %v885 = vld [vmem:[%s811 + $0x74] sm:$0x1]
        %v886 = vsel %vm821, %v660, %v885
        %887 = vst [vmem:[%s811 + $0x74] sm:$0x1] %v886
        %v888 = vld [vmem:[%s811 + $0x78] sm:$0xf]
        %v889 = vsel %vm814, %v667, %v888
        %890 = vst [vmem:[%s811 + $0x78] sm:$0xf] %v889
        %891 = vst.msk [vmem:[%s811 + $0x7c] sm:$0xf] %vm818, %v676
        %v892 = vld [vmem:[%s811 + $0x80] sm:$0x1]
        %v893 = vsel %vm821, %v677, %v892
        %894 = vst [vmem:[%s811 + $0x80] sm:$0x1] %v893
        %v895 = vld [vmem:[%s811 + $0x84] sm:$0xf]
        %v896 = vsel %vm814, %v684, %v895
        %897 = vst [vmem:[%s811 + $0x84] sm:$0xf] %v896
        %898 = vst.msk [vmem:[%s811 + $0x88] sm:$0xf] %vm818, %v693
        %v899 = vld [vmem:[%s811 + $0x8c] sm:$0x1]
        %v900 = vsel %vm821, %v694, %v899
        %901 = vst [vmem:[%s811 + $0x8c] sm:$0x1] %v900
        %v902 = vld [vmem:[%s811 + $0x90] sm:$0xf]
        %v903 = vsel %vm814, %v701, %v902
        %904 = vst [vmem:[%s811 + $0x90] sm:$0xf] %v903
        %905 = vst.msk [vmem:[%s811 + $0x94] sm:$0xf] %vm818, %v710
        %v906 = vld [vmem:[%s811 + $0x98] sm:$0x1]
        %v907 = vsel %vm821, %v711, %v906
        %908 = vst [vmem:[%s811 + $0x98] sm:$0x1] %v907
        %v909 = vld [vmem:[%s811 + $0x9c] sm:$0xf]
        %v910 = vsel %vm814, %v718, %v909
        %911 = vst [vmem:[%s811 + $0x9c] sm:$0xf] %v910
        %912 = vst.msk [vmem:[%s811 + $0xa0] sm:$0xf] %vm818, %v727
        %v913 = vld [vmem:[%s811 + $0xa4] sm:$0x1]
        %v914 = vsel %vm821, %v728, %v913
        %915 = vst [vmem:[%s811 + $0xa4] sm:$0x1] %v914
        %v916 = vld [vmem:[%s811 + $0xa8] sm:$0xf]
        %v917 = vsel %vm814, %v735, %v916
        %918 = vst [vmem:[%s811 + $0xa8] sm:$0xf] %v917
        %919 = vst.msk [vmem:[%s811 + $0xac] sm:$0xf] %vm818, %v744
        %v920 = vld [vmem:[%s811 + $0xb0] sm:$0x1]
        %v921 = vsel %vm821, %v745, %v920
        %922 = vst [vmem:[%s811 + $0xb0] sm:$0x1] %v921
        %v923 = vld [vmem:[%s811 + $0xb4] sm:$0xf]
        %v924 = vsel %vm814, %v752, %v923
        %925 = vst [vmem:[%s811 + $0xb4] sm:$0xf] %v924
        %926 = vst.msk [vmem:[%s811 + $0xb8] sm:$0xf] %vm818, %v761
        %v927 = vld [vmem:[%s811 + $0xbc] sm:$0x1]
        %v928 = vsel %vm821, %v762, %v927
        %929 = vst [vmem:[%s811 + $0xbc] sm:$0x1] %v928
        %930 = vst [vmem:[#allocation4] sm:$0xff] 0.0
        %931 = vst [vmem:[#allocation4 + $0x8] sm:$0xff] 0.0
        %932 = vst [vmem:[#allocation4 + $0x10] sm:$0xff] 0.0
        %933 = vst [vmem:[#allocation4 + $0x18] sm:$0xff] 0.0
        %934 = vst [vmem:[#allocation4 + $0x20] sm:$0xff] 0.0
        %935 = vst [vmem:[#allocation4 + $0x28] sm:$0xff] 0.0
        %936 = vst [vmem:[#allocation4 + $0x30] sm:$0xff] 0.0
        %937 = vst [vmem:[#allocation4 + $0x38] sm:$0xff] 0.0
        %938 = vst [vmem:[#allocation4 + $0x40] sm:$0xff] 0.0
        %939 = vst [vmem:[#allocation4 + $0x48] sm:$0xff] 0.0
        %940 = vst [vmem:[#allocation4 + $0x50] sm:$0xff] 0.0
        %941 = vst [vmem:[#allocation4 + $0x58] sm:$0xff] 0.0
        %942 = vst [vmem:[#allocation4 + $0x60] sm:$0xff] 0.0
        %943 = vst [vmem:[#allocation4 + $0x68] sm:$0xff] 0.0
        %944 = vst [vmem:[#allocation4 + $0x70] sm:$0xff] 0.0
        %945 = vst [vmem:[#allocation4 + $0x78] sm:$0xff] 0.0
        %946 = vst [vmem:[#allocation4 + $0x80] sm:$0xff] 0.0
        %947 = vst [vmem:[#allocation4 + $0x88] sm:$0xff] 0.0
        %948 = vst [vmem:[#allocation4 + $0x90] sm:$0xff] 0.0
        %949 = vst [vmem:[#allocation4 + $0x98] sm:$0xff] 0.0
        %950 = vst [vmem:[#allocation4 + $0xa0] sm:$0xff] 0.0
        %951 = vst [vmem:[#allocation4 + $0xa8] sm:$0xff] 0.0
        %952 = vst [vmem:[#allocation4 + $0xb0] sm:$0xff] 0.0
        %953 = vst [vmem:[#allocation4 + $0xb8] sm:$0xff] 0.0
        %954 = vst [vmem:[#allocation4 + $0xc0] sm:$0xff] 0.0
        %955 = vst [vmem:[#allocation4 + $0xc8] sm:$0xff] 0.0
        %956 = vst [vmem:[#allocation4 + $0xd0] sm:$0xff] 0.0
        %957 = vst [vmem:[#allocation4 + $0xd8] sm:$0xff] 0.0
        %958 = vst [vmem:[#allocation4 + $0xe0] sm:$0xff] 0.0
        %959 = vst [vmem:[#allocation4 + $0xe8] sm:$0xff] 0.0
        %960 = vst [vmem:[#allocation4 + $0xf0] sm:$0xff] 0.0
        %961 = vst [vmem:[#allocation4 + $0xf8] sm:$0xff] 0.0
        %v962 = vld [vmem:[#allocation2] sm:$0xf]
        %v963 = vld [vmem:[#allocation2 + $0x4] sm:$0xf]
        %v964 = vld [vmem:[#allocation2 + $0xc] sm:$0xf]
        %v965 = vld [vmem:[#allocation2 + $0x10] sm:$0xf]
        %v966 = vld [vmem:[#allocation2 + $0x18] sm:$0xf]
        %v967 = vld [vmem:[#allocation2 + $0x1c] sm:$0xf]
        %v968 = vld [vmem:[#allocation2 + $0x24] sm:$0xf]
        %v969 = vld [vmem:[#allocation2 + $0x28] sm:$0xf]
        %v970 = vld [vmem:[#allocation2 + $0x30] sm:$0xf]
        %v971 = vld [vmem:[#allocation2 + $0x34] sm:$0xf]
        %v972 = vld [vmem:[#allocation2 + $0x3c] sm:$0xf]
        %v973 = vld [vmem:[#allocation2 + $0x40] sm:$0xf]
        %v974 = vld [vmem:[#allocation2 + $0x48] sm:$0xf]
        %v975 = vld [vmem:[#allocation2 + $0x4c] sm:$0xf]
        %v976 = vld [vmem:[#allocation2 + $0x54] sm:$0xf]
        %v977 = vld [vmem:[#allocation2 + $0x58] sm:$0xf]
        %v978 = vld [vmem:[#allocation2 + $0x60] sm:$0xf]
        %v979 = vld [vmem:[#allocation2 + $0x64] sm:$0xf]
        %v980 = vld [vmem:[#allocation2 + $0x6c] sm:$0xf]
        %v981 = vld [vmem:[#allocation2 + $0x70] sm:$0xf]
        %v982 = vld [vmem:[#allocation2 + $0x78] sm:$0xf]
        %v983 = vld [vmem:[#allocation2 + $0x7c] sm:$0xf]
        %v984 = vld [vmem:[#allocation2 + $0x84] sm:$0xf]
        %v985 = vld [vmem:[#allocation2 + $0x88] sm:$0xf]
        %v986 = vld [vmem:[#allocation2 + $0x90] sm:$0xf]
        %v987 = vld [vmem:[#allocation2 + $0x94] sm:$0xf]
        %v988 = vld [vmem:[#allocation2 + $0x9c] sm:$0xf]
        %v989 = vld [vmem:[#allocation2 + $0xa0] sm:$0xf]
        %v990 = vld [vmem:[#allocation2 + $0xa8] sm:$0xf]
        %v991 = vld [vmem:[#allocation2 + $0xac] sm:$0xf]
        %v992 = vld [vmem:[#allocation2 + $0xb4] sm:$0xf]
        %v993 = vld [vmem:[#allocation2 + $0xb8] sm:$0xf]
        %v994 = vld [vmem:[#allocation2 + $0x8] sm:$0x1]
        %v995 = vld [vmem:[#allocation2 + $0x14] sm:$0x1]
        %v996 = vld [vmem:[#allocation2 + $0x20] sm:$0x1]
        %v997 = vld [vmem:[#allocation2 + $0x2c] sm:$0x1]
        %v998 = vld [vmem:[#allocation2 + $0x38] sm:$0x1]
        %v999 = vld [vmem:[#allocation2 + $0x44] sm:$0x1]
        %v1000 = vld [vmem:[#allocation2 + $0x50] sm:$0x1]
        %v1001 = vld [vmem:[#allocation2 + $0x5c] sm:$0x1]
        %v1002 = vld [vmem:[#allocation2 + $0x68] sm:$0x1]
        %v1003 = vld [vmem:[#allocation2 + $0x74] sm:$0x1]
        %v1004 = vld [vmem:[#allocation2 + $0x80] sm:$0x1]
        %v1005 = vld [vmem:[#allocation2 + $0x8c] sm:$0x1]
        %v1006 = vld [vmem:[#allocation2 + $0x98] sm:$0x1]
        %v1007 = vld [vmem:[#allocation2 + $0xa4] sm:$0x1]
        %v1008 = vld [vmem:[#allocation2 + $0xb0] sm:$0x1]
        %v1009 = vld [vmem:[#allocation2 + $0xbc] sm:$0x1]
        %v1010 = vld [vmem:[#allocation2] sm:$0xe]
        %v1011 = vld [vmem:[#allocation2 + $0xc] sm:$0xe]
        %v1012 = vld [vmem:[#allocation2 + $0x18] sm:$0xe]
        %v1013 = vld [vmem:[#allocation2 + $0x24] sm:$0xe]
        %v1014 = vld [vmem:[#allocation2 + $0x30] sm:$0xe]
        %v1015 = vld [vmem:[#allocation2 + $0x3c] sm:$0xe]
        %v1016 = vld [vmem:[#allocation2 + $0x48] sm:$0xe]
        %v1017 = vld [vmem:[#allocation2 + $0x54] sm:$0xe]
        %v1018 = vld [vmem:[#allocation2 + $0x60] sm:$0xe]
        %v1019 = vld [vmem:[#allocation2 + $0x6c] sm:$0xe]
        %v1020 = vld [vmem:[#allocation2 + $0x78] sm:$0xe]
        %v1021 = vld [vmem:[#allocation2 + $0x84] sm:$0xe]
        %v1022 = vld [vmem:[#allocation2 + $0x90] sm:$0xe]
        %v1023 = vld [vmem:[#allocation2 + $0x9c] sm:$0xe]
        %v1024 = vld [vmem:[#allocation2 + $0xa8] sm:$0xe]
        %v1025 = vld [vmem:[#allocation2 + $0xb4] sm:$0xe]
        %v1058 = vunpack.c.l.b16 %v962
        %v1059 = vunpack.c.l.b16 %v963
        %v1060 = vunpack.c.l.b16 %v964
        %v1061 = vunpack.c.l.b16 %v965
        %v1062 = vunpack.c.l.b16 %v966
        %v1063 = vunpack.c.l.b16 %v967
        %v1064 = vunpack.c.l.b16 %v968
        %v1065 = vunpack.c.l.b16 %v969
        %v1066 = vunpack.c.l.b16 %v970
        %v1067 = vunpack.c.l.b16 %v971
        %v1068 = vunpack.c.l.b16 %v972
        %v1069 = vunpack.c.l.b16 %v973
        %v1070 = vunpack.c.l.b16 %v974
        %v1071 = vunpack.c.l.b16 %v975
        %v1072 = vunpack.c.l.b16 %v976
        %v1073 = vunpack.c.l.b16 %v977
        %v1074 = vunpack.c.l.b16 %v978
        %v1075 = vunpack.c.l.b16 %v979
        %v1076 = vunpack.c.l.b16 %v980
        %v1077 = vunpack.c.l.b16 %v981
        %v1078 = vunpack.c.l.b16 %v982
        %v1079 = vunpack.c.l.b16 %v983
        %v1080 = vunpack.c.l.b16 %v984
        %v1081 = vunpack.c.l.b16 %v985
        %v1082 = vunpack.c.l.b16 %v986
        %v1083 = vunpack.c.l.b16 %v987
        %v1084 = vunpack.c.l.b16 %v988
        %v1085 = vunpack.c.l.b16 %v989
        %v1086 = vunpack.c.l.b16 %v990
        %v1087 = vunpack.c.l.b16 %v991
        %v1088 = vunpack.c.l.b16 %v992
        %v1089 = vunpack.c.l.b16 %v993
        %v1090 = vpack.c.b16 %v1059, %v1058
        %v1091 = vpack.c.b16 %v1061, %v1060
        %v1092 = vpack.c.b16 %v1063, %v1062
        %v1093 = vpack.c.b16 %v1065, %v1064
        %v1094 = vpack.c.b16 %v1067, %v1066
        %v1095 = vpack.c.b16 %v1069, %v1068
        %v1096 = vpack.c.b16 %v1071, %v1070
        %v1097 = vpack.c.b16 %v1073, %v1072
        %v1098 = vpack.c.b16 %v1075, %v1074
        %v1099 = vpack.c.b16 %v1077, %v1076
        %v1100 = vpack.c.b16 %v1079, %v1078
        %v1101 = vpack.c.b16 %v1081, %v1080
        %v1102 = vpack.c.b16 %v1083, %v1082
        %v1103 = vpack.c.b16 %v1085, %v1084
        %v1104 = vpack.c.b16 %v1087, %v1086
        %v1105 = vpack.c.b16 %v1089, %v1088
        %v1138 = vunpack.c.l.b16 %v994
        %v1139 = vunpack.c.l.b16 %v995
        %v1140 = vunpack.c.l.b16 %v996
        %v1141 = vunpack.c.l.b16 %v997
        %v1142 = vunpack.c.l.b16 %v998
        %v1143 = vunpack.c.l.b16 %v999
        %v1144 = vunpack.c.l.b16 %v1000
        %v1145 = vunpack.c.l.b16 %v1001
        %v1146 = vunpack.c.l.b16 %v1002
        %v1147 = vunpack.c.l.b16 %v1003
        %v1148 = vunpack.c.l.b16 %v1004
        %v1149 = vunpack.c.l.b16 %v1005
        %v1150 = vunpack.c.l.b16 %v1006
        %v1151 = vunpack.c.l.b16 %v1007
        %v1152 = vunpack.c.l.b16 %v1008
        %v1153 = vunpack.c.l.b16 %v1009
        %v1154 = vpack.c.b16 %v1138, %v1138
        %v1155 = vpack.c.b16 %v1139, %v1139
        %v1156 = vpack.c.b16 %v1140, %v1140
        %v1157 = vpack.c.b16 %v1141, %v1141
        %v1158 = vpack.c.b16 %v1142, %v1142
        %v1159 = vpack.c.b16 %v1143, %v1143
        %v1160 = vpack.c.b16 %v1144, %v1144
        %v1161 = vpack.c.b16 %v1145, %v1145
        %v1162 = vpack.c.b16 %v1146, %v1146
        %v1163 = vpack.c.b16 %v1147, %v1147
        %v1164 = vpack.c.b16 %v1148, %v1148
        %v1165 = vpack.c.b16 %v1149, %v1149
        %v1166 = vpack.c.b16 %v1150, %v1150
        %v1167 = vpack.c.b16 %v1151, %v1151
        %v1168 = vpack.c.b16 %v1152, %v1152
        %v1169 = vpack.c.b16 %v1153, %v1153
        %vm1170 = vsmask.f32 7424
        %v1172 = vshrl.u32 %v1090, 16
        %v1174 = vshll.u32 %v1090, 16
        %v1176 = vrot.slane %v1174, 1
        %v1177 = vor.u32 %v1172, %v1176
        %v1179 = vshll.u32 %v1154, 16
        %v1181 = vrot.slane %v1179, 1
        %v1182 = vsel %vm1170, %v1177, %v1181
        %v1184 = vshrl.u32 %v1091, 16
        %v1186 = vshll.u32 %v1091, 16
        %v1188 = vrot.slane %v1186, 1
        %v1189 = vor.u32 %v1184, %v1188
        %v1191 = vshll.u32 %v1155, 16
        %v1193 = vrot.slane %v1191, 1
        %v1194 = vsel %vm1170, %v1189, %v1193
        %v1196 = vshrl.u32 %v1092, 16
        %v1198 = vshll.u32 %v1092, 16
        %v1200 = vrot.slane %v1198, 1
        %v1201 = vor.u32 %v1196, %v1200
        %v1203 = vshll.u32 %v1156, 16
        %v1205 = vrot.slane %v1203, 1
        %v1206 = vsel %vm1170, %v1201, %v1205
        %v1208 = vshrl.u32 %v1093, 16
        %v1210 = vshll.u32 %v1093, 16
        %v1212 = vrot.slane %v1210, 1
        %v1213 = vor.u32 %v1208, %v1212
        %v1215 = vshll.u32 %v1157, 16
        %v1217 = vrot.slane %v1215, 1
        %v1218 = vsel %vm1170, %v1213, %v1217
        %v1220 = vshrl.u32 %v1094, 16
        %v1222 = vshll.u32 %v1094, 16
        %v1224 = vrot.slane %v1222, 1
        %v1225 = vor.u32 %v1220, %v1224
        %v1227 = vshll.u32 %v1158, 16
        %v1229 = vrot.slane %v1227, 1
        %v1230 = vsel %vm1170, %v1225, %v1229
        %v1232 = vshrl.u32 %v1095, 16
        %v1234 = vshll.u32 %v1095, 16
        %v1236 = vrot.slane %v1234, 1
        %v1237 = vor.u32 %v1232, %v1236
        %v1239 = vshll.u32 %v1159, 16
        %v1241 = vrot.slane %v1239, 1
        %v1242 = vsel %vm1170, %v1237, %v1241
        %v1244 = vshrl.u32 %v1096, 16
        %v1246 = vshll.u32 %v1096, 16
        %v1248 = vrot.slane %v1246, 1
        %v1249 = vor.u32 %v1244, %v1248
        %v1251 = vshll.u32 %v1160, 16
        %v1253 = vrot.slane %v1251, 1
        %v1254 = vsel %vm1170, %v1249, %v1253
        %v1256 = vshrl.u32 %v1097, 16
        %v1258 = vshll.u32 %v1097, 16
        %v1260 = vrot.slane %v1258, 1
        %v1261 = vor.u32 %v1256, %v1260
        %v1263 = vshll.u32 %v1161, 16
        %v1265 = vrot.slane %v1263, 1
        %v1266 = vsel %vm1170, %v1261, %v1265
        %v1268 = vshrl.u32 %v1098, 16
        %v1270 = vshll.u32 %v1098, 16
        %v1272 = vrot.slane %v1270, 1
        %v1273 = vor.u32 %v1268, %v1272
        %v1275 = vshll.u32 %v1162, 16
        %v1277 = vrot.slane %v1275, 1
        %v1278 = vsel %vm1170, %v1273, %v1277
        %v1280 = vshrl.u32 %v1099, 16
        %v1282 = vshll.u32 %v1099, 16
        %v1284 = vrot.slane %v1282, 1
        %v1285 = vor.u32 %v1280, %v1284
        %v1287 = vshll.u32 %v1163, 16
        %v1289 = vrot.slane %v1287, 1
        %v1290 = vsel %vm1170, %v1285, %v1289
        %v1292 = vshrl.u32 %v1100, 16
        %v1294 = vshll.u32 %v1100, 16
        %v1296 = vrot.slane %v1294, 1
        %v1297 = vor.u32 %v1292, %v1296
        %v1299 = vshll.u32 %v1164, 16
        %v1301 = vrot.slane %v1299, 1
        %v1302 = vsel %vm1170, %v1297, %v1301
        %v1304 = vshrl.u32 %v1101, 16
        %v1306 = vshll.u32 %v1101, 16
        %v1308 = vrot.slane %v1306, 1
        %v1309 = vor.u32 %v1304, %v1308
        %v1311 = vshll.u32 %v1165, 16
        %v1313 = vrot.slane %v1311, 1
        %v1314 = vsel %vm1170, %v1309, %v1313
        %v1316 = vshrl.u32 %v1102, 16
        %v1318 = vshll.u32 %v1102, 16
        %v1320 = vrot.slane %v1318, 1
        %v1321 = vor.u32 %v1316, %v1320
        %v1323 = vshll.u32 %v1166, 16
        %v1325 = vrot.slane %v1323, 1
        %v1326 = vsel %vm1170, %v1321, %v1325
        %v1328 = vshrl.u32 %v1103, 16
        %v1330 = vshll.u32 %v1103, 16
        %v1332 = vrot.slane %v1330, 1
        %v1333 = vor.u32 %v1328, %v1332
        %v1335 = vshll.u32 %v1167, 16
        %v1337 = vrot.slane %v1335, 1
        %v1338 = vsel %vm1170, %v1333, %v1337
        %v1340 = vshrl.u32 %v1104, 16
        %v1342 = vshll.u32 %v1104, 16
        %v1344 = vrot.slane %v1342, 1
        %v1345 = vor.u32 %v1340, %v1344
        %v1347 = vshll.u32 %v1168, 16
        %v1349 = vrot.slane %v1347, 1
        %v1350 = vsel %vm1170, %v1345, %v1349
        %v1352 = vshrl.u32 %v1105, 16
        %v1354 = vshll.u32 %v1105, 16
        %v1356 = vrot.slane %v1354, 1
        %v1357 = vor.u32 %v1352, %v1356
        %v1359 = vshll.u32 %v1169, 16
        %v1361 = vrot.slane %v1359, 1
        %v1362 = vsel %vm1170, %v1357, %v1361
        %v1395 = vunpack.c.l.b16 %v1010
        %v1396 = vunpack.c.l.b16 %v1011
        %v1397 = vunpack.c.l.b16 %v1012
        %v1398 = vunpack.c.l.b16 %v1013
        %v1399 = vunpack.c.l.b16 %v1014
        %v1400 = vunpack.c.l.b16 %v1015
        %v1401 = vunpack.c.l.b16 %v1016
        %v1402 = vunpack.c.l.b16 %v1017
        %v1403 = vunpack.c.l.b16 %v1018
        %v1404 = vunpack.c.l.b16 %v1019
        %v1405 = vunpack.c.l.b16 %v1020
        %v1406 = vunpack.c.l.b16 %v1021
        %v1407 = vunpack.c.l.b16 %v1022
        %v1408 = vunpack.c.l.b16 %v1023
        %v1409 = vunpack.c.l.b16 %v1024
        %v1410 = vunpack.c.l.b16 %v1025
        %v1411 = vpack.c.b16 %v1059, %v1395
        %v1412 = vpack.c.b16 %v1061, %v1396
        %v1413 = vpack.c.b16 %v1063, %v1397
        %v1414 = vpack.c.b16 %v1065, %v1398
        %v1415 = vpack.c.b16 %v1067, %v1399
        %v1416 = vpack.c.b16 %v1069, %v1400
        %v1417 = vpack.c.b16 %v1071, %v1401
        %v1418 = vpack.c.b16 %v1073, %v1402
        %v1419 = vpack.c.b16 %v1075, %v1403
        %v1420 = vpack.c.b16 %v1077, %v1404
        %v1421 = vpack.c.b16 %v1079, %v1405
        %v1422 = vpack.c.b16 %v1081, %v1406
        %v1423 = vpack.c.b16 %v1083, %v1407
        %v1424 = vpack.c.b16 %v1085, %v1408
        %v1425 = vpack.c.b16 %v1087, %v1409
        %v1426 = vpack.c.b16 %v1089, %v1410
        %vm1427 = vcmask 1046528
        %v1428 = vrot.slane %v1411, 1
        %v1429 = vrot.slane %v1154, 1
        %v1430 = vsel %vm1427, %v1428, %v1429
        %v1431 = vrot.slane %v1412, 1
        %v1432 = vrot.slane %v1155, 1
        %v1433 = vsel %vm1427, %v1431, %v1432
        %v1434 = vrot.slane %v1413, 1
        %v1435 = vrot.slane %v1156, 1
        %v1436 = vsel %vm1427, %v1434, %v1435
        %v1437 = vrot.slane %v1414, 1
        %v1438 = vrot.slane %v1157, 1
        %v1439 = vsel %vm1427, %v1437, %v1438
        %v1440 = vrot.slane %v1415, 1
        %v1441 = vrot.slane %v1158, 1
        %v1442 = vsel %vm1427, %v1440, %v1441
        %v1443 = vrot.slane %v1416, 1
        %v1444 = vrot.slane %v1159, 1
        %v1445 = vsel %vm1427, %v1443, %v1444
        %v1446 = vrot.slane %v1417, 1
        %v1447 = vrot.slane %v1160, 1
        %v1448 = vsel %vm1427, %v1446, %v1447
        %v1449 = vrot.slane %v1418, 1
        %v1450 = vrot.slane %v1161, 1
        %v1451 = vsel %vm1427, %v1449, %v1450
        %v1452 = vrot.slane %v1419, 1
        %v1453 = vrot.slane %v1162, 1
        %v1454 = vsel %vm1427, %v1452, %v1453
        %v1455 = vrot.slane %v1420, 1
        %v1456 = vrot.slane %v1163, 1
        %v1457 = vsel %vm1427, %v1455, %v1456
        %v1458 = vrot.slane %v1421, 1
        %v1459 = vrot.slane %v1164, 1
        %v1460 = vsel %vm1427, %v1458, %v1459
        %v1461 = vrot.slane %v1422, 1
        %v1462 = vrot.slane %v1165, 1
        %v1463 = vsel %vm1427, %v1461, %v1462
        %v1464 = vrot.slane %v1423, 1
        %v1465 = vrot.slane %v1166, 1
        %v1466 = vsel %vm1427, %v1464, %v1465
        %v1467 = vrot.slane %v1424, 1
        %v1468 = vrot.slane %v1167, 1
        %v1469 = vsel %vm1427, %v1467, %v1468
        %v1470 = vrot.slane %v1425, 1
        %v1471 = vrot.slane %v1168, 1
        %v1472 = vsel %vm1427, %v1470, %v1471
        %v1473 = vrot.slane %v1426, 1
        %v1474 = vrot.slane %v1169, 1
        %v1475 = vsel %vm1427, %v1473, %v1474
        %v1492 = vld [vmem:[#allocation4] sm:$0xff]
        %v1493 = vld [vmem:[#allocation4 + $0x8] sm:$0xff]
        %v1494 = vld [vmem:[#allocation4 + $0x10] sm:$0xff]
        %v1495 = vld [vmem:[#allocation4 + $0x18] sm:$0xff]
        %v1496 = vld [vmem:[#allocation4 + $0x20] sm:$0xff]
        %v1497 = vld [vmem:[#allocation4 + $0x28] sm:$0xff]
        %v1498 = vld [vmem:[#allocation4 + $0x30] sm:$0xff]
        %v1499 = vld [vmem:[#allocation4 + $0x38] sm:$0xff]
        %v1500 = vld [vmem:[#allocation4 + $0x40] sm:$0xff]
        %v1501 = vld [vmem:[#allocation4 + $0x48] sm:$0xff]
        %v1502 = vld [vmem:[#allocation4 + $0x50] sm:$0xff]
        %v1503 = vld [vmem:[#allocation4 + $0x58] sm:$0xff]
        %v1504 = vld [vmem:[#allocation4 + $0x60] sm:$0xff]
        %v1505 = vld [vmem:[#allocation4 + $0x68] sm:$0xff]
        %v1506 = vld [vmem:[#allocation4 + $0x70] sm:$0xff]
        %v1507 = vld [vmem:[#allocation4 + $0x78] sm:$0xff]
        %v1508 = vld [vmem:[#allocation4 + $0x80] sm:$0xff]
        %v1509 = vld [vmem:[#allocation4 + $0x88] sm:$0xff]
        %v1510 = vld [vmem:[#allocation4 + $0x90] sm:$0xff]
        %v1511 = vld [vmem:[#allocation4 + $0x98] sm:$0xff]
        %v1512 = vld [vmem:[#allocation4 + $0xa0] sm:$0xff]
        %v1513 = vld [vmem:[#allocation4 + $0xa8] sm:$0xff]
        %v1514 = vld [vmem:[#allocation4 + $0xb0] sm:$0xff]
        %v1515 = vld [vmem:[#allocation4 + $0xb8] sm:$0xff]
        %v1516 = vld [vmem:[#allocation4 + $0xc0] sm:$0xff]
        %v1517 = vld [vmem:[#allocation4 + $0xc8] sm:$0xff]
        %v1518 = vld [vmem:[#allocation4 + $0xd0] sm:$0xff]
        %v1519 = vld [vmem:[#allocation4 + $0xd8] sm:$0xff]
        %v1520 = vld [vmem:[#allocation4 + $0xe0] sm:$0xff]
        %v1521 = vld [vmem:[#allocation4 + $0xe8] sm:$0xff]
        %v1522 = vld [vmem:[#allocation4 + $0xf0] sm:$0xff]
        %v1523 = vld [vmem:[#allocation4 + $0xf8] sm:$0xff]
        %v1524 = vld [vmem:[%s1] sm:$0xf]
        %v1525 = vld [vmem:[%s1 + $0x4] sm:$0xf]
        %v1526 = vld [vmem:[%s1 + $0x8] sm:$0xf]
        %v1527 = vld [vmem:[%s1 + $0xc] sm:$0xf]
        %v1528 = vld [vmem:[%s1 + $0x10] sm:$0xf]
        %v1529 = vld [vmem:[%s1 + $0x14] sm:$0xf]
        %v1530 = vld [vmem:[%s1 + $0x18] sm:$0xf]
        %v1531 = vld [vmem:[%s1 + $0x1c] sm:$0xf]
        %v1532 = vld [vmem:[%s1 + $0x20] sm:$0xf]
        %v1533 = vld [vmem:[%s1 + $0x24] sm:$0xf]
        %v1534 = vld [vmem:[%s1 + $0x28] sm:$0xf]
        %v1535 = vld [vmem:[%s1 + $0x2c] sm:$0xf]
        %v1536 = vld [vmem:[%s1 + $0x30] sm:$0xf]
        %v1537 = vld [vmem:[%s1 + $0x34] sm:$0xf]
        %v1538 = vld [vmem:[%s1 + $0x38] sm:$0xf]
        %v1539 = vld [vmem:[%s1 + $0x3c] sm:$0xf]
        %v1540 = vld [vmem:[%s1 + $0x40] sm:$0xf]
        %v1541 = vld [vmem:[%s1 + $0x44] sm:$0xf]
        %v1542 = vld [vmem:[%s1 + $0x48] sm:$0xf]
        %v1543 = vld [vmem:[%s1 + $0x4c] sm:$0xf]
        %v1544 = vld [vmem:[%s1 + $0x50] sm:$0xf]
        %v1545 = vld [vmem:[%s1 + $0x54] sm:$0xf]
        %v1546 = vld [vmem:[%s1 + $0x58] sm:$0xf]
        %v1547 = vld [vmem:[%s1 + $0x5c] sm:$0xf]
        %v1548 = vld [vmem:[%s1 + $0x60] sm:$0xf]
        %v1549 = vld [vmem:[%s1 + $0x64] sm:$0xf]
        %v1550 = vld [vmem:[%s1 + $0x68] sm:$0xf]
        %v1551 = vld [vmem:[%s1 + $0x6c] sm:$0xf]
        %v1552 = vld [vmem:[%s1 + $0x70] sm:$0xf]
        %v1553 = vld [vmem:[%s1 + $0x74] sm:$0xf]
        %v1554 = vld [vmem:[%s1 + $0x78] sm:$0xf]
        %v1555 = vld [vmem:[%s1 + $0x7c] sm:$0xf]
        %v1556 = vld [vmem:[%s1 + $0x80] sm:$0xf]
        %v1557 = vld [vmem:[%s1 + $0x84] sm:$0xf]
        %v1558 = vld [vmem:[%s1 + $0x88] sm:$0xf]
        %v1559 = vld [vmem:[%s1 + $0x8c] sm:$0xf]
        %v1560 = vld [vmem:[%s1 + $0x90] sm:$0xf]
        %v1561 = vld [vmem:[%s1 + $0x94] sm:$0xf]
        %v1562 = vld [vmem:[%s1 + $0x98] sm:$0xf]
        %v1563 = vld [vmem:[%s1 + $0x9c] sm:$0xf]
        %v1564 = vld [vmem:[%s1 + $0xa0] sm:$0xf]
        %v1565 = vld [vmem:[%s1 + $0xa4] sm:$0xf]
        %v1566 = vld [vmem:[%s1 + $0xa8] sm:$0xf]
        %v1567 = vld [vmem:[%s1 + $0xac] sm:$0xf]
        %v1568 = vld [vmem:[%s1 + $0xb0] sm:$0xf]
        %v1569 = vld [vmem:[%s1 + $0xb4] sm:$0xf]
        %v1570 = vld [vmem:[%s1 + $0xb8] sm:$0xf]
        %v1571 = vld [vmem:[%s1 + $0xbc] sm:$0xf]
        %v1620 = vunpack.c.l.b16 %v1524
        %v1621 = vunpack.c.l.b16 %v1525
        %v1622 = vunpack.c.l.b16 %v1526
        %v1623 = vunpack.c.l.b16 %v1527
        %v1624 = vunpack.c.l.b16 %v1528
        %v1625 = vunpack.c.l.b16 %v1529
        %v1626 = vunpack.c.l.b16 %v1530
        %v1627 = vunpack.c.l.b16 %v1531
        %v1628 = vunpack.c.l.b16 %v1532
        %v1629 = vunpack.c.l.b16 %v1533
        %v1630 = vunpack.c.l.b16 %v1534
        %v1631 = vunpack.c.l.b16 %v1535
        %v1632 = vunpack.c.l.b16 %v1536
        %v1633 = vunpack.c.l.b16 %v1537
        %v1634 = vunpack.c.l.b16 %v1538
        %v1635 = vunpack.c.l.b16 %v1539
        %v1636 = vunpack.c.l.b16 %v1540
        %v1637 = vunpack.c.l.b16 %v1541
        %v1638 = vunpack.c.l.b16 %v1542
        %v1639 = vunpack.c.l.b16 %v1543
        %v1640 = vunpack.c.l.b16 %v1544
        %v1641 = vunpack.c.l.b16 %v1545
        %v1642 = vunpack.c.l.b16 %v1546
        %v1643 = vunpack.c.l.b16 %v1547
        %v1644 = vunpack.c.l.b16 %v1548
        %v1645 = vunpack.c.l.b16 %v1549
        %v1646 = vunpack.c.l.b16 %v1550
        %v1647 = vunpack.c.l.b16 %v1551
        %v1648 = vunpack.c.l.b16 %v1552
        %v1649 = vunpack.c.l.b16 %v1553
        %v1650 = vunpack.c.l.b16 %v1554
        %v1651 = vunpack.c.l.b16 %v1555
        %v1652 = vunpack.c.l.b16 %v1556
        %v1653 = vunpack.c.l.b16 %v1557
        %v1654 = vunpack.c.l.b16 %v1558
        %v1655 = vunpack.c.l.b16 %v1559
        %v1656 = vunpack.c.l.b16 %v1560
        %v1657 = vunpack.c.l.b16 %v1561
        %v1658 = vunpack.c.l.b16 %v1562
        %v1659 = vunpack.c.l.b16 %v1563
        %v1660 = vunpack.c.l.b16 %v1564
        %v1661 = vunpack.c.l.b16 %v1565
        %v1662 = vunpack.c.l.b16 %v1566
        %v1663 = vunpack.c.l.b16 %v1567
        %v1664 = vunpack.c.l.b16 %v1568
        %v1665 = vunpack.c.l.b16 %v1569
        %v1666 = vunpack.c.l.b16 %v1570
        %v1667 = vunpack.c.l.b16 %v1571
        %v1668 = vpack.c.b16 %v1621, %v1620
        %v1669 = vpack.c.b16 %v1623, %v1622
        %v1670 = vpack.c.b16 %v1625, %v1624
        %v1671 = vpack.c.b16 %v1627, %v1626
        %v1672 = vpack.c.b16 %v1629, %v1628
        %v1673 = vpack.c.b16 %v1631, %v1630
        %v1674 = vpack.c.b16 %v1633, %v1632
        %v1675 = vpack.c.b16 %v1635, %v1634
        %v1676 = vpack.c.b16 %v1637, %v1636
        %v1677 = vpack.c.b16 %v1639, %v1638
        %v1678 = vpack.c.b16 %v1641, %v1640
        %v1679 = vpack.c.b16 %v1643, %v1642
        %v1680 = vpack.c.b16 %v1645, %v1644
        %v1681 = vpack.c.b16 %v1647, %v1646
        %v1682 = vpack.c.b16 %v1649, %v1648
        %v1683 = vpack.c.b16 %v1651, %v1650
        %v1684 = vpack.c.b16 %v1653, %v1652
        %v1685 = vpack.c.b16 %v1655, %v1654
        %v1686 = vpack.c.b16 %v1657, %v1656
        %v1687 = vpack.c.b16 %v1659, %v1658
        %v1688 = vpack.c.b16 %v1661, %v1660
        %v1689 = vpack.c.b16 %v1663, %v1662
        %v1690 = vpack.c.b16 %v1665, %v1664
        %v1691 = vpack.c.b16 %v1667, %v1666
        %1716 = vmatprep.subr.bf16.mxu0 0
        %1717 = vmatpush1.bf16.msra.mxu0 %v1675
        %1718 = vmatprep.subr.bf16.mxu0 0
        %1719 = vmatpush1.bf16.msra.mxu0 %v1674
        %1720 = vmatprep.subr.bf16.mxu0 0
        %1721 = vmatpush1.bf16.msra.mxu0 %v1673
        %1722 = vmatprep.subr.bf16.mxu0 0
        %1723 = vmatpush1.bf16.msra.mxu0 %v1672
        %1724 = vmatprep.subr.bf16.mxu0 0
        %1725 = vmatpush1.bf16.msra.mxu0 %v1671
        %1726 = vmatprep.subr.bf16.mxu0 0
        %1727 = vmatpush1.bf16.msra.mxu0 %v1670
        %1728 = vmatprep.subr.bf16.mxu0 0
        %1729 = vmatpush1.bf16.msra.mxu0 %v1669
        %1730 = vmatprep.subr.bf16.mxu0 0
        %1731 = vmatpush1.bf16.msra.mxu0 %v1668
        %1732 = vmatprep.subr.bf16.mxu0 0
        %1733 = vmatpush2.bf16.msra.mxu0 %v1683
        %1734 = vmatprep.subr.bf16.mxu0 0
        %1735 = vmatpush2.bf16.msra.mxu0 %v1682
        %1736 = vmatprep.subr.bf16.mxu0 0
        %1737 = vmatpush2.bf16.msra.mxu0 %v1681
        %1738 = vmatprep.subr.bf16.mxu0 0
        %1739 = vmatpush2.bf16.msra.mxu0 %v1680
        %1740 = vmatprep.subr.bf16.mxu0 0
        %1741 = vmatpush2.bf16.msra.mxu0 %v1679
        %1742 = vmatprep.subr.bf16.mxu0 0
        %1743 = vmatpush2.bf16.msra.mxu0 %v1678
        %1744 = vmatprep.subr.bf16.mxu0 0
        %1745 = vmatpush2.bf16.msra.mxu0 %v1677
        %1746 = vmatprep.subr.bf16.mxu0 0
        %1747 = vmatpush2.bf16.msra.mxu0 %v1676
        %1748 = vmatprep.mubr.bf16.mxu0 %v1182
        %1749 = vmatmul.mubr.bf16.gmra.mxu0 %v1090
        %v1750 = vpop.f32.mrf.mxu0
        %v1751 = vadd.f32 0.0, %v1750
        %v1752 = vpop.f32.mrf.mxu0
        %v1753 = vpop.f32.mrf.mxu0
        %v1754 = vadd.f32 0.0, %v1753
        %v1755 = vpop.f32.mrf.mxu0
        %1756 = vmatprep.mubr.bf16.mxu0 %v1194
        %1757 = vmatmul.mubr.bf16.gmra.mxu0 %v1091
        %v1758 = vpop.f32.mrf.mxu0
        %v1759 = vadd.f32 0.0, %v1758
        %v1760 = vpop.f32.mrf.mxu0
        %v1761 = vpop.f32.mrf.mxu0
        %v1762 = vadd.f32 0.0, %v1761
        %v1763 = vpop.f32.mrf.mxu0
        %1764 = vmatprep.mubr.bf16.mxu0 %v1206
        %1765 = vmatmul.mubr.bf16.gmra.mxu0 %v1092
        %v1766 = vpop.f32.mrf.mxu0
        %v1767 = vadd.f32 0.0, %v1766
        %v1768 = vpop.f32.mrf.mxu0
        %v1769 = vpop.f32.mrf.mxu0
        %v1770 = vadd.f32 0.0, %v1769
        %v1771 = vpop.f32.mrf.mxu0
        %1772 = vmatprep.mubr.bf16.mxu0 %v1218
        %1773 = vmatmul.mubr.bf16.gmra.mxu0 %v1093
        %v1774 = vpop.f32.mrf.mxu0
        %v1775 = vadd.f32 0.0, %v1774
        %v1776 = vpop.f32.mrf.mxu0
        %v1777 = vpop.f32.mrf.mxu0
        %v1778 = vadd.f32 0.0, %v1777
        %v1779 = vpop.f32.mrf.mxu0
        %1780 = vmatprep.mubr.bf16.mxu0 %v1230
        %1781 = vmatmul.mubr.bf16.gmra.mxu0 %v1094
        %v1782 = vpop.f32.mrf.mxu0
        %v1783 = vadd.f32 0.0, %v1782
        %v1784 = vpop.f32.mrf.mxu0
        %v1785 = vpop.f32.mrf.mxu0
        %v1786 = vadd.f32 0.0, %v1785
        %v1787 = vpop.f32.mrf.mxu0
        %1788 = vmatprep.mubr.bf16.mxu0 %v1242
        %1789 = vmatmul.mubr.bf16.gmra.mxu0 %v1095
        %v1790 = vpop.f32.mrf.mxu0
        %v1791 = vadd.f32 0.0, %v1790
        %v1792 = vpop.f32.mrf.mxu0
        %v1793 = vpop.f32.mrf.mxu0
        %v1794 = vadd.f32 0.0, %v1793
        %v1795 = vpop.f32.mrf.mxu0
        %1796 = vmatprep.mubr.bf16.mxu0 %v1254
        %1797 = vmatmul.mubr.bf16.gmra.mxu0 %v1096
        %v1798 = vpop.f32.mrf.mxu0
        %v1799 = vadd.f32 0.0, %v1798
        %v1800 = vpop.f32.mrf.mxu0
        %v1801 = vpop.f32.mrf.mxu0
        %v1802 = vadd.f32 0.0, %v1801
        %v1803 = vpop.f32.mrf.mxu0
        %1804 = vmatprep.mubr.bf16.mxu0 %v1266
        %1805 = vmatmul.mubr.bf16.gmra.mxu0 %v1097
        %v1806 = vpop.f32.mrf.mxu0
        %v1807 = vadd.f32 0.0, %v1806
        %v1808 = vpop.f32.mrf.mxu0
        %v1809 = vpop.f32.mrf.mxu0
        %v1810 = vadd.f32 0.0, %v1809
        %v1811 = vpop.f32.mrf.mxu0
        %1812 = vmatprep.mubr.bf16.mxu0 %v1278
        %1813 = vmatmul.mubr.bf16.gmra.mxu0 %v1098
        %v1814 = vpop.f32.mrf.mxu0
        %v1815 = vadd.f32 0.0, %v1814
        %v1816 = vpop.f32.mrf.mxu0
        %v1817 = vpop.f32.mrf.mxu0
        %v1818 = vadd.f32 0.0, %v1817
        %v1819 = vpop.f32.mrf.mxu0
        %1820 = vmatprep.mubr.bf16.mxu0 %v1290
        %1821 = vmatmul.mubr.bf16.gmra.mxu0 %v1099
        %v1822 = vpop.f32.mrf.mxu0
        %v1823 = vadd.f32 0.0, %v1822
        %v1824 = vpop.f32.mrf.mxu0
        %v1825 = vpop.f32.mrf.mxu0
        %v1826 = vadd.f32 0.0, %v1825
        %v1827 = vpop.f32.mrf.mxu0
        %1828 = vmatprep.mubr.bf16.mxu0 %v1302
        %1829 = vmatmul.mubr.bf16.gmra.mxu0 %v1100
        %v1830 = vpop.f32.mrf.mxu0
        %v1831 = vadd.f32 0.0, %v1830
        %v1832 = vpop.f32.mrf.mxu0
        %v1833 = vpop.f32.mrf.mxu0
        %v1834 = vadd.f32 0.0, %v1833
        %v1835 = vpop.f32.mrf.mxu0
        %1836 = vmatprep.mubr.bf16.mxu0 %v1314
        %1837 = vmatmul.mubr.bf16.gmra.mxu0 %v1101
        %v1838 = vpop.f32.mrf.mxu0
        %v1839 = vadd.f32 0.0, %v1838
        %v1840 = vpop.f32.mrf.mxu0
        %v1841 = vpop.f32.mrf.mxu0
        %v1842 = vadd.f32 0.0, %v1841
        %v1843 = vpop.f32.mrf.mxu0
        %1844 = vmatprep.mubr.bf16.mxu0 %v1326
        %1845 = vmatmul.mubr.bf16.gmra.mxu0 %v1102
        %v1846 = vpop.f32.mrf.mxu0
        %v1847 = vadd.f32 0.0, %v1846
        %v1848 = vpop.f32.mrf.mxu0
        %v1849 = vpop.f32.mrf.mxu0
        %v1850 = vadd.f32 0.0, %v1849
        %v1851 = vpop.f32.mrf.mxu0
        %1852 = vmatprep.mubr.bf16.mxu0 %v1338
        %1853 = vmatmul.mubr.bf16.gmra.mxu0 %v1103
        %v1854 = vpop.f32.mrf.mxu0
        %v1855 = vadd.f32 0.0, %v1854
        %v1856 = vpop.f32.mrf.mxu0
        %v1857 = vpop.f32.mrf.mxu0
        %v1858 = vadd.f32 0.0, %v1857
        %v1859 = vpop.f32.mrf.mxu0
        %1860 = vmatprep.mubr.bf16.mxu0 %v1350
        %1861 = vmatmul.mubr.bf16.gmra.mxu0 %v1104
        %v1862 = vpop.f32.mrf.mxu0
        %v1863 = vadd.f32 0.0, %v1862
        %v1864 = vpop.f32.mrf.mxu0
        %v1865 = vpop.f32.mrf.mxu0
        %v1866 = vadd.f32 0.0, %v1865
        %v1867 = vpop.f32.mrf.mxu0
        %1868 = vmatprep.mubr.bf16.mxu0 %v1362
        %1869 = vmatmul.mubr.bf16.gmra.mxu0 %v1105
        %v1870 = vpop.f32.mrf.mxu0
        %v1871 = vadd.f32 0.0, %v1870
        %v1872 = vpop.f32.mrf.mxu0
        %v1873 = vpop.f32.mrf.mxu0
        %v1874 = vadd.f32 0.0, %v1873
        %v1875 = vpop.f32.mrf.mxu0
        %1876 = vdwg.mxu0
        %1877 = vmatprep.subr.bf16.mxu0 0
        %1878 = vmatpush1.bf16.msra.mxu0 %v1691
        %1879 = vmatprep.subr.bf16.mxu0 0
        %1880 = vmatpush1.bf16.msra.mxu0 %v1690
        %1881 = vmatprep.subr.bf16.mxu0 0
        %1882 = vmatpush1.bf16.msra.mxu0 %v1689
        %1883 = vmatprep.subr.bf16.mxu0 0
        %1884 = vmatpush1.bf16.msra.mxu0 %v1688
        %1885 = vmatprep.subr.bf16.mxu0 0
        %1886 = vmatpush1.bf16.msra.mxu0 %v1687
        %1887 = vmatprep.subr.bf16.mxu0 0
        %1888 = vmatpush1.bf16.msra.mxu0 %v1686
        %1889 = vmatprep.subr.bf16.mxu0 0
        %1890 = vmatpush1.bf16.msra.mxu0 %v1685
        %1891 = vmatprep.subr.bf16.mxu0 0
        %1892 = vmatpush1.bf16.msra.mxu0 %v1684
        %1893 = vmatprep.subr.bf16.mxu0 0
        %1894 = vmatpush2.bf16.msra.mxu0 0
        %1895 = vmatprep.subr.bf16.mxu0 0
        %1896 = vmatpush2.bf16.msra.mxu0 0
        %1897 = vmatprep.subr.bf16.mxu0 0
        %1898 = vmatpush2.bf16.msra.mxu0 0
        %1899 = vmatprep.subr.bf16.mxu0 0
        %1900 = vmatpush2.bf16.msra.mxu0 0
        %1901 = vmatprep.subr.bf16.mxu0 0
        %1902 = vmatpush2.bf16.msra.mxu0 0
        %1903 = vmatprep.subr.bf16.mxu0 0
        %1904 = vmatpush2.bf16.msra.mxu0 0
        %1905 = vmatprep.subr.bf16.mxu0 0
        %1906 = vmatpush2.bf16.msra.mxu0 0
        %1907 = vmatprep.subr.bf16.mxu0 0
        %1908 = vmatpush2.bf16.msra.mxu0 0
        %1909 = vmatprep.mubr.bf16.mxu0 0
        %1910 = vmatmul.mubr.bf16.gmra.mxu0 %v1430
        %v1911 = vpop.f32.mrf.mxu0
        %v1912 = vadd.f32 %v1751, %v1911
        %v1913 = vpop.f32.mrf.mxu0
        %v1914 = vpop.f32.mrf.mxu0
        %v1915 = vadd.f32 %v1754, %v1914
        %v1916 = vpop.f32.mrf.mxu0
        %1917 = vmatprep.mubr.bf16.mxu0 0
        %1918 = vmatmul.mubr.bf16.gmra.mxu0 %v1433
        %v1919 = vpop.f32.mrf.mxu0
        %v1920 = vadd.f32 %v1759, %v1919
        %v1921 = vpop.f32.mrf.mxu0
        %v1922 = vpop.f32.mrf.mxu0
        %v1923 = vadd.f32 %v1762, %v1922
        %v1924 = vpop.f32.mrf.mxu0
        %1925 = vmatprep.mubr.bf16.mxu0 0
        %1926 = vmatmul.mubr.bf16.gmra.mxu0 %v1436
        %v1927 = vpop.f32.mrf.mxu0
        %v1928 = vadd.f32 %v1767, %v1927
        %v1929 = vpop.f32.mrf.mxu0
        %v1930 = vpop.f32.mrf.mxu0
        %v1931 = vadd.f32 %v1770, %v1930
        %v1932 = vpop.f32.mrf.mxu0
        %1933 = vmatprep.mubr.bf16.mxu0 0
        %1934 = vmatmul.mubr.bf16.gmra.mxu0 %v1439
        %v1935 = vpop.f32.mrf.mxu0
        %v1936 = vadd.f32 %v1775, %v1935
        %v1937 = vpop.f32.mrf.mxu0
        %v1938 = vpop.f32.mrf.mxu0
        %v1939 = vadd.f32 %v1778, %v1938
        %v1940 = vpop.f32.mrf.mxu0
        %1941 = vmatprep.mubr.bf16.mxu0 0
        %1942 = vmatmul.mubr.bf16.gmra.mxu0 %v1442
        %v1943 = vpop.f32.mrf.mxu0
        %v1944 = vadd.f32 %v1783, %v1943
        %v1945 = vpop.f32.mrf.mxu0
        %v1946 = vpop.f32.mrf.mxu0
        %v1947 = vadd.f32 %v1786, %v1946
        %v1948 = vpop.f32.mrf.mxu0
        %1949 = vmatprep.mubr.bf16.mxu0 0
        %1950 = vmatmul.mubr.bf16.gmra.mxu0 %v1445
        %v1951 = vpop.f32.mrf.mxu0
        %v1952 = vadd.f32 %v1791, %v1951
        %v1953 = vpop.f32.mrf.mxu0
        %v1954 = vpop.f32.mrf.mxu0
        %v1955 = vadd.f32 %v1794, %v1954
        %v1956 = vpop.f32.mrf.mxu0
        %1957 = vmatprep.mubr.bf16.mxu0 0
        %1958 = vmatmul.mubr.bf16.gmra.mxu0 %v1448
        %v1959 = vpop.f32.mrf.mxu0
        %v1960 = vadd.f32 %v1799, %v1959
        %v1961 = vpop.f32.mrf.mxu0
        %v1962 = vpop.f32.mrf.mxu0
        %v1963 = vadd.f32 %v1802, %v1962
        %v1964 = vpop.f32.mrf.mxu0
        %1965 = vmatprep.mubr.bf16.mxu0 0
        %1966 = vmatmul.mubr.bf16.gmra.mxu0 %v1451
        %v1967 = vpop.f32.mrf.mxu0
        %v1968 = vadd.f32 %v1807, %v1967
        %v1969 = vpop.f32.mrf.mxu0
        %v1970 = vpop.f32.mrf.mxu0
        %v1971 = vadd.f32 %v1810, %v1970
        %v1972 = vpop.f32.mrf.mxu0
        %1973 = vmatprep.mubr.bf16.mxu0 0
        %1974 = vmatmul.mubr.bf16.gmra.mxu0 %v1454
        %v1975 = vpop.f32.mrf.mxu0
        %v1976 = vadd.f32 %v1815, %v1975
        %v1977 = vpop.f32.mrf.mxu0
        %v1978 = vpop.f32.mrf.mxu0
        %v1979 = vadd.f32 %v1818, %v1978
        %v1980 = vpop.f32.mrf.mxu0
        %1981 = vmatprep.mubr.bf16.mxu0 0
        %1982 = vmatmul.mubr.bf16.gmra.mxu0 %v1457
        %v1983 = vpop.f32.mrf.mxu0
        %v1984 = vadd.f32 %v1823, %v1983
        %v1985 = vpop.f32.mrf.mxu0
        %v1986 = vpop.f32.mrf.mxu0
        %v1987 = vadd.f32 %v1826, %v1986
        %v1988 = vpop.f32.mrf.mxu0
        %1989 = vmatprep.mubr.bf16.mxu0 0
        %1990 = vmatmul.mubr.bf16.gmra.mxu0 %v1460
        %v1991 = vpop.f32.mrf.mxu0
        %v1992 = vadd.f32 %v1831, %v1991
        %v1993 = vpop.f32.mrf.mxu0
        %v1994 = vpop.f32.mrf.mxu0
        %v1995 = vadd.f32 %v1834, %v1994
        %v1996 = vpop.f32.mrf.mxu0
        %1997 = vmatprep.mubr.bf16.mxu0 0
        %1998 = vmatmul.mubr.bf16.gmra.mxu0 %v1463
        %v1999 = vpop.f32.mrf.mxu0
        %v2000 = vadd.f32 %v1839, %v1999
        %v2001 = vpop.f32.mrf.mxu0
        %v2002 = vpop.f32.mrf.mxu0
        %v2003 = vadd.f32 %v1842, %v2002
        %v2004 = vpop.f32.mrf.mxu0
        %2005 = vmatprep.mubr.bf16.mxu0 0
        %2006 = vmatmul.mubr.bf16.gmra.mxu0 %v1466
        %v2007 = vpop.f32.mrf.mxu0
        %v2008 = vadd.f32 %v1847, %v2007
        %v2009 = vpop.f32.mrf.mxu0
        %v2010 = vpop.f32.mrf.mxu0
        %v2011 = vadd.f32 %v1850, %v2010
        %v2012 = vpop.f32.mrf.mxu0
        %2013 = vmatprep.mubr.bf16.mxu0 0
        %2014 = vmatmul.mubr.bf16.gmra.mxu0 %v1469
        %v2015 = vpop.f32.mrf.mxu0
        %v2016 = vadd.f32 %v1855, %v2015
        %v2017 = vpop.f32.mrf.mxu0
        %v2018 = vpop.f32.mrf.mxu0
        %v2019 = vadd.f32 %v1858, %v2018
        %v2020 = vpop.f32.mrf.mxu0
        %2021 = vmatprep.mubr.bf16.mxu0 0
        %2022 = vmatmul.mubr.bf16.gmra.mxu0 %v1472
        %v2023 = vpop.f32.mrf.mxu0
        %v2024 = vadd.f32 %v1863, %v2023
        %v2025 = vpop.f32.mrf.mxu0
        %v2026 = vpop.f32.mrf.mxu0
        %v2027 = vadd.f32 %v1866, %v2026
        %v2028 = vpop.f32.mrf.mxu0
        %2029 = vmatprep.mubr.bf16.mxu0 0
        %2030 = vmatmul.mubr.bf16.gmra.mxu0 %v1475
        %v2031 = vpop.f32.mrf.mxu0
        %v2032 = vadd.f32 %v1871, %v2031
        %v2033 = vpop.f32.mrf.mxu0
        %v2034 = vpop.f32.mrf.mxu0
        %v2035 = vadd.f32 %v1874, %v2034
        %v2036 = vpop.f32.mrf.mxu0
        %2037 = vdwg.mxu0
        %v2038 = vadd.f32 %v1492, %v1912
        %v2039 = vadd.f32 %v1493, %v1915
        %v2040 = vadd.f32 %v1494, %v1920
        %v2041 = vadd.f32 %v1495, %v1923
        %v2042 = vadd.f32 %v1496, %v1928
        %v2043 = vadd.f32 %v1497, %v1931
        %v2044 = vadd.f32 %v1498, %v1936
        %v2045 = vadd.f32 %v1499, %v1939
        %v2046 = vadd.f32 %v1500, %v1944
        %v2047 = vadd.f32 %v1501, %v1947
        %v2048 = vadd.f32 %v1502, %v1952
        %v2049 = vadd.f32 %v1503, %v1955
        %v2050 = vadd.f32 %v1504, %v1960
        %v2051 = vadd.f32 %v1505, %v1963
        %v2052 = vadd.f32 %v1506, %v1968
        %v2053 = vadd.f32 %v1507, %v1971
        %v2054 = vadd.f32 %v1508, %v1976
        %v2055 = vadd.f32 %v1509, %v1979
        %v2056 = vadd.f32 %v1510, %v1984
        %v2057 = vadd.f32 %v1511, %v1987
        %v2058 = vadd.f32 %v1512, %v1992
        %v2059 = vadd.f32 %v1513, %v1995
        %v2060 = vadd.f32 %v1514, %v2000
        %v2061 = vadd.f32 %v1515, %v2003
        %v2062 = vadd.f32 %v1516, %v2008
        %v2063 = vadd.f32 %v1517, %v2011
        %v2064 = vadd.f32 %v1518, %v2016
        %v2065 = vadd.f32 %v1519, %v2019
        %v2066 = vadd.f32 %v1520, %v2024
        %v2067 = vadd.f32 %v1521, %v2027
        %v2068 = vadd.f32 %v1522, %v2032
        %v2069 = vadd.f32 %v1523, %v2035
        %2070 = vst [vmem:[#allocation4] sm:$0xff] %v2038
        %2071 = vst [vmem:[#allocation4 + $0x8] sm:$0xff] %v2039
        %2072 = vst [vmem:[#allocation4 + $0x10] sm:$0xff] %v2040
        %2073 = vst [vmem:[#allocation4 + $0x18] sm:$0xff] %v2041
        %2074 = vst [vmem:[#allocation4 + $0x20] sm:$0xff] %v2042
        %2075 = vst [vmem:[#allocation4 + $0x28] sm:$0xff] %v2043
        %2076 = vst [vmem:[#allocation4 + $0x30] sm:$0xff] %v2044
        %2077 = vst [vmem:[#allocation4 + $0x38] sm:$0xff] %v2045
        %2078 = vst [vmem:[#allocation4 + $0x40] sm:$0xff] %v2046
        %2079 = vst [vmem:[#allocation4 + $0x48] sm:$0xff] %v2047
        %2080 = vst [vmem:[#allocation4 + $0x50] sm:$0xff] %v2048
        %2081 = vst [vmem:[#allocation4 + $0x58] sm:$0xff] %v2049
        %2082 = vst [vmem:[#allocation4 + $0x60] sm:$0xff] %v2050
        %2083 = vst [vmem:[#allocation4 + $0x68] sm:$0xff] %v2051
        %2084 = vst [vmem:[#allocation4 + $0x70] sm:$0xff] %v2052
        %2085 = vst [vmem:[#allocation4 + $0x78] sm:$0xff] %v2053
        %2086 = vst [vmem:[#allocation4 + $0x80] sm:$0xff] %v2054
        %2087 = vst [vmem:[#allocation4 + $0x88] sm:$0xff] %v2055
        %2088 = vst [vmem:[#allocation4 + $0x90] sm:$0xff] %v2056
        %2089 = vst [vmem:[#allocation4 + $0x98] sm:$0xff] %v2057
        %2090 = vst [vmem:[#allocation4 + $0xa0] sm:$0xff] %v2058
        %2091 = vst [vmem:[#allocation4 + $0xa8] sm:$0xff] %v2059
        %2092 = vst [vmem:[#allocation4 + $0xb0] sm:$0xff] %v2060
        %2093 = vst [vmem:[#allocation4 + $0xb8] sm:$0xff] %v2061
        %2094 = vst [vmem:[#allocation4 + $0xc0] sm:$0xff] %v2062
        %2095 = vst [vmem:[#allocation4 + $0xc8] sm:$0xff] %v2063
        %2096 = vst [vmem:[#allocation4 + $0xd0] sm:$0xff] %v2064
        %2097 = vst [vmem:[#allocation4 + $0xd8] sm:$0xff] %v2065
        %2098 = vst [vmem:[#allocation4 + $0xe0] sm:$0xff] %v2066
        %2099 = vst [vmem:[#allocation4 + $0xe8] sm:$0xff] %v2067
        %2100 = vst [vmem:[#allocation4 + $0xf0] sm:$0xff] %v2068
        %2101 = vst [vmem:[#allocation4 + $0xf8] sm:$0xff] %v2069
        %v2102 = vld [vmem:[%s811] sm:$0xf]
        %v2103 = vld [vmem:[%s811 + $0x4] sm:$0xf]
        %v2104 = vld [vmem:[%s811 + $0xc] sm:$0xf]
        %v2105 = vld [vmem:[%s811 + $0x10] sm:$0xf]
        %v2106 = vld [vmem:[%s811 + $0x18] sm:$0xf]
        %v2107 = vld [vmem:[%s811 + $0x1c] sm:$0xf]
        %v2108 = vld [vmem:[%s811 + $0x24] sm:$0xf]
        %v2109 = vld [vmem:[%s811 + $0x28] sm:$0xf]
        %v2110 = vld [vmem:[%s811 + $0x30] sm:$0xf]
        %v2111 = vld [vmem:[%s811 + $0x34] sm:$0xf]
        %v2112 = vld [vmem:[%s811 + $0x3c] sm:$0xf]
        %v2113 = vld [vmem:[%s811 + $0x40] sm:$0xf]
        %v2114 = vld [vmem:[%s811 + $0x48] sm:$0xf]
        %v2115 = vld [vmem:[%s811 + $0x4c] sm:$0xf]
        %v2116 = vld [vmem:[%s811 + $0x54] sm:$0xf]
        %v2117 = vld [vmem:[%s811 + $0x58] sm:$0xf]
        %v2118 = vld [vmem:[%s811 + $0x60] sm:$0xf]
        %v2119 = vld [vmem:[%s811 + $0x64] sm:$0xf]
        %v2120 = vld [vmem:[%s811 + $0x6c] sm:$0xf]
        %v2121 = vld [vmem:[%s811 + $0x70] sm:$0xf]
        %v2122 = vld [vmem:[%s811 + $0x78] sm:$0xf]
        %v2123 = vld [vmem:[%s811 + $0x7c] sm:$0xf]
        %v2124 = vld [vmem:[%s811 + $0x84] sm:$0xf]
        %v2125 = vld [vmem:[%s811 + $0x88] sm:$0xf]
        %v2126 = vld [vmem:[%s811 + $0x90] sm:$0xf]
        %v2127 = vld [vmem:[%s811 + $0x94] sm:$0xf]
        %v2128 = vld [vmem:[%s811 + $0x9c] sm:$0xf]
        %v2129 = vld [vmem:[%s811 + $0xa0] sm:$0xf]
        %v2130 = vld [vmem:[%s811 + $0xa8] sm:$0xf]
        %v2131 = vld [vmem:[%s811 + $0xac] sm:$0xf]
        %v2132 = vld [vmem:[%s811 + $0xb4] sm:$0xf]
        %v2133 = vld [vmem:[%s811 + $0xb8] sm:$0xf]
        %v2134 = vld [vmem:[%s811 + $0x8] sm:$0x1]
        %v2135 = vld [vmem:[%s811 + $0x14] sm:$0x1]
        %v2136 = vld [vmem:[%s811 + $0x20] sm:$0x1]
        %v2137 = vld [vmem:[%s811 + $0x2c] sm:$0x1]
        %v2138 = vld [vmem:[%s811 + $0x38] sm:$0x1]
        %v2139 = vld [vmem:[%s811 + $0x44] sm:$0x1]
        %v2140 = vld [vmem:[%s811 + $0x50] sm:$0x1]
        %v2141 = vld [vmem:[%s811 + $0x5c] sm:$0x1]
        %v2142 = vld [vmem:[%s811 + $0x68] sm:$0x1]
        %v2143 = vld [vmem:[%s811 + $0x74] sm:$0x1]
        %v2144 = vld [vmem:[%s811 + $0x80] sm:$0x1]
        %v2145 = vld [vmem:[%s811 + $0x8c] sm:$0x1]
        %v2146 = vld [vmem:[%s811 + $0x98] sm:$0x1]
        %v2147 = vld [vmem:[%s811 + $0xa4] sm:$0x1]
        %v2148 = vld [vmem:[%s811 + $0xb0] sm:$0x1]
        %v2149 = vld [vmem:[%s811 + $0xbc] sm:$0x1]
        %v2150 = vld [vmem:[%s811] sm:$0xe]
        %v2151 = vld [vmem:[%s811 + $0xc] sm:$0xe]
        %v2152 = vld [vmem:[%s811 + $0x18] sm:$0xe]
        %v2153 = vld [vmem:[%s811 + $0x24] sm:$0xe]
        %v2154 = vld [vmem:[%s811 + $0x30] sm:$0xe]
        %v2155 = vld [vmem:[%s811 + $0x3c] sm:$0xe]
        %v2156 = vld [vmem:[%s811 + $0x48] sm:$0xe]
        %v2157 = vld [vmem:[%s811 + $0x54] sm:$0xe]
        %v2158 = vld [vmem:[%s811 + $0x60] sm:$0xe]
        %v2159 = vld [vmem:[%s811 + $0x6c] sm:$0xe]
        %v2160 = vld [vmem:[%s811 + $0x78] sm:$0xe]
        %v2161 = vld [vmem:[%s811 + $0x84] sm:$0xe]
        %v2162 = vld [vmem:[%s811 + $0x90] sm:$0xe]
        %v2163 = vld [vmem:[%s811 + $0x9c] sm:$0xe]
        %v2164 = vld [vmem:[%s811 + $0xa8] sm:$0xe]
        %v2165 = vld [vmem:[%s811 + $0xb4] sm:$0xe]
        %v2198 = vunpack.c.l.b16 %v2102
        %v2199 = vunpack.c.l.b16 %v2103
        %v2200 = vunpack.c.l.b16 %v2104
        %v2201 = vunpack.c.l.b16 %v2105
        %v2202 = vunpack.c.l.b16 %v2106
        %v2203 = vunpack.c.l.b16 %v2107
        %v2204 = vunpack.c.l.b16 %v2108
        %v2205 = vunpack.c.l.b16 %v2109
        %v2206 = vunpack.c.l.b16 %v2110
        %v2207 = vunpack.c.l.b16 %v2111
        %v2208 = vunpack.c.l.b16 %v2112
        %v2209 = vunpack.c.l.b16 %v2113
        %v2210 = vunpack.c.l.b16 %v2114
        %v2211 = vunpack.c.l.b16 %v2115
        %v2212 = vunpack.c.l.b16 %v2116
        %v2213 = vunpack.c.l.b16 %v2117
        %v2214 = vunpack.c.l.b16 %v2118
        %v2215 = vunpack.c.l.b16 %v2119
        %v2216 = vunpack.c.l.b16 %v2120
        %v2217 = vunpack.c.l.b16 %v2121
        %v2218 = vunpack.c.l.b16 %v2122
        %v2219 = vunpack.c.l.b16 %v2123
        %v2220 = vunpack.c.l.b16 %v2124
        %v2221 = vunpack.c.l.b16 %v2125
        %v2222 = vunpack.c.l.b16 %v2126
        %v2223 = vunpack.c.l.b16 %v2127
        %v2224 = vunpack.c.l.b16 %v2128
        %v2225 = vunpack.c.l.b16 %v2129
        %v2226 = vunpack.c.l.b16 %v2130
        %v2227 = vunpack.c.l.b16 %v2131
        %v2228 = vunpack.c.l.b16 %v2132
        %v2229 = vunpack.c.l.b16 %v2133
        %v2230 = vpack.c.b16 %v2199, %v2198
        %v2231 = vpack.c.b16 %v2201, %v2200
        %v2232 = vpack.c.b16 %v2203, %v2202
        %v2233 = vpack.c.b16 %v2205, %v2204
        %v2234 = vpack.c.b16 %v2207, %v2206
        %v2235 = vpack.c.b16 %v2209, %v2208
        %v2236 = vpack.c.b16 %v2211, %v2210
        %v2237 = vpack.c.b16 %v2213, %v2212
        %v2238 = vpack.c.b16 %v2215, %v2214
        %v2239 = vpack.c.b16 %v2217, %v2216
        %v2240 = vpack.c.b16 %v2219, %v2218
        %v2241 = vpack.c.b16 %v2221, %v2220
        %v2242 = vpack.c.b16 %v2223, %v2222
        %v2243 = vpack.c.b16 %v2225, %v2224
        %v2244 = vpack.c.b16 %v2227, %v2226
        %v2245 = vpack.c.b16 %v2229, %v2228
        %v2278 = vunpack.c.l.b16 %v2134
        %v2279 = vunpack.c.l.b16 %v2135
        %v2280 = vunpack.c.l.b16 %v2136
        %v2281 = vunpack.c.l.b16 %v2137
        %v2282 = vunpack.c.l.b16 %v2138
        %v2283 = vunpack.c.l.b16 %v2139
        %v2284 = vunpack.c.l.b16 %v2140
        %v2285 = vunpack.c.l.b16 %v2141
        %v2286 = vunpack.c.l.b16 %v2142
        %v2287 = vunpack.c.l.b16 %v2143
        %v2288 = vunpack.c.l.b16 %v2144
        %v2289 = vunpack.c.l.b16 %v2145
        %v2290 = vunpack.c.l.b16 %v2146
        %v2291 = vunpack.c.l.b16 %v2147
        %v2292 = vunpack.c.l.b16 %v2148
        %v2293 = vunpack.c.l.b16 %v2149
        %v2294 = vpack.c.b16 %v2278, %v2278
        %v2295 = vpack.c.b16 %v2279, %v2279
        %v2296 = vpack.c.b16 %v2280, %v2280
        %v2297 = vpack.c.b16 %v2281, %v2281
        %v2298 = vpack.c.b16 %v2282, %v2282
        %v2299 = vpack.c.b16 %v2283, %v2283
        %v2300 = vpack.c.b16 %v2284, %v2284
        %v2301 = vpack.c.b16 %v2285, %v2285
        %v2302 = vpack.c.b16 %v2286, %v2286
        %v2303 = vpack.c.b16 %v2287, %v2287
        %v2304 = vpack.c.b16 %v2288, %v2288
        %v2305 = vpack.c.b16 %v2289, %v2289
        %v2306 = vpack.c.b16 %v2290, %v2290
        %v2307 = vpack.c.b16 %v2291, %v2291
        %v2308 = vpack.c.b16 %v2292, %v2292
        %v2309 = vpack.c.b16 %v2293, %v2293
        %v2311 = vshrl.u32 %v2230, 16
        %v2313 = vshll.u32 %v2230, 16
        %v2315 = vrot.slane %v2313, 1
        %v2316 = vor.u32 %v2311, %v2315
        %v2318 = vshll.u32 %v2294, 16
        %v2320 = vrot.slane %v2318, 1
        %v2321 = vsel %vm1170, %v2316, %v2320
        %v2323 = vshrl.u32 %v2231, 16
        %v2325 = vshll.u32 %v2231, 16
        %v2327 = vrot.slane %v2325, 1
        %v2328 = vor.u32 %v2323, %v2327
        %v2330 = vshll.u32 %v2295, 16
        %v2332 = vrot.slane %v2330, 1
        %v2333 = vsel %vm1170, %v2328, %v2332
        %v2335 = vshrl.u32 %v2232, 16
        %v2337 = vshll.u32 %v2232, 16
        %v2339 = vrot.slane %v2337, 1
        %v2340 = vor.u32 %v2335, %v2339
        %v2342 = vshll.u32 %v2296, 16
        %v2344 = vrot.slane %v2342, 1
        %v2345 = vsel %vm1170, %v2340, %v2344
        %v2347 = vshrl.u32 %v2233, 16
        %v2349 = vshll.u32 %v2233, 16
        %v2351 = vrot.slane %v2349, 1
        %v2352 = vor.u32 %v2347, %v2351
        %v2354 = vshll.u32 %v2297, 16
        %v2356 = vrot.slane %v2354, 1
        %v2357 = vsel %vm1170, %v2352, %v2356
        %v2359 = vshrl.u32 %v2234, 16
        %v2361 = vshll.u32 %v2234, 16
        %v2363 = vrot.slane %v2361, 1
        %v2364 = vor.u32 %v2359, %v2363
        %v2366 = vshll.u32 %v2298, 16
        %v2368 = vrot.slane %v2366, 1
        %v2369 = vsel %vm1170, %v2364, %v2368
        %v2371 = vshrl.u32 %v2235, 16
        %v2373 = vshll.u32 %v2235, 16
        %v2375 = vrot.slane %v2373, 1
        %v2376 = vor.u32 %v2371, %v2375
        %v2378 = vshll.u32 %v2299, 16
        %v2380 = vrot.slane %v2378, 1
        %v2381 = vsel %vm1170, %v2376, %v2380
        %v2383 = vshrl.u32 %v2236, 16
        %v2385 = vshll.u32 %v2236, 16
        %v2387 = vrot.slane %v2385, 1
        %v2388 = vor.u32 %v2383, %v2387
        %v2390 = vshll.u32 %v2300, 16
        %v2392 = vrot.slane %v2390, 1
        %v2393 = vsel %vm1170, %v2388, %v2392
        %v2395 = vshrl.u32 %v2237, 16
        %v2397 = vshll.u32 %v2237, 16
        %v2399 = vrot.slane %v2397, 1
        %v2400 = vor.u32 %v2395, %v2399
        %v2402 = vshll.u32 %v2301, 16
        %v2404 = vrot.slane %v2402, 1
        %v2405 = vsel %vm1170, %v2400, %v2404
        %v2407 = vshrl.u32 %v2238, 16
        %v2409 = vshll.u32 %v2238, 16
        %v2411 = vrot.slane %v2409, 1
        %v2412 = vor.u32 %v2407, %v2411
        %v2414 = vshll.u32 %v2302, 16
        %v2416 = vrot.slane %v2414, 1
        %v2417 = vsel %vm1170, %v2412, %v2416
        %v2419 = vshrl.u32 %v2239, 16
        %v2421 = vshll.u32 %v2239, 16
        %v2423 = vrot.slane %v2421, 1
        %v2424 = vor.u32 %v2419, %v2423
        %v2426 = vshll.u32 %v2303, 16
        %v2428 = vrot.slane %v2426, 1
        %v2429 = vsel %vm1170, %v2424, %v2428
        %v2431 = vshrl.u32 %v2240, 16
        %v2433 = vshll.u32 %v2240, 16
        %v2435 = vrot.slane %v2433, 1
        %v2436 = vor.u32 %v2431, %v2435
        %v2438 = vshll.u32 %v2304, 16
        %v2440 = vrot.slane %v2438, 1
        %v2441 = vsel %vm1170, %v2436, %v2440
        %v2443 = vshrl.u32 %v2241, 16
        %v2445 = vshll.u32 %v2241, 16
        %v2447 = vrot.slane %v2445, 1
        %v2448 = vor.u32 %v2443, %v2447
        %v2450 = vshll.u32 %v2305, 16
        %v2452 = vrot.slane %v2450, 1
        %v2453 = vsel %vm1170, %v2448, %v2452
        %v2455 = vshrl.u32 %v2242, 16
        %v2457 = vshll.u32 %v2242, 16
        %v2459 = vrot.slane %v2457, 1
        %v2460 = vor.u32 %v2455, %v2459
        %v2462 = vshll.u32 %v2306, 16
        %v2464 = vrot.slane %v2462, 1
        %v2465 = vsel %vm1170, %v2460, %v2464
        %v2467 = vshrl.u32 %v2243, 16
        %v2469 = vshll.u32 %v2243, 16
        %v2471 = vrot.slane %v2469, 1
        %v2472 = vor.u32 %v2467, %v2471
        %v2474 = vshll.u32 %v2307, 16
        %v2476 = vrot.slane %v2474, 1
        %v2477 = vsel %vm1170, %v2472, %v2476
        %v2479 = vshrl.u32 %v2244, 16
        %v2481 = vshll.u32 %v2244, 16
        %v2483 = vrot.slane %v2481, 1
        %v2484 = vor.u32 %v2479, %v2483
        %v2486 = vshll.u32 %v2308, 16
        %v2488 = vrot.slane %v2486, 1
        %v2489 = vsel %vm1170, %v2484, %v2488
        %v2491 = vshrl.u32 %v2245, 16
        %v2493 = vshll.u32 %v2245, 16
        %v2495 = vrot.slane %v2493, 1
        %v2496 = vor.u32 %v2491, %v2495
        %v2498 = vshll.u32 %v2309, 16
        %v2500 = vrot.slane %v2498, 1
        %v2501 = vsel %vm1170, %v2496, %v2500
        %v2534 = vunpack.c.l.b16 %v2150
        %v2535 = vunpack.c.l.b16 %v2151
        %v2536 = vunpack.c.l.b16 %v2152
        %v2537 = vunpack.c.l.b16 %v2153
        %v2538 = vunpack.c.l.b16 %v2154
        %v2539 = vunpack.c.l.b16 %v2155
        %v2540 = vunpack.c.l.b16 %v2156
        %v2541 = vunpack.c.l.b16 %v2157
        %v2542 = vunpack.c.l.b16 %v2158
        %v2543 = vunpack.c.l.b16 %v2159
        %v2544 = vunpack.c.l.b16 %v2160
        %v2545 = vunpack.c.l.b16 %v2161
        %v2546 = vunpack.c.l.b16 %v2162
        %v2547 = vunpack.c.l.b16 %v2163
        %v2548 = vunpack.c.l.b16 %v2164
        %v2549 = vunpack.c.l.b16 %v2165
        %v2550 = vpack.c.b16 %v2199, %v2534
        %v2551 = vpack.c.b16 %v2201, %v2535
        %v2552 = vpack.c.b16 %v2203, %v2536
        %v2553 = vpack.c.b16 %v2205, %v2537
        %v2554 = vpack.c.b16 %v2207, %v2538
        %v2555 = vpack.c.b16 %v2209, %v2539
        %v2556 = vpack.c.b16 %v2211, %v2540
        %v2557 = vpack.c.b16 %v2213, %v2541
        %v2558 = vpack.c.b16 %v2215, %v2542
        %v2559 = vpack.c.b16 %v2217, %v2543
        %v2560 = vpack.c.b16 %v2219, %v2544
        %v2561 = vpack.c.b16 %v2221, %v2545
        %v2562 = vpack.c.b16 %v2223, %v2546
        %v2563 = vpack.c.b16 %v2225, %v2547
        %v2564 = vpack.c.b16 %v2227, %v2548
        %v2565 = vpack.c.b16 %v2229, %v2549
        %v2566 = vrot.slane %v2550, 1
        %v2567 = vrot.slane %v2294, 1
        %v2568 = vsel %vm1427, %v2566, %v2567
        %v2569 = vrot.slane %v2551, 1
        %v2570 = vrot.slane %v2295, 1
        %v2571 = vsel %vm1427, %v2569, %v2570
        %v2572 = vrot.slane %v2552, 1
        %v2573 = vrot.slane %v2296, 1
        %v2574 = vsel %vm1427, %v2572, %v2573
        %v2575 = vrot.slane %v2553, 1
        %v2576 = vrot.slane %v2297, 1
        %v2577 = vsel %vm1427, %v2575, %v2576
        %v2578 = vrot.slane %v2554, 1
        %v2579 = vrot.slane %v2298, 1
        %v2580 = vsel %vm1427, %v2578, %v2579
        %v2581 = vrot.slane %v2555, 1
        %v2582 = vrot.slane %v2299, 1
        %v2583 = vsel %vm1427, %v2581, %v2582
        %v2584 = vrot.slane %v2556, 1
        %v2585 = vrot.slane %v2300, 1
        %v2586 = vsel %vm1427, %v2584, %v2585
        %v2587 = vrot.slane %v2557, 1
        %v2588 = vrot.slane %v2301, 1
        %v2589 = vsel %vm1427, %v2587, %v2588
        %v2590 = vrot.slane %v2558, 1
        %v2591 = vrot.slane %v2302, 1
        %v2592 = vsel %vm1427, %v2590, %v2591
        %v2593 = vrot.slane %v2559, 1
        %v2594 = vrot.slane %v2303, 1
        %v2595 = vsel %vm1427, %v2593, %v2594
        %v2596 = vrot.slane %v2560, 1
        %v2597 = vrot.slane %v2304, 1
        %v2598 = vsel %vm1427, %v2596, %v2597
        %v2599 = vrot.slane %v2561, 1
        %v2600 = vrot.slane %v2305, 1
        %v2601 = vsel %vm1427, %v2599, %v2600
        %v2602 = vrot.slane %v2562, 1
        %v2603 = vrot.slane %v2306, 1
        %v2604 = vsel %vm1427, %v2602, %v2603
        %v2605 = vrot.slane %v2563, 1
        %v2606 = vrot.slane %v2307, 1
        %v2607 = vsel %vm1427, %v2605, %v2606
        %v2608 = vrot.slane %v2564, 1
        %v2609 = vrot.slane %v2308, 1
        %v2610 = vsel %vm1427, %v2608, %v2609
        %v2611 = vrot.slane %v2565, 1
        %v2612 = vrot.slane %v2309, 1
        %v2613 = vsel %vm1427, %v2611, %v2612
        %v2630 = vld [vmem:[#allocation4] sm:$0xff]
        %v2631 = vld [vmem:[#allocation4 + $0x8] sm:$0xff]
        %v2632 = vld [vmem:[#allocation4 + $0x10] sm:$0xff]
        %v2633 = vld [vmem:[#allocation4 + $0x18] sm:$0xff]
        %v2634 = vld [vmem:[#allocation4 + $0x20] sm:$0xff]
        %v2635 = vld [vmem:[#allocation4 + $0x28] sm:$0xff]
        %v2636 = vld [vmem:[#allocation4 + $0x30] sm:$0xff]
        %v2637 = vld [vmem:[#allocation4 + $0x38] sm:$0xff]
        %v2638 = vld [vmem:[#allocation4 + $0x40] sm:$0xff]
        %v2639 = vld [vmem:[#allocation4 + $0x48] sm:$0xff]
        %v2640 = vld [vmem:[#allocation4 + $0x50] sm:$0xff]
        %v2641 = vld [vmem:[#allocation4 + $0x58] sm:$0xff]
        %v2642 = vld [vmem:[#allocation4 + $0x60] sm:$0xff]
        %v2643 = vld [vmem:[#allocation4 + $0x68] sm:$0xff]
        %v2644 = vld [vmem:[#allocation4 + $0x70] sm:$0xff]
        %v2645 = vld [vmem:[#allocation4 + $0x78] sm:$0xff]
        %v2646 = vld [vmem:[#allocation4 + $0x80] sm:$0xff]
        %v2647 = vld [vmem:[#allocation4 + $0x88] sm:$0xff]
        %v2648 = vld [vmem:[#allocation4 + $0x90] sm:$0xff]
        %v2649 = vld [vmem:[#allocation4 + $0x98] sm:$0xff]
        %v2650 = vld [vmem:[#allocation4 + $0xa0] sm:$0xff]
        %v2651 = vld [vmem:[#allocation4 + $0xa8] sm:$0xff]
        %v2652 = vld [vmem:[#allocation4 + $0xb0] sm:$0xff]
        %v2653 = vld [vmem:[#allocation4 + $0xb8] sm:$0xff]
        %v2654 = vld [vmem:[#allocation4 + $0xc0] sm:$0xff]
        %v2655 = vld [vmem:[#allocation4 + $0xc8] sm:$0xff]
        %v2656 = vld [vmem:[#allocation4 + $0xd0] sm:$0xff]
        %v2657 = vld [vmem:[#allocation4 + $0xd8] sm:$0xff]
        %v2658 = vld [vmem:[#allocation4 + $0xe0] sm:$0xff]
        %v2659 = vld [vmem:[#allocation4 + $0xe8] sm:$0xff]
        %v2660 = vld [vmem:[#allocation4 + $0xf0] sm:$0xff]
        %v2661 = vld [vmem:[#allocation4 + $0xf8] sm:$0xff]
        %s2662 = scalar_lea.vmem %s1, 192
        %v2663 = vld [vmem:[%s2662] sm:$0xf]
        %v2664 = vld [vmem:[%s2662 + $0x4] sm:$0xf]
        %v2665 = vld [vmem:[%s2662 + $0x8] sm:$0xf]
        %v2666 = vld [vmem:[%s2662 + $0xc] sm:$0xf]
        %v2667 = vld [vmem:[%s2662 + $0x10] sm:$0xf]
        %v2668 = vld [vmem:[%s2662 + $0x14] sm:$0xf]
        %v2669 = vld [vmem:[%s2662 + $0x18] sm:$0xf]
        %v2670 = vld [vmem:[%s2662 + $0x1c] sm:$0xf]
        %v2671 = vld [vmem:[%s2662 + $0x20] sm:$0xf]
        %v2672 = vld [vmem:[%s2662 + $0x24] sm:$0xf]
        %v2673 = vld [vmem:[%s2662 + $0x28] sm:$0xf]
        %v2674 = vld [vmem:[%s2662 + $0x2c] sm:$0xf]
        %v2675 = vld [vmem:[%s2662 + $0x30] sm:$0xf]
        %v2676 = vld [vmem:[%s2662 + $0x34] sm:$0xf]
        %v2677 = vld [vmem:[%s2662 + $0x38] sm:$0xf]
        %v2678 = vld [vmem:[%s2662 + $0x3c] sm:$0xf]
        %v2679 = vld [vmem:[%s2662 + $0x40] sm:$0xf]
        %v2680 = vld [vmem:[%s2662 + $0x44] sm:$0xf]
        %v2681 = vld [vmem:[%s2662 + $0x48] sm:$0xf]
        %v2682 = vld [vmem:[%s2662 + $0x4c] sm:$0xf]
        %v2683 = vld [vmem:[%s2662 + $0x50] sm:$0xf]
        %v2684 = vld [vmem:[%s2662 + $0x54] sm:$0xf]
        %v2685 = vld [vmem:[%s2662 + $0x58] sm:$0xf]
        %v2686 = vld [vmem:[%s2662 + $0x5c] sm:$0xf]
        %v2687 = vld [vmem:[%s2662 + $0x60] sm:$0xf]
        %v2688 = vld [vmem:[%s2662 + $0x64] sm:$0xf]
        %v2689 = vld [vmem:[%s2662 + $0x68] sm:$0xf]
        %v2690 = vld [vmem:[%s2662 + $0x6c] sm:$0xf]
        %v2691 = vld [vmem:[%s2662 + $0x70] sm:$0xf]
        %v2692 = vld [vmem:[%s2662 + $0x74] sm:$0xf]
        %v2693 = vld [vmem:[%s2662 + $0x78] sm:$0xf]
        %v2694 = vld [vmem:[%s2662 + $0x7c] sm:$0xf]
        %v2695 = vld [vmem:[%s2662 + $0x80] sm:$0xf]
        %v2696 = vld [vmem:[%s2662 + $0x84] sm:$0xf]
        %v2697 = vld [vmem:[%s2662 + $0x88] sm:$0xf]
        %v2698 = vld [vmem:[%s2662 + $0x8c] sm:$0xf]
        %v2699 = vld [vmem:[%s2662 + $0x90] sm:$0xf]
        %v2700 = vld [vmem:[%s2662 + $0x94] sm:$0xf]
        %v2701 = vld [vmem:[%s2662 + $0x98] sm:$0xf]
        %v2702 = vld [vmem:[%s2662 + $0x9c] sm:$0xf]
        %v2703 = vld [vmem:[%s2662 + $0xa0] sm:$0xf]
        %v2704 = vld [vmem:[%s2662 + $0xa4] sm:$0xf]
        %v2705 = vld [vmem:[%s2662 + $0xa8] sm:$0xf]
        %v2706 = vld [vmem:[%s2662 + $0xac] sm:$0xf]
        %v2707 = vld [vmem:[%s2662 + $0xb0] sm:$0xf]
        %v2708 = vld [vmem:[%s2662 + $0xb4] sm:$0xf]
        %v2709 = vld [vmem:[%s2662 + $0xb8] sm:$0xf]
        %v2710 = vld [vmem:[%s2662 + $0xbc] sm:$0xf]
        %v2759 = vunpack.c.l.b16 %v2663
        %v2760 = vunpack.c.l.b16 %v2664
        %v2761 = vunpack.c.l.b16 %v2665
        %v2762 = vunpack.c.l.b16 %v2666
        %v2763 = vunpack.c.l.b16 %v2667
        %v2764 = vunpack.c.l.b16 %v2668
        %v2765 = vunpack.c.l.b16 %v2669
        %v2766 = vunpack.c.l.b16 %v2670
        %v2767 = vunpack.c.l.b16 %v2671
        %v2768 = vunpack.c.l.b16 %v2672
        %v2769 = vunpack.c.l.b16 %v2673
        %v2770 = vunpack.c.l.b16 %v2674
        %v2771 = vunpack.c.l.b16 %v2675
        %v2772 = vunpack.c.l.b16 %v2676
        %v2773 = vunpack.c.l.b16 %v2677
        %v2774 = vunpack.c.l.b16 %v2678
        %v2775 = vunpack.c.l.b16 %v2679
        %v2776 = vunpack.c.l.b16 %v2680
        %v2777 = vunpack.c.l.b16 %v2681
        %v2778 = vunpack.c.l.b16 %v2682
        %v2779 = vunpack.c.l.b16 %v2683
        %v2780 = vunpack.c.l.b16 %v2684
        %v2781 = vunpack.c.l.b16 %v2685
        %v2782 = vunpack.c.l.b16 %v2686
        %v2783 = vunpack.c.l.b16 %v2687
        %v2784 = vunpack.c.l.b16 %v2688
        %v2785 = vunpack.c.l.b16 %v2689
        %v2786 = vunpack.c.l.b16 %v2690
        %v2787 = vunpack.c.l.b16 %v2691
        %v2788 = vunpack.c.l.b16 %v2692
        %v2789 = vunpack.c.l.b16 %v2693
        %v2790 = vunpack.c.l.b16 %v2694
        %v2791 = vunpack.c.l.b16 %v2695
        %v2792 = vunpack.c.l.b16 %v2696
        %v2793 = vunpack.c.l.b16 %v2697
        %v2794 = vunpack.c.l.b16 %v2698
        %v2795 = vunpack.c.l.b16 %v2699
        %v2796 = vunpack.c.l.b16 %v2700
        %v2797 = vunpack.c.l.b16 %v2701
        %v2798 = vunpack.c.l.b16 %v2702
        %v2799 = vunpack.c.l.b16 %v2703
        %v2800 = vunpack.c.l.b16 %v2704
        %v2801 = vunpack.c.l.b16 %v2705
        %v2802 = vunpack.c.l.b16 %v2706
        %v2803 = vunpack.c.l.b16 %v2707
        %v2804 = vunpack.c.l.b16 %v2708
        %v2805 = vunpack.c.l.b16 %v2709
        %v2806 = vunpack.c.l.b16 %v2710
        %v2807 = vpack.c.b16 %v2760, %v2759
        %v2808 = vpack.c.b16 %v2762, %v2761
        %v2809 = vpack.c.b16 %v2764, %v2763
        %v2810 = vpack.c.b16 %v2766, %v2765
        %v2811 = vpack.c.b16 %v2768, %v2767
        %v2812 = vpack.c.b16 %v2770, %v2769
        %v2813 = vpack.c.b16 %v2772, %v2771
        %v2814 = vpack.c.b16 %v2774, %v2773
        %v2815 = vpack.c.b16 %v2776, %v2775
        %v2816 = vpack.c.b16 %v2778, %v2777
        %v2817 = vpack.c.b16 %v2780, %v2779
        %v2818 = vpack.c.b16 %v2782, %v2781
        %v2819 = vpack.c.b16 %v2784, %v2783
        %v2820 = vpack.c.b16 %v2786, %v2785
        %v2821 = vpack.c.b16 %v2788, %v2787
        %v2822 = vpack.c.b16 %v2790, %v2789
        %v2823 = vpack.c.b16 %v2792, %v2791
        %v2824 = vpack.c.b16 %v2794, %v2793
        %v2825 = vpack.c.b16 %v2796, %v2795
        %v2826 = vpack.c.b16 %v2798, %v2797
        %v2827 = vpack.c.b16 %v2800, %v2799
        %v2828 = vpack.c.b16 %v2802, %v2801
        %v2829 = vpack.c.b16 %v2804, %v2803
        %v2830 = vpack.c.b16 %v2806, %v2805
        %2855 = vmatprep.subr.bf16.mxu0 0
        %2856 = vmatpush1.bf16.msra.mxu0 %v2814
        %2857 = vmatprep.subr.bf16.mxu0 0
        %2858 = vmatpush1.bf16.msra.mxu0 %v2813
        %2859 = vmatprep.subr.bf16.mxu0 0
        %2860 = vmatpush1.bf16.msra.mxu0 %v2812
        %2861 = vmatprep.subr.bf16.mxu0 0
        %2862 = vmatpush1.bf16.msra.mxu0 %v2811
        %2863 = vmatprep.subr.bf16.mxu0 0
        %2864 = vmatpush1.bf16.msra.mxu0 %v2810
        %2865 = vmatprep.subr.bf16.mxu0 0
        %2866 = vmatpush1.bf16.msra.mxu0 %v2809
        %2867 = vmatprep.subr.bf16.mxu0 0
        %2868 = vmatpush1.bf16.msra.mxu0 %v2808
        %2869 = vmatprep.subr.bf16.mxu0 0
        %2870 = vmatpush1.bf16.msra.mxu0 %v2807
        %2871 = vmatprep.subr.bf16.mxu0 0
        %2872 = vmatpush2.bf16.msra.mxu0 %v2822
        %2873 = vmatprep.subr.bf16.mxu0 0
        %2874 = vmatpush2.bf16.msra.mxu0 %v2821
        %2875 = vmatprep.subr.bf16.mxu0 0
        %2876 = vmatpush2.bf16.msra.mxu0 %v2820
        %2877 = vmatprep.subr.bf16.mxu0 0
        %2878 = vmatpush2.bf16.msra.mxu0 %v2819
        %2879 = vmatprep.subr.bf16.mxu0 0
        %2880 = vmatpush2.bf16.msra.mxu0 %v2818
        %2881 = vmatprep.subr.bf16.mxu0 0
        %2882 = vmatpush2.bf16.msra.mxu0 %v2817
        %2883 = vmatprep.subr.bf16.mxu0 0
        %2884 = vmatpush2.bf16.msra.mxu0 %v2816
        %2885 = vmatprep.subr.bf16.mxu0 0
        %2886 = vmatpush2.bf16.msra.mxu0 %v2815
        %2887 = vmatprep.mubr.bf16.mxu0 %v2321
        %2888 = vmatmul.mubr.bf16.gmra.mxu0 %v2230
        %v2889 = vpop.f32.mrf.mxu0
        %v2890 = vadd.f32 0.0, %v2889
        %v2891 = vpop.f32.mrf.mxu0
        %v2892 = vpop.f32.mrf.mxu0
        %v2893 = vadd.f32 0.0, %v2892
        %v2894 = vpop.f32.mrf.mxu0
        %2895 = vmatprep.mubr.bf16.mxu0 %v2333
        %2896 = vmatmul.mubr.bf16.gmra.mxu0 %v2231
        %v2897 = vpop.f32.mrf.mxu0
        %v2898 = vadd.f32 0.0, %v2897
        %v2899 = vpop.f32.mrf.mxu0
        %v2900 = vpop.f32.mrf.mxu0
        %v2901 = vadd.f32 0.0, %v2900
        %v2902 = vpop.f32.mrf.mxu0
        %2903 = vmatprep.mubr.bf16.mxu0 %v2345
        %2904 = vmatmul.mubr.bf16.gmra.mxu0 %v2232
        %v2905 = vpop.f32.mrf.mxu0
        %v2906 = vadd.f32 0.0, %v2905
        %v2907 = vpop.f32.mrf.mxu0
        %v2908 = vpop.f32.mrf.mxu0
        %v2909 = vadd.f32 0.0, %v2908
        %v2910 = vpop.f32.mrf.mxu0
        %2911 = vmatprep.mubr.bf16.mxu0 %v2357
        %2912 = vmatmul.mubr.bf16.gmra.mxu0 %v2233
        %v2913 = vpop.f32.mrf.mxu0
        %v2914 = vadd.f32 0.0, %v2913
        %v2915 = vpop.f32.mrf.mxu0
        %v2916 = vpop.f32.mrf.mxu0
        %v2917 = vadd.f32 0.0, %v2916
        %v2918 = vpop.f32.mrf.mxu0
        %2919 = vmatprep.mubr.bf16.mxu0 %v2369
        %2920 = vmatmul.mubr.bf16.gmra.mxu0 %v2234
        %v2921 = vpop.f32.mrf.mxu0
        %v2922 = vadd.f32 0.0, %v2921
        %v2923 = vpop.f32.mrf.mxu0
        %v2924 = vpop.f32.mrf.mxu0
        %v2925 = vadd.f32 0.0, %v2924
        %v2926 = vpop.f32.mrf.mxu0
        %2927 = vmatprep.mubr.bf16.mxu0 %v2381
        %2928 = vmatmul.mubr.bf16.gmra.mxu0 %v2235
        %v2929 = vpop.f32.mrf.mxu0
        %v2930 = vadd.f32 0.0, %v2929
        %v2931 = vpop.f32.mrf.mxu0
        %v2932 = vpop.f32.mrf.mxu0
        %v2933 = vadd.f32 0.0, %v2932
        %v2934 = vpop.f32.mrf.mxu0
        %2935 = vmatprep.mubr.bf16.mxu0 %v2393
        %2936 = vmatmul.mubr.bf16.gmra.mxu0 %v2236
        %v2937 = vpop.f32.mrf.mxu0
        %v2938 = vadd.f32 0.0, %v2937
        %v2939 = vpop.f32.mrf.mxu0
        %v2940 = vpop.f32.mrf.mxu0
        %v2941 = vadd.f32 0.0, %v2940
        %v2942 = vpop.f32.mrf.mxu0
        %2943 = vmatprep.mubr.bf16.mxu0 %v2405
        %2944 = vmatmul.mubr.bf16.gmra.mxu0 %v2237
        %v2945 = vpop.f32.mrf.mxu0
        %v2946 = vadd.f32 0.0, %v2945
        %v2947 = vpop.f32.mrf.mxu0
        %v2948 = vpop.f32.mrf.mxu0
        %v2949 = vadd.f32 0.0, %v2948
        %v2950 = vpop.f32.mrf.mxu0
        %2951 = vmatprep.mubr.bf16.mxu0 %v2417
        %2952 = vmatmul.mubr.bf16.gmra.mxu0 %v2238
        %v2953 = vpop.f32.mrf.mxu0
        %v2954 = vadd.f32 0.0, %v2953
        %v2955 = vpop.f32.mrf.mxu0
        %v2956 = vpop.f32.mrf.mxu0
        %v2957 = vadd.f32 0.0, %v2956
        %v2958 = vpop.f32.mrf.mxu0
        %2959 = vmatprep.mubr.bf16.mxu0 %v2429
        %2960 = vmatmul.mubr.bf16.gmra.mxu0 %v2239
        %v2961 = vpop.f32.mrf.mxu0
        %v2962 = vadd.f32 0.0, %v2961
        %v2963 = vpop.f32.mrf.mxu0
        %v2964 = vpop.f32.mrf.mxu0
        %v2965 = vadd.f32 0.0, %v2964
        %v2966 = vpop.f32.mrf.mxu0
        %2967 = vmatprep.mubr.bf16.mxu0 %v2441
        %2968 = vmatmul.mubr.bf16.gmra.mxu0 %v2240
        %v2969 = vpop.f32.mrf.mxu0
        %v2970 = vadd.f32 0.0, %v2969
        %v2971 = vpop.f32.mrf.mxu0
        %v2972 = vpop.f32.mrf.mxu0
        %v2973 = vadd.f32 0.0, %v2972
        %v2974 = vpop.f32.mrf.mxu0
        %2975 = vmatprep.mubr.bf16.mxu0 %v2453
        %2976 = vmatmul.mubr.bf16.gmra.mxu0 %v2241
        %v2977 = vpop.f32.mrf.mxu0
        %v2978 = vadd.f32 0.0, %v2977
        %v2979 = vpop.f32.mrf.mxu0
        %v2980 = vpop.f32.mrf.mxu0
        %v2981 = vadd.f32 0.0, %v2980
        %v2982 = vpop.f32.mrf.mxu0
        %2983 = vmatprep.mubr.bf16.mxu0 %v2465
        %2984 = vmatmul.mubr.bf16.gmra.mxu0 %v2242
        %v2985 = vpop.f32.mrf.mxu0
        %v2986 = vadd.f32 0.0, %v2985
        %v2987 = vpop.f32.mrf.mxu0
        %v2988 = vpop.f32.mrf.mxu0
        %v2989 = vadd.f32 0.0, %v2988
        %v2990 = vpop.f32.mrf.mxu0
        %2991 = vmatprep.mubr.bf16.mxu0 %v2477
        %2992 = vmatmul.mubr.bf16.gmra.mxu0 %v2243
        %v2993 = vpop.f32.mrf.mxu0
        %v2994 = vadd.f32 0.0, %v2993
        %v2995 = vpop.f32.mrf.mxu0
        %v2996 = vpop.f32.mrf.mxu0
        %v2997 = vadd.f32 0.0, %v2996
        %v2998 = vpop.f32.mrf.mxu0
        %2999 = vmatprep.mubr.bf16.mxu0 %v2489
        %3000 = vmatmul.mubr.bf16.gmra.mxu0 %v2244
        %v3001 = vpop.f32.mrf.mxu0
        %v3002 = vadd.f32 0.0, %v3001
        %v3003 = vpop.f32.mrf.mxu0
        %v3004 = vpop.f32.mrf.mxu0
        %v3005 = vadd.f32 0.0, %v3004
        %v3006 = vpop.f32.mrf.mxu0
        %3007 = vmatprep.mubr.bf16.mxu0 %v2501
        %3008 = vmatmul.mubr.bf16.gmra.mxu0 %v2245
        %v3009 = vpop.f32.mrf.mxu0
        %v3010 = vadd.f32 0.0, %v3009
        %v3011 = vpop.f32.mrf.mxu0
        %v3012 = vpop.f32.mrf.mxu0
        %v3013 = vadd.f32 0.0, %v3012
        %v3014 = vpop.f32.mrf.mxu0
        %3015 = vdwg.mxu0
        %3016 = vmatprep.subr.bf16.mxu0 0
        %3017 = vmatpush1.bf16.msra.mxu0 %v2830
        %3018 = vmatprep.subr.bf16.mxu0 0
        %3019 = vmatpush1.bf16.msra.mxu0 %v2829
        %3020 = vmatprep.subr.bf16.mxu0 0
        %3021 = vmatpush1.bf16.msra.mxu0 %v2828
        %3022 = vmatprep.subr.bf16.mxu0 0
        %3023 = vmatpush1.bf16.msra.mxu0 %v2827
        %3024 = vmatprep.subr.bf16.mxu0 0
        %3025 = vmatpush1.bf16.msra.mxu0 %v2826
        %3026 = vmatprep.subr.bf16.mxu0 0
        %3027 = vmatpush1.bf16.msra.mxu0 %v2825
        %3028 = vmatprep.subr.bf16.mxu0 0
        %3029 = vmatpush1.bf16.msra.mxu0 %v2824
        %3030 = vmatprep.subr.bf16.mxu0 0
        %3031 = vmatpush1.bf16.msra.mxu0 %v2823
        %3032 = vmatprep.subr.bf16.mxu0 0
        %3033 = vmatpush2.bf16.msra.mxu0 0
        %3034 = vmatprep.subr.bf16.mxu0 0
        %3035 = vmatpush2.bf16.msra.mxu0 0
        %3036 = vmatprep.subr.bf16.mxu0 0
        %3037 = vmatpush2.bf16.msra.mxu0 0
        %3038 = vmatprep.subr.bf16.mxu0 0
        %3039 = vmatpush2.bf16.msra.mxu0 0
        %3040 = vmatprep.subr.bf16.mxu0 0
        %3041 = vmatpush2.bf16.msra.mxu0 0
        %3042 = vmatprep.subr.bf16.mxu0 0
        %3043 = vmatpush2.bf16.msra.mxu0 0
        %3044 = vmatprep.subr.bf16.mxu0 0
        %3045 = vmatpush2.bf16.msra.mxu0 0
        %3046 = vmatprep.subr.bf16.mxu0 0
        %3047 = vmatpush2.bf16.msra.mxu0 0
        %3048 = vmatprep.mubr.bf16.mxu0 0
        %3049 = vmatmul.mubr.bf16.gmra.mxu0 %v2568
        %v3050 = vpop.f32.mrf.mxu0
        %v3051 = vadd.f32 %v2890, %v3050
        %v3052 = vpop.f32.mrf.mxu0
        %v3053 = vpop.f32.mrf.mxu0
        %v3054 = vadd.f32 %v2893, %v3053
        %v3055 = vpop.f32.mrf.mxu0
        %3056 = vmatprep.mubr.bf16.mxu0 0
        %3057 = vmatmul.mubr.bf16.gmra.mxu0 %v2571
        %v3058 = vpop.f32.mrf.mxu0
        %v3059 = vadd.f32 %v2898, %v3058
        %v3060 = vpop.f32.mrf.mxu0
        %v3061 = vpop.f32.mrf.mxu0
        %v3062 = vadd.f32 %v2901, %v3061
        %v3063 = vpop.f32.mrf.mxu0
        %3064 = vmatprep.mubr.bf16.mxu0 0
        %3065 = vmatmul.mubr.bf16.gmra.mxu0 %v2574
        %v3066 = vpop.f32.mrf.mxu0
        %v3067 = vadd.f32 %v2906, %v3066
        %v3068 = vpop.f32.mrf.mxu0
        %v3069 = vpop.f32.mrf.mxu0
        %v3070 = vadd.f32 %v2909, %v3069
        %v3071 = vpop.f32.mrf.mxu0
        %3072 = vmatprep.mubr.bf16.mxu0 0
        %3073 = vmatmul.mubr.bf16.gmra.mxu0 %v2577
        %v3074 = vpop.f32.mrf.mxu0
        %v3075 = vadd.f32 %v2914, %v3074
        %v3076 = vpop.f32.mrf.mxu0
        %v3077 = vpop.f32.mrf.mxu0
        %v3078 = vadd.f32 %v2917, %v3077
        %v3079 = vpop.f32.mrf.mxu0
        %3080 = vmatprep.mubr.bf16.mxu0 0
        %3081 = vmatmul.mubr.bf16.gmra.mxu0 %v2580
        %v3082 = vpop.f32.mrf.mxu0
        %v3083 = vadd.f32 %v2922, %v3082
        %v3084 = vpop.f32.mrf.mxu0
        %v3085 = vpop.f32.mrf.mxu0
        %v3086 = vadd.f32 %v2925, %v3085
        %v3087 = vpop.f32.mrf.mxu0
        %3088 = vmatprep.mubr.bf16.mxu0 0
        %3089 = vmatmul.mubr.bf16.gmra.mxu0 %v2583
        %v3090 = vpop.f32.mrf.mxu0
        %v3091 = vadd.f32 %v2930, %v3090
        %v3092 = vpop.f32.mrf.mxu0
        %v3093 = vpop.f32.mrf.mxu0
        %v3094 = vadd.f32 %v2933, %v3093
        %v3095 = vpop.f32.mrf.mxu0
        %3096 = vmatprep.mubr.bf16.mxu0 0
        %3097 = vmatmul.mubr.bf16.gmra.mxu0 %v2586
        %v3098 = vpop.f32.mrf.mxu0
        %v3099 = vadd.f32 %v2938, %v3098
        %v3100 = vpop.f32.mrf.mxu0
        %v3101 = vpop.f32.mrf.mxu0
        %v3102 = vadd.f32 %v2941, %v3101
        %v3103 = vpop.f32.mrf.mxu0
        %3104 = vmatprep.mubr.bf16.mxu0 0
        %3105 = vmatmul.mubr.bf16.gmra.mxu0 %v2589
        %v3106 = vpop.f32.mrf.mxu0
        %v3107 = vadd.f32 %v2946, %v3106
        %v3108 = vpop.f32.mrf.mxu0
        %v3109 = vpop.f32.mrf.mxu0
        %v3110 = vadd.f32 %v2949, %v3109
        %v3111 = vpop.f32.mrf.mxu0
        %3112 = vmatprep.mubr.bf16.mxu0 0
        %3113 = vmatmul.mubr.bf16.gmra.mxu0 %v2592
        %v3114 = vpop.f32.mrf.mxu0
        %v3115 = vadd.f32 %v2954, %v3114
        %v3116 = vpop.f32.mrf.mxu0
        %v3117 = vpop.f32.mrf.mxu0
        %v3118 = vadd.f32 %v2957, %v3117
        %v3119 = vpop.f32.mrf.mxu0
        %3120 = vmatprep.mubr.bf16.mxu0 0
        %3121 = vmatmul.mubr.bf16.gmra.mxu0 %v2595
        %v3122 = vpop.f32.mrf.mxu0
        %v3123 = vadd.f32 %v2962, %v3122
        %v3124 = vpop.f32.mrf.mxu0
        %v3125 = vpop.f32.mrf.mxu0
        %v3126 = vadd.f32 %v2965, %v3125
        %v3127 = vpop.f32.mrf.mxu0
        %3128 = vmatprep.mubr.bf16.mxu0 0
        %3129 = vmatmul.mubr.bf16.gmra.mxu0 %v2598
        %v3130 = vpop.f32.mrf.mxu0
        %v3131 = vadd.f32 %v2970, %v3130
        %v3132 = vpop.f32.mrf.mxu0
        %v3133 = vpop.f32.mrf.mxu0
        %v3134 = vadd.f32 %v2973, %v3133
        %v3135 = vpop.f32.mrf.mxu0
        %3136 = vmatprep.mubr.bf16.mxu0 0
        %3137 = vmatmul.mubr.bf16.gmra.mxu0 %v2601
        %v3138 = vpop.f32.mrf.mxu0
        %v3139 = vadd.f32 %v2978, %v3138
        %v3140 = vpop.f32.mrf.mxu0
        %v3141 = vpop.f32.mrf.mxu0
        %v3142 = vadd.f32 %v2981, %v3141
        %v3143 = vpop.f32.mrf.mxu0
        %3144 = vmatprep.mubr.bf16.mxu0 0
        %3145 = vmatmul.mubr.bf16.gmra.mxu0 %v2604
        %v3146 = vpop.f32.mrf.mxu0
        %v3147 = vadd.f32 %v2986, %v3146
        %v3148 = vpop.f32.mrf.mxu0
        %v3149 = vpop.f32.mrf.mxu0
        %v3150 = vadd.f32 %v2989, %v3149
        %v3151 = vpop.f32.mrf.mxu0
        %3152 = vmatprep.mubr.bf16.mxu0 0
        %3153 = vmatmul.mubr.bf16.gmra.mxu0 %v2607
        %v3154 = vpop.f32.mrf.mxu0
        %v3155 = vadd.f32 %v2994, %v3154
        %v3156 = vpop.f32.mrf.mxu0
        %v3157 = vpop.f32.mrf.mxu0
        %v3158 = vadd.f32 %v2997, %v3157
        %v3159 = vpop.f32.mrf.mxu0
        %3160 = vmatprep.mubr.bf16.mxu0 0
        %3161 = vmatmul.mubr.bf16.gmra.mxu0 %v2610
        %v3162 = vpop.f32.mrf.mxu0
        %v3163 = vadd.f32 %v3002, %v3162
        %v3164 = vpop.f32.mrf.mxu0
        %v3165 = vpop.f32.mrf.mxu0
        %v3166 = vadd.f32 %v3005, %v3165
        %v3167 = vpop.f32.mrf.mxu0
        %3168 = vmatprep.mubr.bf16.mxu0 0
        %3169 = vmatmul.mubr.bf16.gmra.mxu0 %v2613
        %v3170 = vpop.f32.mrf.mxu0
        %v3171 = vadd.f32 %v3010, %v3170
        %v3172 = vpop.f32.mrf.mxu0
        %v3173 = vpop.f32.mrf.mxu0
        %v3174 = vadd.f32 %v3013, %v3173
        %v3175 = vpop.f32.mrf.mxu0
        %3176 = vdwg.mxu0
        %v3177 = vadd.f32 %v2630, %v3051
        %v3178 = vadd.f32 %v2631, %v3054
        %v3179 = vadd.f32 %v2632, %v3059
        %v3180 = vadd.f32 %v2633, %v3062
        %v3181 = vadd.f32 %v2634, %v3067
        %v3182 = vadd.f32 %v2635, %v3070
        %v3183 = vadd.f32 %v2636, %v3075
        %v3184 = vadd.f32 %v2637, %v3078
        %v3185 = vadd.f32 %v2638, %v3083
        %v3186 = vadd.f32 %v2639, %v3086
        %v3187 = vadd.f32 %v2640, %v3091
        %v3188 = vadd.f32 %v2641, %v3094
        %v3189 = vadd.f32 %v2642, %v3099
        %v3190 = vadd.f32 %v2643, %v3102
        %v3191 = vadd.f32 %v2644, %v3107
        %v3192 = vadd.f32 %v2645, %v3110
        %v3193 = vadd.f32 %v2646, %v3115
        %v3194 = vadd.f32 %v2647, %v3118
        %v3195 = vadd.f32 %v2648, %v3123
        %v3196 = vadd.f32 %v2649, %v3126
        %v3197 = vadd.f32 %v2650, %v3131
        %v3198 = vadd.f32 %v2651, %v3134
        %v3199 = vadd.f32 %v2652, %v3139
        %v3200 = vadd.f32 %v2653, %v3142
        %v3201 = vadd.f32 %v2654, %v3147
        %v3202 = vadd.f32 %v2655, %v3150
        %v3203 = vadd.f32 %v2656, %v3155
        %v3204 = vadd.f32 %v2657, %v3158
        %v3205 = vadd.f32 %v2658, %v3163
        %v3206 = vadd.f32 %v2659, %v3166
        %v3207 = vadd.f32 %v2660, %v3171
        %v3208 = vadd.f32 %v2661, %v3174
        %3209 = vst [vmem:[#allocation4] sm:$0xff] %v3177
        %3210 = vst [vmem:[#allocation4 + $0x8] sm:$0xff] %v3178
        %3211 = vst [vmem:[#allocation4 + $0x10] sm:$0xff] %v3179
        %3212 = vst [vmem:[#allocation4 + $0x18] sm:$0xff] %v3180
        %3213 = vst [vmem:[#allocation4 + $0x20] sm:$0xff] %v3181
        %3214 = vst [vmem:[#allocation4 + $0x28] sm:$0xff] %v3182
        %3215 = vst [vmem:[#allocation4 + $0x30] sm:$0xff] %v3183
        %3216 = vst [vmem:[#allocation4 + $0x38] sm:$0xff] %v3184
        %3217 = vst [vmem:[#allocation4 + $0x40] sm:$0xff] %v3185
        %3218 = vst [vmem:[#allocation4 + $0x48] sm:$0xff] %v3186
        %3219 = vst [vmem:[#allocation4 + $0x50] sm:$0xff] %v3187
        %3220 = vst [vmem:[#allocation4 + $0x58] sm:$0xff] %v3188
        %3221 = vst [vmem:[#allocation4 + $0x60] sm:$0xff] %v3189
        %3222 = vst [vmem:[#allocation4 + $0x68] sm:$0xff] %v3190
        %3223 = vst [vmem:[#allocation4 + $0x70] sm:$0xff] %v3191
        %3224 = vst [vmem:[#allocation4 + $0x78] sm:$0xff] %v3192
        %3225 = vst [vmem:[#allocation4 + $0x80] sm:$0xff] %v3193
        %3226 = vst [vmem:[#allocation4 + $0x88] sm:$0xff] %v3194
        %3227 = vst [vmem:[#allocation4 + $0x90] sm:$0xff] %v3195
        %3228 = vst [vmem:[#allocation4 + $0x98] sm:$0xff] %v3196
        %3229 = vst [vmem:[#allocation4 + $0xa0] sm:$0xff] %v3197
        %3230 = vst [vmem:[#allocation4 + $0xa8] sm:$0xff] %v3198
        %3231 = vst [vmem:[#allocation4 + $0xb0] sm:$0xff] %v3199
        %3232 = vst [vmem:[#allocation4 + $0xb8] sm:$0xff] %v3200
        %3233 = vst [vmem:[#allocation4 + $0xc0] sm:$0xff] %v3201
        %3234 = vst [vmem:[#allocation4 + $0xc8] sm:$0xff] %v3202
        %3235 = vst [vmem:[#allocation4 + $0xd0] sm:$0xff] %v3203
        %3236 = vst [vmem:[#allocation4 + $0xd8] sm:$0xff] %v3204
        %3237 = vst [vmem:[#allocation4 + $0xe0] sm:$0xff] %v3205
        %3238 = vst [vmem:[#allocation4 + $0xe8] sm:$0xff] %v3206
        %3239 = vst [vmem:[#allocation4 + $0xf0] sm:$0xff] %v3207
        %3240 = vst [vmem:[#allocation4 + $0xf8] sm:$0xff] %v3208
        %s3241 = scalar_lea.vmem [#allocation2], 24
        %v3242 = vld [vmem:[%s3241] sm:$0xf]
        %v3243 = vld [vmem:[%s3241 + $0x4] sm:$0xf]
        %v3244 = vld [vmem:[%s3241 + $0xc] sm:$0xf]
        %v3245 = vld [vmem:[%s3241 + $0x10] sm:$0xf]
        %v3246 = vld [vmem:[%s3241 + $0x18] sm:$0xf]
        %v3247 = vld [vmem:[%s3241 + $0x1c] sm:$0xf]
        %v3248 = vld [vmem:[%s3241 + $0x24] sm:$0xf]
        %v3249 = vld [vmem:[%s3241 + $0x28] sm:$0xf]
        %v3250 = vld [vmem:[%s3241 + $0x30] sm:$0xf]
        %v3251 = vld [vmem:[%s3241 + $0x34] sm:$0xf]
        %v3252 = vld [vmem:[%s3241 + $0x3c] sm:$0xf]
        %v3253 = vld [vmem:[%s3241 + $0x40] sm:$0xf]
        %v3254 = vld [vmem:[%s3241 + $0x48] sm:$0xf]
        %v3255 = vld [vmem:[%s3241 + $0x4c] sm:$0xf]
        %v3256 = vld [vmem:[%s3241 + $0x54] sm:$0xf]
        %v3257 = vld [vmem:[%s3241 + $0x58] sm:$0xf]
        %v3258 = vld [vmem:[%s3241 + $0x60] sm:$0xf]
        %v3259 = vld [vmem:[%s3241 + $0x64] sm:$0xf]
        %v3260 = vld [vmem:[%s3241 + $0x6c] sm:$0xf]
        %v3261 = vld [vmem:[%s3241 + $0x70] sm:$0xf]
        %v3262 = vld [vmem:[%s3241 + $0x78] sm:$0xf]
        %v3263 = vld [vmem:[%s3241 + $0x7c] sm:$0xf]
        %v3264 = vld [vmem:[%s3241 + $0x84] sm:$0xf]
        %v3265 = vld [vmem:[%s3241 + $0x88] sm:$0xf]
        %v3266 = vld [vmem:[%s3241 + $0x90] sm:$0xf]
        %v3267 = vld [vmem:[%s3241 + $0x94] sm:$0xf]
        %v3268 = vld [vmem:[%s3241 + $0x9c] sm:$0xf]
        %v3269 = vld [vmem:[%s3241 + $0xa0] sm:$0xf]
        %v3270 = vld [vmem:[%s3241 + $0xa8] sm:$0xf]
        %v3271 = vld [vmem:[%s3241 + $0xac] sm:$0xf]
        %v3272 = vld [vmem:[%s3241 + $0xb4] sm:$0xf]
        %v3273 = vld [vmem:[%s3241 + $0xb8] sm:$0xf]
        %v3274 = vld [vmem:[%s3241 + $0x8] sm:$0x1]
        %v3275 = vld [vmem:[%s3241 + $0x14] sm:$0x1]
        %v3276 = vld [vmem:[%s3241 + $0x20] sm:$0x1]
        %v3277 = vld [vmem:[%s3241 + $0x2c] sm:$0x1]
        %v3278 = vld [vmem:[%s3241 + $0x38] sm:$0x1]
        %v3279 = vld [vmem:[%s3241 + $0x44] sm:$0x1]
        %v3280 = vld [vmem:[%s3241 + $0x50] sm:$0x1]
        %v3281 = vld [vmem:[%s3241 + $0x5c] sm:$0x1]
        %v3282 = vld [vmem:[%s3241 + $0x68] sm:$0x1]
        %v3283 = vld [vmem:[%s3241 + $0x74] sm:$0x1]
        %v3284 = vld [vmem:[%s3241 + $0x80] sm:$0x1]
        %v3285 = vld [vmem:[%s3241 + $0x8c] sm:$0x1]
        %v3286 = vld [vmem:[%s3241 + $0x98] sm:$0x1]
        %v3287 = vld [vmem:[%s3241 + $0xa4] sm:$0x1]
        %v3288 = vld [vmem:[%s3241 + $0xb0] sm:$0x1]
        %v3289 = vld [vmem:[%s3241 + $0xbc] sm:$0x1]
        %v3290 = vld [vmem:[%s3241] sm:$0xe]
        %v3291 = vld [vmem:[%s3241 + $0xc] sm:$0xe]
        %v3292 = vld [vmem:[%s3241 + $0x18] sm:$0xe]
        %v3293 = vld [vmem:[%s3241 + $0x24] sm:$0xe]
        %v3294 = vld [vmem:[%s3241 + $0x30] sm:$0xe]
        %v3295 = vld [vmem:[%s3241 + $0x3c] sm:$0xe]
        %v3296 = vld [vmem:[%s3241 + $0x48] sm:$0xe]
        %v3297 = vld [vmem:[%s3241 + $0x54] sm:$0xe]
        %v3298 = vld [vmem:[%s3241 + $0x60] sm:$0xe]
        %v3299 = vld [vmem:[%s3241 + $0x6c] sm:$0xe]
        %v3300 = vld [vmem:[%s3241 + $0x78] sm:$0xe]
        %v3301 = vld [vmem:[%s3241 + $0x84] sm:$0xe]
        %v3302 = vld [vmem:[%s3241 + $0x90] sm:$0xe]
        %v3303 = vld [vmem:[%s3241 + $0x9c] sm:$0xe]
        %v3304 = vld [vmem:[%s3241 + $0xa8] sm:$0xe]
        %v3305 = vld [vmem:[%s3241 + $0xb4] sm:$0xe]
        %v3338 = vunpack.c.l.b16 %v3242
        %v3339 = vunpack.c.l.b16 %v3243
        %v3340 = vunpack.c.l.b16 %v3244
        %v3341 = vunpack.c.l.b16 %v3245
        %v3342 = vunpack.c.l.b16 %v3246
        %v3343 = vunpack.c.l.b16 %v3247
        %v3344 = vunpack.c.l.b16 %v3248
        %v3345 = vunpack.c.l.b16 %v3249
        %v3346 = vunpack.c.l.b16 %v3250
        %v3347 = vunpack.c.l.b16 %v3251
        %v3348 = vunpack.c.l.b16 %v3252
        %v3349 = vunpack.c.l.b16 %v3253
        %v3350 = vunpack.c.l.b16 %v3254
        %v3351 = vunpack.c.l.b16 %v3255
        %v3352 = vunpack.c.l.b16 %v3256
        %v3353 = vunpack.c.l.b16 %v3257
        %v3354 = vunpack.c.l.b16 %v3258
        %v3355 = vunpack.c.l.b16 %v3259
        %v3356 = vunpack.c.l.b16 %v3260
        %v3357 = vunpack.c.l.b16 %v3261
        %v3358 = vunpack.c.l.b16 %v3262
        %v3359 = vunpack.c.l.b16 %v3263
        %v3360 = vunpack.c.l.b16 %v3264
        %v3361 = vunpack.c.l.b16 %v3265
        %v3362 = vunpack.c.l.b16 %v3266
        %v3363 = vunpack.c.l.b16 %v3267
        %v3364 = vunpack.c.l.b16 %v3268
        %v3365 = vunpack.c.l.b16 %v3269
        %v3366 = vunpack.c.l.b16 %v3270
        %v3367 = vunpack.c.l.b16 %v3271
        %v3368 = vunpack.c.l.b16 %v3272
        %v3369 = vunpack.c.l.b16 %v3273
        %v3370 = vpack.c.b16 %v3339, %v3338
        %v3371 = vpack.c.b16 %v3341, %v3340
        %v3372 = vpack.c.b16 %v3343, %v3342
        %v3373 = vpack.c.b16 %v3345, %v3344
        %v3374 = vpack.c.b16 %v3347, %v3346
        %v3375 = vpack.c.b16 %v3349, %v3348
        %v3376 = vpack.c.b16 %v3351, %v3350
        %v3377 = vpack.c.b16 %v3353, %v3352
        %v3378 = vpack.c.b16 %v3355, %v3354
        %v3379 = vpack.c.b16 %v3357, %v3356
        %v3380 = vpack.c.b16 %v3359, %v3358
        %v3381 = vpack.c.b16 %v3361, %v3360
        %v3382 = vpack.c.b16 %v3363, %v3362
        %v3383 = vpack.c.b16 %v3365, %v3364
        %v3384 = vpack.c.b16 %v3367, %v3366
        %v3385 = vpack.c.b16 %v3369, %v3368
        %v3418 = vunpack.c.l.b16 %v3274
        %v3419 = vunpack.c.l.b16 %v3275
        %v3420 = vunpack.c.l.b16 %v3276
        %v3421 = vunpack.c.l.b16 %v3277
        %v3422 = vunpack.c.l.b16 %v3278
        %v3423 = vunpack.c.l.b16 %v3279
        %v3424 = vunpack.c.l.b16 %v3280
        %v3425 = vunpack.c.l.b16 %v3281
        %v3426 = vunpack.c.l.b16 %v3282
        %v3427 = vunpack.c.l.b16 %v3283
        %v3428 = vunpack.c.l.b16 %v3284
        %v3429 = vunpack.c.l.b16 %v3285
        %v3430 = vunpack.c.l.b16 %v3286
        %v3431 = vunpack.c.l.b16 %v3287
        %v3432 = vunpack.c.l.b16 %v3288
        %v3433 = vunpack.c.l.b16 %v3289
        %v3434 = vpack.c.b16 %v3418, %v3418
        %v3435 = vpack.c.b16 %v3419, %v3419
        %v3436 = vpack.c.b16 %v3420, %v3420
        %v3437 = vpack.c.b16 %v3421, %v3421
        %v3438 = vpack.c.b16 %v3422, %v3422
        %v3439 = vpack.c.b16 %v3423, %v3423
        %v3440 = vpack.c.b16 %v3424, %v3424
        %v3441 = vpack.c.b16 %v3425, %v3425
        %v3442 = vpack.c.b16 %v3426, %v3426
        %v3443 = vpack.c.b16 %v3427, %v3427
        %v3444 = vpack.c.b16 %v3428, %v3428
        %v3445 = vpack.c.b16 %v3429, %v3429
        %v3446 = vpack.c.b16 %v3430, %v3430
        %v3447 = vpack.c.b16 %v3431, %v3431
        %v3448 = vpack.c.b16 %v3432, %v3432
        %v3449 = vpack.c.b16 %v3433, %v3433
        %v3451 = vshrl.u32 %v3370, 16
        %v3453 = vshll.u32 %v3370, 16
        %v3455 = vrot.slane %v3453, 1
        %v3456 = vor.u32 %v3451, %v3455
        %v3458 = vshll.u32 %v3434, 16
        %v3460 = vrot.slane %v3458, 1
        %v3461 = vsel %vm1170, %v3456, %v3460
        %v3463 = vshrl.u32 %v3371, 16
        %v3465 = vshll.u32 %v3371, 16
        %v3467 = vrot.slane %v3465, 1
        %v3468 = vor.u32 %v3463, %v3467
        %v3470 = vshll.u32 %v3435, 16
        %v3472 = vrot.slane %v3470, 1
        %v3473 = vsel %vm1170, %v3468, %v3472
        %v3475 = vshrl.u32 %v3372, 16
        %v3477 = vshll.u32 %v3372, 16
        %v3479 = vrot.slane %v3477, 1
        %v3480 = vor.u32 %v3475, %v3479
        %v3482 = vshll.u32 %v3436, 16
        %v3484 = vrot.slane %v3482, 1
        %v3485 = vsel %vm1170, %v3480, %v3484
        %v3487 = vshrl.u32 %v3373, 16
        %v3489 = vshll.u32 %v3373, 16
        %v3491 = vrot.slane %v3489, 1
        %v3492 = vor.u32 %v3487, %v3491
        %v3494 = vshll.u32 %v3437, 16
        %v3496 = vrot.slane %v3494, 1
        %v3497 = vsel %vm1170, %v3492, %v3496
        %v3499 = vshrl.u32 %v3374, 16
        %v3501 = vshll.u32 %v3374, 16
        %v3503 = vrot.slane %v3501, 1
        %v3504 = vor.u32 %v3499, %v3503
        %v3506 = vshll.u32 %v3438, 16
        %v3508 = vrot.slane %v3506, 1
        %v3509 = vsel %vm1170, %v3504, %v3508
        %v3511 = vshrl.u32 %v3375, 16
        %v3513 = vshll.u32 %v3375, 16
        %v3515 = vrot.slane %v3513, 1
        %v3516 = vor.u32 %v3511, %v3515
        %v3518 = vshll.u32 %v3439, 16
        %v3520 = vrot.slane %v3518, 1
        %v3521 = vsel %vm1170, %v3516, %v3520
        %v3523 = vshrl.u32 %v3376, 16
        %v3525 = vshll.u32 %v3376, 16
        %v3527 = vrot.slane %v3525, 1
        %v3528 = vor.u32 %v3523, %v3527
        %v3530 = vshll.u32 %v3440, 16
        %v3532 = vrot.slane %v3530, 1
        %v3533 = vsel %vm1170, %v3528, %v3532
        %v3535 = vshrl.u32 %v3377, 16
        %v3537 = vshll.u32 %v3377, 16
        %v3539 = vrot.slane %v3537, 1
        %v3540 = vor.u32 %v3535, %v3539
        %v3542 = vshll.u32 %v3441, 16
        %v3544 = vrot.slane %v3542, 1
        %v3545 = vsel %vm1170, %v3540, %v3544
        %v3547 = vshrl.u32 %v3378, 16
        %v3549 = vshll.u32 %v3378, 16
        %v3551 = vrot.slane %v3549, 1
        %v3552 = vor.u32 %v3547, %v3551
        %v3554 = vshll.u32 %v3442, 16
        %v3556 = vrot.slane %v3554, 1
        %v3557 = vsel %vm1170, %v3552, %v3556
        %v3559 = vshrl.u32 %v3379, 16
        %v3561 = vshll.u32 %v3379, 16
        %v3563 = vrot.slane %v3561, 1
        %v3564 = vor.u32 %v3559, %v3563
        %v3566 = vshll.u32 %v3443, 16
        %v3568 = vrot.slane %v3566, 1
        %v3569 = vsel %vm1170, %v3564, %v3568
        %v3571 = vshrl.u32 %v3380, 16
        %v3573 = vshll.u32 %v3380, 16
        %v3575 = vrot.slane %v3573, 1
        %v3576 = vor.u32 %v3571, %v3575
        %v3578 = vshll.u32 %v3444, 16
        %v3580 = vrot.slane %v3578, 1
        %v3581 = vsel %vm1170, %v3576, %v3580
        %v3583 = vshrl.u32 %v3381, 16
        %v3585 = vshll.u32 %v3381, 16
        %v3587 = vrot.slane %v3585, 1
        %v3588 = vor.u32 %v3583, %v3587
        %v3590 = vshll.u32 %v3445, 16
        %v3592 = vrot.slane %v3590, 1
        %v3593 = vsel %vm1170, %v3588, %v3592
        %v3595 = vshrl.u32 %v3382, 16
        %v3597 = vshll.u32 %v3382, 16
        %v3599 = vrot.slane %v3597, 1
        %v3600 = vor.u32 %v3595, %v3599
        %v3602 = vshll.u32 %v3446, 16
        %v3604 = vrot.slane %v3602, 1
        %v3605 = vsel %vm1170, %v3600, %v3604
        %v3607 = vshrl.u32 %v3383, 16
        %v3609 = vshll.u32 %v3383, 16
        %v3611 = vrot.slane %v3609, 1
        %v3612 = vor.u32 %v3607, %v3611
        %v3614 = vshll.u32 %v3447, 16
        %v3616 = vrot.slane %v3614, 1
        %v3617 = vsel %vm1170, %v3612, %v3616
        %v3619 = vshrl.u32 %v3384, 16
        %v3621 = vshll.u32 %v3384, 16
        %v3623 = vrot.slane %v3621, 1
        %v3624 = vor.u32 %v3619, %v3623
        %v3626 = vshll.u32 %v3448, 16
        %v3628 = vrot.slane %v3626, 1
        %v3629 = vsel %vm1170, %v3624, %v3628
        %v3631 = vshrl.u32 %v3385, 16
        %v3633 = vshll.u32 %v3385, 16
        %v3635 = vrot.slane %v3633, 1
        %v3636 = vor.u32 %v3631, %v3635
        %v3638 = vshll.u32 %v3449, 16
        %v3640 = vrot.slane %v3638, 1
        %v3641 = vsel %vm1170, %v3636, %v3640
        %v3674 = vunpack.c.l.b16 %v3290
        %v3675 = vunpack.c.l.b16 %v3291
        %v3676 = vunpack.c.l.b16 %v3292
        %v3677 = vunpack.c.l.b16 %v3293
        %v3678 = vunpack.c.l.b16 %v3294
        %v3679 = vunpack.c.l.b16 %v3295
        %v3680 = vunpack.c.l.b16 %v3296
        %v3681 = vunpack.c.l.b16 %v3297
        %v3682 = vunpack.c.l.b16 %v3298
        %v3683 = vunpack.c.l.b16 %v3299
        %v3684 = vunpack.c.l.b16 %v3300
        %v3685 = vunpack.c.l.b16 %v3301
        %v3686 = vunpack.c.l.b16 %v3302
        %v3687 = vunpack.c.l.b16 %v3303
        %v3688 = vunpack.c.l.b16 %v3304
        %v3689 = vunpack.c.l.b16 %v3305
        %v3690 = vpack.c.b16 %v3339, %v3674
        %v3691 = vpack.c.b16 %v3341, %v3675
        %v3692 = vpack.c.b16 %v3343, %v3676
        %v3693 = vpack.c.b16 %v3345, %v3677
        %v3694 = vpack.c.b16 %v3347, %v3678
        %v3695 = vpack.c.b16 %v3349, %v3679
        %v3696 = vpack.c.b16 %v3351, %v3680
        %v3697 = vpack.c.b16 %v3353, %v3681
        %v3698 = vpack.c.b16 %v3355, %v3682
        %v3699 = vpack.c.b16 %v3357, %v3683
        %v3700 = vpack.c.b16 %v3359, %v3684
        %v3701 = vpack.c.b16 %v3361, %v3685
        %v3702 = vpack.c.b16 %v3363, %v3686
        %v3703 = vpack.c.b16 %v3365, %v3687
        %v3704 = vpack.c.b16 %v3367, %v3688
        %v3705 = vpack.c.b16 %v3369, %v3689
        %v3706 = vrot.slane %v3690, 1
        %v3707 = vrot.slane %v3434, 1
        %v3708 = vsel %vm1427, %v3706, %v3707
        %v3709 = vrot.slane %v3691, 1
        %v3710 = vrot.slane %v3435, 1
        %v3711 = vsel %vm1427, %v3709, %v3710
        %v3712 = vrot.slane %v3692, 1
        %v3713 = vrot.slane %v3436, 1
        %v3714 = vsel %vm1427, %v3712, %v3713
        %v3715 = vrot.slane %v3693, 1
        %v3716 = vrot.slane %v3437, 1
        %v3717 = vsel %vm1427, %v3715, %v3716
        %v3718 = vrot.slane %v3694, 1
        %v3719 = vrot.slane %v3438, 1
        %v3720 = vsel %vm1427, %v3718, %v3719
        %v3721 = vrot.slane %v3695, 1
        %v3722 = vrot.slane %v3439, 1
        %v3723 = vsel %vm1427, %v3721, %v3722
        %v3724 = vrot.slane %v3696, 1
        %v3725 = vrot.slane %v3440, 1
        %v3726 = vsel %vm1427, %v3724, %v3725
        %v3727 = vrot.slane %v3697, 1
        %v3728 = vrot.slane %v3441, 1
        %v3729 = vsel %vm1427, %v3727, %v3728
        %v3730 = vrot.slane %v3698, 1
        %v3731 = vrot.slane %v3442, 1
        %v3732 = vsel %vm1427, %v3730, %v3731
        %v3733 = vrot.slane %v3699, 1
        %v3734 = vrot.slane %v3443, 1
        %v3735 = vsel %vm1427, %v3733, %v3734
        %v3736 = vrot.slane %v3700, 1
        %v3737 = vrot.slane %v3444, 1
        %v3738 = vsel %vm1427, %v3736, %v3737
        %v3739 = vrot.slane %v3701, 1
        %v3740 = vrot.slane %v3445, 1
        %v3741 = vsel %vm1427, %v3739, %v3740
        %v3742 = vrot.slane %v3702, 1
        %v3743 = vrot.slane %v3446, 1
        %v3744 = vsel %vm1427, %v3742, %v3743
        %v3745 = vrot.slane %v3703, 1
        %v3746 = vrot.slane %v3447, 1
        %v3747 = vsel %vm1427, %v3745, %v3746
        %v3748 = vrot.slane %v3704, 1
        %v3749 = vrot.slane %v3448, 1
        %v3750 = vsel %vm1427, %v3748, %v3749
        %v3751 = vrot.slane %v3705, 1
        %v3752 = vrot.slane %v3449, 1
        %v3753 = vsel %vm1427, %v3751, %v3752
        %v3770 = vld [vmem:[#allocation4] sm:$0xff]
        %v3771 = vld [vmem:[#allocation4 + $0x8] sm:$0xff]
        %v3772 = vld [vmem:[#allocation4 + $0x10] sm:$0xff]
        %v3773 = vld [vmem:[#allocation4 + $0x18] sm:$0xff]
        %v3774 = vld [vmem:[#allocation4 + $0x20] sm:$0xff]
        %v3775 = vld [vmem:[#allocation4 + $0x28] sm:$0xff]
        %v3776 = vld [vmem:[#allocation4 + $0x30] sm:$0xff]
        %v3777 = vld [vmem:[#allocation4 + $0x38] sm:$0xff]
        %v3778 = vld [vmem:[#allocation4 + $0x40] sm:$0xff]
        %v3779 = vld [vmem:[#allocation4 + $0x48] sm:$0xff]
        %v3780 = vld [vmem:[#allocation4 + $0x50] sm:$0xff]
        %v3781 = vld [vmem:[#allocation4 + $0x58] sm:$0xff]
        %v3782 = vld [vmem:[#allocation4 + $0x60] sm:$0xff]
        %v3783 = vld [vmem:[#allocation4 + $0x68] sm:$0xff]
        %v3784 = vld [vmem:[#allocation4 + $0x70] sm:$0xff]
        %v3785 = vld [vmem:[#allocation4 + $0x78] sm:$0xff]
        %v3786 = vld [vmem:[#allocation4 + $0x80] sm:$0xff]
        %v3787 = vld [vmem:[#allocation4 + $0x88] sm:$0xff]
        %v3788 = vld [vmem:[#allocation4 + $0x90] sm:$0xff]
        %v3789 = vld [vmem:[#allocation4 + $0x98] sm:$0xff]
        %v3790 = vld [vmem:[#allocation4 + $0xa0] sm:$0xff]
        %v3791 = vld [vmem:[#allocation4 + $0xa8] sm:$0xff]
        %v3792 = vld [vmem:[#allocation4 + $0xb0] sm:$0xff]
        %v3793 = vld [vmem:[#allocation4 + $0xb8] sm:$0xff]
        %v3794 = vld [vmem:[#allocation4 + $0xc0] sm:$0xff]
        %v3795 = vld [vmem:[#allocation4 + $0xc8] sm:$0xff]
        %v3796 = vld [vmem:[#allocation4 + $0xd0] sm:$0xff]
        %v3797 = vld [vmem:[#allocation4 + $0xd8] sm:$0xff]
        %v3798 = vld [vmem:[#allocation4 + $0xe0] sm:$0xff]
        %v3799 = vld [vmem:[#allocation4 + $0xe8] sm:$0xff]
        %v3800 = vld [vmem:[#allocation4 + $0xf0] sm:$0xff]
        %v3801 = vld [vmem:[#allocation4 + $0xf8] sm:$0xff]
        %s3802 = scalar_lea.vmem %s1, 384
        %v3803 = vld [vmem:[%s3802] sm:$0xf]
        %v3804 = vld [vmem:[%s3802 + $0x4] sm:$0xf]
        %v3805 = vld [vmem:[%s3802 + $0x8] sm:$0xf]
        %v3806 = vld [vmem:[%s3802 + $0xc] sm:$0xf]
        %v3807 = vld [vmem:[%s3802 + $0x10] sm:$0xf]
        %v3808 = vld [vmem:[%s3802 + $0x14] sm:$0xf]
        %v3809 = vld [vmem:[%s3802 + $0x18] sm:$0xf]
        %v3810 = vld [vmem:[%s3802 + $0x1c] sm:$0xf]
        %v3811 = vld [vmem:[%s3802 + $0x20] sm:$0xf]
        %v3812 = vld [vmem:[%s3802 + $0x24] sm:$0xf]
        %v3813 = vld [vmem:[%s3802 + $0x28] sm:$0xf]
        %v3814 = vld [vmem:[%s3802 + $0x2c] sm:$0xf]
        %v3815 = vld [vmem:[%s3802 + $0x30] sm:$0xf]
        %v3816 = vld [vmem:[%s3802 + $0x34] sm:$0xf]
        %v3817 = vld [vmem:[%s3802 + $0x38] sm:$0xf]
        %v3818 = vld [vmem:[%s3802 + $0x3c] sm:$0xf]
        %v3819 = vld [vmem:[%s3802 + $0x40] sm:$0xf]
        %v3820 = vld [vmem:[%s3802 + $0x44] sm:$0xf]
        %v3821 = vld [vmem:[%s3802 + $0x48] sm:$0xf]
        %v3822 = vld [vmem:[%s3802 + $0x4c] sm:$0xf]
        %v3823 = vld [vmem:[%s3802 + $0x50] sm:$0xf]
        %v3824 = vld [vmem:[%s3802 + $0x54] sm:$0xf]
        %v3825 = vld [vmem:[%s3802 + $0x58] sm:$0xf]
        %v3826 = vld [vmem:[%s3802 + $0x5c] sm:$0xf]
        %v3827 = vld [vmem:[%s3802 + $0x60] sm:$0xf]
        %v3828 = vld [vmem:[%s3802 + $0x64] sm:$0xf]
        %v3829 = vld [vmem:[%s3802 + $0x68] sm:$0xf]
        %v3830 = vld [vmem:[%s3802 + $0x6c] sm:$0xf]
        %v3831 = vld [vmem:[%s3802 + $0x70] sm:$0xf]
        %v3832 = vld [vmem:[%s3802 + $0x74] sm:$0xf]
        %v3833 = vld [vmem:[%s3802 + $0x78] sm:$0xf]
        %v3834 = vld [vmem:[%s3802 + $0x7c] sm:$0xf]
        %v3835 = vld [vmem:[%s3802 + $0x80] sm:$0xf]
        %v3836 = vld [vmem:[%s3802 + $0x84] sm:$0xf]
        %v3837 = vld [vmem:[%s3802 + $0x88] sm:$0xf]
        %v3838 = vld [vmem:[%s3802 + $0x8c] sm:$0xf]
        %v3839 = vld [vmem:[%s3802 + $0x90] sm:$0xf]
        %v3840 = vld [vmem:[%s3802 + $0x94] sm:$0xf]
        %v3841 = vld [vmem:[%s3802 + $0x98] sm:$0xf]
        %v3842 = vld [vmem:[%s3802 + $0x9c] sm:$0xf]
        %v3843 = vld [vmem:[%s3802 + $0xa0] sm:$0xf]
        %v3844 = vld [vmem:[%s3802 + $0xa4] sm:$0xf]
        %v3845 = vld [vmem:[%s3802 + $0xa8] sm:$0xf]
        %v3846 = vld [vmem:[%s3802 + $0xac] sm:$0xf]
        %v3847 = vld [vmem:[%s3802 + $0xb0] sm:$0xf]
        %v3848 = vld [vmem:[%s3802 + $0xb4] sm:$0xf]
        %v3849 = vld [vmem:[%s3802 + $0xb8] sm:$0xf]
        %v3850 = vld [vmem:[%s3802 + $0xbc] sm:$0xf]
        %v3899 = vunpack.c.l.b16 %v3803
        %v3900 = vunpack.c.l.b16 %v3804
        %v3901 = vunpack.c.l.b16 %v3805
        %v3902 = vunpack.c.l.b16 %v3806
        %v3903 = vunpack.c.l.b16 %v3807
        %v3904 = vunpack.c.l.b16 %v3808
        %v3905 = vunpack.c.l.b16 %v3809
        %v3906 = vunpack.c.l.b16 %v3810
        %v3907 = vunpack.c.l.b16 %v3811
        %v3908 = vunpack.c.l.b16 %v3812
        %v3909 = vunpack.c.l.b16 %v3813
        %v3910 = vunpack.c.l.b16 %v3814
        %v3911 = vunpack.c.l.b16 %v3815
        %v3912 = vunpack.c.l.b16 %v3816
        %v3913 = vunpack.c.l.b16 %v3817
        %v3914 = vunpack.c.l.b16 %v3818
        %v3915 = vunpack.c.l.b16 %v3819
        %v3916 = vunpack.c.l.b16 %v3820
        %v3917 = vunpack.c.l.b16 %v3821
        %v3918 = vunpack.c.l.b16 %v3822
        %v3919 = vunpack.c.l.b16 %v3823
        %v3920 = vunpack.c.l.b16 %v3824
        %v3921 = vunpack.c.l.b16 %v3825
        %v3922 = vunpack.c.l.b16 %v3826
        %v3923 = vunpack.c.l.b16 %v3827
        %v3924 = vunpack.c.l.b16 %v3828
        %v3925 = vunpack.c.l.b16 %v3829
        %v3926 = vunpack.c.l.b16 %v3830
        %v3927 = vunpack.c.l.b16 %v3831
        %v3928 = vunpack.c.l.b16 %v3832
        %v3929 = vunpack.c.l.b16 %v3833
        %v3930 = vunpack.c.l.b16 %v3834
        %v3931 = vunpack.c.l.b16 %v3835
        %v3932 = vunpack.c.l.b16 %v3836
        %v3933 = vunpack.c.l.b16 %v3837
        %v3934 = vunpack.c.l.b16 %v3838
        %v3935 = vunpack.c.l.b16 %v3839
        %v3936 = vunpack.c.l.b16 %v3840
        %v3937 = vunpack.c.l.b16 %v3841
        %v3938 = vunpack.c.l.b16 %v3842
        %v3939 = vunpack.c.l.b16 %v3843
        %v3940 = vunpack.c.l.b16 %v3844
        %v3941 = vunpack.c.l.b16 %v3845
        %v3942 = vunpack.c.l.b16 %v3846
        %v3943 = vunpack.c.l.b16 %v3847
        %v3944 = vunpack.c.l.b16 %v3848
        %v3945 = vunpack.c.l.b16 %v3849
        %v3946 = vunpack.c.l.b16 %v3850
        %v3947 = vpack.c.b16 %v3900, %v3899
        %v3948 = vpack.c.b16 %v3902, %v3901
        %v3949 = vpack.c.b16 %v3904, %v3903
        %v3950 = vpack.c.b16 %v3906, %v3905
        %v3951 = vpack.c.b16 %v3908, %v3907
        %v3952 = vpack.c.b16 %v3910, %v3909
        %v3953 = vpack.c.b16 %v3912, %v3911
        %v3954 = vpack.c.b16 %v3914, %v3913
        %v3955 = vpack.c.b16 %v3916, %v3915
        %v3956 = vpack.c.b16 %v3918, %v3917
        %v3957 = vpack.c.b16 %v3920, %v3919
        %v3958 = vpack.c.b16 %v3922, %v3921
        %v3959 = vpack.c.b16 %v3924, %v3923
        %v3960 = vpack.c.b16 %v3926, %v3925
        %v3961 = vpack.c.b16 %v3928, %v3927
        %v3962 = vpack.c.b16 %v3930, %v3929
        %v3963 = vpack.c.b16 %v3932, %v3931
        %v3964 = vpack.c.b16 %v3934, %v3933
        %v3965 = vpack.c.b16 %v3936, %v3935
        %v3966 = vpack.c.b16 %v3938, %v3937
        %v3967 = vpack.c.b16 %v3940, %v3939
        %v3968 = vpack.c.b16 %v3942, %v3941
        %v3969 = vpack.c.b16 %v3944, %v3943
        %v3970 = vpack.c.b16 %v3946, %v3945
        %3995 = vmatprep.subr.bf16.mxu0 0
        %3996 = vmatpush1.bf16.msra.mxu0 %v3954
        %3997 = vmatprep.subr.bf16.mxu0 0
        %3998 = vmatpush1.bf16.msra.mxu0 %v3953
        %3999 = vmatprep.subr.bf16.mxu0 0
        %4000 = vmatpush1.bf16.msra.mxu0 %v3952
        %4001 = vmatprep.subr.bf16.mxu0 0
        %4002 = vmatpush1.bf16.msra.mxu0 %v3951
        %4003 = vmatprep.subr.bf16.mxu0 0
        %4004 = vmatpush1.bf16.msra.mxu0 %v3950
        %4005 = vmatprep.subr.bf16.mxu0 0
        %4006 = vmatpush1.bf16.msra.mxu0 %v3949
        %4007 = vmatprep.subr.bf16.mxu0 0
        %4008 = vmatpush1.bf16.msra.mxu0 %v3948
        %4009 = vmatprep.subr.bf16.mxu0 0
        %4010 = vmatpush1.bf16.msra.mxu0 %v3947
        %4011 = vmatprep.subr.bf16.mxu0 0
        %4012 = vmatpush2.bf16.msra.mxu0 %v3962
        %4013 = vmatprep.subr.bf16.mxu0 0
        %4014 = vmatpush2.bf16.msra.mxu0 %v3961
        %4015 = vmatprep.subr.bf16.mxu0 0
        %4016 = vmatpush2.bf16.msra.mxu0 %v3960
        %4017 = vmatprep.subr.bf16.mxu0 0
        %4018 = vmatpush2.bf16.msra.mxu0 %v3959
        %4019 = vmatprep.subr.bf16.mxu0 0
        %4020 = vmatpush2.bf16.msra.mxu0 %v3958
        %4021 = vmatprep.subr.bf16.mxu0 0
        %4022 = vmatpush2.bf16.msra.mxu0 %v3957
        %4023 = vmatprep.subr.bf16.mxu0 0
        %4024 = vmatpush2.bf16.msra.mxu0 %v3956
        %4025 = vmatprep.subr.bf16.mxu0 0
        %4026 = vmatpush2.bf16.msra.mxu0 %v3955
        %4027 = vmatprep.mubr.bf16.mxu0 %v3461
        %4028 = vmatmul.mubr.bf16.gmra.mxu0 %v3370
        %v4029 = vpop.f32.mrf.mxu0
        %v4030 = vadd.f32 0.0, %v4029
        %v4031 = vpop.f32.mrf.mxu0
        %v4032 = vpop.f32.mrf.mxu0
        %v4033 = vadd.f32 0.0, %v4032
        %v4034 = vpop.f32.mrf.mxu0
        %4035 = vmatprep.mubr.bf16.mxu0 %v3473
        %4036 = vmatmul.mubr.bf16.gmra.mxu0 %v3371
        %v4037 = vpop.f32.mrf.mxu0
        %v4038 = vadd.f32 0.0, %v4037
        %v4039 = vpop.f32.mrf.mxu0
        %v4040 = vpop.f32.mrf.mxu0
        %v4041 = vadd.f32 0.0, %v4040
        %v4042 = vpop.f32.mrf.mxu0
        %4043 = vmatprep.mubr.bf16.mxu0 %v3485
        %4044 = vmatmul.mubr.bf16.gmra.mxu0 %v3372
        %v4045 = vpop.f32.mrf.mxu0
        %v4046 = vadd.f32 0.0, %v4045
        %v4047 = vpop.f32.mrf.mxu0
        %v4048 = vpop.f32.mrf.mxu0
        %v4049 = vadd.f32 0.0, %v4048
        %v4050 = vpop.f32.mrf.mxu0
        %4051 = vmatprep.mubr.bf16.mxu0 %v3497
        %4052 = vmatmul.mubr.bf16.gmra.mxu0 %v3373
        %v4053 = vpop.f32.mrf.mxu0
        %v4054 = vadd.f32 0.0, %v4053
        %v4055 = vpop.f32.mrf.mxu0
        %v4056 = vpop.f32.mrf.mxu0
        %v4057 = vadd.f32 0.0, %v4056
        %v4058 = vpop.f32.mrf.mxu0
        %4059 = vmatprep.mubr.bf16.mxu0 %v3509
        %4060 = vmatmul.mubr.bf16.gmra.mxu0 %v3374
        %v4061 = vpop.f32.mrf.mxu0
        %v4062 = vadd.f32 0.0, %v4061
        %v4063 = vpop.f32.mrf.mxu0
        %v4064 = vpop.f32.mrf.mxu0
        %v4065 = vadd.f32 0.0, %v4064
        %v4066 = vpop.f32.mrf.mxu0
        %4067 = vmatprep.mubr.bf16.mxu0 %v3521
        %4068 = vmatmul.mubr.bf16.gmra.mxu0 %v3375
        %v4069 = vpop.f32.mrf.mxu0
        %v4070 = vadd.f32 0.0, %v4069
        %v4071 = vpop.f32.mrf.mxu0
        %v4072 = vpop.f32.mrf.mxu0
        %v4073 = vadd.f32 0.0, %v4072
        %v4074 = vpop.f32.mrf.mxu0
        %4075 = vmatprep.mubr.bf16.mxu0 %v3533
        %4076 = vmatmul.mubr.bf16.gmra.mxu0 %v3376
        %v4077 = vpop.f32.mrf.mxu0
        %v4078 = vadd.f32 0.0, %v4077
        %v4079 = vpop.f32.mrf.mxu0
        %v4080 = vpop.f32.mrf.mxu0
        %v4081 = vadd.f32 0.0, %v4080
        %v4082 = vpop.f32.mrf.mxu0
        %4083 = vmatprep.mubr.bf16.mxu0 %v3545
        %4084 = vmatmul.mubr.bf16.gmra.mxu0 %v3377
        %v4085 = vpop.f32.mrf.mxu0
        %v4086 = vadd.f32 0.0, %v4085
        %v4087 = vpop.f32.mrf.mxu0
        %v4088 = vpop.f32.mrf.mxu0
        %v4089 = vadd.f32 0.0, %v4088
        %v4090 = vpop.f32.mrf.mxu0
        %4091 = vmatprep.mubr.bf16.mxu0 %v3557
        %4092 = vmatmul.mubr.bf16.gmra.mxu0 %v3378
        %v4093 = vpop.f32.mrf.mxu0
        %v4094 = vadd.f32 0.0, %v4093
        %v4095 = vpop.f32.mrf.mxu0
        %v4096 = vpop.f32.mrf.mxu0
        %v4097 = vadd.f32 0.0, %v4096
        %v4098 = vpop.f32.mrf.mxu0
        %4099 = vmatprep.mubr.bf16.mxu0 %v3569
        %4100 = vmatmul.mubr.bf16.gmra.mxu0 %v3379
        %v4101 = vpop.f32.mrf.mxu0
        %v4102 = vadd.f32 0.0, %v4101
        %v4103 = vpop.f32.mrf.mxu0
        %v4104 = vpop.f32.mrf.mxu0
        %v4105 = vadd.f32 0.0, %v4104
        %v4106 = vpop.f32.mrf.mxu0
        %4107 = vmatprep.mubr.bf16.mxu0 %v3581
        %4108 = vmatmul.mubr.bf16.gmra.mxu0 %v3380
        %v4109 = vpop.f32.mrf.mxu0
        %v4110 = vadd.f32 0.0, %v4109
        %v4111 = vpop.f32.mrf.mxu0
        %v4112 = vpop.f32.mrf.mxu0
        %v4113 = vadd.f32 0.0, %v4112
        %v4114 = vpop.f32.mrf.mxu0
        %4115 = vmatprep.mubr.bf16.mxu0 %v3593
        %4116 = vmatmul.mubr.bf16.gmra.mxu0 %v3381
        %v4117 = vpop.f32.mrf.mxu0
        %v4118 = vadd.f32 0.0, %v4117
        %v4119 = vpop.f32.mrf.mxu0
        %v4120 = vpop.f32.mrf.mxu0
        %v4121 = vadd.f32 0.0, %v4120
        %v4122 = vpop.f32.mrf.mxu0
        %4123 = vmatprep.mubr.bf16.mxu0 %v3605
        %4124 = vmatmul.mubr.bf16.gmra.mxu0 %v3382
        %v4125 = vpop.f32.mrf.mxu0
        %v4126 = vadd.f32 0.0, %v4125
        %v4127 = vpop.f32.mrf.mxu0
        %v4128 = vpop.f32.mrf.mxu0
        %v4129 = vadd.f32 0.0, %v4128
        %v4130 = vpop.f32.mrf.mxu0
        %4131 = vmatprep.mubr.bf16.mxu0 %v3617
        %4132 = vmatmul.mubr.bf16.gmra.mxu0 %v3383
        %v4133 = vpop.f32.mrf.mxu0
        %v4134 = vadd.f32 0.0, %v4133
        %v4135 = vpop.f32.mrf.mxu0
        %v4136 = vpop.f32.mrf.mxu0
        %v4137 = vadd.f32 0.0, %v4136
        %v4138 = vpop.f32.mrf.mxu0
        %4139 = vmatprep.mubr.bf16.mxu0 %v3629
        %4140 = vmatmul.mubr.bf16.gmra.mxu0 %v3384
        %v4141 = vpop.f32.mrf.mxu0
        %v4142 = vadd.f32 0.0, %v4141
        %v4143 = vpop.f32.mrf.mxu0
        %v4144 = vpop.f32.mrf.mxu0
        %v4145 = vadd.f32 0.0, %v4144
        %v4146 = vpop.f32.mrf.mxu0
        %4147 = vmatprep.mubr.bf16.mxu0 %v3641
        %4148 = vmatmul.mubr.bf16.gmra.mxu0 %v3385
        %v4149 = vpop.f32.mrf.mxu0
        %v4150 = vadd.f32 0.0, %v4149
        %v4151 = vpop.f32.mrf.mxu0
        %v4152 = vpop.f32.mrf.mxu0
        %v4153 = vadd.f32 0.0, %v4152
        %v4154 = vpop.f32.mrf.mxu0
        %4155 = vdwg.mxu0
        %4156 = vmatprep.subr.bf16.mxu0 0
        %4157 = vmatpush1.bf16.msra.mxu0 %v3970
        %4158 = vmatprep.subr.bf16.mxu0 0
        %4159 = vmatpush1.bf16.msra.mxu0 %v3969
        %4160 = vmatprep.subr.bf16.mxu0 0
        %4161 = vmatpush1.bf16.msra.mxu0 %v3968
        %4162 = vmatprep.subr.bf16.mxu0 0
        %4163 = vmatpush1.bf16.msra.mxu0 %v3967
        %4164 = vmatprep.subr.bf16.mxu0 0
        %4165 = vmatpush1.bf16.msra.mxu0 %v3966
        %4166 = vmatprep.subr.bf16.mxu0 0
        %4167 = vmatpush1.bf16.msra.mxu0 %v3965
        %4168 = vmatprep.subr.bf16.mxu0 0
        %4169 = vmatpush1.bf16.msra.mxu0 %v3964
        %4170 = vmatprep.subr.bf16.mxu0 0
        %4171 = vmatpush1.bf16.msra.mxu0 %v3963
        %4172 = vmatprep.subr.bf16.mxu0 0
        %4173 = vmatpush2.bf16.msra.mxu0 0
        %4174 = vmatprep.subr.bf16.mxu0 0
        %4175 = vmatpush2.bf16.msra.mxu0 0
        %4176 = vmatprep.subr.bf16.mxu0 0
        %4177 = vmatpush2.bf16.msra.mxu0 0
        %4178 = vmatprep.subr.bf16.mxu0 0
        %4179 = vmatpush2.bf16.msra.mxu0 0
        %4180 = vmatprep.subr.bf16.mxu0 0
        %4181 = vmatpush2.bf16.msra.mxu0 0
        %4182 = vmatprep.subr.bf16.mxu0 0
        %4183 = vmatpush2.bf16.msra.mxu0 0
        %4184 = vmatprep.subr.bf16.mxu0 0
        %4185 = vmatpush2.bf16.msra.mxu0 0
        %4186 = vmatprep.subr.bf16.mxu0 0
        %4187 = vmatpush2.bf16.msra.mxu0 0
        %4188 = vmatprep.mubr.bf16.mxu0 0
        %4189 = vmatmul.mubr.bf16.gmra.mxu0 %v3708
        %v4190 = vpop.f32.mrf.mxu0
        %v4191 = vadd.f32 %v4030, %v4190
        %v4192 = vpop.f32.mrf.mxu0
        %v4193 = vpop.f32.mrf.mxu0
        %v4194 = vadd.f32 %v4033, %v4193
        %v4195 = vpop.f32.mrf.mxu0
        %4196 = vmatprep.mubr.bf16.mxu0 0
        %4197 = vmatmul.mubr.bf16.gmra.mxu0 %v3711
        %v4198 = vpop.f32.mrf.mxu0
        %v4199 = vadd.f32 %v4038, %v4198
        %v4200 = vpop.f32.mrf.mxu0
        %v4201 = vpop.f32.mrf.mxu0
        %v4202 = vadd.f32 %v4041, %v4201
        %v4203 = vpop.f32.mrf.mxu0
        %4204 = vmatprep.mubr.bf16.mxu0 0
        %4205 = vmatmul.mubr.bf16.gmra.mxu0 %v3714
        %v4206 = vpop.f32.mrf.mxu0
        %v4207 = vadd.f32 %v4046, %v4206
        %v4208 = vpop.f32.mrf.mxu0
        %v4209 = vpop.f32.mrf.mxu0
        %v4210 = vadd.f32 %v4049, %v4209
        %v4211 = vpop.f32.mrf.mxu0
        %4212 = vmatprep.mubr.bf16.mxu0 0
        %4213 = vmatmul.mubr.bf16.gmra.mxu0 %v3717
        %v4214 = vpop.f32.mrf.mxu0
        %v4215 = vadd.f32 %v4054, %v4214
        %v4216 = vpop.f32.mrf.mxu0
        %v4217 = vpop.f32.mrf.mxu0
        %v4218 = vadd.f32 %v4057, %v4217
        %v4219 = vpop.f32.mrf.mxu0
        %4220 = vmatprep.mubr.bf16.mxu0 0
        %4221 = vmatmul.mubr.bf16.gmra.mxu0 %v3720
        %v4222 = vpop.f32.mrf.mxu0
        %v4223 = vadd.f32 %v4062, %v4222
        %v4224 = vpop.f32.mrf.mxu0
        %v4225 = vpop.f32.mrf.mxu0
        %v4226 = vadd.f32 %v4065, %v4225
        %v4227 = vpop.f32.mrf.mxu0
        %4228 = vmatprep.mubr.bf16.mxu0 0
        %4229 = vmatmul.mubr.bf16.gmra.mxu0 %v3723
        %v4230 = vpop.f32.mrf.mxu0
        %v4231 = vadd.f32 %v4070, %v4230
        %v4232 = vpop.f32.mrf.mxu0
        %v4233 = vpop.f32.mrf.mxu0
        %v4234 = vadd.f32 %v4073, %v4233
        %v4235 = vpop.f32.mrf.mxu0
        %4236 = vmatprep.mubr.bf16.mxu0 0
        %4237 = vmatmul.mubr.bf16.gmra.mxu0 %v3726
        %v4238 = vpop.f32.mrf.mxu0
        %v4239 = vadd.f32 %v4078, %v4238
        %v4240 = vpop.f32.mrf.mxu0
        %v4241 = vpop.f32.mrf.mxu0
        %v4242 = vadd.f32 %v4081, %v4241
        %v4243 = vpop.f32.mrf.mxu0
        %4244 = vmatprep.mubr.bf16.mxu0 0
        %4245 = vmatmul.mubr.bf16.gmra.mxu0 %v3729
        %v4246 = vpop.f32.mrf.mxu0
        %v4247 = vadd.f32 %v4086, %v4246
        %v4248 = vpop.f32.mrf.mxu0
        %v4249 = vpop.f32.mrf.mxu0
        %v4250 = vadd.f32 %v4089, %v4249
        %v4251 = vpop.f32.mrf.mxu0
        %4252 = vmatprep.mubr.bf16.mxu0 0
        %4253 = vmatmul.mubr.bf16.gmra.mxu0 %v3732
        %v4254 = vpop.f32.mrf.mxu0
        %v4255 = vadd.f32 %v4094, %v4254
        %v4256 = vpop.f32.mrf.mxu0
        %v4257 = vpop.f32.mrf.mxu0
        %v4258 = vadd.f32 %v4097, %v4257
        %v4259 = vpop.f32.mrf.mxu0
        %4260 = vmatprep.mubr.bf16.mxu0 0
        %4261 = vmatmul.mubr.bf16.gmra.mxu0 %v3735
        %v4262 = vpop.f32.mrf.mxu0
        %v4263 = vadd.f32 %v4102, %v4262
        %v4264 = vpop.f32.mrf.mxu0
        %v4265 = vpop.f32.mrf.mxu0
        %v4266 = vadd.f32 %v4105, %v4265
        %v4267 = vpop.f32.mrf.mxu0
        %4268 = vmatprep.mubr.bf16.mxu0 0
        %4269 = vmatmul.mubr.bf16.gmra.mxu0 %v3738
        %v4270 = vpop.f32.mrf.mxu0
        %v4271 = vadd.f32 %v4110, %v4270
        %v4272 = vpop.f32.mrf.mxu0
        %v4273 = vpop.f32.mrf.mxu0
        %v4274 = vadd.f32 %v4113, %v4273
        %v4275 = vpop.f32.mrf.mxu0
        %4276 = vmatprep.mubr.bf16.mxu0 0
        %4277 = vmatmul.mubr.bf16.gmra.mxu0 %v3741
        %v4278 = vpop.f32.mrf.mxu0
        %v4279 = vadd.f32 %v4118, %v4278
        %v4280 = vpop.f32.mrf.mxu0
        %v4281 = vpop.f32.mrf.mxu0
        %v4282 = vadd.f32 %v4121, %v4281
        %v4283 = vpop.f32.mrf.mxu0
        %4284 = vmatprep.mubr.bf16.mxu0 0
        %4285 = vmatmul.mubr.bf16.gmra.mxu0 %v3744
        %v4286 = vpop.f32.mrf.mxu0
        %v4287 = vadd.f32 %v4126, %v4286
        %v4288 = vpop.f32.mrf.mxu0
        %v4289 = vpop.f32.mrf.mxu0
        %v4290 = vadd.f32 %v4129, %v4289
        %v4291 = vpop.f32.mrf.mxu0
        %4292 = vmatprep.mubr.bf16.mxu0 0
        %4293 = vmatmul.mubr.bf16.gmra.mxu0 %v3747
        %v4294 = vpop.f32.mrf.mxu0
        %v4295 = vadd.f32 %v4134, %v4294
        %v4296 = vpop.f32.mrf.mxu0
        %v4297 = vpop.f32.mrf.mxu0
        %v4298 = vadd.f32 %v4137, %v4297
        %v4299 = vpop.f32.mrf.mxu0
        %4300 = vmatprep.mubr.bf16.mxu0 0
        %4301 = vmatmul.mubr.bf16.gmra.mxu0 %v3750
        %v4302 = vpop.f32.mrf.mxu0
        %v4303 = vadd.f32 %v4142, %v4302
        %v4304 = vpop.f32.mrf.mxu0
        %v4305 = vpop.f32.mrf.mxu0
        %v4306 = vadd.f32 %v4145, %v4305
        %v4307 = vpop.f32.mrf.mxu0
        %4308 = vmatprep.mubr.bf16.mxu0 0
        %4309 = vmatmul.mubr.bf16.gmra.mxu0 %v3753
        %v4310 = vpop.f32.mrf.mxu0
        %v4311 = vadd.f32 %v4150, %v4310
        %v4312 = vpop.f32.mrf.mxu0
        %v4313 = vpop.f32.mrf.mxu0
        %v4314 = vadd.f32 %v4153, %v4313
        %v4315 = vpop.f32.mrf.mxu0
        %4316 = vdwg.mxu0
        %v4317 = vadd.f32 %v3770, %v4191
        %v4318 = vadd.f32 %v3771, %v4194
        %v4319 = vadd.f32 %v3772, %v4199
        %v4320 = vadd.f32 %v3773, %v4202
        %v4321 = vadd.f32 %v3774, %v4207
        %v4322 = vadd.f32 %v3775, %v4210
        %v4323 = vadd.f32 %v3776, %v4215
        %v4324 = vadd.f32 %v3777, %v4218
        %v4325 = vadd.f32 %v3778, %v4223
        %v4326 = vadd.f32 %v3779, %v4226
        %v4327 = vadd.f32 %v3780, %v4231
        %v4328 = vadd.f32 %v3781, %v4234
        %v4329 = vadd.f32 %v3782, %v4239
        %v4330 = vadd.f32 %v3783, %v4242
        %v4331 = vadd.f32 %v3784, %v4247
        %v4332 = vadd.f32 %v3785, %v4250
        %v4333 = vadd.f32 %v3786, %v4255
        %v4334 = vadd.f32 %v3787, %v4258
        %v4335 = vadd.f32 %v3788, %v4263
        %v4336 = vadd.f32 %v3789, %v4266
        %v4337 = vadd.f32 %v3790, %v4271
        %v4338 = vadd.f32 %v3791, %v4274
        %v4339 = vadd.f32 %v3792, %v4279
        %v4340 = vadd.f32 %v3793, %v4282
        %v4341 = vadd.f32 %v3794, %v4287
        %v4342 = vadd.f32 %v3795, %v4290
        %v4343 = vadd.f32 %v3796, %v4295
        %v4344 = vadd.f32 %v3797, %v4298
        %v4345 = vadd.f32 %v3798, %v4303
        %v4346 = vadd.f32 %v3799, %v4306
        %v4347 = vadd.f32 %v3800, %v4311
        %v4348 = vadd.f32 %v3801, %v4314
        %4349 = vst [vmem:[#allocation4] sm:$0xff] %v4317
        %4350 = vst [vmem:[#allocation4 + $0x8] sm:$0xff] %v4318
        %4351 = vst [vmem:[#allocation4 + $0x10] sm:$0xff] %v4319
        %4352 = vst [vmem:[#allocation4 + $0x18] sm:$0xff] %v4320
        %4353 = vst [vmem:[#allocation4 + $0x20] sm:$0xff] %v4321
        %4354 = vst [vmem:[#allocation4 + $0x28] sm:$0xff] %v4322
        %4355 = vst [vmem:[#allocation4 + $0x30] sm:$0xff] %v4323
        %4356 = vst [vmem:[#allocation4 + $0x38] sm:$0xff] %v4324
        %4357 = vst [vmem:[#allocation4 + $0x40] sm:$0xff] %v4325
        %4358 = vst [vmem:[#allocation4 + $0x48] sm:$0xff] %v4326
        %4359 = vst [vmem:[#allocation4 + $0x50] sm:$0xff] %v4327
        %4360 = vst [vmem:[#allocation4 + $0x58] sm:$0xff] %v4328
        %4361 = vst [vmem:[#allocation4 + $0x60] sm:$0xff] %v4329
        %4362 = vst [vmem:[#allocation4 + $0x68] sm:$0xff] %v4330
        %4363 = vst [vmem:[#allocation4 + $0x70] sm:$0xff] %v4331
        %4364 = vst [vmem:[#allocation4 + $0x78] sm:$0xff] %v4332
        %4365 = vst [vmem:[#allocation4 + $0x80] sm:$0xff] %v4333
        %4366 = vst [vmem:[#allocation4 + $0x88] sm:$0xff] %v4334
        %4367 = vst [vmem:[#allocation4 + $0x90] sm:$0xff] %v4335
        %4368 = vst [vmem:[#allocation4 + $0x98] sm:$0xff] %v4336
        %4369 = vst [vmem:[#allocation4 + $0xa0] sm:$0xff] %v4337
        %4370 = vst [vmem:[#allocation4 + $0xa8] sm:$0xff] %v4338
        %4371 = vst [vmem:[#allocation4 + $0xb0] sm:$0xff] %v4339
        %4372 = vst [vmem:[#allocation4 + $0xb8] sm:$0xff] %v4340
        %4373 = vst [vmem:[#allocation4 + $0xc0] sm:$0xff] %v4341
        %4374 = vst [vmem:[#allocation4 + $0xc8] sm:$0xff] %v4342
        %4375 = vst [vmem:[#allocation4 + $0xd0] sm:$0xff] %v4343
        %4376 = vst [vmem:[#allocation4 + $0xd8] sm:$0xff] %v4344
        %4377 = vst [vmem:[#allocation4 + $0xe0] sm:$0xff] %v4345
        %4378 = vst [vmem:[#allocation4 + $0xe8] sm:$0xff] %v4346
        %4379 = vst [vmem:[#allocation4 + $0xf0] sm:$0xff] %v4347
        %4380 = vst [vmem:[#allocation4 + $0xf8] sm:$0xff] %v4348
        %v4381 = vld [vmem:[#allocation4] sm:$0xff]
        %v4382 = vld [vmem:[#allocation4 + $0x8] sm:$0xff]
        %v4383 = vld [vmem:[#allocation4 + $0x10] sm:$0xff]
        %v4384 = vld [vmem:[#allocation4 + $0x18] sm:$0xff]
        %v4385 = vld [vmem:[#allocation4 + $0x20] sm:$0xff]
        %v4386 = vld [vmem:[#allocation4 + $0x28] sm:$0xff]
        %v4387 = vld [vmem:[#allocation4 + $0x30] sm:$0xff]
        %v4388 = vld [vmem:[#allocation4 + $0x38] sm:$0xff]
        %v4389 = vld [vmem:[#allocation4 + $0x40] sm:$0xff]
        %v4390 = vld [vmem:[#allocation4 + $0x48] sm:$0xff]
        %v4391 = vld [vmem:[#allocation4 + $0x50] sm:$0xff]
        %v4392 = vld [vmem:[#allocation4 + $0x58] sm:$0xff]
        %v4393 = vld [vmem:[#allocation4 + $0x60] sm:$0xff]
        %v4394 = vld [vmem:[#allocation4 + $0x68] sm:$0xff]
        %v4395 = vld [vmem:[#allocation4 + $0x70] sm:$0xff]
        %v4396 = vld [vmem:[#allocation4 + $0x78] sm:$0xff]
        %v4397 = vld [vmem:[#allocation4 + $0x80] sm:$0xff]
        %v4398 = vld [vmem:[#allocation4 + $0x88] sm:$0xff]
        %v4399 = vld [vmem:[#allocation4 + $0x90] sm:$0xff]
        %v4400 = vld [vmem:[#allocation4 + $0x98] sm:$0xff]
        %v4401 = vld [vmem:[#allocation4 + $0xa0] sm:$0xff]
        %v4402 = vld [vmem:[#allocation4 + $0xa8] sm:$0xff]
        %v4403 = vld [vmem:[#allocation4 + $0xb0] sm:$0xff]
        %v4404 = vld [vmem:[#allocation4 + $0xb8] sm:$0xff]
        %v4405 = vld [vmem:[#allocation4 + $0xc0] sm:$0xff]
        %v4406 = vld [vmem:[#allocation4 + $0xc8] sm:$0xff]
        %v4407 = vld [vmem:[#allocation4 + $0xd0] sm:$0xff]
        %v4408 = vld [vmem:[#allocation4 + $0xd8] sm:$0xff]
        %v4409 = vld [vmem:[#allocation4 + $0xe0] sm:$0xff]
        %v4410 = vld [vmem:[#allocation4 + $0xe8] sm:$0xff]
        %v4411 = vld [vmem:[#allocation4 + $0xf0] sm:$0xff]
        %v4412 = vld [vmem:[#allocation4 + $0xf8] sm:$0xff]
        %v4413 = vld [vmem:[%s2] sm:$0x1]
        %v4415 = vlaneseq
        %v4416 = vshrl.u32 %v4415, 7
        %v4417 = vsub.s32 0, %v4416
        %v4418 = vrot.slane %v4413, %v4417
        %v4420 = vadd.f32 %v4381, %v4418
        %v4421 = vadd.f32 %v4382, %v4418
        %v4422 = vadd.f32 %v4383, %v4418
        %v4423 = vadd.f32 %v4384, %v4418
        %v4424 = vadd.f32 %v4385, %v4418
        %v4425 = vadd.f32 %v4386, %v4418
        %v4426 = vadd.f32 %v4387, %v4418
        %v4427 = vadd.f32 %v4388, %v4418
        %v4428 = vadd.f32 %v4389, %v4418
        %v4429 = vadd.f32 %v4390, %v4418
        %v4430 = vadd.f32 %v4391, %v4418
        %v4431 = vadd.f32 %v4392, %v4418
        %v4432 = vadd.f32 %v4393, %v4418
        %v4433 = vadd.f32 %v4394, %v4418
        %v4434 = vadd.f32 %v4395, %v4418
        %v4435 = vadd.f32 %v4396, %v4418
        %v4436 = vadd.f32 %v4397, %v4418
        %v4437 = vadd.f32 %v4398, %v4418
        %v4438 = vadd.f32 %v4399, %v4418
        %v4439 = vadd.f32 %v4400, %v4418
        %v4440 = vadd.f32 %v4401, %v4418
        %v4441 = vadd.f32 %v4402, %v4418
        %v4442 = vadd.f32 %v4403, %v4418
        %v4443 = vadd.f32 %v4404, %v4418
        %v4444 = vadd.f32 %v4405, %v4418
        %v4445 = vadd.f32 %v4406, %v4418
        %v4446 = vadd.f32 %v4407, %v4418
        %v4447 = vadd.f32 %v4408, %v4418
        %v4448 = vadd.f32 %v4409, %v4418
        %v4449 = vadd.f32 %v4410, %v4418
        %v4450 = vadd.f32 %v4411, %v4418
        %v4451 = vadd.f32 %v4412, %v4418
        %v4452 = vmax.f32 %v4420, 0.0
        %v4453 = vmax.f32 %v4421, 0.0
        %v4454 = vmax.f32 %v4422, 0.0
        %v4455 = vmax.f32 %v4423, 0.0
        %v4456 = vmax.f32 %v4424, 0.0
        %v4457 = vmax.f32 %v4425, 0.0
        %v4458 = vmax.f32 %v4426, 0.0
        %v4459 = vmax.f32 %v4427, 0.0
        %v4460 = vmax.f32 %v4428, 0.0
        %v4461 = vmax.f32 %v4429, 0.0
        %v4462 = vmax.f32 %v4430, 0.0
        %v4463 = vmax.f32 %v4431, 0.0
        %v4464 = vmax.f32 %v4432, 0.0
        %v4465 = vmax.f32 %v4433, 0.0
        %v4466 = vmax.f32 %v4434, 0.0
        %v4467 = vmax.f32 %v4435, 0.0
        %v4468 = vmax.f32 %v4436, 0.0
        %v4469 = vmax.f32 %v4437, 0.0
        %v4470 = vmax.f32 %v4438, 0.0
        %v4471 = vmax.f32 %v4439, 0.0
        %v4472 = vmax.f32 %v4440, 0.0
        %v4473 = vmax.f32 %v4441, 0.0
        %v4474 = vmax.f32 %v4442, 0.0
        %v4475 = vmax.f32 %v4443, 0.0
        %v4476 = vmax.f32 %v4444, 0.0
        %v4477 = vmax.f32 %v4445, 0.0
        %v4478 = vmax.f32 %v4446, 0.0
        %v4479 = vmax.f32 %v4447, 0.0
        %v4480 = vmax.f32 %v4448, 0.0
        %v4481 = vmax.f32 %v4449, 0.0
        %v4482 = vmax.f32 %v4450, 0.0
        %v4483 = vmax.f32 %v4451, 0.0
        %4484 = vst [vmem:[#allocation3] sm:$0xf] 0
        %4485 = vst [vmem:[#allocation3 + $0x4] sm:$0xf] 0
        %4486 = vst [vmem:[#allocation3 + $0x8] sm:$0x1] 0
        %4487 = vst [vmem:[#allocation3 + $0xc] sm:$0xf] 0
        %4488 = vst [vmem:[#allocation3 + $0x10] sm:$0xf] 0
        %4489 = vst [vmem:[#allocation3 + $0x14] sm:$0x1] 0
        %4490 = vst [vmem:[#allocation3 + $0x18] sm:$0xf] 0
        %4491 = vst [vmem:[#allocation3 + $0x1c] sm:$0xf] 0
        %4492 = vst [vmem:[#allocation3 + $0x20] sm:$0x1] 0
        %4493 = vst [vmem:[#allocation3 + $0x24] sm:$0xf] 0
        %4494 = vst [vmem:[#allocation3 + $0x28] sm:$0xf] 0
        %4495 = vst [vmem:[#allocation3 + $0x2c] sm:$0x1] 0
        %4496 = vst [vmem:[#allocation3 + $0x30] sm:$0xf] 0
        %4497 = vst [vmem:[#allocation3 + $0x34] sm:$0xf] 0
        %4498 = vst [vmem:[#allocation3 + $0x38] sm:$0x1] 0
        %4499 = vst [vmem:[#allocation3 + $0x3c] sm:$0xf] 0
        %4500 = vst [vmem:[#allocation3 + $0x40] sm:$0xf] 0
        %4501 = vst [vmem:[#allocation3 + $0x44] sm:$0x1] 0
        %4502 = vst [vmem:[#allocation3 + $0x48] sm:$0xf] 0
        %4503 = vst [vmem:[#allocation3 + $0x4c] sm:$0xf] 0
        %4504 = vst [vmem:[#allocation3 + $0x50] sm:$0x1] 0
        %4505 = vst [vmem:[#allocation3 + $0x54] sm:$0xf] 0
        %4506 = vst [vmem:[#allocation3 + $0x58] sm:$0xf] 0
        %4507 = vst [vmem:[#allocation3 + $0x5c] sm:$0x1] 0
        %4508 = vst [vmem:[#allocation3 + $0x60] sm:$0xf] 0
        %4509 = vst [vmem:[#allocation3 + $0x64] sm:$0xf] 0
        %4510 = vst [vmem:[#allocation3 + $0x68] sm:$0x1] 0
        %4511 = vst [vmem:[#allocation3 + $0x6c] sm:$0xf] 0
        %4512 = vst [vmem:[#allocation3 + $0x70] sm:$0xf] 0
        %4513 = vst [vmem:[#allocation3 + $0x74] sm:$0x1] 0
        %4514 = vst [vmem:[#allocation3 + $0x78] sm:$0xf] 0
        %4515 = vst [vmem:[#allocation3 + $0x7c] sm:$0xf] 0
        %4516 = vst [vmem:[#allocation3 + $0x80] sm:$0x1] 0
        %4517 = vst [vmem:[#allocation3 + $0x84] sm:$0xf] 0
        %4518 = vst [vmem:[#allocation3 + $0x88] sm:$0xf] 0
        %4519 = vst [vmem:[#allocation3 + $0x8c] sm:$0x1] 0
        %4520 = vst [vmem:[#allocation3 + $0x90] sm:$0xf] 0
        %4521 = vst [vmem:[#allocation3 + $0x94] sm:$0xf] 0
        %4522 = vst [vmem:[#allocation3 + $0x98] sm:$0x1] 0
        %4523 = vst [vmem:[#allocation3 + $0x9c] sm:$0xf] 0
        %4524 = vst [vmem:[#allocation3 + $0xa0] sm:$0xf] 0
        %4525 = vst [vmem:[#allocation3 + $0xa4] sm:$0x1] 0
        %4526 = vst [vmem:[#allocation3 + $0xa8] sm:$0xf] 0
        %4527 = vst [vmem:[#allocation3 + $0xac] sm:$0xf] 0
        %4528 = vst [vmem:[#allocation3 + $0xb0] sm:$0x1] 0
        %4529 = vst [vmem:[#allocation3 + $0xb4] sm:$0xf] 0
        %4530 = vst [vmem:[#allocation3 + $0xb8] sm:$0xf] 0
        %4531 = vst [vmem:[#allocation3 + $0xbc] sm:$0x1] 0
        %4532 = vst [vmem:[#allocation3 + $0xc0] sm:$0xf] 0
        %4533 = vst [vmem:[#allocation3 + $0xc4] sm:$0xf] 0
        %4534 = vst [vmem:[#allocation3 + $0xc8] sm:$0x1] 0
        %4535 = vst [vmem:[#allocation3 + $0xcc] sm:$0xf] 0
        %4536 = vst [vmem:[#allocation3 + $0xd0] sm:$0xf] 0
        %4537 = vst [vmem:[#allocation3 + $0xd4] sm:$0x1] 0
        %v4538 = vpack.c.bf16 %v4453, %v4452
        %v4539 = vpack.c.bf16 %v4455, %v4454
        %v4540 = vpack.c.bf16 %v4457, %v4456
        %v4541 = vpack.c.bf16 %v4459, %v4458
        %v4542 = vpack.c.bf16 %v4461, %v4460
        %v4543 = vpack.c.bf16 %v4463, %v4462
        %v4544 = vpack.c.bf16 %v4465, %v4464
        %v4545 = vpack.c.bf16 %v4467, %v4466
        %v4546 = vpack.c.bf16 %v4469, %v4468
        %v4547 = vpack.c.bf16 %v4471, %v4470
        %v4548 = vpack.c.bf16 %v4473, %v4472
        %v4549 = vpack.c.bf16 %v4475, %v4474
        %v4550 = vpack.c.bf16 %v4477, %v4476
        %v4551 = vpack.c.bf16 %v4479, %v4478
        %v4552 = vpack.c.bf16 %v4481, %v4480
        %v4553 = vpack.c.bf16 %v4483, %v4482
        %v4570 = vunpack.c.l.b16 %v4538
        %v4571 = vunpack.c.h.b16 %v4538
        %v4572 = vunpack.c.l.b16 %v4539
        %v4573 = vunpack.c.h.b16 %v4539
        %v4574 = vunpack.c.l.b16 %v4540
        %v4575 = vunpack.c.h.b16 %v4540
        %v4576 = vunpack.c.l.b16 %v4541
        %v4577 = vunpack.c.h.b16 %v4541
        %v4578 = vunpack.c.l.b16 %v4542
        %v4579 = vunpack.c.h.b16 %v4542
        %v4580 = vunpack.c.l.b16 %v4543
        %v4581 = vunpack.c.h.b16 %v4543
        %v4582 = vunpack.c.l.b16 %v4544
        %v4583 = vunpack.c.h.b16 %v4544
        %v4584 = vunpack.c.l.b16 %v4545
        %v4585 = vunpack.c.h.b16 %v4545
        %v4586 = vunpack.c.l.b16 %v4546
        %v4587 = vunpack.c.h.b16 %v4546
        %v4588 = vunpack.c.l.b16 %v4547
        %v4589 = vunpack.c.h.b16 %v4547
        %v4590 = vunpack.c.l.b16 %v4548
        %v4591 = vunpack.c.h.b16 %v4548
        %v4592 = vunpack.c.l.b16 %v4549
        %v4593 = vunpack.c.h.b16 %v4549
        %v4594 = vunpack.c.l.b16 %v4550
        %v4595 = vunpack.c.h.b16 %v4550
        %v4596 = vunpack.c.l.b16 %v4551
        %v4597 = vunpack.c.h.b16 %v4551
        %v4598 = vunpack.c.l.b16 %v4552
        %v4599 = vunpack.c.h.b16 %v4552
        %v4600 = vunpack.c.l.b16 %v4553
        %v4601 = vunpack.c.h.b16 %v4553
        %v4602 = vpack.c.b16 %v4570, %v4570
        %v4603 = vpack.c.b16 %v4571, %v4571
        %v4604 = vpack.c.b16 %v4572, %v4572
        %v4605 = vpack.c.b16 %v4573, %v4573
        %v4606 = vpack.c.b16 %v4574, %v4574
        %v4607 = vpack.c.b16 %v4575, %v4575
        %v4608 = vpack.c.b16 %v4576, %v4576
        %v4609 = vpack.c.b16 %v4577, %v4577
        %v4610 = vpack.c.b16 %v4578, %v4578
        %v4611 = vpack.c.b16 %v4579, %v4579
        %v4612 = vpack.c.b16 %v4580, %v4580
        %v4613 = vpack.c.b16 %v4581, %v4581
        %v4614 = vpack.c.b16 %v4582, %v4582
        %v4615 = vpack.c.b16 %v4583, %v4583
        %v4616 = vpack.c.b16 %v4584, %v4584
        %v4617 = vpack.c.b16 %v4585, %v4585
        %v4618 = vpack.c.b16 %v4586, %v4586
        %v4619 = vpack.c.b16 %v4587, %v4587
        %v4620 = vpack.c.b16 %v4588, %v4588
        %v4621 = vpack.c.b16 %v4589, %v4589
        %v4622 = vpack.c.b16 %v4590, %v4590
        %v4623 = vpack.c.b16 %v4591, %v4591
        %v4624 = vpack.c.b16 %v4592, %v4592
        %v4625 = vpack.c.b16 %v4593, %v4593
        %v4626 = vpack.c.b16 %v4594, %v4594
        %v4627 = vpack.c.b16 %v4595, %v4595
        %v4628 = vpack.c.b16 %v4596, %v4596
        %v4629 = vpack.c.b16 %v4597, %v4597
        %v4630 = vpack.c.b16 %v4598, %v4598
        %v4631 = vpack.c.b16 %v4599, %v4599
        %v4632 = vpack.c.b16 %v4600, %v4600
        %v4633 = vpack.c.b16 %v4601, %v4601
        %v4635 = vshrl.u32 %v4602, 16
        %v4637 = vrot.slane %v4635, 7
        %v4638 = vshll.u32 %v4602, 16
        %v4640 = vor.u32 %v4637, %v4638
        %v4641 = vrot.slane %v4637, 4
        %v4643 = vshrl.u32 %v4603, 16
        %v4645 = vrot.slane %v4643, 7
        %v4646 = vshll.u32 %v4603, 16
        %v4648 = vor.u32 %v4645, %v4646
        %v4649 = vsel %vm490, %v4641, %v4648
        %v4650 = vrot.slane %v4645, 4
        %v4652 = vshrl.u32 %v4604, 16
        %v4654 = vrot.slane %v4652, 7
        %v4655 = vshll.u32 %v4604, 16
        %v4657 = vor.u32 %v4654, %v4655
        %v4658 = vrot.slane %v4654, 4
        %v4660 = vshrl.u32 %v4605, 16
        %v4662 = vrot.slane %v4660, 7
        %v4663 = vshll.u32 %v4605, 16
        %v4665 = vor.u32 %v4662, %v4663
        %v4666 = vsel %vm490, %v4658, %v4665
        %v4667 = vrot.slane %v4662, 4
        %v4669 = vshrl.u32 %v4606, 16
        %v4671 = vrot.slane %v4669, 7
        %v4672 = vshll.u32 %v4606, 16
        %v4674 = vor.u32 %v4671, %v4672
        %v4675 = vrot.slane %v4671, 4
        %v4677 = vshrl.u32 %v4607, 16
        %v4679 = vrot.slane %v4677, 7
        %v4680 = vshll.u32 %v4607, 16
        %v4682 = vor.u32 %v4679, %v4680
        %v4683 = vsel %vm490, %v4675, %v4682
        %v4684 = vrot.slane %v4679, 4
        %v4686 = vshrl.u32 %v4608, 16
        %v4688 = vrot.slane %v4686, 7
        %v4689 = vshll.u32 %v4608, 16
        %v4691 = vor.u32 %v4688, %v4689
        %v4692 = vrot.slane %v4688, 4
        %v4694 = vshrl.u32 %v4609, 16
        %v4696 = vrot.slane %v4694, 7
        %v4697 = vshll.u32 %v4609, 16
        %v4699 = vor.u32 %v4696, %v4697
        %v4700 = vsel %vm490, %v4692, %v4699
        %v4701 = vrot.slane %v4696, 4
        %v4703 = vshrl.u32 %v4610, 16
        %v4705 = vrot.slane %v4703, 7
        %v4706 = vshll.u32 %v4610, 16
        %v4708 = vor.u32 %v4705, %v4706
        %v4709 = vrot.slane %v4705, 4
        %v4711 = vshrl.u32 %v4611, 16
        %v4713 = vrot.slane %v4711, 7
        %v4714 = vshll.u32 %v4611, 16
        %v4716 = vor.u32 %v4713, %v4714
        %v4717 = vsel %vm490, %v4709, %v4716
        %v4718 = vrot.slane %v4713, 4
        %v4720 = vshrl.u32 %v4612, 16
        %v4722 = vrot.slane %v4720, 7
        %v4723 = vshll.u32 %v4612, 16
        %v4725 = vor.u32 %v4722, %v4723
        %v4726 = vrot.slane %v4722, 4
        %v4728 = vshrl.u32 %v4613, 16
        %v4730 = vrot.slane %v4728, 7
        %v4731 = vshll.u32 %v4613, 16
        %v4733 = vor.u32 %v4730, %v4731
        %v4734 = vsel %vm490, %v4726, %v4733
        %v4735 = vrot.slane %v4730, 4
        %v4737 = vshrl.u32 %v4614, 16
        %v4739 = vrot.slane %v4737, 7
        %v4740 = vshll.u32 %v4614, 16
        %v4742 = vor.u32 %v4739, %v4740
        %v4743 = vrot.slane %v4739, 4
        %v4745 = vshrl.u32 %v4615, 16
        %v4747 = vrot.slane %v4745, 7
        %v4748 = vshll.u32 %v4615, 16
        %v4750 = vor.u32 %v4747, %v4748
        %v4751 = vsel %vm490, %v4743, %v4750
        %v4752 = vrot.slane %v4747, 4
        %v4754 = vshrl.u32 %v4616, 16
        %v4756 = vrot.slane %v4754, 7
        %v4757 = vshll.u32 %v4616, 16
        %v4759 = vor.u32 %v4756, %v4757
        %v4760 = vrot.slane %v4756, 4
        %v4762 = vshrl.u32 %v4617, 16
        %v4764 = vrot.slane %v4762, 7
        %v4765 = vshll.u32 %v4617, 16
        %v4767 = vor.u32 %v4764, %v4765
        %v4768 = vsel %vm490, %v4760, %v4767
        %v4769 = vrot.slane %v4764, 4
        %v4771 = vshrl.u32 %v4618, 16
        %v4773 = vrot.slane %v4771, 7
        %v4774 = vshll.u32 %v4618, 16
        %v4776 = vor.u32 %v4773, %v4774
        %v4777 = vrot.slane %v4773, 4
        %v4779 = vshrl.u32 %v4619, 16
        %v4781 = vrot.slane %v4779, 7
        %v4782 = vshll.u32 %v4619, 16
        %v4784 = vor.u32 %v4781, %v4782
        %v4785 = vsel %vm490, %v4777, %v4784
        %v4786 = vrot.slane %v4781, 4
        %v4788 = vshrl.u32 %v4620, 16
        %v4790 = vrot.slane %v4788, 7
        %v4791 = vshll.u32 %v4620, 16
        %v4793 = vor.u32 %v4790, %v4791
        %v4794 = vrot.slane %v4790, 4
        %v4796 = vshrl.u32 %v4621, 16
        %v4798 = vrot.slane %v4796, 7
        %v4799 = vshll.u32 %v4621, 16
        %v4801 = vor.u32 %v4798, %v4799
        %v4802 = vsel %vm490, %v4794, %v4801
        %v4803 = vrot.slane %v4798, 4
        %v4805 = vshrl.u32 %v4622, 16
        %v4807 = vrot.slane %v4805, 7
        %v4808 = vshll.u32 %v4622, 16
        %v4810 = vor.u32 %v4807, %v4808
        %v4811 = vrot.slane %v4807, 4
        %v4813 = vshrl.u32 %v4623, 16
        %v4815 = vrot.slane %v4813, 7
        %v4816 = vshll.u32 %v4623, 16
        %v4818 = vor.u32 %v4815, %v4816
        %v4819 = vsel %vm490, %v4811, %v4818
        %v4820 = vrot.slane %v4815, 4
        %v4822 = vshrl.u32 %v4624, 16
        %v4824 = vrot.slane %v4822, 7
        %v4825 = vshll.u32 %v4624, 16
        %v4827 = vor.u32 %v4824, %v4825
        %v4828 = vrot.slane %v4824, 4
        %v4830 = vshrl.u32 %v4625, 16
        %v4832 = vrot.slane %v4830, 7
        %v4833 = vshll.u32 %v4625, 16
        %v4835 = vor.u32 %v4832, %v4833
        %v4836 = vsel %vm490, %v4828, %v4835
        %v4837 = vrot.slane %v4832, 4
        %v4839 = vshrl.u32 %v4626, 16
        %v4841 = vrot.slane %v4839, 7
        %v4842 = vshll.u32 %v4626, 16
        %v4844 = vor.u32 %v4841, %v4842
        %v4845 = vrot.slane %v4841, 4
        %v4847 = vshrl.u32 %v4627, 16
        %v4849 = vrot.slane %v4847, 7
        %v4850 = vshll.u32 %v4627, 16
        %v4852 = vor.u32 %v4849, %v4850
        %v4853 = vsel %vm490, %v4845, %v4852
        %v4854 = vrot.slane %v4849, 4
        %v4856 = vshrl.u32 %v4628, 16
        %v4858 = vrot.slane %v4856, 7
        %v4859 = vshll.u32 %v4628, 16
        %v4861 = vor.u32 %v4858, %v4859
        %v4862 = vrot.slane %v4858, 4
        %v4864 = vshrl.u32 %v4629, 16
        %v4866 = vrot.slane %v4864, 7
        %v4867 = vshll.u32 %v4629, 16
        %v4869 = vor.u32 %v4866, %v4867
        %v4870 = vsel %vm490, %v4862, %v4869
        %v4871 = vrot.slane %v4866, 4
        %v4873 = vshrl.u32 %v4630, 16
        %v4875 = vrot.slane %v4873, 7
        %v4876 = vshll.u32 %v4630, 16
        %v4878 = vor.u32 %v4875, %v4876
        %v4879 = vrot.slane %v4875, 4
        %v4881 = vshrl.u32 %v4631, 16
        %v4883 = vrot.slane %v4881, 7
        %v4884 = vshll.u32 %v4631, 16
        %v4886 = vor.u32 %v4883, %v4884
        %v4887 = vsel %vm490, %v4879, %v4886
        %v4888 = vrot.slane %v4883, 4
        %v4890 = vshrl.u32 %v4632, 16
        %v4892 = vrot.slane %v4890, 7
        %v4893 = vshll.u32 %v4632, 16
        %v4895 = vor.u32 %v4892, %v4893
        %v4896 = vrot.slane %v4892, 4
        %v4898 = vshrl.u32 %v4633, 16
        %v4900 = vrot.slane %v4898, 7
        %v4901 = vshll.u32 %v4633, 16
        %v4903 = vor.u32 %v4900, %v4901
        %v4904 = vsel %vm490, %v4896, %v4903
        %v4905 = vrot.slane %v4900, 4
        %s4954 = scalar_lea.vmem [#allocation3], 12
        %vm4955 = vcmask 1043456
        %vm4956 = vmand %vm4955, %vm813
        %v4957 = vld [vmem:[%s4954] sm:$0xf]
        %v4958 = vsel %vm4956, %v4640, %v4957
        %4959 = vst [vmem:[%s4954] sm:$0xf] %v4958
        %4960 = vst [vmem:[%s4954 + $0x4] sm:$0xf] %v4649
        %vm4961 = vcmask 1040384
        %vm4962 = vmand %vm4961, %vm488
        %v4963 = vld [vmem:[%s4954 + $0x8] sm:$0x1]
        %v4964 = vsel %vm4962, %v4650, %v4963
        %4965 = vst [vmem:[%s4954 + $0x8] sm:$0x1] %v4964
        %v4966 = vld [vmem:[%s4954 + $0xc] sm:$0xf]
        %v4967 = vsel %vm4956, %v4657, %v4966
        %4968 = vst [vmem:[%s4954 + $0xc] sm:$0xf] %v4967
        %4969 = vst [vmem:[%s4954 + $0x10] sm:$0xf] %v4666
        %v4970 = vld [vmem:[%s4954 + $0x14] sm:$0x1]
        %v4971 = vsel %vm4962, %v4667, %v4970
        %4972 = vst [vmem:[%s4954 + $0x14] sm:$0x1] %v4971
        %v4973 = vld [vmem:[%s4954 + $0x18] sm:$0xf]
        %v4974 = vsel %vm4956, %v4674, %v4973
        %4975 = vst [vmem:[%s4954 + $0x18] sm:$0xf] %v4974
        %4976 = vst [vmem:[%s4954 + $0x1c] sm:$0xf] %v4683
        %v4977 = vld [vmem:[%s4954 + $0x20] sm:$0x1]
        %v4978 = vsel %vm4962, %v4684, %v4977
        %4979 = vst [vmem:[%s4954 + $0x20] sm:$0x1] %v4978
        %v4980 = vld [vmem:[%s4954 + $0x24] sm:$0xf]
        %v4981 = vsel %vm4956, %v4691, %v4980
        %4982 = vst [vmem:[%s4954 + $0x24] sm:$0xf] %v4981
        %4983 = vst [vmem:[%s4954 + $0x28] sm:$0xf] %v4700
        %v4984 = vld [vmem:[%s4954 + $0x2c] sm:$0x1]
        %v4985 = vsel %vm4962, %v4701, %v4984
        %4986 = vst [vmem:[%s4954 + $0x2c] sm:$0x1] %v4985
        %v4987 = vld [vmem:[%s4954 + $0x30] sm:$0xf]
        %v4988 = vsel %vm4956, %v4708, %v4987
        %4989 = vst [vmem:[%s4954 + $0x30] sm:$0xf] %v4988
        %4990 = vst [vmem:[%s4954 + $0x34] sm:$0xf] %v4717
        %v4991 = vld [vmem:[%s4954 + $0x38] sm:$0x1]
        %v4992 = vsel %vm4962, %v4718, %v4991
        %4993 = vst [vmem:[%s4954 + $0x38] sm:$0x1] %v4992
        %v4994 = vld [vmem:[%s4954 + $0x3c] sm:$0xf]
        %v4995 = vsel %vm4956, %v4725, %v4994
        %4996 = vst [vmem:[%s4954 + $0x3c] sm:$0xf] %v4995
        %4997 = vst [vmem:[%s4954 + $0x40] sm:$0xf] %v4734
        %v4998 = vld [vmem:[%s4954 + $0x44] sm:$0x1]
        %v4999 = vsel %vm4962, %v4735, %v4998
        %5000 = vst [vmem:[%s4954 + $0x44] sm:$0x1] %v4999
        %v5001 = vld [vmem:[%s4954 + $0x48] sm:$0xf]
        %v5002 = vsel %vm4956, %v4742, %v5001
        %5003 = vst [vmem:[%s4954 + $0x48] sm:$0xf] %v5002
        %5004 = vst [vmem:[%s4954 + $0x4c] sm:$0xf] %v4751
        %v5005 = vld [vmem:[%s4954 + $0x50] sm:$0x1]
        %v5006 = vsel %vm4962, %v4752, %v5005
        %5007 = vst [vmem:[%s4954 + $0x50] sm:$0x1] %v5006
        %v5008 = vld [vmem:[%s4954 + $0x54] sm:$0xf]
        %v5009 = vsel %vm4956, %v4759, %v5008
        %5010 = vst [vmem:[%s4954 + $0x54] sm:$0xf] %v5009
        %5011 = vst [vmem:[%s4954 + $0x58] sm:$0xf] %v4768
        %v5012 = vld [vmem:[%s4954 + $0x5c] sm:$0x1]
        %v5013 = vsel %vm4962, %v4769, %v5012
        %5014 = vst [vmem:[%s4954 + $0x5c] sm:$0x1] %v5013
        %v5015 = vld [vmem:[%s4954 + $0x60] sm:$0xf]
        %v5016 = vsel %vm4956, %v4776, %v5015
        %5017 = vst [vmem:[%s4954 + $0x60] sm:$0xf] %v5016
        %5018 = vst [vmem:[%s4954 + $0x64] sm:$0xf] %v4785
        %v5019 = vld [vmem:[%s4954 + $0x68] sm:$0x1]
        %v5020 = vsel %vm4962, %v4786, %v5019
        %5021 = vst [vmem:[%s4954 + $0x68] sm:$0x1] %v5020
        %v5022 = vld [vmem:[%s4954 + $0x6c] sm:$0xf]
        %v5023 = vsel %vm4956, %v4793, %v5022
        %5024 = vst [vmem:[%s4954 + $0x6c] sm:$0xf] %v5023
        %5025 = vst [vmem:[%s4954 + $0x70] sm:$0xf] %v4802
        %v5026 = vld [vmem:[%s4954 + $0x74] sm:$0x1]
        %v5027 = vsel %vm4962, %v4803, %v5026
        %5028 = vst [vmem:[%s4954 + $0x74] sm:$0x1] %v5027
        %v5029 = vld [vmem:[%s4954 + $0x78] sm:$0xf]
        %v5030 = vsel %vm4956, %v4810, %v5029
        %5031 = vst [vmem:[%s4954 + $0x78] sm:$0xf] %v5030
        %5032 = vst [vmem:[%s4954 + $0x7c] sm:$0xf] %v4819
        %v5033 = vld [vmem:[%s4954 + $0x80] sm:$0x1]
        %v5034 = vsel %vm4962, %v4820, %v5033
        %5035 = vst [vmem:[%s4954 + $0x80] sm:$0x1] %v5034
        %v5036 = vld [vmem:[%s4954 + $0x84] sm:$0xf]
        %v5037 = vsel %vm4956, %v4827, %v5036
        %5038 = vst [vmem:[%s4954 + $0x84] sm:$0xf] %v5037
        %5039 = vst [vmem:[%s4954 + $0x88] sm:$0xf] %v4836
        %v5040 = vld [vmem:[%s4954 + $0x8c] sm:$0x1]
        %v5041 = vsel %vm4962, %v4837, %v5040
        %5042 = vst [vmem:[%s4954 + $0x8c] sm:$0x1] %v5041
        %v5043 = vld [vmem:[%s4954 + $0x90] sm:$0xf]
        %v5044 = vsel %vm4956, %v4844, %v5043
        %5045 = vst [vmem:[%s4954 + $0x90] sm:$0xf] %v5044
        %5046 = vst [vmem:[%s4954 + $0x94] sm:$0xf] %v4853
        %v5047 = vld [vmem:[%s4954 + $0x98] sm:$0x1]
        %v5048 = vsel %vm4962, %v4854, %v5047
        %5049 = vst [vmem:[%s4954 + $0x98] sm:$0x1] %v5048
        %v5050 = vld [vmem:[%s4954 + $0x9c] sm:$0xf]
        %v5051 = vsel %vm4956, %v4861, %v5050
        %5052 = vst [vmem:[%s4954 + $0x9c] sm:$0xf] %v5051
        %5053 = vst [vmem:[%s4954 + $0xa0] sm:$0xf] %v4870
        %v5054 = vld [vmem:[%s4954 + $0xa4] sm:$0x1]
        %v5055 = vsel %vm4962, %v4871, %v5054
        %5056 = vst [vmem:[%s4954 + $0xa4] sm:$0x1] %v5055
        %v5057 = vld [vmem:[%s4954 + $0xa8] sm:$0xf]
        %v5058 = vsel %vm4956, %v4878, %v5057
        %5059 = vst [vmem:[%s4954 + $0xa8] sm:$0xf] %v5058
        %5060 = vst [vmem:[%s4954 + $0xac] sm:$0xf] %v4887
        %v5061 = vld [vmem:[%s4954 + $0xb0] sm:$0x1]
        %v5062 = vsel %vm4962, %v4888, %v5061
        %5063 = vst [vmem:[%s4954 + $0xb0] sm:$0x1] %v5062
        %v5064 = vld [vmem:[%s4954 + $0xb4] sm:$0xf]
        %v5065 = vsel %vm4956, %v4895, %v5064
        %5066 = vst [vmem:[%s4954 + $0xb4] sm:$0xf] %v5065
        %5067 = vst [vmem:[%s4954 + $0xb8] sm:$0xf] %v4904
        %v5068 = vld [vmem:[%s4954 + $0xbc] sm:$0x1]
        %v5069 = vsel %vm4962, %v4905, %v5068
        %5070 = vst [vmem:[%s4954 + $0xbc] sm:$0x1] %v5069
        %5071 = vst [vmem:[#allocation4] sm:$0xff] 0.0
        %5072 = vst [vmem:[#allocation4 + $0x8] sm:$0xff] 0.0
        %5073 = vst [vmem:[#allocation4 + $0x10] sm:$0xff] 0.0
        %5074 = vst [vmem:[#allocation4 + $0x18] sm:$0xff] 0.0
        %5075 = vst [vmem:[#allocation4 + $0x20] sm:$0xff] 0.0
        %5076 = vst [vmem:[#allocation4 + $0x28] sm:$0xff] 0.0
        %5077 = vst [vmem:[#allocation4 + $0x30] sm:$0xff] 0.0
        %5078 = vst [vmem:[#allocation4 + $0x38] sm:$0xff] 0.0
        %5079 = vst [vmem:[#allocation4 + $0x40] sm:$0xff] 0.0
        %5080 = vst [vmem:[#allocation4 + $0x48] sm:$0xff] 0.0
        %5081 = vst [vmem:[#allocation4 + $0x50] sm:$0xff] 0.0
        %5082 = vst [vmem:[#allocation4 + $0x58] sm:$0xff] 0.0
        %5083 = vst [vmem:[#allocation4 + $0x60] sm:$0xff] 0.0
        %5084 = vst [vmem:[#allocation4 + $0x68] sm:$0xff] 0.0
        %5085 = vst [vmem:[#allocation4 + $0x70] sm:$0xff] 0.0
        %5086 = vst [vmem:[#allocation4 + $0x78] sm:$0xff] 0.0
        %5087 = vst [vmem:[#allocation4 + $0x80] sm:$0xff] 0.0
        %5088 = vst [vmem:[#allocation4 + $0x88] sm:$0xff] 0.0
        %5089 = vst [vmem:[#allocation4 + $0x90] sm:$0xff] 0.0
        %5090 = vst [vmem:[#allocation4 + $0x98] sm:$0xff] 0.0
        %5091 = vst [vmem:[#allocation4 + $0xa0] sm:$0xff] 0.0
        %5092 = vst [vmem:[#allocation4 + $0xa8] sm:$0xff] 0.0
        %5093 = vst [vmem:[#allocation4 + $0xb0] sm:$0xff] 0.0
        %5094 = vst [vmem:[#allocation4 + $0xb8] sm:$0xff] 0.0
        %5095 = vst [vmem:[#allocation4 + $0xc0] sm:$0xff] 0.0
        %5096 = vst [vmem:[#allocation4 + $0xc8] sm:$0xff] 0.0
        %5097 = vst [vmem:[#allocation4 + $0xd0] sm:$0xff] 0.0
        %5098 = vst [vmem:[#allocation4 + $0xd8] sm:$0xff] 0.0
        %5099 = vst [vmem:[#allocation4 + $0xe0] sm:$0xff] 0.0
        %5100 = vst [vmem:[#allocation4 + $0xe8] sm:$0xff] 0.0
        %5101 = vst [vmem:[#allocation4 + $0xf0] sm:$0xff] 0.0
        %5102 = vst [vmem:[#allocation4 + $0xf8] sm:$0xff] 0.0
        %v5103 = vld [vmem:[#allocation3] sm:$0xf]
        %v5104 = vld [vmem:[#allocation3 + $0x4] sm:$0xf]
        %v5105 = vld [vmem:[#allocation3 + $0xc] sm:$0xf]
        %v5106 = vld [vmem:[#allocation3 + $0x10] sm:$0xf]
        %v5107 = vld [vmem:[#allocation3 + $0x18] sm:$0xf]
        %v5108 = vld [vmem:[#allocation3 + $0x1c] sm:$0xf]
        %v5109 = vld [vmem:[#allocation3 + $0x24] sm:$0xf]
        %v5110 = vld [vmem:[#allocation3 + $0x28] sm:$0xf]
        %v5111 = vld [vmem:[#allocation3 + $0x30] sm:$0xf]
        %v5112 = vld [vmem:[#allocation3 + $0x34] sm:$0xf]
        %v5113 = vld [vmem:[#allocation3 + $0x3c] sm:$0xf]
        %v5114 = vld [vmem:[#allocation3 + $0x40] sm:$0xf]
        %v5115 = vld [vmem:[#allocation3 + $0x48] sm:$0xf]
        %v5116 = vld [vmem:[#allocation3 + $0x4c] sm:$0xf]
        %v5117 = vld [vmem:[#allocation3 + $0x54] sm:$0xf]
        %v5118 = vld [vmem:[#allocation3 + $0x58] sm:$0xf]
        %v5119 = vld [vmem:[#allocation3 + $0x60] sm:$0xf]
        %v5120 = vld [vmem:[#allocation3 + $0x64] sm:$0xf]
        %v5121 = vld [vmem:[#allocation3 + $0x6c] sm:$0xf]
        %v5122 = vld [vmem:[#allocation3 + $0x70] sm:$0xf]
        %v5123 = vld [vmem:[#allocation3 + $0x78] sm:$0xf]
        %v5124 = vld [vmem:[#allocation3 + $0x7c] sm:$0xf]
        %v5125 = vld [vmem:[#allocation3 + $0x84] sm:$0xf]
        %v5126 = vld [vmem:[#allocation3 + $0x88] sm:$0xf]
        %v5127 = vld [vmem:[#allocation3 + $0x90] sm:$0xf]
        %v5128 = vld [vmem:[#allocation3 + $0x94] sm:$0xf]
        %v5129 = vld [vmem:[#allocation3 + $0x9c] sm:$0xf]
        %v5130 = vld [vmem:[#allocation3 + $0xa0] sm:$0xf]
        %v5131 = vld [vmem:[#allocation3 + $0xa8] sm:$0xf]
        %v5132 = vld [vmem:[#allocation3 + $0xac] sm:$0xf]
        %v5133 = vld [vmem:[#allocation3 + $0xb4] sm:$0xf]
        %v5134 = vld [vmem:[#allocation3 + $0xb8] sm:$0xf]
        %v5135 = vld [vmem:[#allocation3 + $0x8] sm:$0x1]
        %v5136 = vld [vmem:[#allocation3 + $0x14] sm:$0x1]
        %v5137 = vld [vmem:[#allocation3 + $0x20] sm:$0x1]
        %v5138 = vld [vmem:[#allocation3 + $0x2c] sm:$0x1]
        %v5139 = vld [vmem:[#allocation3 + $0x38] sm:$0x1]
        %v5140 = vld [vmem:[#allocation3 + $0x44] sm:$0x1]
        %v5141 = vld [vmem:[#allocation3 + $0x50] sm:$0x1]
        %v5142 = vld [vmem:[#allocation3 + $0x5c] sm:$0x1]
        %v5143 = vld [vmem:[#allocation3 + $0x68] sm:$0x1]
        %v5144 = vld [vmem:[#allocation3 + $0x74] sm:$0x1]
        %v5145 = vld [vmem:[#allocation3 + $0x80] sm:$0x1]
        %v5146 = vld [vmem:[#allocation3 + $0x8c] sm:$0x1]
        %v5147 = vld [vmem:[#allocation3 + $0x98] sm:$0x1]
        %v5148 = vld [vmem:[#allocation3 + $0xa4] sm:$0x1]
        %v5149 = vld [vmem:[#allocation3 + $0xb0] sm:$0x1]
        %v5150 = vld [vmem:[#allocation3 + $0xbc] sm:$0x1]
        %v5151 = vld [vmem:[#allocation3] sm:$0xe]
        %v5152 = vld [vmem:[#allocation3 + $0xc] sm:$0xe]
        %v5153 = vld [vmem:[#allocation3 + $0x18] sm:$0xe]
        %v5154 = vld [vmem:[#allocation3 + $0x24] sm:$0xe]
        %v5155 = vld [vmem:[#allocation3 + $0x30] sm:$0xe]
        %v5156 = vld [vmem:[#allocation3 + $0x3c] sm:$0xe]
        %v5157 = vld [vmem:[#allocation3 + $0x48] sm:$0xe]
        %v5158 = vld [vmem:[#allocation3 + $0x54] sm:$0xe]
        %v5159 = vld [vmem:[#allocation3 + $0x60] sm:$0xe]
        %v5160 = vld [vmem:[#allocation3 + $0x6c] sm:$0xe]
        %v5161 = vld [vmem:[#allocation3 + $0x78] sm:$0xe]
        %v5162 = vld [vmem:[#allocation3 + $0x84] sm:$0xe]
        %v5163 = vld [vmem:[#allocation3 + $0x90] sm:$0xe]
        %v5164 = vld [vmem:[#allocation3 + $0x9c] sm:$0xe]
        %v5165 = vld [vmem:[#allocation3 + $0xa8] sm:$0xe]
        %v5166 = vld [vmem:[#allocation3 + $0xb4] sm:$0xe]
        %v5199 = vunpack.c.l.b16 %v5103
        %v5200 = vunpack.c.l.b16 %v5104
        %v5201 = vunpack.c.l.b16 %v5105
        %v5202 = vunpack.c.l.b16 %v5106
        %v5203 = vunpack.c.l.b16 %v5107
        %v5204 = vunpack.c.l.b16 %v5108
        %v5205 = vunpack.c.l.b16 %v5109
        %v5206 = vunpack.c.l.b16 %v5110
        %v5207 = vunpack.c.l.b16 %v5111
        %v5208 = vunpack.c.l.b16 %v5112
        %v5209 = vunpack.c.l.b16 %v5113
        %v5210 = vunpack.c.l.b16 %v5114
        %v5211 = vunpack.c.l.b16 %v5115
        %v5212 = vunpack.c.l.b16 %v5116
        %v5213 = vunpack.c.l.b16 %v5117
        %v5214 = vunpack.c.l.b16 %v5118
        %v5215 = vunpack.c.l.b16 %v5119
        %v5216 = vunpack.c.l.b16 %v5120
        %v5217 = vunpack.c.l.b16 %v5121
        %v5218 = vunpack.c.l.b16 %v5122
        %v5219 = vunpack.c.l.b16 %v5123
        %v5220 = vunpack.c.l.b16 %v5124
        %v5221 = vunpack.c.l.b16 %v5125
        %v5222 = vunpack.c.l.b16 %v5126
        %v5223 = vunpack.c.l.b16 %v5127
        %v5224 = vunpack.c.l.b16 %v5128
        %v5225 = vunpack.c.l.b16 %v5129
        %v5226 = vunpack.c.l.b16 %v5130
        %v5227 = vunpack.c.l.b16 %v5131
        %v5228 = vunpack.c.l.b16 %v5132
        %v5229 = vunpack.c.l.b16 %v5133
        %v5230 = vunpack.c.l.b16 %v5134
        %v5231 = vpack.c.b16 %v5200, %v5199
        %v5232 = vpack.c.b16 %v5202, %v5201
        %v5233 = vpack.c.b16 %v5204, %v5203
        %v5234 = vpack.c.b16 %v5206, %v5205
        %v5235 = vpack.c.b16 %v5208, %v5207
        %v5236 = vpack.c.b16 %v5210, %v5209
        %v5237 = vpack.c.b16 %v5212, %v5211
        %v5238 = vpack.c.b16 %v5214, %v5213
        %v5239 = vpack.c.b16 %v5216, %v5215
        %v5240 = vpack.c.b16 %v5218, %v5217
        %v5241 = vpack.c.b16 %v5220, %v5219
        %v5242 = vpack.c.b16 %v5222, %v5221
        %v5243 = vpack.c.b16 %v5224, %v5223
        %v5244 = vpack.c.b16 %v5226, %v5225
        %v5245 = vpack.c.b16 %v5228, %v5227
        %v5246 = vpack.c.b16 %v5230, %v5229
        %v5279 = vunpack.c.l.b16 %v5135
        %v5280 = vunpack.c.l.b16 %v5136
        %v5281 = vunpack.c.l.b16 %v5137
        %v5282 = vunpack.c.l.b16 %v5138
        %v5283 = vunpack.c.l.b16 %v5139
        %v5284 = vunpack.c.l.b16 %v5140
        %v5285 = vunpack.c.l.b16 %v5141
        %v5286 = vunpack.c.l.b16 %v5142
        %v5287 = vunpack.c.l.b16 %v5143
        %v5288 = vunpack.c.l.b16 %v5144
        %v5289 = vunpack.c.l.b16 %v5145
        %v5290 = vunpack.c.l.b16 %v5146
        %v5291 = vunpack.c.l.b16 %v5147
        %v5292 = vunpack.c.l.b16 %v5148
        %v5293 = vunpack.c.l.b16 %v5149
        %v5294 = vunpack.c.l.b16 %v5150
        %v5295 = vpack.c.b16 %v5279, %v5279
        %v5296 = vpack.c.b16 %v5280, %v5280
        %v5297 = vpack.c.b16 %v5281, %v5281
        %v5298 = vpack.c.b16 %v5282, %v5282
        %v5299 = vpack.c.b16 %v5283, %v5283
        %v5300 = vpack.c.b16 %v5284, %v5284
        %v5301 = vpack.c.b16 %v5285, %v5285
        %v5302 = vpack.c.b16 %v5286, %v5286
        %v5303 = vpack.c.b16 %v5287, %v5287
        %v5304 = vpack.c.b16 %v5288, %v5288
        %v5305 = vpack.c.b16 %v5289, %v5289
        %v5306 = vpack.c.b16 %v5290, %v5290
        %v5307 = vpack.c.b16 %v5291, %v5291
        %v5308 = vpack.c.b16 %v5292, %v5292
        %v5309 = vpack.c.b16 %v5293, %v5293
        %v5310 = vpack.c.b16 %v5294, %v5294
        %v5312 = vshrl.u32 %v5231, 16
        %v5314 = vshll.u32 %v5231, 16
        %v5316 = vrot.slane %v5314, 1
        %v5317 = vor.u32 %v5312, %v5316
        %v5319 = vshll.u32 %v5295, 16
        %v5321 = vrot.slane %v5319, 1
        %v5322 = vsel %vm1170, %v5317, %v5321
        %v5324 = vshrl.u32 %v5232, 16
        %v5326 = vshll.u32 %v5232, 16
        %v5328 = vrot.slane %v5326, 1
        %v5329 = vor.u32 %v5324, %v5328
        %v5331 = vshll.u32 %v5296, 16
        %v5333 = vrot.slane %v5331, 1
        %v5334 = vsel %vm1170, %v5329, %v5333
        %v5336 = vshrl.u32 %v5233, 16
        %v5338 = vshll.u32 %v5233, 16
        %v5340 = vrot.slane %v5338, 1
        %v5341 = vor.u32 %v5336, %v5340
        %v5343 = vshll.u32 %v5297, 16
        %v5345 = vrot.slane %v5343, 1
        %v5346 = vsel %vm1170, %v5341, %v5345
        %v5348 = vshrl.u32 %v5234, 16
        %v5350 = vshll.u32 %v5234, 16
        %v5352 = vrot.slane %v5350, 1
        %v5353 = vor.u32 %v5348, %v5352
        %v5355 = vshll.u32 %v5298, 16
        %v5357 = vrot.slane %v5355, 1
        %v5358 = vsel %vm1170, %v5353, %v5357
        %v5360 = vshrl.u32 %v5235, 16
        %v5362 = vshll.u32 %v5235, 16
        %v5364 = vrot.slane %v5362, 1
        %v5365 = vor.u32 %v5360, %v5364
        %v5367 = vshll.u32 %v5299, 16
        %v5369 = vrot.slane %v5367, 1
        %v5370 = vsel %vm1170, %v5365, %v5369
        %v5372 = vshrl.u32 %v5236, 16
        %v5374 = vshll.u32 %v5236, 16
        %v5376 = vrot.slane %v5374, 1
        %v5377 = vor.u32 %v5372, %v5376
        %v5379 = vshll.u32 %v5300, 16
        %v5381 = vrot.slane %v5379, 1
        %v5382 = vsel %vm1170, %v5377, %v5381
        %v5384 = vshrl.u32 %v5237, 16
        %v5386 = vshll.u32 %v5237, 16
        %v5388 = vrot.slane %v5386, 1
        %v5389 = vor.u32 %v5384, %v5388
        %v5391 = vshll.u32 %v5301, 16
        %v5393 = vrot.slane %v5391, 1
        %v5394 = vsel %vm1170, %v5389, %v5393
        %v5396 = vshrl.u32 %v5238, 16
        %v5398 = vshll.u32 %v5238, 16
        %v5400 = vrot.slane %v5398, 1
        %v5401 = vor.u32 %v5396, %v5400
        %v5403 = vshll.u32 %v5302, 16
        %v5405 = vrot.slane %v5403, 1
        %v5406 = vsel %vm1170, %v5401, %v5405
        %v5408 = vshrl.u32 %v5239, 16
        %v5410 = vshll.u32 %v5239, 16
        %v5412 = vrot.slane %v5410, 1
        %v5413 = vor.u32 %v5408, %v5412
        %v5415 = vshll.u32 %v5303, 16
        %v5417 = vrot.slane %v5415, 1
        %v5418 = vsel %vm1170, %v5413, %v5417
        %v5420 = vshrl.u32 %v5240, 16
        %v5422 = vshll.u32 %v5240, 16
        %v5424 = vrot.slane %v5422, 1
        %v5425 = vor.u32 %v5420, %v5424
        %v5427 = vshll.u32 %v5304, 16
        %v5429 = vrot.slane %v5427, 1
        %v5430 = vsel %vm1170, %v5425, %v5429
        %v5432 = vshrl.u32 %v5241, 16
        %v5434 = vshll.u32 %v5241, 16
        %v5436 = vrot.slane %v5434, 1
        %v5437 = vor.u32 %v5432, %v5436
        %v5439 = vshll.u32 %v5305, 16
        %v5441 = vrot.slane %v5439, 1
        %v5442 = vsel %vm1170, %v5437, %v5441
        %v5444 = vshrl.u32 %v5242, 16
        %v5446 = vshll.u32 %v5242, 16
        %v5448 = vrot.slane %v5446, 1
        %v5449 = vor.u32 %v5444, %v5448
        %v5451 = vshll.u32 %v5306, 16
        %v5453 = vrot.slane %v5451, 1
        %v5454 = vsel %vm1170, %v5449, %v5453
        %v5456 = vshrl.u32 %v5243, 16
        %v5458 = vshll.u32 %v5243, 16
        %v5460 = vrot.slane %v5458, 1
        %v5461 = vor.u32 %v5456, %v5460
        %v5463 = vshll.u32 %v5307, 16
        %v5465 = vrot.slane %v5463, 1
        %v5466 = vsel %vm1170, %v5461, %v5465
        %v5468 = vshrl.u32 %v5244, 16
        %v5470 = vshll.u32 %v5244, 16
        %v5472 = vrot.slane %v5470, 1
        %v5473 = vor.u32 %v5468, %v5472
        %v5475 = vshll.u32 %v5308, 16
        %v5477 = vrot.slane %v5475, 1
        %v5478 = vsel %vm1170, %v5473, %v5477
        %v5480 = vshrl.u32 %v5245, 16
        %v5482 = vshll.u32 %v5245, 16
        %v5484 = vrot.slane %v5482, 1
        %v5485 = vor.u32 %v5480, %v5484
        %v5487 = vshll.u32 %v5309, 16
        %v5489 = vrot.slane %v5487, 1
        %v5490 = vsel %vm1170, %v5485, %v5489
        %v5492 = vshrl.u32 %v5246, 16
        %v5494 = vshll.u32 %v5246, 16
        %v5496 = vrot.slane %v5494, 1
        %v5497 = vor.u32 %v5492, %v5496
        %v5499 = vshll.u32 %v5310, 16
        %v5501 = vrot.slane %v5499, 1
        %v5502 = vsel %vm1170, %v5497, %v5501
        %v5535 = vunpack.c.l.b16 %v5151
        %v5536 = vunpack.c.l.b16 %v5152
        %v5537 = vunpack.c.l.b16 %v5153
        %v5538 = vunpack.c.l.b16 %v5154
        %v5539 = vunpack.c.l.b16 %v5155
        %v5540 = vunpack.c.l.b16 %v5156
        %v5541 = vunpack.c.l.b16 %v5157
        %v5542 = vunpack.c.l.b16 %v5158
        %v5543 = vunpack.c.l.b16 %v5159
        %v5544 = vunpack.c.l.b16 %v5160
        %v5545 = vunpack.c.l.b16 %v5161
        %v5546 = vunpack.c.l.b16 %v5162
        %v5547 = vunpack.c.l.b16 %v5163
        %v5548 = vunpack.c.l.b16 %v5164
        %v5549 = vunpack.c.l.b16 %v5165
        %v5550 = vunpack.c.l.b16 %v5166
        %v5551 = vpack.c.b16 %v5200, %v5535
        %v5552 = vpack.c.b16 %v5202, %v5536
        %v5553 = vpack.c.b16 %v5204, %v5537
        %v5554 = vpack.c.b16 %v5206, %v5538
        %v5555 = vpack.c.b16 %v5208, %v5539
        %v5556 = vpack.c.b16 %v5210, %v5540
        %v5557 = vpack.c.b16 %v5212, %v5541
        %v5558 = vpack.c.b16 %v5214, %v5542
        %v5559 = vpack.c.b16 %v5216, %v5543
        %v5560 = vpack.c.b16 %v5218, %v5544
        %v5561 = vpack.c.b16 %v5220, %v5545
        %v5562 = vpack.c.b16 %v5222, %v5546
        %v5563 = vpack.c.b16 %v5224, %v5547
        %v5564 = vpack.c.b16 %v5226, %v5548
        %v5565 = vpack.c.b16 %v5228, %v5549
        %v5566 = vpack.c.b16 %v5230, %v5550
        %v5567 = vrot.slane %v5551, 1
        %v5568 = vrot.slane %v5295, 1
        %v5569 = vsel %vm1427, %v5567, %v5568
        %v5570 = vrot.slane %v5552, 1
        %v5571 = vrot.slane %v5296, 1
        %v5572 = vsel %vm1427, %v5570, %v5571
        %v5573 = vrot.slane %v5553, 1
        %v5574 = vrot.slane %v5297, 1
        %v5575 = vsel %vm1427, %v5573, %v5574
        %v5576 = vrot.slane %v5554, 1
        %v5577 = vrot.slane %v5298, 1
        %v5578 = vsel %vm1427, %v5576, %v5577
        %v5579 = vrot.slane %v5555, 1
        %v5580 = vrot.slane %v5299, 1
        %v5581 = vsel %vm1427, %v5579, %v5580
        %v5582 = vrot.slane %v5556, 1
        %v5583 = vrot.slane %v5300, 1
        %v5584 = vsel %vm1427, %v5582, %v5583
        %v5585 = vrot.slane %v5557, 1
        %v5586 = vrot.slane %v5301, 1
        %v5587 = vsel %vm1427, %v5585, %v5586
        %v5588 = vrot.slane %v5558, 1
        %v5589 = vrot.slane %v5302, 1
        %v5590 = vsel %vm1427, %v5588, %v5589
        %v5591 = vrot.slane %v5559, 1
        %v5592 = vrot.slane %v5303, 1
        %v5593 = vsel %vm1427, %v5591, %v5592
        %v5594 = vrot.slane %v5560, 1
        %v5595 = vrot.slane %v5304, 1
        %v5596 = vsel %vm1427, %v5594, %v5595
        %v5597 = vrot.slane %v5561, 1
        %v5598 = vrot.slane %v5305, 1
        %v5599 = vsel %vm1427, %v5597, %v5598
        %v5600 = vrot.slane %v5562, 1
        %v5601 = vrot.slane %v5306, 1
        %v5602 = vsel %vm1427, %v5600, %v5601
        %v5603 = vrot.slane %v5563, 1
        %v5604 = vrot.slane %v5307, 1
        %v5605 = vsel %vm1427, %v5603, %v5604
        %v5606 = vrot.slane %v5564, 1
        %v5607 = vrot.slane %v5308, 1
        %v5608 = vsel %vm1427, %v5606, %v5607
        %v5609 = vrot.slane %v5565, 1
        %v5610 = vrot.slane %v5309, 1
        %v5611 = vsel %vm1427, %v5609, %v5610
        %v5612 = vrot.slane %v5566, 1
        %v5613 = vrot.slane %v5310, 1
        %v5614 = vsel %vm1427, %v5612, %v5613
        %v5631 = vld [vmem:[#allocation4] sm:$0xff]
        %v5632 = vld [vmem:[#allocation4 + $0x8] sm:$0xff]
        %v5633 = vld [vmem:[#allocation4 + $0x10] sm:$0xff]
        %v5634 = vld [vmem:[#allocation4 + $0x18] sm:$0xff]
        %v5635 = vld [vmem:[#allocation4 + $0x20] sm:$0xff]
        %v5636 = vld [vmem:[#allocation4 + $0x28] sm:$0xff]
        %v5637 = vld [vmem:[#allocation4 + $0x30] sm:$0xff]
        %v5638 = vld [vmem:[#allocation4 + $0x38] sm:$0xff]
        %v5639 = vld [vmem:[#allocation4 + $0x40] sm:$0xff]
        %v5640 = vld [vmem:[#allocation4 + $0x48] sm:$0xff]
        %v5641 = vld [vmem:[#allocation4 + $0x50] sm:$0xff]
        %v5642 = vld [vmem:[#allocation4 + $0x58] sm:$0xff]
        %v5643 = vld [vmem:[#allocation4 + $0x60] sm:$0xff]
        %v5644 = vld [vmem:[#allocation4 + $0x68] sm:$0xff]
        %v5645 = vld [vmem:[#allocation4 + $0x70] sm:$0xff]
        %v5646 = vld [vmem:[#allocation4 + $0x78] sm:$0xff]
        %v5647 = vld [vmem:[#allocation4 + $0x80] sm:$0xff]
        %v5648 = vld [vmem:[#allocation4 + $0x88] sm:$0xff]
        %v5649 = vld [vmem:[#allocation4 + $0x90] sm:$0xff]
        %v5650 = vld [vmem:[#allocation4 + $0x98] sm:$0xff]
        %v5651 = vld [vmem:[#allocation4 + $0xa0] sm:$0xff]
        %v5652 = vld [vmem:[#allocation4 + $0xa8] sm:$0xff]
        %v5653 = vld [vmem:[#allocation4 + $0xb0] sm:$0xff]
        %v5654 = vld [vmem:[#allocation4 + $0xb8] sm:$0xff]
        %v5655 = vld [vmem:[#allocation4 + $0xc0] sm:$0xff]
        %v5656 = vld [vmem:[#allocation4 + $0xc8] sm:$0xff]
        %v5657 = vld [vmem:[#allocation4 + $0xd0] sm:$0xff]
        %v5658 = vld [vmem:[#allocation4 + $0xd8] sm:$0xff]
        %v5659 = vld [vmem:[#allocation4 + $0xe0] sm:$0xff]
        %v5660 = vld [vmem:[#allocation4 + $0xe8] sm:$0xff]
        %v5661 = vld [vmem:[#allocation4 + $0xf0] sm:$0xff]
        %v5662 = vld [vmem:[#allocation4 + $0xf8] sm:$0xff]
        %v5663 = vld [vmem:[#allocation5] sm:$0xf]
        %v5664 = vld [vmem:[#allocation5 + $0x4] sm:$0xf]
        %v5665 = vld [vmem:[#allocation5 + $0x8] sm:$0xf]
        %v5666 = vld [vmem:[#allocation5 + $0xc] sm:$0xf]
        %v5667 = vld [vmem:[#allocation5 + $0x10] sm:$0xf]
        %v5668 = vld [vmem:[#allocation5 + $0x14] sm:$0xf]
        %v5669 = vld [vmem:[#allocation5 + $0x18] sm:$0xf]
        %v5670 = vld [vmem:[#allocation5 + $0x1c] sm:$0xf]
        %v5671 = vld [vmem:[#allocation5 + $0x20] sm:$0xf]
        %v5672 = vld [vmem:[#allocation5 + $0x24] sm:$0xf]
        %v5673 = vld [vmem:[#allocation5 + $0x28] sm:$0xf]
        %v5674 = vld [vmem:[#allocation5 + $0x2c] sm:$0xf]
        %v5675 = vld [vmem:[#allocation5 + $0x30] sm:$0xf]
        %v5676 = vld [vmem:[#allocation5 + $0x34] sm:$0xf]
        %v5677 = vld [vmem:[#allocation5 + $0x38] sm:$0xf]
        %v5678 = vld [vmem:[#allocation5 + $0x3c] sm:$0xf]
        %v5679 = vld [vmem:[#allocation5 + $0x40] sm:$0xf]
        %v5680 = vld [vmem:[#allocation5 + $0x44] sm:$0xf]
        %v5681 = vld [vmem:[#allocation5 + $0x48] sm:$0xf]
        %v5682 = vld [vmem:[#allocation5 + $0x4c] sm:$0xf]
        %v5683 = vld [vmem:[#allocation5 + $0x50] sm:$0xf]
        %v5684 = vld [vmem:[#allocation5 + $0x54] sm:$0xf]
        %v5685 = vld [vmem:[#allocation5 + $0x58] sm:$0xf]
        %v5686 = vld [vmem:[#allocation5 + $0x5c] sm:$0xf]
        %v5687 = vld [vmem:[#allocation5 + $0x60] sm:$0xf]
        %v5688 = vld [vmem:[#allocation5 + $0x64] sm:$0xf]
        %v5689 = vld [vmem:[#allocation5 + $0x68] sm:$0xf]
        %v5690 = vld [vmem:[#allocation5 + $0x6c] sm:$0xf]
        %v5691 = vld [vmem:[#allocation5 + $0x70] sm:$0xf]
        %v5692 = vld [vmem:[#allocation5 + $0x74] sm:$0xf]
        %v5693 = vld [vmem:[#allocation5 + $0x78] sm:$0xf]
        %v5694 = vld [vmem:[#allocation5 + $0x7c] sm:$0xf]
        %v5695 = vld [vmem:[#allocation5 + $0x80] sm:$0xf]
        %v5696 = vld [vmem:[#allocation5 + $0x84] sm:$0xf]
        %v5697 = vld [vmem:[#allocation5 + $0x88] sm:$0xf]
        %v5698 = vld [vmem:[#allocation5 + $0x8c] sm:$0xf]
        %v5699 = vld [vmem:[#allocation5 + $0x90] sm:$0xf]
        %v5700 = vld [vmem:[#allocation5 + $0x94] sm:$0xf]
        %v5701 = vld [vmem:[#allocation5 + $0x98] sm:$0xf]
        %v5702 = vld [vmem:[#allocation5 + $0x9c] sm:$0xf]
        %v5703 = vld [vmem:[#allocation5 + $0xa0] sm:$0xf]
        %v5704 = vld [vmem:[#allocation5 + $0xa4] sm:$0xf]
        %v5705 = vld [vmem:[#allocation5 + $0xa8] sm:$0xf]
        %v5706 = vld [vmem:[#allocation5 + $0xac] sm:$0xf]
        %v5707 = vld [vmem:[#allocation5 + $0xb0] sm:$0xf]
        %v5708 = vld [vmem:[#allocation5 + $0xb4] sm:$0xf]
        %v5709 = vld [vmem:[#allocation5 + $0xb8] sm:$0xf]
        %v5710 = vld [vmem:[#allocation5 + $0xbc] sm:$0xf]
        %v5759 = vunpack.c.l.b16 %v5663
        %v5760 = vunpack.c.l.b16 %v5664
        %v5761 = vunpack.c.l.b16 %v5665
        %v5762 = vunpack.c.l.b16 %v5666
        %v5763 = vunpack.c.l.b16 %v5667
        %v5764 = vunpack.c.l.b16 %v5668
        %v5765 = vunpack.c.l.b16 %v5669
        %v5766 = vunpack.c.l.b16 %v5670
        %v5767 = vunpack.c.l.b16 %v5671
        %v5768 = vunpack.c.l.b16 %v5672
        %v5769 = vunpack.c.l.b16 %v5673
        %v5770 = vunpack.c.l.b16 %v5674
        %v5771 = vunpack.c.l.b16 %v5675
        %v5772 = vunpack.c.l.b16 %v5676
        %v5773 = vunpack.c.l.b16 %v5677
        %v5774 = vunpack.c.l.b16 %v5678
        %v5775 = vunpack.c.l.b16 %v5679
        %v5776 = vunpack.c.l.b16 %v5680
        %v5777 = vunpack.c.l.b16 %v5681
        %v5778 = vunpack.c.l.b16 %v5682
        %v5779 = vunpack.c.l.b16 %v5683
        %v5780 = vunpack.c.l.b16 %v5684
        %v5781 = vunpack.c.l.b16 %v5685
        %v5782 = vunpack.c.l.b16 %v5686
        %v5783 = vunpack.c.l.b16 %v5687
        %v5784 = vunpack.c.l.b16 %v5688
        %v5785 = vunpack.c.l.b16 %v5689
        %v5786 = vunpack.c.l.b16 %v5690
        %v5787 = vunpack.c.l.b16 %v5691
        %v5788 = vunpack.c.l.b16 %v5692
        %v5789 = vunpack.c.l.b16 %v5693
        %v5790 = vunpack.c.l.b16 %v5694
        %v5791 = vunpack.c.l.b16 %v5695
        %v5792 = vunpack.c.l.b16 %v5696
        %v5793 = vunpack.c.l.b16 %v5697
        %v5794 = vunpack.c.l.b16 %v5698
        %v5795 = vunpack.c.l.b16 %v5699
        %v5796 = vunpack.c.l.b16 %v5700
        %v5797 = vunpack.c.l.b16 %v5701
        %v5798 = vunpack.c.l.b16 %v5702
        %v5799 = vunpack.c.l.b16 %v5703
        %v5800 = vunpack.c.l.b16 %v5704
        %v5801 = vunpack.c.l.b16 %v5705
        %v5802 = vunpack.c.l.b16 %v5706
        %v5803 = vunpack.c.l.b16 %v5707
        %v5804 = vunpack.c.l.b16 %v5708
        %v5805 = vunpack.c.l.b16 %v5709
        %v5806 = vunpack.c.l.b16 %v5710
        %v5807 = vpack.c.b16 %v5760, %v5759
        %v5808 = vpack.c.b16 %v5762, %v5761
        %v5809 = vpack.c.b16 %v5764, %v5763
        %v5810 = vpack.c.b16 %v5766, %v5765
        %v5811 = vpack.c.b16 %v5768, %v5767
        %v5812 = vpack.c.b16 %v5770, %v5769
        %v5813 = vpack.c.b16 %v5772, %v5771
        %v5814 = vpack.c.b16 %v5774, %v5773
        %v5815 = vpack.c.b16 %v5776, %v5775
        %v5816 = vpack.c.b16 %v5778, %v5777
        %v5817 = vpack.c.b16 %v5780, %v5779
        %v5818 = vpack.c.b16 %v5782, %v5781
        %v5819 = vpack.c.b16 %v5784, %v5783
        %v5820 = vpack.c.b16 %v5786, %v5785
        %v5821 = vpack.c.b16 %v5788, %v5787
        %v5822 = vpack.c.b16 %v5790, %v5789
        %v5823 = vpack.c.b16 %v5792, %v5791
        %v5824 = vpack.c.b16 %v5794, %v5793
        %v5825 = vpack.c.b16 %v5796, %v5795
        %v5826 = vpack.c.b16 %v5798, %v5797
        %v5827 = vpack.c.b16 %v5800, %v5799
        %v5828 = vpack.c.b16 %v5802, %v5801
        %v5829 = vpack.c.b16 %v5804, %v5803
        %v5830 = vpack.c.b16 %v5806, %v5805
        %5855 = vmatprep.subr.bf16.mxu0 0
        %5856 = vmatpush1.bf16.msra.mxu0 %v5814
        %5857 = vmatprep.subr.bf16.mxu0 0
        %5858 = vmatpush1.bf16.msra.mxu0 %v5813
        %5859 = vmatprep.subr.bf16.mxu0 0
        %5860 = vmatpush1.bf16.msra.mxu0 %v5812
        %5861 = vmatprep.subr.bf16.mxu0 0
        %5862 = vmatpush1.bf16.msra.mxu0 %v5811
        %5863 = vmatprep.subr.bf16.mxu0 0
        %5864 = vmatpush1.bf16.msra.mxu0 %v5810
        %5865 = vmatprep.subr.bf16.mxu0 0
        %5866 = vmatpush1.bf16.msra.mxu0 %v5809
        %5867 = vmatprep.subr.bf16.mxu0 0
        %5868 = vmatpush1.bf16.msra.mxu0 %v5808
        %5869 = vmatprep.subr.bf16.mxu0 0
        %5870 = vmatpush1.bf16.msra.mxu0 %v5807
        %5871 = vmatprep.subr.bf16.mxu0 0
        %5872 = vmatpush2.bf16.msra.mxu0 %v5822
        %5873 = vmatprep.subr.bf16.mxu0 0
        %5874 = vmatpush2.bf16.msra.mxu0 %v5821
        %5875 = vmatprep.subr.bf16.mxu0 0
        %5876 = vmatpush2.bf16.msra.mxu0 %v5820
        %5877 = vmatprep.subr.bf16.mxu0 0
        %5878 = vmatpush2.bf16.msra.mxu0 %v5819
        %5879 = vmatprep.subr.bf16.mxu0 0
        %5880 = vmatpush2.bf16.msra.mxu0 %v5818
        %5881 = vmatprep.subr.bf16.mxu0 0
        %5882 = vmatpush2.bf16.msra.mxu0 %v5817
        %5883 = vmatprep.subr.bf16.mxu0 0
        %5884 = vmatpush2.bf16.msra.mxu0 %v5816
        %5885 = vmatprep.subr.bf16.mxu0 0
        %5886 = vmatpush2.bf16.msra.mxu0 %v5815
        %5887 = vmatprep.mubr.bf16.mxu0 %v5322
        %5888 = vmatmul.mubr.bf16.gmra.mxu0 %v5231
        %v5889 = vpop.f32.mrf.mxu0
        %v5890 = vadd.f32 0.0, %v5889
        %v5891 = vpop.f32.mrf.mxu0
        %v5892 = vpop.f32.mrf.mxu0
        %v5893 = vadd.f32 0.0, %v5892
        %v5894 = vpop.f32.mrf.mxu0
        %5895 = vmatprep.mubr.bf16.mxu0 %v5334
        %5896 = vmatmul.mubr.bf16.gmra.mxu0 %v5232
        %v5897 = vpop.f32.mrf.mxu0
        %v5898 = vadd.f32 0.0, %v5897
        %v5899 = vpop.f32.mrf.mxu0
        %v5900 = vpop.f32.mrf.mxu0
        %v5901 = vadd.f32 0.0, %v5900
        %v5902 = vpop.f32.mrf.mxu0
        %5903 = vmatprep.mubr.bf16.mxu0 %v5346
        %5904 = vmatmul.mubr.bf16.gmra.mxu0 %v5233
        %v5905 = vpop.f32.mrf.mxu0
        %v5906 = vadd.f32 0.0, %v5905
        %v5907 = vpop.f32.mrf.mxu0
        %v5908 = vpop.f32.mrf.mxu0
        %v5909 = vadd.f32 0.0, %v5908
        %v5910 = vpop.f32.mrf.mxu0
        %5911 = vmatprep.mubr.bf16.mxu0 %v5358
        %5912 = vmatmul.mubr.bf16.gmra.mxu0 %v5234
        %v5913 = vpop.f32.mrf.mxu0
        %v5914 = vadd.f32 0.0, %v5913
        %v5915 = vpop.f32.mrf.mxu0
        %v5916 = vpop.f32.mrf.mxu0
        %v5917 = vadd.f32 0.0, %v5916
        %v5918 = vpop.f32.mrf.mxu0
        %5919 = vmatprep.mubr.bf16.mxu0 %v5370
        %5920 = vmatmul.mubr.bf16.gmra.mxu0 %v5235
        %v5921 = vpop.f32.mrf.mxu0
        %v5922 = vadd.f32 0.0, %v5921
        %v5923 = vpop.f32.mrf.mxu0
        %v5924 = vpop.f32.mrf.mxu0
        %v5925 = vadd.f32 0.0, %v5924
        %v5926 = vpop.f32.mrf.mxu0
        %5927 = vmatprep.mubr.bf16.mxu0 %v5382
        %5928 = vmatmul.mubr.bf16.gmra.mxu0 %v5236
        %v5929 = vpop.f32.mrf.mxu0
        %v5930 = vadd.f32 0.0, %v5929
        %v5931 = vpop.f32.mrf.mxu0
        %v5932 = vpop.f32.mrf.mxu0
        %v5933 = vadd.f32 0.0, %v5932
        %v5934 = vpop.f32.mrf.mxu0
        %5935 = vmatprep.mubr.bf16.mxu0 %v5394
        %5936 = vmatmul.mubr.bf16.gmra.mxu0 %v5237
        %v5937 = vpop.f32.mrf.mxu0
        %v5938 = vadd.f32 0.0, %v5937
        %v5939 = vpop.f32.mrf.mxu0
        %v5940 = vpop.f32.mrf.mxu0
        %v5941 = vadd.f32 0.0, %v5940
        %v5942 = vpop.f32.mrf.mxu0
        %5943 = vmatprep.mubr.bf16.mxu0 %v5406
        %5944 = vmatmul.mubr.bf16.gmra.mxu0 %v5238
        %v5945 = vpop.f32.mrf.mxu0
        %v5946 = vadd.f32 0.0, %v5945
        %v5947 = vpop.f32.mrf.mxu0
        %v5948 = vpop.f32.mrf.mxu0
        %v5949 = vadd.f32 0.0, %v5948
        %v5950 = vpop.f32.mrf.mxu0
        %5951 = vmatprep.mubr.bf16.mxu0 %v5418
        %5952 = vmatmul.mubr.bf16.gmra.mxu0 %v5239
        %v5953 = vpop.f32.mrf.mxu0
        %v5954 = vadd.f32 0.0, %v5953
        %v5955 = vpop.f32.mrf.mxu0
        %v5956 = vpop.f32.mrf.mxu0
        %v5957 = vadd.f32 0.0, %v5956
        %v5958 = vpop.f32.mrf.mxu0
        %5959 = vmatprep.mubr.bf16.mxu0 %v5430
        %5960 = vmatmul.mubr.bf16.gmra.mxu0 %v5240
        %v5961 = vpop.f32.mrf.mxu0
        %v5962 = vadd.f32 0.0, %v5961
        %v5963 = vpop.f32.mrf.mxu0
        %v5964 = vpop.f32.mrf.mxu0
        %v5965 = vadd.f32 0.0, %v5964
        %v5966 = vpop.f32.mrf.mxu0
        %5967 = vmatprep.mubr.bf16.mxu0 %v5442
        %5968 = vmatmul.mubr.bf16.gmra.mxu0 %v5241
        %v5969 = vpop.f32.mrf.mxu0
        %v5970 = vadd.f32 0.0, %v5969
        %v5971 = vpop.f32.mrf.mxu0
        %v5972 = vpop.f32.mrf.mxu0
        %v5973 = vadd.f32 0.0, %v5972
        %v5974 = vpop.f32.mrf.mxu0
        %5975 = vmatprep.mubr.bf16.mxu0 %v5454
        %5976 = vmatmul.mubr.bf16.gmra.mxu0 %v5242
        %v5977 = vpop.f32.mrf.mxu0
        %v5978 = vadd.f32 0.0, %v5977
        %v5979 = vpop.f32.mrf.mxu0
        %v5980 = vpop.f32.mrf.mxu0
        %v5981 = vadd.f32 0.0, %v5980
        %v5982 = vpop.f32.mrf.mxu0
        %5983 = vmatprep.mubr.bf16.mxu0 %v5466
        %5984 = vmatmul.mubr.bf16.gmra.mxu0 %v5243
        %v5985 = vpop.f32.mrf.mxu0
        %v5986 = vadd.f32 0.0, %v5985
        %v5987 = vpop.f32.mrf.mxu0
        %v5988 = vpop.f32.mrf.mxu0
        %v5989 = vadd.f32 0.0, %v5988
        %v5990 = vpop.f32.mrf.mxu0
        %5991 = vmatprep.mubr.bf16.mxu0 %v5478
        %5992 = vmatmul.mubr.bf16.gmra.mxu0 %v5244
        %v5993 = vpop.f32.mrf.mxu0
        %v5994 = vadd.f32 0.0, %v5993
        %v5995 = vpop.f32.mrf.mxu0
        %v5996 = vpop.f32.mrf.mxu0
        %v5997 = vadd.f32 0.0, %v5996
        %v5998 = vpop.f32.mrf.mxu0
        %5999 = vmatprep.mubr.bf16.mxu0 %v5490
        %6000 = vmatmul.mubr.bf16.gmra.mxu0 %v5245
        %v6001 = vpop.f32.mrf.mxu0
        %v6002 = vadd.f32 0.0, %v6001
        %v6003 = vpop.f32.mrf.mxu0
        %v6004 = vpop.f32.mrf.mxu0
        %v6005 = vadd.f32 0.0, %v6004
        %v6006 = vpop.f32.mrf.mxu0
        %6007 = vmatprep.mubr.bf16.mxu0 %v5502
        %6008 = vmatmul.mubr.bf16.gmra.mxu0 %v5246
        %v6009 = vpop.f32.mrf.mxu0
        %v6010 = vadd.f32 0.0, %v6009
        %v6011 = vpop.f32.mrf.mxu0
        %v6012 = vpop.f32.mrf.mxu0
        %v6013 = vadd.f32 0.0, %v6012
        %v6014 = vpop.f32.mrf.mxu0
        %6015 = vdwg.mxu0
        %6016 = vmatprep.subr.bf16.mxu0 0
        %6017 = vmatpush1.bf16.msra.mxu0 %v5830
        %6018 = vmatprep.subr.bf16.mxu0 0
        %6019 = vmatpush1.bf16.msra.mxu0 %v5829
        %6020 = vmatprep.subr.bf16.mxu0 0
        %6021 = vmatpush1.bf16.msra.mxu0 %v5828
        %6022 = vmatprep.subr.bf16.mxu0 0
        %6023 = vmatpush1.bf16.msra.mxu0 %v5827
        %6024 = vmatprep.subr.bf16.mxu0 0
        %6025 = vmatpush1.bf16.msra.mxu0 %v5826
        %6026 = vmatprep.subr.bf16.mxu0 0
        %6027 = vmatpush1.bf16.msra.mxu0 %v5825
        %6028 = vmatprep.subr.bf16.mxu0 0
        %6029 = vmatpush1.bf16.msra.mxu0 %v5824
        %6030 = vmatprep.subr.bf16.mxu0 0
        %6031 = vmatpush1.bf16.msra.mxu0 %v5823
        %6032 = vmatprep.subr.bf16.mxu0 0
        %6033 = vmatpush2.bf16.msra.mxu0 0
        %6034 = vmatprep.subr.bf16.mxu0 0
        %6035 = vmatpush2.bf16.msra.mxu0 0
        %6036 = vmatprep.subr.bf16.mxu0 0
        %6037 = vmatpush2.bf16.msra.mxu0 0
        %6038 = vmatprep.subr.bf16.mxu0 0
        %6039 = vmatpush2.bf16.msra.mxu0 0
        %6040 = vmatprep.subr.bf16.mxu0 0
        %6041 = vmatpush2.bf16.msra.mxu0 0
        %6042 = vmatprep.subr.bf16.mxu0 0
        %6043 = vmatpush2.bf16.msra.mxu0 0
        %6044 = vmatprep.subr.bf16.mxu0 0
        %6045 = vmatpush2.bf16.msra.mxu0 0
        %6046 = vmatprep.subr.bf16.mxu0 0
        %6047 = vmatpush2.bf16.msra.mxu0 0
        %6048 = vmatprep.mubr.bf16.mxu0 0
        %6049 = vmatmul.mubr.bf16.gmra.mxu0 %v5569
        %v6050 = vpop.f32.mrf.mxu0
        %v6051 = vadd.f32 %v5890, %v6050
        %v6052 = vpop.f32.mrf.mxu0
        %v6053 = vpop.f32.mrf.mxu0
        %v6054 = vadd.f32 %v5893, %v6053
        %v6055 = vpop.f32.mrf.mxu0
        %6056 = vmatprep.mubr.bf16.mxu0 0
        %6057 = vmatmul.mubr.bf16.gmra.mxu0 %v5572
        %v6058 = vpop.f32.mrf.mxu0
        %v6059 = vadd.f32 %v5898, %v6058
        %v6060 = vpop.f32.mrf.mxu0
        %v6061 = vpop.f32.mrf.mxu0
        %v6062 = vadd.f32 %v5901, %v6061
        %v6063 = vpop.f32.mrf.mxu0
        %6064 = vmatprep.mubr.bf16.mxu0 0
        %6065 = vmatmul.mubr.bf16.gmra.mxu0 %v5575
        %v6066 = vpop.f32.mrf.mxu0
        %v6067 = vadd.f32 %v5906, %v6066
        %v6068 = vpop.f32.mrf.mxu0
        %v6069 = vpop.f32.mrf.mxu0
        %v6070 = vadd.f32 %v5909, %v6069
        %v6071 = vpop.f32.mrf.mxu0
        %6072 = vmatprep.mubr.bf16.mxu0 0
        %6073 = vmatmul.mubr.bf16.gmra.mxu0 %v5578
        %v6074 = vpop.f32.mrf.mxu0
        %v6075 = vadd.f32 %v5914, %v6074
        %v6076 = vpop.f32.mrf.mxu0
        %v6077 = vpop.f32.mrf.mxu0
        %v6078 = vadd.f32 %v5917, %v6077
        %v6079 = vpop.f32.mrf.mxu0
        %6080 = vmatprep.mubr.bf16.mxu0 0
        %6081 = vmatmul.mubr.bf16.gmra.mxu0 %v5581
        %v6082 = vpop.f32.mrf.mxu0
        %v6083 = vadd.f32 %v5922, %v6082
        %v6084 = vpop.f32.mrf.mxu0
        %v6085 = vpop.f32.mrf.mxu0
        %v6086 = vadd.f32 %v5925, %v6085
        %v6087 = vpop.f32.mrf.mxu0
        %6088 = vmatprep.mubr.bf16.mxu0 0
        %6089 = vmatmul.mubr.bf16.gmra.mxu0 %v5584
        %v6090 = vpop.f32.mrf.mxu0
        %v6091 = vadd.f32 %v5930, %v6090
        %v6092 = vpop.f32.mrf.mxu0
        %v6093 = vpop.f32.mrf.mxu0
        %v6094 = vadd.f32 %v5933, %v6093
        %v6095 = vpop.f32.mrf.mxu0
        %6096 = vmatprep.mubr.bf16.mxu0 0
        %6097 = vmatmul.mubr.bf16.gmra.mxu0 %v5587
        %v6098 = vpop.f32.mrf.mxu0
        %v6099 = vadd.f32 %v5938, %v6098
        %v6100 = vpop.f32.mrf.mxu0
        %v6101 = vpop.f32.mrf.mxu0
        %v6102 = vadd.f32 %v5941, %v6101
        %v6103 = vpop.f32.mrf.mxu0
        %6104 = vmatprep.mubr.bf16.mxu0 0
        %6105 = vmatmul.mubr.bf16.gmra.mxu0 %v5590
        %v6106 = vpop.f32.mrf.mxu0
        %v6107 = vadd.f32 %v5946, %v6106
        %v6108 = vpop.f32.mrf.mxu0
        %v6109 = vpop.f32.mrf.mxu0
        %v6110 = vadd.f32 %v5949, %v6109
        %v6111 = vpop.f32.mrf.mxu0
        %6112 = vmatprep.mubr.bf16.mxu0 0
        %6113 = vmatmul.mubr.bf16.gmra.mxu0 %v5593
        %v6114 = vpop.f32.mrf.mxu0
        %v6115 = vadd.f32 %v5954, %v6114
        %v6116 = vpop.f32.mrf.mxu0
        %v6117 = vpop.f32.mrf.mxu0
        %v6118 = vadd.f32 %v5957, %v6117
        %v6119 = vpop.f32.mrf.mxu0
        %6120 = vmatprep.mubr.bf16.mxu0 0
        %6121 = vmatmul.mubr.bf16.gmra.mxu0 %v5596
        %v6122 = vpop.f32.mrf.mxu0
        %v6123 = vadd.f32 %v5962, %v6122
        %v6124 = vpop.f32.mrf.mxu0
        %v6125 = vpop.f32.mrf.mxu0
        %v6126 = vadd.f32 %v5965, %v6125
        %v6127 = vpop.f32.mrf.mxu0
        %6128 = vmatprep.mubr.bf16.mxu0 0
        %6129 = vmatmul.mubr.bf16.gmra.mxu0 %v5599
        %v6130 = vpop.f32.mrf.mxu0
        %v6131 = vadd.f32 %v5970, %v6130
        %v6132 = vpop.f32.mrf.mxu0
        %v6133 = vpop.f32.mrf.mxu0
        %v6134 = vadd.f32 %v5973, %v6133
        %v6135 = vpop.f32.mrf.mxu0
        %6136 = vmatprep.mubr.bf16.mxu0 0
        %6137 = vmatmul.mubr.bf16.gmra.mxu0 %v5602
        %v6138 = vpop.f32.mrf.mxu0
        %v6139 = vadd.f32 %v5978, %v6138
        %v6140 = vpop.f32.mrf.mxu0
        %v6141 = vpop.f32.mrf.mxu0
        %v6142 = vadd.f32 %v5981, %v6141
        %v6143 = vpop.f32.mrf.mxu0
        %6144 = vmatprep.mubr.bf16.mxu0 0
        %6145 = vmatmul.mubr.bf16.gmra.mxu0 %v5605
        %v6146 = vpop.f32.mrf.mxu0
        %v6147 = vadd.f32 %v5986, %v6146
        %v6148 = vpop.f32.mrf.mxu0
        %v6149 = vpop.f32.mrf.mxu0
        %v6150 = vadd.f32 %v5989, %v6149
        %v6151 = vpop.f32.mrf.mxu0
        %6152 = vmatprep.mubr.bf16.mxu0 0
        %6153 = vmatmul.mubr.bf16.gmra.mxu0 %v5608
        %v6154 = vpop.f32.mrf.mxu0
        %v6155 = vadd.f32 %v5994, %v6154
        %v6156 = vpop.f32.mrf.mxu0
        %v6157 = vpop.f32.mrf.mxu0
        %v6158 = vadd.f32 %v5997, %v6157
        %v6159 = vpop.f32.mrf.mxu0
        %6160 = vmatprep.mubr.bf16.mxu0 0
        %6161 = vmatmul.mubr.bf16.gmra.mxu0 %v5611
        %v6162 = vpop.f32.mrf.mxu0
        %v6163 = vadd.f32 %v6002, %v6162
        %v6164 = vpop.f32.mrf.mxu0
        %v6165 = vpop.f32.mrf.mxu0
        %v6166 = vadd.f32 %v6005, %v6165
        %v6167 = vpop.f32.mrf.mxu0
        %6168 = vmatprep.mubr.bf16.mxu0 0
        %6169 = vmatmul.mubr.bf16.gmra.mxu0 %v5614
        %v6170 = vpop.f32.mrf.mxu0
        %v6171 = vadd.f32 %v6010, %v6170
        %v6172 = vpop.f32.mrf.mxu0
        %v6173 = vpop.f32.mrf.mxu0
        %v6174 = vadd.f32 %v6013, %v6173
        %v6175 = vpop.f32.mrf.mxu0
        %6176 = vdwg.mxu0
        %v6177 = vadd.f32 %v5631, %v6051
        %v6178 = vadd.f32 %v5632, %v6054
        %v6179 = vadd.f32 %v5633, %v6059
        %v6180 = vadd.f32 %v5634, %v6062
        %v6181 = vadd.f32 %v5635, %v6067
        %v6182 = vadd.f32 %v5636, %v6070
        %v6183 = vadd.f32 %v5637, %v6075
        %v6184 = vadd.f32 %v5638, %v6078
        %v6185 = vadd.f32 %v5639, %v6083
        %v6186 = vadd.f32 %v5640, %v6086
        %v6187 = vadd.f32 %v5641, %v6091
        %v6188 = vadd.f32 %v5642, %v6094
        %v6189 = vadd.f32 %v5643, %v6099
        %v6190 = vadd.f32 %v5644, %v6102
        %v6191 = vadd.f32 %v5645, %v6107
        %v6192 = vadd.f32 %v5646, %v6110
        %v6193 = vadd.f32 %v5647, %v6115
        %v6194 = vadd.f32 %v5648, %v6118
        %v6195 = vadd.f32 %v5649, %v6123
        %v6196 = vadd.f32 %v5650, %v6126
        %v6197 = vadd.f32 %v5651, %v6131
        %v6198 = vadd.f32 %v5652, %v6134
        %v6199 = vadd.f32 %v5653, %v6139
        %v6200 = vadd.f32 %v5654, %v6142
        %v6201 = vadd.f32 %v5655, %v6147
        %v6202 = vadd.f32 %v5656, %v6150
        %v6203 = vadd.f32 %v5657, %v6155
        %v6204 = vadd.f32 %v5658, %v6158
        %v6205 = vadd.f32 %v5659, %v6163
        %v6206 = vadd.f32 %v5660, %v6166
        %v6207 = vadd.f32 %v5661, %v6171
        %v6208 = vadd.f32 %v5662, %v6174
        %6209 = vst [vmem:[#allocation4] sm:$0xff] %v6177
        %6210 = vst [vmem:[#allocation4 + $0x8] sm:$0xff] %v6178
        %6211 = vst [vmem:[#allocation4 + $0x10] sm:$0xff] %v6179
        %6212 = vst [vmem:[#allocation4 + $0x18] sm:$0xff] %v6180
        %6213 = vst [vmem:[#allocation4 + $0x20] sm:$0xff] %v6181
        %6214 = vst [vmem:[#allocation4 + $0x28] sm:$0xff] %v6182
        %6215 = vst [vmem:[#allocation4 + $0x30] sm:$0xff] %v6183
        %6216 = vst [vmem:[#allocation4 + $0x38] sm:$0xff] %v6184
        %6217 = vst [vmem:[#allocation4 + $0x40] sm:$0xff] %v6185
        %6218 = vst [vmem:[#allocation4 + $0x48] sm:$0xff] %v6186
        %6219 = vst [vmem:[#allocation4 + $0x50] sm:$0xff] %v6187
        %6220 = vst [vmem:[#allocation4 + $0x58] sm:$0xff] %v6188
        %6221 = vst [vmem:[#allocation4 + $0x60] sm:$0xff] %v6189
        %6222 = vst [vmem:[#allocation4 + $0x68] sm:$0xff] %v6190
        %6223 = vst [vmem:[#allocation4 + $0x70] sm:$0xff] %v6191
        %6224 = vst [vmem:[#allocation4 + $0x78] sm:$0xff] %v6192
        %6225 = vst [vmem:[#allocation4 + $0x80] sm:$0xff] %v6193
        %6226 = vst [vmem:[#allocation4 + $0x88] sm:$0xff] %v6194
        %6227 = vst [vmem:[#allocation4 + $0x90] sm:$0xff] %v6195
        %6228 = vst [vmem:[#allocation4 + $0x98] sm:$0xff] %v6196
        %6229 = vst [vmem:[#allocation4 + $0xa0] sm:$0xff] %v6197
        %6230 = vst [vmem:[#allocation4 + $0xa8] sm:$0xff] %v6198
        %6231 = vst [vmem:[#allocation4 + $0xb0] sm:$0xff] %v6199
        %6232 = vst [vmem:[#allocation4 + $0xb8] sm:$0xff] %v6200
        %6233 = vst [vmem:[#allocation4 + $0xc0] sm:$0xff] %v6201
        %6234 = vst [vmem:[#allocation4 + $0xc8] sm:$0xff] %v6202
        %6235 = vst [vmem:[#allocation4 + $0xd0] sm:$0xff] %v6203
        %6236 = vst [vmem:[#allocation4 + $0xd8] sm:$0xff] %v6204
        %6237 = vst [vmem:[#allocation4 + $0xe0] sm:$0xff] %v6205
        %6238 = vst [vmem:[#allocation4 + $0xe8] sm:$0xff] %v6206
        %6239 = vst [vmem:[#allocation4 + $0xf0] sm:$0xff] %v6207
        %6240 = vst [vmem:[#allocation4 + $0xf8] sm:$0xff] %v6208
        %v6241 = vld [vmem:[%s4954] sm:$0xf]
        %v6242 = vld [vmem:[%s4954 + $0x4] sm:$0xf]
        %v6243 = vld [vmem:[%s4954 + $0xc] sm:$0xf]
        %v6244 = vld [vmem:[%s4954 + $0x10] sm:$0xf]
        %v6245 = vld [vmem:[%s4954 + $0x18] sm:$0xf]
        %v6246 = vld [vmem:[%s4954 + $0x1c] sm:$0xf]
        %v6247 = vld [vmem:[%s4954 + $0x24] sm:$0xf]
        %v6248 = vld [vmem:[%s4954 + $0x28] sm:$0xf]
        %v6249 = vld [vmem:[%s4954 + $0x30] sm:$0xf]
        %v6250 = vld [vmem:[%s4954 + $0x34] sm:$0xf]
        %v6251 = vld [vmem:[%s4954 + $0x3c] sm:$0xf]
        %v6252 = vld [vmem:[%s4954 + $0x40] sm:$0xf]
        %v6253 = vld [vmem:[%s4954 + $0x48] sm:$0xf]
        %v6254 = vld [vmem:[%s4954 + $0x4c] sm:$0xf]
        %v6255 = vld [vmem:[%s4954 + $0x54] sm:$0xf]
        %v6256 = vld [vmem:[%s4954 + $0x58] sm:$0xf]
        %v6257 = vld [vmem:[%s4954 + $0x60] sm:$0xf]
        %v6258 = vld [vmem:[%s4954 + $0x64] sm:$0xf]
        %v6259 = vld [vmem:[%s4954 + $0x6c] sm:$0xf]
        %v6260 = vld [vmem:[%s4954 + $0x70] sm:$0xf]
        %v6261 = vld [vmem:[%s4954 + $0x78] sm:$0xf]
        %v6262 = vld [vmem:[%s4954 + $0x7c] sm:$0xf]
        %v6263 = vld [vmem:[%s4954 + $0x84] sm:$0xf]
        %v6264 = vld [vmem:[%s4954 + $0x88] sm:$0xf]
        %v6265 = vld [vmem:[%s4954 + $0x90] sm:$0xf]
        %v6266 = vld [vmem:[%s4954 + $0x94] sm:$0xf]
        %v6267 = vld [vmem:[%s4954 + $0x9c] sm:$0xf]
        %v6268 = vld [vmem:[%s4954 + $0xa0] sm:$0xf]
        %v6269 = vld [vmem:[%s4954 + $0xa8] sm:$0xf]
        %v6270 = vld [vmem:[%s4954 + $0xac] sm:$0xf]
        %v6271 = vld [vmem:[%s4954 + $0xb4] sm:$0xf]
        %v6272 = vld [vmem:[%s4954 + $0xb8] sm:$0xf]
        %v6273 = vld [vmem:[%s4954 + $0x8] sm:$0x1]
        %v6274 = vld [vmem:[%s4954 + $0x14] sm:$0x1]
        %v6275 = vld [vmem:[%s4954 + $0x20] sm:$0x1]
        %v6276 = vld [vmem:[%s4954 + $0x2c] sm:$0x1]
        %v6277 = vld [vmem:[%s4954 + $0x38] sm:$0x1]
        %v6278 = vld [vmem:[%s4954 + $0x44] sm:$0x1]
        %v6279 = vld [vmem:[%s4954 + $0x50] sm:$0x1]
        %v6280 = vld [vmem:[%s4954 + $0x5c] sm:$0x1]
        %v6281 = vld [vmem:[%s4954 + $0x68] sm:$0x1]
        %v6282 = vld [vmem:[%s4954 + $0x74] sm:$0x1]
        %v6283 = vld [vmem:[%s4954 + $0x80] sm:$0x1]
        %v6284 = vld [vmem:[%s4954 + $0x8c] sm:$0x1]
        %v6285 = vld [vmem:[%s4954 + $0x98] sm:$0x1]
        %v6286 = vld [vmem:[%s4954 + $0xa4] sm:$0x1]
        %v6287 = vld [vmem:[%s4954 + $0xb0] sm:$0x1]
        %v6288 = vld [vmem:[%s4954 + $0xbc] sm:$0x1]
        %v6289 = vld [vmem:[%s4954] sm:$0xe]
        %v6290 = vld [vmem:[%s4954 + $0xc] sm:$0xe]
        %v6291 = vld [vmem:[%s4954 + $0x18] sm:$0xe]
        %v6292 = vld [vmem:[%s4954 + $0x24] sm:$0xe]
        %v6293 = vld [vmem:[%s4954 + $0x30] sm:$0xe]
        %v6294 = vld [vmem:[%s4954 + $0x3c] sm:$0xe]
        %v6295 = vld [vmem:[%s4954 + $0x48] sm:$0xe]
        %v6296 = vld [vmem:[%s4954 + $0x54] sm:$0xe]
        %v6297 = vld [vmem:[%s4954 + $0x60] sm:$0xe]
        %v6298 = vld [vmem:[%s4954 + $0x6c] sm:$0xe]
        %v6299 = vld [vmem:[%s4954 + $0x78] sm:$0xe]
        %v6300 = vld [vmem:[%s4954 + $0x84] sm:$0xe]
        %v6301 = vld [vmem:[%s4954 + $0x90] sm:$0xe]
        %v6302 = vld [vmem:[%s4954 + $0x9c] sm:$0xe]
        %v6303 = vld [vmem:[%s4954 + $0xa8] sm:$0xe]
        %v6304 = vld [vmem:[%s4954 + $0xb4] sm:$0xe]
        %v6337 = vunpack.c.l.b16 %v6241
        %v6338 = vunpack.c.l.b16 %v6242
        %v6339 = vunpack.c.l.b16 %v6243
        %v6340 = vunpack.c.l.b16 %v6244
        %v6341 = vunpack.c.l.b16 %v6245
        %v6342 = vunpack.c.l.b16 %v6246
        %v6343 = vunpack.c.l.b16 %v6247
        %v6344 = vunpack.c.l.b16 %v6248
        %v6345 = vunpack.c.l.b16 %v6249
        %v6346 = vunpack.c.l.b16 %v6250
        %v6347 = vunpack.c.l.b16 %v6251
        %v6348 = vunpack.c.l.b16 %v6252
        %v6349 = vunpack.c.l.b16 %v6253
        %v6350 = vunpack.c.l.b16 %v6254
        %v6351 = vunpack.c.l.b16 %v6255
        %v6352 = vunpack.c.l.b16 %v6256
        %v6353 = vunpack.c.l.b16 %v6257
        %v6354 = vunpack.c.l.b16 %v6258
        %v6355 = vunpack.c.l.b16 %v6259
        %v6356 = vunpack.c.l.b16 %v6260
        %v6357 = vunpack.c.l.b16 %v6261
        %v6358 = vunpack.c.l.b16 %v6262
        %v6359 = vunpack.c.l.b16 %v6263
        %v6360 = vunpack.c.l.b16 %v6264
        %v6361 = vunpack.c.l.b16 %v6265
        %v6362 = vunpack.c.l.b16 %v6266
        %v6363 = vunpack.c.l.b16 %v6267
        %v6364 = vunpack.c.l.b16 %v6268
        %v6365 = vunpack.c.l.b16 %v6269
        %v6366 = vunpack.c.l.b16 %v6270
        %v6367 = vunpack.c.l.b16 %v6271
        %v6368 = vunpack.c.l.b16 %v6272
        %v6369 = vpack.c.b16 %v6338, %v6337
        %v6370 = vpack.c.b16 %v6340, %v6339
        %v6371 = vpack.c.b16 %v6342, %v6341
        %v6372 = vpack.c.b16 %v6344, %v6343
        %v6373 = vpack.c.b16 %v6346, %v6345
        %v6374 = vpack.c.b16 %v6348, %v6347
        %v6375 = vpack.c.b16 %v6350, %v6349
        %v6376 = vpack.c.b16 %v6352, %v6351
        %v6377 = vpack.c.b16 %v6354, %v6353
        %v6378 = vpack.c.b16 %v6356, %v6355
        %v6379 = vpack.c.b16 %v6358, %v6357
        %v6380 = vpack.c.b16 %v6360, %v6359
        %v6381 = vpack.c.b16 %v6362, %v6361
        %v6382 = vpack.c.b16 %v6364, %v6363
        %v6383 = vpack.c.b16 %v6366, %v6365
        %v6384 = vpack.c.b16 %v6368, %v6367
        %v6417 = vunpack.c.l.b16 %v6273
        %v6418 = vunpack.c.l.b16 %v6274
        %v6419 = vunpack.c.l.b16 %v6275
        %v6420 = vunpack.c.l.b16 %v6276
        %v6421 = vunpack.c.l.b16 %v6277
        %v6422 = vunpack.c.l.b16 %v6278
        %v6423 = vunpack.c.l.b16 %v6279
        %v6424 = vunpack.c.l.b16 %v6280
        %v6425 = vunpack.c.l.b16 %v6281
        %v6426 = vunpack.c.l.b16 %v6282
        %v6427 = vunpack.c.l.b16 %v6283
        %v6428 = vunpack.c.l.b16 %v6284
        %v6429 = vunpack.c.l.b16 %v6285
        %v6430 = vunpack.c.l.b16 %v6286
        %v6431 = vunpack.c.l.b16 %v6287
        %v6432 = vunpack.c.l.b16 %v6288
        %v6433 = vpack.c.b16 %v6417, %v6417
        %v6434 = vpack.c.b16 %v6418, %v6418
        %v6435 = vpack.c.b16 %v6419, %v6419
        %v6436 = vpack.c.b16 %v6420, %v6420
        %v6437 = vpack.c.b16 %v6421, %v6421
        %v6438 = vpack.c.b16 %v6422, %v6422
        %v6439 = vpack.c.b16 %v6423, %v6423
        %v6440 = vpack.c.b16 %v6424, %v6424
        %v6441 = vpack.c.b16 %v6425, %v6425
        %v6442 = vpack.c.b16 %v6426, %v6426
        %v6443 = vpack.c.b16 %v6427, %v6427
        %v6444 = vpack.c.b16 %v6428, %v6428
        %v6445 = vpack.c.b16 %v6429, %v6429
        %v6446 = vpack.c.b16 %v6430, %v6430
        %v6447 = vpack.c.b16 %v6431, %v6431
        %v6448 = vpack.c.b16 %v6432, %v6432
        %v6450 = vshrl.u32 %v6369, 16
        %v6452 = vshll.u32 %v6369, 16
        %v6454 = vrot.slane %v6452, 1
        %v6455 = vor.u32 %v6450, %v6454
        %v6457 = vshll.u32 %v6433, 16
        %v6459 = vrot.slane %v6457, 1
        %v6460 = vsel %vm1170, %v6455, %v6459
        %v6462 = vshrl.u32 %v6370, 16
        %v6464 = vshll.u32 %v6370, 16
        %v6466 = vrot.slane %v6464, 1
        %v6467 = vor.u32 %v6462, %v6466
        %v6469 = vshll.u32 %v6434, 16
        %v6471 = vrot.slane %v6469, 1
        %v6472 = vsel %vm1170, %v6467, %v6471
        %v6474 = vshrl.u32 %v6371, 16
        %v6476 = vshll.u32 %v6371, 16
        %v6478 = vrot.slane %v6476, 1
        %v6479 = vor.u32 %v6474, %v6478
        %v6481 = vshll.u32 %v6435, 16
        %v6483 = vrot.slane %v6481, 1
        %v6484 = vsel %vm1170, %v6479, %v6483
        %v6486 = vshrl.u32 %v6372, 16
        %v6488 = vshll.u32 %v6372, 16
        %v6490 = vrot.slane %v6488, 1
        %v6491 = vor.u32 %v6486, %v6490
        %v6493 = vshll.u32 %v6436, 16
        %v6495 = vrot.slane %v6493, 1
        %v6496 = vsel %vm1170, %v6491, %v6495
        %v6498 = vshrl.u32 %v6373, 16
        %v6500 = vshll.u32 %v6373, 16
        %v6502 = vrot.slane %v6500, 1
        %v6503 = vor.u32 %v6498, %v6502
        %v6505 = vshll.u32 %v6437, 16
        %v6507 = vrot.slane %v6505, 1
        %v6508 = vsel %vm1170, %v6503, %v6507
        %v6510 = vshrl.u32 %v6374, 16
        %v6512 = vshll.u32 %v6374, 16
        %v6514 = vrot.slane %v6512, 1
        %v6515 = vor.u32 %v6510, %v6514
        %v6517 = vshll.u32 %v6438, 16
        %v6519 = vrot.slane %v6517, 1
        %v6520 = vsel %vm1170, %v6515, %v6519
        %v6522 = vshrl.u32 %v6375, 16
        %v6524 = vshll.u32 %v6375, 16
        %v6526 = vrot.slane %v6524, 1
        %v6527 = vor.u32 %v6522, %v6526
        %v6529 = vshll.u32 %v6439, 16
        %v6531 = vrot.slane %v6529, 1
        %v6532 = vsel %vm1170, %v6527, %v6531
        %v6534 = vshrl.u32 %v6376, 16
        %v6536 = vshll.u32 %v6376, 16
        %v6538 = vrot.slane %v6536, 1
        %v6539 = vor.u32 %v6534, %v6538
        %v6541 = vshll.u32 %v6440, 16
        %v6543 = vrot.slane %v6541, 1
        %v6544 = vsel %vm1170, %v6539, %v6543
        %v6546 = vshrl.u32 %v6377, 16
        %v6548 = vshll.u32 %v6377, 16
        %v6550 = vrot.slane %v6548, 1
        %v6551 = vor.u32 %v6546, %v6550
        %v6553 = vshll.u32 %v6441, 16
        %v6555 = vrot.slane %v6553, 1
        %v6556 = vsel %vm1170, %v6551, %v6555
        %v6558 = vshrl.u32 %v6378, 16
        %v6560 = vshll.u32 %v6378, 16
        %v6562 = vrot.slane %v6560, 1
        %v6563 = vor.u32 %v6558, %v6562
        %v6565 = vshll.u32 %v6442, 16
        %v6567 = vrot.slane %v6565, 1
        %v6568 = vsel %vm1170, %v6563, %v6567
        %v6570 = vshrl.u32 %v6379, 16
        %v6572 = vshll.u32 %v6379, 16
        %v6574 = vrot.slane %v6572, 1
        %v6575 = vor.u32 %v6570, %v6574
        %v6577 = vshll.u32 %v6443, 16
        %v6579 = vrot.slane %v6577, 1
        %v6580 = vsel %vm1170, %v6575, %v6579
        %v6582 = vshrl.u32 %v6380, 16
        %v6584 = vshll.u32 %v6380, 16
        %v6586 = vrot.slane %v6584, 1
        %v6587 = vor.u32 %v6582, %v6586
        %v6589 = vshll.u32 %v6444, 16
        %v6591 = vrot.slane %v6589, 1
        %v6592 = vsel %vm1170, %v6587, %v6591
        %v6594 = vshrl.u32 %v6381, 16
        %v6596 = vshll.u32 %v6381, 16
        %v6598 = vrot.slane %v6596, 1
        %v6599 = vor.u32 %v6594, %v6598
        %v6601 = vshll.u32 %v6445, 16
        %v6603 = vrot.slane %v6601, 1
        %v6604 = vsel %vm1170, %v6599, %v6603
        %v6606 = vshrl.u32 %v6382, 16
        %v6608 = vshll.u32 %v6382, 16
        %v6610 = vrot.slane %v6608, 1
        %v6611 = vor.u32 %v6606, %v6610
        %v6613 = vshll.u32 %v6446, 16
        %v6615 = vrot.slane %v6613, 1
        %v6616 = vsel %vm1170, %v6611, %v6615
        %v6618 = vshrl.u32 %v6383, 16
        %v6620 = vshll.u32 %v6383, 16
        %v6622 = vrot.slane %v6620, 1
        %v6623 = vor.u32 %v6618, %v6622
        %v6625 = vshll.u32 %v6447, 16
        %v6627 = vrot.slane %v6625, 1
        %v6628 = vsel %vm1170, %v6623, %v6627
        %v6630 = vshrl.u32 %v6384, 16
        %v6632 = vshll.u32 %v6384, 16
        %v6634 = vrot.slane %v6632, 1
        %v6635 = vor.u32 %v6630, %v6634
        %v6637 = vshll.u32 %v6448, 16
        %v6639 = vrot.slane %v6637, 1
        %v6640 = vsel %vm1170, %v6635, %v6639
        %v6673 = vunpack.c.l.b16 %v6289
        %v6674 = vunpack.c.l.b16 %v6290
        %v6675 = vunpack.c.l.b16 %v6291
        %v6676 = vunpack.c.l.b16 %v6292
        %v6677 = vunpack.c.l.b16 %v6293
        %v6678 = vunpack.c.l.b16 %v6294
        %v6679 = vunpack.c.l.b16 %v6295
        %v6680 = vunpack.c.l.b16 %v6296
        %v6681 = vunpack.c.l.b16 %v6297
        %v6682 = vunpack.c.l.b16 %v6298
        %v6683 = vunpack.c.l.b16 %v6299
        %v6684 = vunpack.c.l.b16 %v6300
        %v6685 = vunpack.c.l.b16 %v6301
        %v6686 = vunpack.c.l.b16 %v6302
        %v6687 = vunpack.c.l.b16 %v6303
        %v6688 = vunpack.c.l.b16 %v6304
        %v6689 = vpack.c.b16 %v6338, %v6673
        %v6690 = vpack.c.b16 %v6340, %v6674
        %v6691 = vpack.c.b16 %v6342, %v6675
        %v6692 = vpack.c.b16 %v6344, %v6676
        %v6693 = vpack.c.b16 %v6346, %v6677
        %v6694 = vpack.c.b16 %v6348, %v6678
        %v6695 = vpack.c.b16 %v6350, %v6679
        %v6696 = vpack.c.b16 %v6352, %v6680
        %v6697 = vpack.c.b16 %v6354, %v6681
        %v6698 = vpack.c.b16 %v6356, %v6682
        %v6699 = vpack.c.b16 %v6358, %v6683
        %v6700 = vpack.c.b16 %v6360, %v6684
        %v6701 = vpack.c.b16 %v6362, %v6685
        %v6702 = vpack.c.b16 %v6364, %v6686
        %v6703 = vpack.c.b16 %v6366, %v6687
        %v6704 = vpack.c.b16 %v6368, %v6688
        %v6705 = vrot.slane %v6689, 1
        %v6706 = vrot.slane %v6433, 1
        %v6707 = vsel %vm1427, %v6705, %v6706
        %v6708 = vrot.slane %v6690, 1
        %v6709 = vrot.slane %v6434, 1
        %v6710 = vsel %vm1427, %v6708, %v6709
        %v6711 = vrot.slane %v6691, 1
        %v6712 = vrot.slane %v6435, 1
        %v6713 = vsel %vm1427, %v6711, %v6712
        %v6714 = vrot.slane %v6692, 1
        %v6715 = vrot.slane %v6436, 1
        %v6716 = vsel %vm1427, %v6714, %v6715
        %v6717 = vrot.slane %v6693, 1
        %v6718 = vrot.slane %v6437, 1
        %v6719 = vsel %vm1427, %v6717, %v6718
        %v6720 = vrot.slane %v6694, 1
        %v6721 = vrot.slane %v6438, 1
        %v6722 = vsel %vm1427, %v6720, %v6721
        %v6723 = vrot.slane %v6695, 1
        %v6724 = vrot.slane %v6439, 1
        %v6725 = vsel %vm1427, %v6723, %v6724
        %v6726 = vrot.slane %v6696, 1
        %v6727 = vrot.slane %v6440, 1
        %v6728 = vsel %vm1427, %v6726, %v6727
        %v6729 = vrot.slane %v6697, 1
        %v6730 = vrot.slane %v6441, 1
        %v6731 = vsel %vm1427, %v6729, %v6730
        %v6732 = vrot.slane %v6698, 1
        %v6733 = vrot.slane %v6442, 1
        %v6734 = vsel %vm1427, %v6732, %v6733
        %v6735 = vrot.slane %v6699, 1
        %v6736 = vrot.slane %v6443, 1
        %v6737 = vsel %vm1427, %v6735, %v6736
        %v6738 = vrot.slane %v6700, 1
        %v6739 = vrot.slane %v6444, 1
        %v6740 = vsel %vm1427, %v6738, %v6739
        %v6741 = vrot.slane %v6701, 1
        %v6742 = vrot.slane %v6445, 1
        %v6743 = vsel %vm1427, %v6741, %v6742
        %v6744 = vrot.slane %v6702, 1
        %v6745 = vrot.slane %v6446, 1
        %v6746 = vsel %vm1427, %v6744, %v6745
        %v6747 = vrot.slane %v6703, 1
        %v6748 = vrot.slane %v6447, 1
        %v6749 = vsel %vm1427, %v6747, %v6748
        %v6750 = vrot.slane %v6704, 1
        %v6751 = vrot.slane %v6448, 1
        %v6752 = vsel %vm1427, %v6750, %v6751
        %v6769 = vld [vmem:[#allocation4] sm:$0xff]
        %v6770 = vld [vmem:[#allocation4 + $0x8] sm:$0xff]
        %v6771 = vld [vmem:[#allocation4 + $0x10] sm:$0xff]
        %v6772 = vld [vmem:[#allocation4 + $0x18] sm:$0xff]
        %v6773 = vld [vmem:[#allocation4 + $0x20] sm:$0xff]
        %v6774 = vld [vmem:[#allocation4 + $0x28] sm:$0xff]
        %v6775 = vld [vmem:[#allocation4 + $0x30] sm:$0xff]
        %v6776 = vld [vmem:[#allocation4 + $0x38] sm:$0xff]
        %v6777 = vld [vmem:[#allocation4 + $0x40] sm:$0xff]
        %v6778 = vld [vmem:[#allocation4 + $0x48] sm:$0xff]
        %v6779 = vld [vmem:[#allocation4 + $0x50] sm:$0xff]
        %v6780 = vld [vmem:[#allocation4 + $0x58] sm:$0xff]
        %v6781 = vld [vmem:[#allocation4 + $0x60] sm:$0xff]
        %v6782 = vld [vmem:[#allocation4 + $0x68] sm:$0xff]
        %v6783 = vld [vmem:[#allocation4 + $0x70] sm:$0xff]
        %v6784 = vld [vmem:[#allocation4 + $0x78] sm:$0xff]
        %v6785 = vld [vmem:[#allocation4 + $0x80] sm:$0xff]
        %v6786 = vld [vmem:[#allocation4 + $0x88] sm:$0xff]
        %v6787 = vld [vmem:[#allocation4 + $0x90] sm:$0xff]
        %v6788 = vld [vmem:[#allocation4 + $0x98] sm:$0xff]
        %v6789 = vld [vmem:[#allocation4 + $0xa0] sm:$0xff]
        %v6790 = vld [vmem:[#allocation4 + $0xa8] sm:$0xff]
        %v6791 = vld [vmem:[#allocation4 + $0xb0] sm:$0xff]
        %v6792 = vld [vmem:[#allocation4 + $0xb8] sm:$0xff]
        %v6793 = vld [vmem:[#allocation4 + $0xc0] sm:$0xff]
        %v6794 = vld [vmem:[#allocation4 + $0xc8] sm:$0xff]
        %v6795 = vld [vmem:[#allocation4 + $0xd0] sm:$0xff]
        %v6796 = vld [vmem:[#allocation4 + $0xd8] sm:$0xff]
        %v6797 = vld [vmem:[#allocation4 + $0xe0] sm:$0xff]
        %v6798 = vld [vmem:[#allocation4 + $0xe8] sm:$0xff]
        %v6799 = vld [vmem:[#allocation4 + $0xf0] sm:$0xff]
        %v6800 = vld [vmem:[#allocation4 + $0xf8] sm:$0xff]
        %s6801 = scalar_lea.vmem [#allocation5], 192
        %v6802 = vld [vmem:[%s6801] sm:$0xf]
        %v6803 = vld [vmem:[%s6801 + $0x4] sm:$0xf]
        %v6804 = vld [vmem:[%s6801 + $0x8] sm:$0xf]
        %v6805 = vld [vmem:[%s6801 + $0xc] sm:$0xf]
        %v6806 = vld [vmem:[%s6801 + $0x10] sm:$0xf]
        %v6807 = vld [vmem:[%s6801 + $0x14] sm:$0xf]
        %v6808 = vld [vmem:[%s6801 + $0x18] sm:$0xf]
        %v6809 = vld [vmem:[%s6801 + $0x1c] sm:$0xf]
        %v6810 = vld [vmem:[%s6801 + $0x20] sm:$0xf]
        %v6811 = vld [vmem:[%s6801 + $0x24] sm:$0xf]
        %v6812 = vld [vmem:[%s6801 + $0x28] sm:$0xf]
        %v6813 = vld [vmem:[%s6801 + $0x2c] sm:$0xf]
        %v6814 = vld [vmem:[%s6801 + $0x30] sm:$0xf]
        %v6815 = vld [vmem:[%s6801 + $0x34] sm:$0xf]
        %v6816 = vld [vmem:[%s6801 + $0x38] sm:$0xf]
        %v6817 = vld [vmem:[%s6801 + $0x3c] sm:$0xf]
        %v6818 = vld [vmem:[%s6801 + $0x40] sm:$0xf]
        %v6819 = vld [vmem:[%s6801 + $0x44] sm:$0xf]
        %v6820 = vld [vmem:[%s6801 + $0x48] sm:$0xf]
        %v6821 = vld [vmem:[%s6801 + $0x4c] sm:$0xf]
        %v6822 = vld [vmem:[%s6801 + $0x50] sm:$0xf]
        %v6823 = vld [vmem:[%s6801 + $0x54] sm:$0xf]
        %v6824 = vld [vmem:[%s6801 + $0x58] sm:$0xf]
        %v6825 = vld [vmem:[%s6801 + $0x5c] sm:$0xf]
        %v6826 = vld [vmem:[%s6801 + $0x60] sm:$0xf]
        %v6827 = vld [vmem:[%s6801 + $0x64] sm:$0xf]
        %v6828 = vld [vmem:[%s6801 + $0x68] sm:$0xf]
        %v6829 = vld [vmem:[%s6801 + $0x6c] sm:$0xf]
        %v6830 = vld [vmem:[%s6801 + $0x70] sm:$0xf]
        %v6831 = vld [vmem:[%s6801 + $0x74] sm:$0xf]
        %v6832 = vld [vmem:[%s6801 + $0x78] sm:$0xf]
        %v6833 = vld [vmem:[%s6801 + $0x7c] sm:$0xf]
        %v6834 = vld [vmem:[%s6801 + $0x80] sm:$0xf]
        %v6835 = vld [vmem:[%s6801 + $0x84] sm:$0xf]
        %v6836 = vld [vmem:[%s6801 + $0x88] sm:$0xf]
        %v6837 = vld [vmem:[%s6801 + $0x8c] sm:$0xf]
        %v6838 = vld [vmem:[%s6801 + $0x90] sm:$0xf]
        %v6839 = vld [vmem:[%s6801 + $0x94] sm:$0xf]
        %v6840 = vld [vmem:[%s6801 + $0x98] sm:$0xf]
        %v6841 = vld [vmem:[%s6801 + $0x9c] sm:$0xf]
        %v6842 = vld [vmem:[%s6801 + $0xa0] sm:$0xf]
        %v6843 = vld [vmem:[%s6801 + $0xa4] sm:$0xf]
        %v6844 = vld [vmem:[%s6801 + $0xa8] sm:$0xf]
        %v6845 = vld [vmem:[%s6801 + $0xac] sm:$0xf]
        %v6846 = vld [vmem:[%s6801 + $0xb0] sm:$0xf]
        %v6847 = vld [vmem:[%s6801 + $0xb4] sm:$0xf]
        %v6848 = vld [vmem:[%s6801 + $0xb8] sm:$0xf]
        %v6849 = vld [vmem:[%s6801 + $0xbc] sm:$0xf]
        %v6898 = vunpack.c.l.b16 %v6802
        %v6899 = vunpack.c.l.b16 %v6803
        %v6900 = vunpack.c.l.b16 %v6804
        %v6901 = vunpack.c.l.b16 %v6805
        %v6902 = vunpack.c.l.b16 %v6806
        %v6903 = vunpack.c.l.b16 %v6807
        %v6904 = vunpack.c.l.b16 %v6808
        %v6905 = vunpack.c.l.b16 %v6809
        %v6906 = vunpack.c.l.b16 %v6810
        %v6907 = vunpack.c.l.b16 %v6811
        %v6908 = vunpack.c.l.b16 %v6812
        %v6909 = vunpack.c.l.b16 %v6813
        %v6910 = vunpack.c.l.b16 %v6814
        %v6911 = vunpack.c.l.b16 %v6815
        %v6912 = vunpack.c.l.b16 %v6816
        %v6913 = vunpack.c.l.b16 %v6817
        %v6914 = vunpack.c.l.b16 %v6818
        %v6915 = vunpack.c.l.b16 %v6819
        %v6916 = vunpack.c.l.b16 %v6820
        %v6917 = vunpack.c.l.b16 %v6821
        %v6918 = vunpack.c.l.b16 %v6822
        %v6919 = vunpack.c.l.b16 %v6823
        %v6920 = vunpack.c.l.b16 %v6824
        %v6921 = vunpack.c.l.b16 %v6825
        %v6922 = vunpack.c.l.b16 %v6826
        %v6923 = vunpack.c.l.b16 %v6827
        %v6924 = vunpack.c.l.b16 %v6828
        %v6925 = vunpack.c.l.b16 %v6829
        %v6926 = vunpack.c.l.b16 %v6830
        %v6927 = vunpack.c.l.b16 %v6831
        %v6928 = vunpack.c.l.b16 %v6832
        %v6929 = vunpack.c.l.b16 %v6833
        %v6930 = vunpack.c.l.b16 %v6834
        %v6931 = vunpack.c.l.b16 %v6835
        %v6932 = vunpack.c.l.b16 %v6836
        %v6933 = vunpack.c.l.b16 %v6837
        %v6934 = vunpack.c.l.b16 %v6838
        %v6935 = vunpack.c.l.b16 %v6839
        %v6936 = vunpack.c.l.b16 %v6840
        %v6937 = vunpack.c.l.b16 %v6841
        %v6938 = vunpack.c.l.b16 %v6842
        %v6939 = vunpack.c.l.b16 %v6843
        %v6940 = vunpack.c.l.b16 %v6844
        %v6941 = vunpack.c.l.b16 %v6845
        %v6942 = vunpack.c.l.b16 %v6846
        %v6943 = vunpack.c.l.b16 %v6847
        %v6944 = vunpack.c.l.b16 %v6848
        %v6945 = vunpack.c.l.b16 %v6849
        %v6946 = vpack.c.b16 %v6899, %v6898
        %v6947 = vpack.c.b16 %v6901, %v6900
        %v6948 = vpack.c.b16 %v6903, %v6902
        %v6949 = vpack.c.b16 %v6905, %v6904
        %v6950 = vpack.c.b16 %v6907, %v6906
        %v6951 = vpack.c.b16 %v6909, %v6908
        %v6952 = vpack.c.b16 %v6911, %v6910
        %v6953 = vpack.c.b16 %v6913, %v6912
        %v6954 = vpack.c.b16 %v6915, %v6914
        %v6955 = vpack.c.b16 %v6917, %v6916
        %v6956 = vpack.c.b16 %v6919, %v6918
        %v6957 = vpack.c.b16 %v6921, %v6920
        %v6958 = vpack.c.b16 %v6923, %v6922
        %v6959 = vpack.c.b16 %v6925, %v6924
        %v6960 = vpack.c.b16 %v6927, %v6926
        %v6961 = vpack.c.b16 %v6929, %v6928
        %v6962 = vpack.c.b16 %v6931, %v6930
        %v6963 = vpack.c.b16 %v6933, %v6932
        %v6964 = vpack.c.b16 %v6935, %v6934
        %v6965 = vpack.c.b16 %v6937, %v6936
        %v6966 = vpack.c.b16 %v6939, %v6938
        %v6967 = vpack.c.b16 %v6941, %v6940
        %v6968 = vpack.c.b16 %v6943, %v6942
        %v6969 = vpack.c.b16 %v6945, %v6944
        %6994 = vmatprep.subr.bf16.mxu0 0
        %6995 = vmatpush1.bf16.msra.mxu0 %v6953
        %6996 = vmatprep.subr.bf16.mxu0 0
        %6997 = vmatpush1.bf16.msra.mxu0 %v6952
        %6998 = vmatprep.subr.bf16.mxu0 0
        %6999 = vmatpush1.bf16.msra.mxu0 %v6951
        %7000 = vmatprep.subr.bf16.mxu0 0
        %7001 = vmatpush1.bf16.msra.mxu0 %v6950
        %7002 = vmatprep.subr.bf16.mxu0 0
        %7003 = vmatpush1.bf16.msra.mxu0 %v6949
        %7004 = vmatprep.subr.bf16.mxu0 0
        %7005 = vmatpush1.bf16.msra.mxu0 %v6948
        %7006 = vmatprep.subr.bf16.mxu0 0
        %7007 = vmatpush1.bf16.msra.mxu0 %v6947
        %7008 = vmatprep.subr.bf16.mxu0 0
        %7009 = vmatpush1.bf16.msra.mxu0 %v6946
        %7010 = vmatprep.subr.bf16.mxu0 0
        %7011 = vmatpush2.bf16.msra.mxu0 %v6961
        %7012 = vmatprep.subr.bf16.mxu0 0
        %7013 = vmatpush2.bf16.msra.mxu0 %v6960
        %7014 = vmatprep.subr.bf16.mxu0 0
        %7015 = vmatpush2.bf16.msra.mxu0 %v6959
        %7016 = vmatprep.subr.bf16.mxu0 0
        %7017 = vmatpush2.bf16.msra.mxu0 %v6958
        %7018 = vmatprep.subr.bf16.mxu0 0
        %7019 = vmatpush2.bf16.msra.mxu0 %v6957
        %7020 = vmatprep.subr.bf16.mxu0 0
        %7021 = vmatpush2.bf16.msra.mxu0 %v6956
        %7022 = vmatprep.subr.bf16.mxu0 0
        %7023 = vmatpush2.bf16.msra.mxu0 %v6955
        %7024 = vmatprep.subr.bf16.mxu0 0
        %7025 = vmatpush2.bf16.msra.mxu0 %v6954
        %7026 = vmatprep.mubr.bf16.mxu0 %v6460
        %7027 = vmatmul.mubr.bf16.gmra.mxu0 %v6369
        %v7028 = vpop.f32.mrf.mxu0
        %v7029 = vadd.f32 0.0, %v7028
        %v7030 = vpop.f32.mrf.mxu0
        %v7031 = vpop.f32.mrf.mxu0
        %v7032 = vadd.f32 0.0, %v7031
        %v7033 = vpop.f32.mrf.mxu0
        %7034 = vmatprep.mubr.bf16.mxu0 %v6472
        %7035 = vmatmul.mubr.bf16.gmra.mxu0 %v6370
        %v7036 = vpop.f32.mrf.mxu0
        %v7037 = vadd.f32 0.0, %v7036
        %v7038 = vpop.f32.mrf.mxu0
        %v7039 = vpop.f32.mrf.mxu0
        %v7040 = vadd.f32 0.0, %v7039
        %v7041 = vpop.f32.mrf.mxu0
        %7042 = vmatprep.mubr.bf16.mxu0 %v6484
        %7043 = vmatmul.mubr.bf16.gmra.mxu0 %v6371
        %v7044 = vpop.f32.mrf.mxu0
        %v7045 = vadd.f32 0.0, %v7044
        %v7046 = vpop.f32.mrf.mxu0
        %v7047 = vpop.f32.mrf.mxu0
        %v7048 = vadd.f32 0.0, %v7047
        %v7049 = vpop.f32.mrf.mxu0
        %7050 = vmatprep.mubr.bf16.mxu0 %v6496
        %7051 = vmatmul.mubr.bf16.gmra.mxu0 %v6372
        %v7052 = vpop.f32.mrf.mxu0
        %v7053 = vadd.f32 0.0, %v7052
        %v7054 = vpop.f32.mrf.mxu0
        %v7055 = vpop.f32.mrf.mxu0
        %v7056 = vadd.f32 0.0, %v7055
        %v7057 = vpop.f32.mrf.mxu0
        %7058 = vmatprep.mubr.bf16.mxu0 %v6508
        %7059 = vmatmul.mubr.bf16.gmra.mxu0 %v6373
        %v7060 = vpop.f32.mrf.mxu0
        %v7061 = vadd.f32 0.0, %v7060
        %v7062 = vpop.f32.mrf.mxu0
        %v7063 = vpop.f32.mrf.mxu0
        %v7064 = vadd.f32 0.0, %v7063
        %v7065 = vpop.f32.mrf.mxu0
        %7066 = vmatprep.mubr.bf16.mxu0 %v6520
        %7067 = vmatmul.mubr.bf16.gmra.mxu0 %v6374
        %v7068 = vpop.f32.mrf.mxu0
        %v7069 = vadd.f32 0.0, %v7068
        %v7070 = vpop.f32.mrf.mxu0
        %v7071 = vpop.f32.mrf.mxu0
        %v7072 = vadd.f32 0.0, %v7071
        %v7073 = vpop.f32.mrf.mxu0
        %7074 = vmatprep.mubr.bf16.mxu0 %v6532
        %7075 = vmatmul.mubr.bf16.gmra.mxu0 %v6375
        %v7076 = vpop.f32.mrf.mxu0
        %v7077 = vadd.f32 0.0, %v7076
        %v7078 = vpop.f32.mrf.mxu0
        %v7079 = vpop.f32.mrf.mxu0
        %v7080 = vadd.f32 0.0, %v7079
        %v7081 = vpop.f32.mrf.mxu0
        %7082 = vmatprep.mubr.bf16.mxu0 %v6544
        %7083 = vmatmul.mubr.bf16.gmra.mxu0 %v6376
        %v7084 = vpop.f32.mrf.mxu0
        %v7085 = vadd.f32 0.0, %v7084
        %v7086 = vpop.f32.mrf.mxu0
        %v7087 = vpop.f32.mrf.mxu0
        %v7088 = vadd.f32 0.0, %v7087
        %v7089 = vpop.f32.mrf.mxu0
        %7090 = vmatprep.mubr.bf16.mxu0 %v6556
        %7091 = vmatmul.mubr.bf16.gmra.mxu0 %v6377
        %v7092 = vpop.f32.mrf.mxu0
        %v7093 = vadd.f32 0.0, %v7092
        %v7094 = vpop.f32.mrf.mxu0
        %v7095 = vpop.f32.mrf.mxu0
        %v7096 = vadd.f32 0.0, %v7095
        %v7097 = vpop.f32.mrf.mxu0
        %7098 = vmatprep.mubr.bf16.mxu0 %v6568
        %7099 = vmatmul.mubr.bf16.gmra.mxu0 %v6378
        %v7100 = vpop.f32.mrf.mxu0
        %v7101 = vadd.f32 0.0, %v7100
        %v7102 = vpop.f32.mrf.mxu0
        %v7103 = vpop.f32.mrf.mxu0
        %v7104 = vadd.f32 0.0, %v7103
        %v7105 = vpop.f32.mrf.mxu0
        %7106 = vmatprep.mubr.bf16.mxu0 %v6580
        %7107 = vmatmul.mubr.bf16.gmra.mxu0 %v6379
        %v7108 = vpop.f32.mrf.mxu0
        %v7109 = vadd.f32 0.0, %v7108
        %v7110 = vpop.f32.mrf.mxu0
        %v7111 = vpop.f32.mrf.mxu0
        %v7112 = vadd.f32 0.0, %v7111
        %v7113 = vpop.f32.mrf.mxu0
        %7114 = vmatprep.mubr.bf16.mxu0 %v6592
        %7115 = vmatmul.mubr.bf16.gmra.mxu0 %v6380
        %v7116 = vpop.f32.mrf.mxu0
        %v7117 = vadd.f32 0.0, %v7116
        %v7118 = vpop.f32.mrf.mxu0
        %v7119 = vpop.f32.mrf.mxu0
        %v7120 = vadd.f32 0.0, %v7119
        %v7121 = vpop.f32.mrf.mxu0
        %7122 = vmatprep.mubr.bf16.mxu0 %v6604
        %7123 = vmatmul.mubr.bf16.gmra.mxu0 %v6381
        %v7124 = vpop.f32.mrf.mxu0
        %v7125 = vadd.f32 0.0, %v7124
        %v7126 = vpop.f32.mrf.mxu0
        %v7127 = vpop.f32.mrf.mxu0
        %v7128 = vadd.f32 0.0, %v7127
        %v7129 = vpop.f32.mrf.mxu0
        %7130 = vmatprep.mubr.bf16.mxu0 %v6616
        %7131 = vmatmul.mubr.bf16.gmra.mxu0 %v6382
        %v7132 = vpop.f32.mrf.mxu0
        %v7133 = vadd.f32 0.0, %v7132
        %v7134 = vpop.f32.mrf.mxu0
        %v7135 = vpop.f32.mrf.mxu0
        %v7136 = vadd.f32 0.0, %v7135
        %v7137 = vpop.f32.mrf.mxu0
        %7138 = vmatprep.mubr.bf16.mxu0 %v6628
        %7139 = vmatmul.mubr.bf16.gmra.mxu0 %v6383
        %v7140 = vpop.f32.mrf.mxu0
        %v7141 = vadd.f32 0.0, %v7140
        %v7142 = vpop.f32.mrf.mxu0
        %v7143 = vpop.f32.mrf.mxu0
        %v7144 = vadd.f32 0.0, %v7143
        %v7145 = vpop.f32.mrf.mxu0
        %7146 = vmatprep.mubr.bf16.mxu0 %v6640
        %7147 = vmatmul.mubr.bf16.gmra.mxu0 %v6384
        %v7148 = vpop.f32.mrf.mxu0
        %v7149 = vadd.f32 0.0, %v7148
        %v7150 = vpop.f32.mrf.mxu0
        %v7151 = vpop.f32.mrf.mxu0
        %v7152 = vadd.f32 0.0, %v7151
        %v7153 = vpop.f32.mrf.mxu0
        %7154 = vdwg.mxu0
        %7155 = vmatprep.subr.bf16.mxu0 0
        %7156 = vmatpush1.bf16.msra.mxu0 %v6969
        %7157 = vmatprep.subr.bf16.mxu0 0
        %7158 = vmatpush1.bf16.msra.mxu0 %v6968
        %7159 = vmatprep.subr.bf16.mxu0 0
        %7160 = vmatpush1.bf16.msra.mxu0 %v6967
        %7161 = vmatprep.subr.bf16.mxu0 0
        %7162 = vmatpush1.bf16.msra.mxu0 %v6966
        %7163 = vmatprep.subr.bf16.mxu0 0
        %7164 = vmatpush1.bf16.msra.mxu0 %v6965
        %7165 = vmatprep.subr.bf16.mxu0 0
        %7166 = vmatpush1.bf16.msra.mxu0 %v6964
        %7167 = vmatprep.subr.bf16.mxu0 0
        %7168 = vmatpush1.bf16.msra.mxu0 %v6963
        %7169 = vmatprep.subr.bf16.mxu0 0
        %7170 = vmatpush1.bf16.msra.mxu0 %v6962
        %7171 = vmatprep.subr.bf16.mxu0 0
        %7172 = vmatpush2.bf16.msra.mxu0 0
        %7173 = vmatprep.subr.bf16.mxu0 0
        %7174 = vmatpush2.bf16.msra.mxu0 0
        %7175 = vmatprep.subr.bf16.mxu0 0
        %7176 = vmatpush2.bf16.msra.mxu0 0
        %7177 = vmatprep.subr.bf16.mxu0 0
        %7178 = vmatpush2.bf16.msra.mxu0 0
        %7179 = vmatprep.subr.bf16.mxu0 0
        %7180 = vmatpush2.bf16.msra.mxu0 0
        %7181 = vmatprep.subr.bf16.mxu0 0
        %7182 = vmatpush2.bf16.msra.mxu0 0
        %7183 = vmatprep.subr.bf16.mxu0 0
        %7184 = vmatpush2.bf16.msra.mxu0 0
        %7185 = vmatprep.subr.bf16.mxu0 0
        %7186 = vmatpush2.bf16.msra.mxu0 0
        %7187 = vmatprep.mubr.bf16.mxu0 0
        %7188 = vmatmul.mubr.bf16.gmra.mxu0 %v6707
        %v7189 = vpop.f32.mrf.mxu0
        %v7190 = vadd.f32 %v7029, %v7189
        %v7191 = vpop.f32.mrf.mxu0
        %v7192 = vpop.f32.mrf.mxu0
        %v7193 = vadd.f32 %v7032, %v7192
        %v7194 = vpop.f32.mrf.mxu0
        %7195 = vmatprep.mubr.bf16.mxu0 0
        %7196 = vmatmul.mubr.bf16.gmra.mxu0 %v6710
        %v7197 = vpop.f32.mrf.mxu0
        %v7198 = vadd.f32 %v7037, %v7197
        %v7199 = vpop.f32.mrf.mxu0
        %v7200 = vpop.f32.mrf.mxu0
        %v7201 = vadd.f32 %v7040, %v7200
        %v7202 = vpop.f32.mrf.mxu0
        %7203 = vmatprep.mubr.bf16.mxu0 0
        %7204 = vmatmul.mubr.bf16.gmra.mxu0 %v6713
        %v7205 = vpop.f32.mrf.mxu0
        %v7206 = vadd.f32 %v7045, %v7205
        %v7207 = vpop.f32.mrf.mxu0
        %v7208 = vpop.f32.mrf.mxu0
        %v7209 = vadd.f32 %v7048, %v7208
        %v7210 = vpop.f32.mrf.mxu0
        %7211 = vmatprep.mubr.bf16.mxu0 0
        %7212 = vmatmul.mubr.bf16.gmra.mxu0 %v6716
        %v7213 = vpop.f32.mrf.mxu0
        %v7214 = vadd.f32 %v7053, %v7213
        %v7215 = vpop.f32.mrf.mxu0
        %v7216 = vpop.f32.mrf.mxu0
        %v7217 = vadd.f32 %v7056, %v7216
        %v7218 = vpop.f32.mrf.mxu0
        %7219 = vmatprep.mubr.bf16.mxu0 0
        %7220 = vmatmul.mubr.bf16.gmra.mxu0 %v6719
        %v7221 = vpop.f32.mrf.mxu0
        %v7222 = vadd.f32 %v7061, %v7221
        %v7223 = vpop.f32.mrf.mxu0
        %v7224 = vpop.f32.mrf.mxu0
        %v7225 = vadd.f32 %v7064, %v7224
        %v7226 = vpop.f32.mrf.mxu0
        %7227 = vmatprep.mubr.bf16.mxu0 0
        %7228 = vmatmul.mubr.bf16.gmra.mxu0 %v6722
        %v7229 = vpop.f32.mrf.mxu0
        %v7230 = vadd.f32 %v7069, %v7229
        %v7231 = vpop.f32.mrf.mxu0
        %v7232 = vpop.f32.mrf.mxu0
        %v7233 = vadd.f32 %v7072, %v7232
        %v7234 = vpop.f32.mrf.mxu0
        %7235 = vmatprep.mubr.bf16.mxu0 0
        %7236 = vmatmul.mubr.bf16.gmra.mxu0 %v6725
        %v7237 = vpop.f32.mrf.mxu0
        %v7238 = vadd.f32 %v7077, %v7237
        %v7239 = vpop.f32.mrf.mxu0
        %v7240 = vpop.f32.mrf.mxu0
        %v7241 = vadd.f32 %v7080, %v7240
        %v7242 = vpop.f32.mrf.mxu0
        %7243 = vmatprep.mubr.bf16.mxu0 0
        %7244 = vmatmul.mubr.bf16.gmra.mxu0 %v6728
        %v7245 = vpop.f32.mrf.mxu0
        %v7246 = vadd.f32 %v7085, %v7245
        %v7247 = vpop.f32.mrf.mxu0
        %v7248 = vpop.f32.mrf.mxu0
        %v7249 = vadd.f32 %v7088, %v7248
        %v7250 = vpop.f32.mrf.mxu0
        %7251 = vmatprep.mubr.bf16.mxu0 0
        %7252 = vmatmul.mubr.bf16.gmra.mxu0 %v6731
        %v7253 = vpop.f32.mrf.mxu0
        %v7254 = vadd.f32 %v7093, %v7253
        %v7255 = vpop.f32.mrf.mxu0
        %v7256 = vpop.f32.mrf.mxu0
        %v7257 = vadd.f32 %v7096, %v7256
        %v7258 = vpop.f32.mrf.mxu0
        %7259 = vmatprep.mubr.bf16.mxu0 0
        %7260 = vmatmul.mubr.bf16.gmra.mxu0 %v6734
        %v7261 = vpop.f32.mrf.mxu0
        %v7262 = vadd.f32 %v7101, %v7261
        %v7263 = vpop.f32.mrf.mxu0
        %v7264 = vpop.f32.mrf.mxu0
        %v7265 = vadd.f32 %v7104, %v7264
        %v7266 = vpop.f32.mrf.mxu0
        %7267 = vmatprep.mubr.bf16.mxu0 0
        %7268 = vmatmul.mubr.bf16.gmra.mxu0 %v6737
        %v7269 = vpop.f32.mrf.mxu0
        %v7270 = vadd.f32 %v7109, %v7269
        %v7271 = vpop.f32.mrf.mxu0
        %v7272 = vpop.f32.mrf.mxu0
        %v7273 = vadd.f32 %v7112, %v7272
        %v7274 = vpop.f32.mrf.mxu0
        %7275 = vmatprep.mubr.bf16.mxu0 0
        %7276 = vmatmul.mubr.bf16.gmra.mxu0 %v6740
        %v7277 = vpop.f32.mrf.mxu0
        %v7278 = vadd.f32 %v7117, %v7277
        %v7279 = vpop.f32.mrf.mxu0
        %v7280 = vpop.f32.mrf.mxu0
        %v7281 = vadd.f32 %v7120, %v7280
        %v7282 = vpop.f32.mrf.mxu0
        %7283 = vmatprep.mubr.bf16.mxu0 0
        %7284 = vmatmul.mubr.bf16.gmra.mxu0 %v6743
        %v7285 = vpop.f32.mrf.mxu0
        %v7286 = vadd.f32 %v7125, %v7285
        %v7287 = vpop.f32.mrf.mxu0
        %v7288 = vpop.f32.mrf.mxu0
        %v7289 = vadd.f32 %v7128, %v7288
        %v7290 = vpop.f32.mrf.mxu0
        %7291 = vmatprep.mubr.bf16.mxu0 0
        %7292 = vmatmul.mubr.bf16.gmra.mxu0 %v6746
        %v7293 = vpop.f32.mrf.mxu0
        %v7294 = vadd.f32 %v7133, %v7293
        %v7295 = vpop.f32.mrf.mxu0
        %v7296 = vpop.f32.mrf.mxu0
        %v7297 = vadd.f32 %v7136, %v7296
        %v7298 = vpop.f32.mrf.mxu0
        %7299 = vmatprep.mubr.bf16.mxu0 0
        %7300 = vmatmul.mubr.bf16.gmra.mxu0 %v6749
        %v7301 = vpop.f32.mrf.mxu0
        %v7302 = vadd.f32 %v7141, %v7301
        %v7303 = vpop.f32.mrf.mxu0
        %v7304 = vpop.f32.mrf.mxu0
        %v7305 = vadd.f32 %v7144, %v7304
        %v7306 = vpop.f32.mrf.mxu0
        %7307 = vmatprep.mubr.bf16.mxu0 0
        %7308 = vmatmul.mubr.bf16.gmra.mxu0 %v6752
        %v7309 = vpop.f32.mrf.mxu0
        %v7310 = vadd.f32 %v7149, %v7309
        %v7311 = vpop.f32.mrf.mxu0
        %v7312 = vpop.f32.mrf.mxu0
        %v7313 = vadd.f32 %v7152, %v7312
        %v7314 = vpop.f32.mrf.mxu0
        %7315 = vdwg.mxu0
        %v7316 = vadd.f32 %v6769, %v7190
        %v7317 = vadd.f32 %v6770, %v7193
        %v7318 = vadd.f32 %v6771, %v7198
        %v7319 = vadd.f32 %v6772, %v7201
        %v7320 = vadd.f32 %v6773, %v7206
        %v7321 = vadd.f32 %v6774, %v7209
        %v7322 = vadd.f32 %v6775, %v7214
        %v7323 = vadd.f32 %v6776, %v7217
        %v7324 = vadd.f32 %v6777, %v7222
        %v7325 = vadd.f32 %v6778, %v7225
        %v7326 = vadd.f32 %v6779, %v7230
        %v7327 = vadd.f32 %v6780, %v7233
        %v7328 = vadd.f32 %v6781, %v7238
        %v7329 = vadd.f32 %v6782, %v7241
        %v7330 = vadd.f32 %v6783, %v7246
        %v7331 = vadd.f32 %v6784, %v7249
        %v7332 = vadd.f32 %v6785, %v7254
        %v7333 = vadd.f32 %v6786, %v7257
        %v7334 = vadd.f32 %v6787, %v7262
        %v7335 = vadd.f32 %v6788, %v7265
        %v7336 = vadd.f32 %v6789, %v7270
        %v7337 = vadd.f32 %v6790, %v7273
        %v7338 = vadd.f32 %v6791, %v7278
        %v7339 = vadd.f32 %v6792, %v7281
        %v7340 = vadd.f32 %v6793, %v7286
        %v7341 = vadd.f32 %v6794, %v7289
        %v7342 = vadd.f32 %v6795, %v7294
        %v7343 = vadd.f32 %v6796, %v7297
        %v7344 = vadd.f32 %v6797, %v7302
        %v7345 = vadd.f32 %v6798, %v7305
        %v7346 = vadd.f32 %v6799, %v7310
        %v7347 = vadd.f32 %v6800, %v7313
        %7348 = vst [vmem:[#allocation4] sm:$0xff] %v7316
        %7349 = vst [vmem:[#allocation4 + $0x8] sm:$0xff] %v7317
        %7350 = vst [vmem:[#allocation4 + $0x10] sm:$0xff] %v7318
        %7351 = vst [vmem:[#allocation4 + $0x18] sm:$0xff] %v7319
        %7352 = vst [vmem:[#allocation4 + $0x20] sm:$0xff] %v7320
        %7353 = vst [vmem:[#allocation4 + $0x28] sm:$0xff] %v7321
        %7354 = vst [vmem:[#allocation4 + $0x30] sm:$0xff] %v7322
        %7355 = vst [vmem:[#allocation4 + $0x38] sm:$0xff] %v7323
        %7356 = vst [vmem:[#allocation4 + $0x40] sm:$0xff] %v7324
        %7357 = vst [vmem:[#allocation4 + $0x48] sm:$0xff] %v7325
        %7358 = vst [vmem:[#allocation4 + $0x50] sm:$0xff] %v7326
        %7359 = vst [vmem:[#allocation4 + $0x58] sm:$0xff] %v7327
        %7360 = vst [vmem:[#allocation4 + $0x60] sm:$0xff] %v7328
        %7361 = vst [vmem:[#allocation4 + $0x68] sm:$0xff] %v7329
        %7362 = vst [vmem:[#allocation4 + $0x70] sm:$0xff] %v7330
        %7363 = vst [vmem:[#allocation4 + $0x78] sm:$0xff] %v7331
        %7364 = vst [vmem:[#allocation4 + $0x80] sm:$0xff] %v7332
        %7365 = vst [vmem:[#allocation4 + $0x88] sm:$0xff] %v7333
        %7366 = vst [vmem:[#allocation4 + $0x90] sm:$0xff] %v7334
        %7367 = vst [vmem:[#allocation4 + $0x98] sm:$0xff] %v7335
        %7368 = vst [vmem:[#allocation4 + $0xa0] sm:$0xff] %v7336
        %7369 = vst [vmem:[#allocation4 + $0xa8] sm:$0xff] %v7337
        %7370 = vst [vmem:[#allocation4 + $0xb0] sm:$0xff] %v7338
        %7371 = vst [vmem:[#allocation4 + $0xb8] sm:$0xff] %v7339
        %7372 = vst [vmem:[#allocation4 + $0xc0] sm:$0xff] %v7340
        %7373 = vst [vmem:[#allocation4 + $0xc8] sm:$0xff] %v7341
        %7374 = vst [vmem:[#allocation4 + $0xd0] sm:$0xff] %v7342
        %7375 = vst [vmem:[#allocation4 + $0xd8] sm:$0xff] %v7343
        %7376 = vst [vmem:[#allocation4 + $0xe0] sm:$0xff] %v7344
        %7377 = vst [vmem:[#allocation4 + $0xe8] sm:$0xff] %v7345
        %7378 = vst [vmem:[#allocation4 + $0xf0] sm:$0xff] %v7346
        %7379 = vst [vmem:[#allocation4 + $0xf8] sm:$0xff] %v7347
        %s7380 = scalar_lea.vmem [#allocation3], 24
        %v7381 = vld [vmem:[%s7380] sm:$0xf]
        %v7382 = vld [vmem:[%s7380 + $0x4] sm:$0xf]
        %v7383 = vld [vmem:[%s7380 + $0xc] sm:$0xf]
        %v7384 = vld [vmem:[%s7380 + $0x10] sm:$0xf]
        %v7385 = vld [vmem:[%s7380 + $0x18] sm:$0xf]
        %v7386 = vld [vmem:[%s7380 + $0x1c] sm:$0xf]
        %v7387 = vld [vmem:[%s7380 + $0x24] sm:$0xf]
        %v7388 = vld [vmem:[%s7380 + $0x28] sm:$0xf]
        %v7389 = vld [vmem:[%s7380 + $0x30] sm:$0xf]
        %v7390 = vld [vmem:[%s7380 + $0x34] sm:$0xf]
        %v7391 = vld [vmem:[%s7380 + $0x3c] sm:$0xf]
        %v7392 = vld [vmem:[%s7380 + $0x40] sm:$0xf]
        %v7393 = vld [vmem:[%s7380 + $0x48] sm:$0xf]
        %v7394 = vld [vmem:[%s7380 + $0x4c] sm:$0xf]
        %v7395 = vld [vmem:[%s7380 + $0x54] sm:$0xf]
        %v7396 = vld [vmem:[%s7380 + $0x58] sm:$0xf]
        %v7397 = vld [vmem:[%s7380 + $0x60] sm:$0xf]
        %v7398 = vld [vmem:[%s7380 + $0x64] sm:$0xf]
        %v7399 = vld [vmem:[%s7380 + $0x6c] sm:$0xf]
        %v7400 = vld [vmem:[%s7380 + $0x70] sm:$0xf]
        %v7401 = vld [vmem:[%s7380 + $0x78] sm:$0xf]
        %v7402 = vld [vmem:[%s7380 + $0x7c] sm:$0xf]
        %v7403 = vld [vmem:[%s7380 + $0x84] sm:$0xf]
        %v7404 = vld [vmem:[%s7380 + $0x88] sm:$0xf]
        %v7405 = vld [vmem:[%s7380 + $0x90] sm:$0xf]
        %v7406 = vld [vmem:[%s7380 + $0x94] sm:$0xf]
        %v7407 = vld [vmem:[%s7380 + $0x9c] sm:$0xf]
        %v7408 = vld [vmem:[%s7380 + $0xa0] sm:$0xf]
        %v7409 = vld [vmem:[%s7380 + $0xa8] sm:$0xf]
        %v7410 = vld [vmem:[%s7380 + $0xac] sm:$0xf]
        %v7411 = vld [vmem:[%s7380 + $0xb4] sm:$0xf]
        %v7412 = vld [vmem:[%s7380 + $0xb8] sm:$0xf]
        %v7413 = vld [vmem:[%s7380 + $0x8] sm:$0x1]
        %v7414 = vld [vmem:[%s7380 + $0x14] sm:$0x1]
        %v7415 = vld [vmem:[%s7380 + $0x20] sm:$0x1]
        %v7416 = vld [vmem:[%s7380 + $0x2c] sm:$0x1]
        %v7417 = vld [vmem:[%s7380 + $0x38] sm:$0x1]
        %v7418 = vld [vmem:[%s7380 + $0x44] sm:$0x1]
        %v7419 = vld [vmem:[%s7380 + $0x50] sm:$0x1]
        %v7420 = vld [vmem:[%s7380 + $0x5c] sm:$0x1]
        %v7421 = vld [vmem:[%s7380 + $0x68] sm:$0x1]
        %v7422 = vld [vmem:[%s7380 + $0x74] sm:$0x1]
        %v7423 = vld [vmem:[%s7380 + $0x80] sm:$0x1]
        %v7424 = vld [vmem:[%s7380 + $0x8c] sm:$0x1]
        %v7425 = vld [vmem:[%s7380 + $0x98] sm:$0x1]
        %v7426 = vld [vmem:[%s7380 + $0xa4] sm:$0x1]
        %v7427 = vld [vmem:[%s7380 + $0xb0] sm:$0x1]
        %v7428 = vld [vmem:[%s7380 + $0xbc] sm:$0x1]
        %v7429 = vld [vmem:[%s7380] sm:$0xe]
        %v7430 = vld [vmem:[%s7380 + $0xc] sm:$0xe]
        %v7431 = vld [vmem:[%s7380 + $0x18] sm:$0xe]
        %v7432 = vld [vmem:[%s7380 + $0x24] sm:$0xe]
        %v7433 = vld [vmem:[%s7380 + $0x30] sm:$0xe]
        %v7434 = vld [vmem:[%s7380 + $0x3c] sm:$0xe]
        %v7435 = vld [vmem:[%s7380 + $0x48] sm:$0xe]
        %v7436 = vld [vmem:[%s7380 + $0x54] sm:$0xe]
        %v7437 = vld [vmem:[%s7380 + $0x60] sm:$0xe]
        %v7438 = vld [vmem:[%s7380 + $0x6c] sm:$0xe]
        %v7439 = vld [vmem:[%s7380 + $0x78] sm:$0xe]
        %v7440 = vld [vmem:[%s7380 + $0x84] sm:$0xe]
        %v7441 = vld [vmem:[%s7380 + $0x90] sm:$0xe]
        %v7442 = vld [vmem:[%s7380 + $0x9c] sm:$0xe]
        %v7443 = vld [vmem:[%s7380 + $0xa8] sm:$0xe]
        %v7444 = vld [vmem:[%s7380 + $0xb4] sm:$0xe]
        %v7477 = vunpack.c.l.b16 %v7381
        %v7478 = vunpack.c.l.b16 %v7382
        %v7479 = vunpack.c.l.b16 %v7383
        %v7480 = vunpack.c.l.b16 %v7384
        %v7481 = vunpack.c.l.b16 %v7385
        %v7482 = vunpack.c.l.b16 %v7386
        %v7483 = vunpack.c.l.b16 %v7387
        %v7484 = vunpack.c.l.b16 %v7388
        %v7485 = vunpack.c.l.b16 %v7389
        %v7486 = vunpack.c.l.b16 %v7390
        %v7487 = vunpack.c.l.b16 %v7391
        %v7488 = vunpack.c.l.b16 %v7392
        %v7489 = vunpack.c.l.b16 %v7393
        %v7490 = vunpack.c.l.b16 %v7394
        %v7491 = vunpack.c.l.b16 %v7395
        %v7492 = vunpack.c.l.b16 %v7396
        %v7493 = vunpack.c.l.b16 %v7397
        %v7494 = vunpack.c.l.b16 %v7398
        %v7495 = vunpack.c.l.b16 %v7399
        %v7496 = vunpack.c.l.b16 %v7400
        %v7497 = vunpack.c.l.b16 %v7401
        %v7498 = vunpack.c.l.b16 %v7402
        %v7499 = vunpack.c.l.b16 %v7403
        %v7500 = vunpack.c.l.b16 %v7404
        %v7501 = vunpack.c.l.b16 %v7405
        %v7502 = vunpack.c.l.b16 %v7406
        %v7503 = vunpack.c.l.b16 %v7407
        %v7504 = vunpack.c.l.b16 %v7408
        %v7505 = vunpack.c.l.b16 %v7409
        %v7506 = vunpack.c.l.b16 %v7410
        %v7507 = vunpack.c.l.b16 %v7411
        %v7508 = vunpack.c.l.b16 %v7412
        %v7509 = vpack.c.b16 %v7478, %v7477
        %v7510 = vpack.c.b16 %v7480, %v7479
        %v7511 = vpack.c.b16 %v7482, %v7481
        %v7512 = vpack.c.b16 %v7484, %v7483
        %v7513 = vpack.c.b16 %v7486, %v7485
        %v7514 = vpack.c.b16 %v7488, %v7487
        %v7515 = vpack.c.b16 %v7490, %v7489
        %v7516 = vpack.c.b16 %v7492, %v7491
        %v7517 = vpack.c.b16 %v7494, %v7493
        %v7518 = vpack.c.b16 %v7496, %v7495
        %v7519 = vpack.c.b16 %v7498, %v7497
        %v7520 = vpack.c.b16 %v7500, %v7499
        %v7521 = vpack.c.b16 %v7502, %v7501
        %v7522 = vpack.c.b16 %v7504, %v7503
        %v7523 = vpack.c.b16 %v7506, %v7505
        %v7524 = vpack.c.b16 %v7508, %v7507
        %v7557 = vunpack.c.l.b16 %v7413
        %v7558 = vunpack.c.l.b16 %v7414
        %v7559 = vunpack.c.l.b16 %v7415
        %v7560 = vunpack.c.l.b16 %v7416
        %v7561 = vunpack.c.l.b16 %v7417
        %v7562 = vunpack.c.l.b16 %v7418
        %v7563 = vunpack.c.l.b16 %v7419
        %v7564 = vunpack.c.l.b16 %v7420
        %v7565 = vunpack.c.l.b16 %v7421
        %v7566 = vunpack.c.l.b16 %v7422
        %v7567 = vunpack.c.l.b16 %v7423
        %v7568 = vunpack.c.l.b16 %v7424
        %v7569 = vunpack.c.l.b16 %v7425
        %v7570 = vunpack.c.l.b16 %v7426
        %v7571 = vunpack.c.l.b16 %v7427
        %v7572 = vunpack.c.l.b16 %v7428
        %v7573 = vpack.c.b16 %v7557, %v7557
        %v7574 = vpack.c.b16 %v7558, %v7558
        %v7575 = vpack.c.b16 %v7559, %v7559
        %v7576 = vpack.c.b16 %v7560, %v7560
        %v7577 = vpack.c.b16 %v7561, %v7561
        %v7578 = vpack.c.b16 %v7562, %v7562
        %v7579 = vpack.c.b16 %v7563, %v7563
        %v7580 = vpack.c.b16 %v7564, %v7564
        %v7581 = vpack.c.b16 %v7565, %v7565
        %v7582 = vpack.c.b16 %v7566, %v7566
        %v7583 = vpack.c.b16 %v7567, %v7567
        %v7584 = vpack.c.b16 %v7568, %v7568
        %v7585 = vpack.c.b16 %v7569, %v7569
        %v7586 = vpack.c.b16 %v7570, %v7570
        %v7587 = vpack.c.b16 %v7571, %v7571
        %v7588 = vpack.c.b16 %v7572, %v7572
        %v7590 = vshrl.u32 %v7509, 16
        %v7592 = vshll.u32 %v7509, 16
        %v7594 = vrot.slane %v7592, 1
        %v7595 = vor.u32 %v7590, %v7594
        %v7597 = vshll.u32 %v7573, 16
        %v7599 = vrot.slane %v7597, 1
        %v7600 = vsel %vm1170, %v7595, %v7599
        %v7602 = vshrl.u32 %v7510, 16
        %v7604 = vshll.u32 %v7510, 16
        %v7606 = vrot.slane %v7604, 1
        %v7607 = vor.u32 %v7602, %v7606
        %v7609 = vshll.u32 %v7574, 16
        %v7611 = vrot.slane %v7609, 1
        %v7612 = vsel %vm1170, %v7607, %v7611
        %v7614 = vshrl.u32 %v7511, 16
        %v7616 = vshll.u32 %v7511, 16
        %v7618 = vrot.slane %v7616, 1
        %v7619 = vor.u32 %v7614, %v7618
        %v7621 = vshll.u32 %v7575, 16
        %v7623 = vrot.slane %v7621, 1
        %v7624 = vsel %vm1170, %v7619, %v7623
        %v7626 = vshrl.u32 %v7512, 16
        %v7628 = vshll.u32 %v7512, 16
        %v7630 = vrot.slane %v7628, 1
        %v7631 = vor.u32 %v7626, %v7630
        %v7633 = vshll.u32 %v7576, 16
        %v7635 = vrot.slane %v7633, 1
        %v7636 = vsel %vm1170, %v7631, %v7635
        %v7638 = vshrl.u32 %v7513, 16
        %v7640 = vshll.u32 %v7513, 16
        %v7642 = vrot.slane %v7640, 1
        %v7643 = vor.u32 %v7638, %v7642
        %v7645 = vshll.u32 %v7577, 16
        %v7647 = vrot.slane %v7645, 1
        %v7648 = vsel %vm1170, %v7643, %v7647
        %v7650 = vshrl.u32 %v7514, 16
        %v7652 = vshll.u32 %v7514, 16
        %v7654 = vrot.slane %v7652, 1
        %v7655 = vor.u32 %v7650, %v7654
        %v7657 = vshll.u32 %v7578, 16
        %v7659 = vrot.slane %v7657, 1
        %v7660 = vsel %vm1170, %v7655, %v7659
        %v7662 = vshrl.u32 %v7515, 16
        %v7664 = vshll.u32 %v7515, 16
        %v7666 = vrot.slane %v7664, 1
        %v7667 = vor.u32 %v7662, %v7666
        %v7669 = vshll.u32 %v7579, 16
        %v7671 = vrot.slane %v7669, 1
        %v7672 = vsel %vm1170, %v7667, %v7671
        %v7674 = vshrl.u32 %v7516, 16
        %v7676 = vshll.u32 %v7516, 16
        %v7678 = vrot.slane %v7676, 1
        %v7679 = vor.u32 %v7674, %v7678
        %v7681 = vshll.u32 %v7580, 16
        %v7683 = vrot.slane %v7681, 1
        %v7684 = vsel %vm1170, %v7679, %v7683
        %v7686 = vshrl.u32 %v7517, 16
        %v7688 = vshll.u32 %v7517, 16
        %v7690 = vrot.slane %v7688, 1
        %v7691 = vor.u32 %v7686, %v7690
        %v7693 = vshll.u32 %v7581, 16
        %v7695 = vrot.slane %v7693, 1
        %v7696 = vsel %vm1170, %v7691, %v7695
        %v7698 = vshrl.u32 %v7518, 16
        %v7700 = vshll.u32 %v7518, 16
        %v7702 = vrot.slane %v7700, 1
        %v7703 = vor.u32 %v7698, %v7702
        %v7705 = vshll.u32 %v7582, 16
        %v7707 = vrot.slane %v7705, 1
        %v7708 = vsel %vm1170, %v7703, %v7707
        %v7710 = vshrl.u32 %v7519, 16
        %v7712 = vshll.u32 %v7519, 16
        %v7714 = vrot.slane %v7712, 1
        %v7715 = vor.u32 %v7710, %v7714
        %v7717 = vshll.u32 %v7583, 16
        %v7719 = vrot.slane %v7717, 1
        %v7720 = vsel %vm1170, %v7715, %v7719
        %v7722 = vshrl.u32 %v7520, 16
        %v7724 = vshll.u32 %v7520, 16
        %v7726 = vrot.slane %v7724, 1
        %v7727 = vor.u32 %v7722, %v7726
        %v7729 = vshll.u32 %v7584, 16
        %v7731 = vrot.slane %v7729, 1
        %v7732 = vsel %vm1170, %v7727, %v7731
        %v7734 = vshrl.u32 %v7521, 16
        %v7736 = vshll.u32 %v7521, 16
        %v7738 = vrot.slane %v7736, 1
        %v7739 = vor.u32 %v7734, %v7738
        %v7741 = vshll.u32 %v7585, 16
        %v7743 = vrot.slane %v7741, 1
        %v7744 = vsel %vm1170, %v7739, %v7743
        %v7746 = vshrl.u32 %v7522, 16
        %v7748 = vshll.u32 %v7522, 16
        %v7750 = vrot.slane %v7748, 1
        %v7751 = vor.u32 %v7746, %v7750
        %v7753 = vshll.u32 %v7586, 16
        %v7755 = vrot.slane %v7753, 1
        %v7756 = vsel %vm1170, %v7751, %v7755
        %v7758 = vshrl.u32 %v7523, 16
        %v7760 = vshll.u32 %v7523, 16
        %v7762 = vrot.slane %v7760, 1
        %v7763 = vor.u32 %v7758, %v7762
        %v7765 = vshll.u32 %v7587, 16
        %v7767 = vrot.slane %v7765, 1
        %v7768 = vsel %vm1170, %v7763, %v7767
        %v7770 = vshrl.u32 %v7524, 16
        %v7772 = vshll.u32 %v7524, 16
        %v7774 = vrot.slane %v7772, 1
        %v7775 = vor.u32 %v7770, %v7774
        %v7777 = vshll.u32 %v7588, 16
        %v7779 = vrot.slane %v7777, 1
        %v7780 = vsel %vm1170, %v7775, %v7779
        %v7813 = vunpack.c.l.b16 %v7429
        %v7814 = vunpack.c.l.b16 %v7430
        %v7815 = vunpack.c.l.b16 %v7431
        %v7816 = vunpack.c.l.b16 %v7432
        %v7817 = vunpack.c.l.b16 %v7433
        %v7818 = vunpack.c.l.b16 %v7434
        %v7819 = vunpack.c.l.b16 %v7435
        %v7820 = vunpack.c.l.b16 %v7436
        %v7821 = vunpack.c.l.b16 %v7437
        %v7822 = vunpack.c.l.b16 %v7438
        %v7823 = vunpack.c.l.b16 %v7439
        %v7824 = vunpack.c.l.b16 %v7440
        %v7825 = vunpack.c.l.b16 %v7441
        %v7826 = vunpack.c.l.b16 %v7442
        %v7827 = vunpack.c.l.b16 %v7443
        %v7828 = vunpack.c.l.b16 %v7444
        %v7829 = vpack.c.b16 %v7478, %v7813
        %v7830 = vpack.c.b16 %v7480, %v7814
        %v7831 = vpack.c.b16 %v7482, %v7815
        %v7832 = vpack.c.b16 %v7484, %v7816
        %v7833 = vpack.c.b16 %v7486, %v7817
        %v7834 = vpack.c.b16 %v7488, %v7818
        %v7835 = vpack.c.b16 %v7490, %v7819
        %v7836 = vpack.c.b16 %v7492, %v7820
        %v7837 = vpack.c.b16 %v7494, %v7821
        %v7838 = vpack.c.b16 %v7496, %v7822
        %v7839 = vpack.c.b16 %v7498, %v7823
        %v7840 = vpack.c.b16 %v7500, %v7824
        %v7841 = vpack.c.b16 %v7502, %v7825
        %v7842 = vpack.c.b16 %v7504, %v7826
        %v7843 = vpack.c.b16 %v7506, %v7827
        %v7844 = vpack.c.b16 %v7508, %v7828
        %v7845 = vrot.slane %v7829, 1
        %v7846 = vrot.slane %v7573, 1
        %v7847 = vsel %vm1427, %v7845, %v7846
        %v7848 = vrot.slane %v7830, 1
        %v7849 = vrot.slane %v7574, 1
        %v7850 = vsel %vm1427, %v7848, %v7849
        %v7851 = vrot.slane %v7831, 1
        %v7852 = vrot.slane %v7575, 1
        %v7853 = vsel %vm1427, %v7851, %v7852
        %v7854 = vrot.slane %v7832, 1
        %v7855 = vrot.slane %v7576, 1
        %v7856 = vsel %vm1427, %v7854, %v7855
        %v7857 = vrot.slane %v7833, 1
        %v7858 = vrot.slane %v7577, 1
        %v7859 = vsel %vm1427, %v7857, %v7858
        %v7860 = vrot.slane %v7834, 1
        %v7861 = vrot.slane %v7578, 1
        %v7862 = vsel %vm1427, %v7860, %v7861
        %v7863 = vrot.slane %v7835, 1
        %v7864 = vrot.slane %v7579, 1
        %v7865 = vsel %vm1427, %v7863, %v7864
        %v7866 = vrot.slane %v7836, 1
        %v7867 = vrot.slane %v7580, 1
        %v7868 = vsel %vm1427, %v7866, %v7867
        %v7869 = vrot.slane %v7837, 1
        %v7870 = vrot.slane %v7581, 1
        %v7871 = vsel %vm1427, %v7869, %v7870
        %v7872 = vrot.slane %v7838, 1
        %v7873 = vrot.slane %v7582, 1
        %v7874 = vsel %vm1427, %v7872, %v7873
        %v7875 = vrot.slane %v7839, 1
        %v7876 = vrot.slane %v7583, 1
        %v7877 = vsel %vm1427, %v7875, %v7876
        %v7878 = vrot.slane %v7840, 1
        %v7879 = vrot.slane %v7584, 1
        %v7880 = vsel %vm1427, %v7878, %v7879
        %v7881 = vrot.slane %v7841, 1
        %v7882 = vrot.slane %v7585, 1
        %v7883 = vsel %vm1427, %v7881, %v7882
        %v7884 = vrot.slane %v7842, 1
        %v7885 = vrot.slane %v7586, 1
        %v7886 = vsel %vm1427, %v7884, %v7885
        %v7887 = vrot.slane %v7843, 1
        %v7888 = vrot.slane %v7587, 1
        %v7889 = vsel %vm1427, %v7887, %v7888
        %v7890 = vrot.slane %v7844, 1
        %v7891 = vrot.slane %v7588, 1
        %v7892 = vsel %vm1427, %v7890, %v7891
        %v7909 = vld [vmem:[#allocation4] sm:$0xff]
        %v7910 = vld [vmem:[#allocation4 + $0x8] sm:$0xff]
        %v7911 = vld [vmem:[#allocation4 + $0x10] sm:$0xff]
        %v7912 = vld [vmem:[#allocation4 + $0x18] sm:$0xff]
        %v7913 = vld [vmem:[#allocation4 + $0x20] sm:$0xff]
        %v7914 = vld [vmem:[#allocation4 + $0x28] sm:$0xff]
        %v7915 = vld [vmem:[#allocation4 + $0x30] sm:$0xff]
        %v7916 = vld [vmem:[#allocation4 + $0x38] sm:$0xff]
        %v7917 = vld [vmem:[#allocation4 + $0x40] sm:$0xff]
        %v7918 = vld [vmem:[#allocation4 + $0x48] sm:$0xff]
        %v7919 = vld [vmem:[#allocation4 + $0x50] sm:$0xff]
        %v7920 = vld [vmem:[#allocation4 + $0x58] sm:$0xff]
        %v7921 = vld [vmem:[#allocation4 + $0x60] sm:$0xff]
        %v7922 = vld [vmem:[#allocation4 + $0x68] sm:$0xff]
        %v7923 = vld [vmem:[#allocation4 + $0x70] sm:$0xff]
        %v7924 = vld [vmem:[#allocation4 + $0x78] sm:$0xff]
        %v7925 = vld [vmem:[#allocation4 + $0x80] sm:$0xff]
        %v7926 = vld [vmem:[#allocation4 + $0x88] sm:$0xff]
        %v7927 = vld [vmem:[#allocation4 + $0x90] sm:$0xff]
        %v7928 = vld [vmem:[#allocation4 + $0x98] sm:$0xff]
        %v7929 = vld [vmem:[#allocation4 + $0xa0] sm:$0xff]
        %v7930 = vld [vmem:[#allocation4 + $0xa8] sm:$0xff]
        %v7931 = vld [vmem:[#allocation4 + $0xb0] sm:$0xff]
        %v7932 = vld [vmem:[#allocation4 + $0xb8] sm:$0xff]
        %v7933 = vld [vmem:[#allocation4 + $0xc0] sm:$0xff]
        %v7934 = vld [vmem:[#allocation4 + $0xc8] sm:$0xff]
        %v7935 = vld [vmem:[#allocation4 + $0xd0] sm:$0xff]
        %v7936 = vld [vmem:[#allocation4 + $0xd8] sm:$0xff]
        %v7937 = vld [vmem:[#allocation4 + $0xe0] sm:$0xff]
        %v7938 = vld [vmem:[#allocation4 + $0xe8] sm:$0xff]
        %v7939 = vld [vmem:[#allocation4 + $0xf0] sm:$0xff]
        %v7940 = vld [vmem:[#allocation4 + $0xf8] sm:$0xff]
        %s7941 = scalar_lea.vmem [#allocation5], 384
        %v7942 = vld [vmem:[%s7941] sm:$0xf]
        %v7943 = vld [vmem:[%s7941 + $0x4] sm:$0xf]
        %v7944 = vld [vmem:[%s7941 + $0x8] sm:$0xf]
        %v7945 = vld [vmem:[%s7941 + $0xc] sm:$0xf]
        %v7946 = vld [vmem:[%s7941 + $0x10] sm:$0xf]
        %v7947 = vld [vmem:[%s7941 + $0x14] sm:$0xf]
        %v7948 = vld [vmem:[%s7941 + $0x18] sm:$0xf]
        %v7949 = vld [vmem:[%s7941 + $0x1c] sm:$0xf]
        %v7950 = vld [vmem:[%s7941 + $0x20] sm:$0xf]
        %v7951 = vld [vmem:[%s7941 + $0x24] sm:$0xf]
        %v7952 = vld [vmem:[%s7941 + $0x28] sm:$0xf]
        %v7953 = vld [vmem:[%s7941 + $0x2c] sm:$0xf]
        %v7954 = vld [vmem:[%s7941 + $0x30] sm:$0xf]
        %v7955 = vld [vmem:[%s7941 + $0x34] sm:$0xf]
        %v7956 = vld [vmem:[%s7941 + $0x38] sm:$0xf]
        %v7957 = vld [vmem:[%s7941 + $0x3c] sm:$0xf]
        %v7958 = vld [vmem:[%s7941 + $0x40] sm:$0xf]
        %v7959 = vld [vmem:[%s7941 + $0x44] sm:$0xf]
        %v7960 = vld [vmem:[%s7941 + $0x48] sm:$0xf]
        %v7961 = vld [vmem:[%s7941 + $0x4c] sm:$0xf]
        %v7962 = vld [vmem:[%s7941 + $0x50] sm:$0xf]
        %v7963 = vld [vmem:[%s7941 + $0x54] sm:$0xf]
        %v7964 = vld [vmem:[%s7941 + $0x58] sm:$0xf]
        %v7965 = vld [vmem:[%s7941 + $0x5c] sm:$0xf]
        %v7966 = vld [vmem:[%s7941 + $0x60] sm:$0xf]
        %v7967 = vld [vmem:[%s7941 + $0x64] sm:$0xf]
        %v7968 = vld [vmem:[%s7941 + $0x68] sm:$0xf]
        %v7969 = vld [vmem:[%s7941 + $0x6c] sm:$0xf]
        %v7970 = vld [vmem:[%s7941 + $0x70] sm:$0xf]
        %v7971 = vld [vmem:[%s7941 + $0x74] sm:$0xf]
        %v7972 = vld [vmem:[%s7941 + $0x78] sm:$0xf]
        %v7973 = vld [vmem:[%s7941 + $0x7c] sm:$0xf]
        %v7974 = vld [vmem:[%s7941 + $0x80] sm:$0xf]
        %v7975 = vld [vmem:[%s7941 + $0x84] sm:$0xf]
        %v7976 = vld [vmem:[%s7941 + $0x88] sm:$0xf]
        %v7977 = vld [vmem:[%s7941 + $0x8c] sm:$0xf]
        %v7978 = vld [vmem:[%s7941 + $0x90] sm:$0xf]
        %v7979 = vld [vmem:[%s7941 + $0x94] sm:$0xf]
        %v7980 = vld [vmem:[%s7941 + $0x98] sm:$0xf]
        %v7981 = vld [vmem:[%s7941 + $0x9c] sm:$0xf]
        %v7982 = vld [vmem:[%s7941 + $0xa0] sm:$0xf]
        %v7983 = vld [vmem:[%s7941 + $0xa4] sm:$0xf]
        %v7984 = vld [vmem:[%s7941 + $0xa8] sm:$0xf]
        %v7985 = vld [vmem:[%s7941 + $0xac] sm:$0xf]
        %v7986 = vld [vmem:[%s7941 + $0xb0] sm:$0xf]
        %v7987 = vld [vmem:[%s7941 + $0xb4] sm:$0xf]
        %v7988 = vld [vmem:[%s7941 + $0xb8] sm:$0xf]
        %v7989 = vld [vmem:[%s7941 + $0xbc] sm:$0xf]
        %v8038 = vunpack.c.l.b16 %v7942
        %v8039 = vunpack.c.l.b16 %v7943
        %v8040 = vunpack.c.l.b16 %v7944
        %v8041 = vunpack.c.l.b16 %v7945
        %v8042 = vunpack.c.l.b16 %v7946
        %v8043 = vunpack.c.l.b16 %v7947
        %v8044 = vunpack.c.l.b16 %v7948
        %v8045 = vunpack.c.l.b16 %v7949
        %v8046 = vunpack.c.l.b16 %v7950
        %v8047 = vunpack.c.l.b16 %v7951
        %v8048 = vunpack.c.l.b16 %v7952
        %v8049 = vunpack.c.l.b16 %v7953
        %v8050 = vunpack.c.l.b16 %v7954
        %v8051 = vunpack.c.l.b16 %v7955
        %v8052 = vunpack.c.l.b16 %v7956
        %v8053 = vunpack.c.l.b16 %v7957
        %v8054 = vunpack.c.l.b16 %v7958
        %v8055 = vunpack.c.l.b16 %v7959
        %v8056 = vunpack.c.l.b16 %v7960
        %v8057 = vunpack.c.l.b16 %v7961
        %v8058 = vunpack.c.l.b16 %v7962
        %v8059 = vunpack.c.l.b16 %v7963
        %v8060 = vunpack.c.l.b16 %v7964
        %v8061 = vunpack.c.l.b16 %v7965
        %v8062 = vunpack.c.l.b16 %v7966
        %v8063 = vunpack.c.l.b16 %v7967
        %v8064 = vunpack.c.l.b16 %v7968
        %v8065 = vunpack.c.l.b16 %v7969
        %v8066 = vunpack.c.l.b16 %v7970
        %v8067 = vunpack.c.l.b16 %v7971
        %v8068 = vunpack.c.l.b16 %v7972
        %v8069 = vunpack.c.l.b16 %v7973
        %v8070 = vunpack.c.l.b16 %v7974
        %v8071 = vunpack.c.l.b16 %v7975
        %v8072 = vunpack.c.l.b16 %v7976
        %v8073 = vunpack.c.l.b16 %v7977
        %v8074 = vunpack.c.l.b16 %v7978
        %v8075 = vunpack.c.l.b16 %v7979
        %v8076 = vunpack.c.l.b16 %v7980
        %v8077 = vunpack.c.l.b16 %v7981
        %v8078 = vunpack.c.l.b16 %v7982
        %v8079 = vunpack.c.l.b16 %v7983
        %v8080 = vunpack.c.l.b16 %v7984
        %v8081 = vunpack.c.l.b16 %v7985
        %v8082 = vunpack.c.l.b16 %v7986
        %v8083 = vunpack.c.l.b16 %v7987
        %v8084 = vunpack.c.l.b16 %v7988
        %v8085 = vunpack.c.l.b16 %v7989
        %v8086 = vpack.c.b16 %v8039, %v8038
        %v8087 = vpack.c.b16 %v8041, %v8040
        %v8088 = vpack.c.b16 %v8043, %v8042
        %v8089 = vpack.c.b16 %v8045, %v8044
        %v8090 = vpack.c.b16 %v8047, %v8046
        %v8091 = vpack.c.b16 %v8049, %v8048
        %v8092 = vpack.c.b16 %v8051, %v8050
        %v8093 = vpack.c.b16 %v8053, %v8052
        %v8094 = vpack.c.b16 %v8055, %v8054
        %v8095 = vpack.c.b16 %v8057, %v8056
        %v8096 = vpack.c.b16 %v8059, %v8058
        %v8097 = vpack.c.b16 %v8061, %v8060
        %v8098 = vpack.c.b16 %v8063, %v8062
        %v8099 = vpack.c.b16 %v8065, %v8064
        %v8100 = vpack.c.b16 %v8067, %v8066
        %v8101 = vpack.c.b16 %v8069, %v8068
        %v8102 = vpack.c.b16 %v8071, %v8070
        %v8103 = vpack.c.b16 %v8073, %v8072
        %v8104 = vpack.c.b16 %v8075, %v8074
        %v8105 = vpack.c.b16 %v8077, %v8076
        %v8106 = vpack.c.b16 %v8079, %v8078
        %v8107 = vpack.c.b16 %v8081, %v8080
        %v8108 = vpack.c.b16 %v8083, %v8082
        %v8109 = vpack.c.b16 %v8085, %v8084
        %8134 = vmatprep.subr.bf16.mxu0 0
        %8135 = vmatpush1.bf16.msra.mxu0 %v8093
        %8136 = vmatprep.subr.bf16.mxu0 0
        %8137 = vmatpush1.bf16.msra.mxu0 %v8092
        %8138 = vmatprep.subr.bf16.mxu0 0
        %8139 = vmatpush1.bf16.msra.mxu0 %v8091
        %8140 = vmatprep.subr.bf16.mxu0 0
        %8141 = vmatpush1.bf16.msra.mxu0 %v8090
        %8142 = vmatprep.subr.bf16.mxu0 0
        %8143 = vmatpush1.bf16.msra.mxu0 %v8089
        %8144 = vmatprep.subr.bf16.mxu0 0
        %8145 = vmatpush1.bf16.msra.mxu0 %v8088
        %8146 = vmatprep.subr.bf16.mxu0 0
        %8147 = vmatpush1.bf16.msra.mxu0 %v8087
        %8148 = vmatprep.subr.bf16.mxu0 0
        %8149 = vmatpush1.bf16.msra.mxu0 %v8086
        %8150 = vmatprep.subr.bf16.mxu0 0
        %8151 = vmatpush2.bf16.msra.mxu0 %v8101
        %8152 = vmatprep.subr.bf16.mxu0 0
        %8153 = vmatpush2.bf16.msra.mxu0 %v8100
        %8154 = vmatprep.subr.bf16.mxu0 0
        %8155 = vmatpush2.bf16.msra.mxu0 %v8099
        %8156 = vmatprep.subr.bf16.mxu0 0
        %8157 = vmatpush2.bf16.msra.mxu0 %v8098
        %8158 = vmatprep.subr.bf16.mxu0 0
        %8159 = vmatpush2.bf16.msra.mxu0 %v8097
        %8160 = vmatprep.subr.bf16.mxu0 0
        %8161 = vmatpush2.bf16.msra.mxu0 %v8096
        %8162 = vmatprep.subr.bf16.mxu0 0
        %8163 = vmatpush2.bf16.msra.mxu0 %v8095
        %8164 = vmatprep.subr.bf16.mxu0 0
        %8165 = vmatpush2.bf16.msra.mxu0 %v8094
        %8166 = vmatprep.mubr.bf16.mxu0 %v7600
        %8167 = vmatmul.mubr.bf16.gmra.mxu0 %v7509
        %v8168 = vpop.f32.mrf.mxu0
        %v8169 = vadd.f32 0.0, %v8168
        %v8170 = vpop.f32.mrf.mxu0
        %v8171 = vpop.f32.mrf.mxu0
        %v8172 = vadd.f32 0.0, %v8171
        %v8173 = vpop.f32.mrf.mxu0
        %8174 = vmatprep.mubr.bf16.mxu0 %v7612
        %8175 = vmatmul.mubr.bf16.gmra.mxu0 %v7510
        %v8176 = vpop.f32.mrf.mxu0
        %v8177 = vadd.f32 0.0, %v8176
        %v8178 = vpop.f32.mrf.mxu0
        %v8179 = vpop.f32.mrf.mxu0
        %v8180 = vadd.f32 0.0, %v8179
        %v8181 = vpop.f32.mrf.mxu0
        %8182 = vmatprep.mubr.bf16.mxu0 %v7624
        %8183 = vmatmul.mubr.bf16.gmra.mxu0 %v7511
        %v8184 = vpop.f32.mrf.mxu0
        %v8185 = vadd.f32 0.0, %v8184
        %v8186 = vpop.f32.mrf.mxu0
        %v8187 = vpop.f32.mrf.mxu0
        %v8188 = vadd.f32 0.0, %v8187
        %v8189 = vpop.f32.mrf.mxu0
        %8190 = vmatprep.mubr.bf16.mxu0 %v7636
        %8191 = vmatmul.mubr.bf16.gmra.mxu0 %v7512
        %v8192 = vpop.f32.mrf.mxu0
        %v8193 = vadd.f32 0.0, %v8192
        %v8194 = vpop.f32.mrf.mxu0
        %v8195 = vpop.f32.mrf.mxu0
        %v8196 = vadd.f32 0.0, %v8195
        %v8197 = vpop.f32.mrf.mxu0
        %8198 = vmatprep.mubr.bf16.mxu0 %v7648
        %8199 = vmatmul.mubr.bf16.gmra.mxu0 %v7513
        %v8200 = vpop.f32.mrf.mxu0
        %v8201 = vadd.f32 0.0, %v8200
        %v8202 = vpop.f32.mrf.mxu0
        %v8203 = vpop.f32.mrf.mxu0
        %v8204 = vadd.f32 0.0, %v8203
        %v8205 = vpop.f32.mrf.mxu0
        %8206 = vmatprep.mubr.bf16.mxu0 %v7660
        %8207 = vmatmul.mubr.bf16.gmra.mxu0 %v7514
        %v8208 = vpop.f32.mrf.mxu0
        %v8209 = vadd.f32 0.0, %v8208
        %v8210 = vpop.f32.mrf.mxu0
        %v8211 = vpop.f32.mrf.mxu0
        %v8212 = vadd.f32 0.0, %v8211
        %v8213 = vpop.f32.mrf.mxu0
        %8214 = vmatprep.mubr.bf16.mxu0 %v7672
        %8215 = vmatmul.mubr.bf16.gmra.mxu0 %v7515
        %v8216 = vpop.f32.mrf.mxu0
        %v8217 = vadd.f32 0.0, %v8216
        %v8218 = vpop.f32.mrf.mxu0
        %v8219 = vpop.f32.mrf.mxu0
        %v8220 = vadd.f32 0.0, %v8219
        %v8221 = vpop.f32.mrf.mxu0
        %8222 = vmatprep.mubr.bf16.mxu0 %v7684
        %8223 = vmatmul.mubr.bf16.gmra.mxu0 %v7516
        %v8224 = vpop.f32.mrf.mxu0
        %v8225 = vadd.f32 0.0, %v8224
        %v8226 = vpop.f32.mrf.mxu0
        %v8227 = vpop.f32.mrf.mxu0
        %v8228 = vadd.f32 0.0, %v8227
        %v8229 = vpop.f32.mrf.mxu0
        %8230 = vmatprep.mubr.bf16.mxu0 %v7696
        %8231 = vmatmul.mubr.bf16.gmra.mxu0 %v7517
        %v8232 = vpop.f32.mrf.mxu0
        %v8233 = vadd.f32 0.0, %v8232
        %v8234 = vpop.f32.mrf.mxu0
        %v8235 = vpop.f32.mrf.mxu0
        %v8236 = vadd.f32 0.0, %v8235
        %v8237 = vpop.f32.mrf.mxu0
        %8238 = vmatprep.mubr.bf16.mxu0 %v7708
        %8239 = vmatmul.mubr.bf16.gmra.mxu0 %v7518
        %v8240 = vpop.f32.mrf.mxu0
        %v8241 = vadd.f32 0.0, %v8240
        %v8242 = vpop.f32.mrf.mxu0
        %v8243 = vpop.f32.mrf.mxu0
        %v8244 = vadd.f32 0.0, %v8243
        %v8245 = vpop.f32.mrf.mxu0
        %8246 = vmatprep.mubr.bf16.mxu0 %v7720
        %8247 = vmatmul.mubr.bf16.gmra.mxu0 %v7519
        %v8248 = vpop.f32.mrf.mxu0
        %v8249 = vadd.f32 0.0, %v8248
        %v8250 = vpop.f32.mrf.mxu0
        %v8251 = vpop.f32.mrf.mxu0
        %v8252 = vadd.f32 0.0, %v8251
        %v8253 = vpop.f32.mrf.mxu0
        %8254 = vmatprep.mubr.bf16.mxu0 %v7732
        %8255 = vmatmul.mubr.bf16.gmra.mxu0 %v7520
        %v8256 = vpop.f32.mrf.mxu0
        %v8257 = vadd.f32 0.0, %v8256
        %v8258 = vpop.f32.mrf.mxu0
        %v8259 = vpop.f32.mrf.mxu0
        %v8260 = vadd.f32 0.0, %v8259
        %v8261 = vpop.f32.mrf.mxu0
        %8262 = vmatprep.mubr.bf16.mxu0 %v7744
        %8263 = vmatmul.mubr.bf16.gmra.mxu0 %v7521
        %v8264 = vpop.f32.mrf.mxu0
        %v8265 = vadd.f32 0.0, %v8264
        %v8266 = vpop.f32.mrf.mxu0
        %v8267 = vpop.f32.mrf.mxu0
        %v8268 = vadd.f32 0.0, %v8267
        %v8269 = vpop.f32.mrf.mxu0
        %8270 = vmatprep.mubr.bf16.mxu0 %v7756
        %8271 = vmatmul.mubr.bf16.gmra.mxu0 %v7522
        %v8272 = vpop.f32.mrf.mxu0
        %v8273 = vadd.f32 0.0, %v8272
        %v8274 = vpop.f32.mrf.mxu0
        %v8275 = vpop.f32.mrf.mxu0
        %v8276 = vadd.f32 0.0, %v8275
        %v8277 = vpop.f32.mrf.mxu0
        %8278 = vmatprep.mubr.bf16.mxu0 %v7768
        %8279 = vmatmul.mubr.bf16.gmra.mxu0 %v7523
        %v8280 = vpop.f32.mrf.mxu0
        %v8281 = vadd.f32 0.0, %v8280
        %v8282 = vpop.f32.mrf.mxu0
        %v8283 = vpop.f32.mrf.mxu0
        %v8284 = vadd.f32 0.0, %v8283
        %v8285 = vpop.f32.mrf.mxu0
        %8286 = vmatprep.mubr.bf16.mxu0 %v7780
        %8287 = vmatmul.mubr.bf16.gmra.mxu0 %v7524
        %v8288 = vpop.f32.mrf.mxu0
        %v8289 = vadd.f32 0.0, %v8288
        %v8290 = vpop.f32.mrf.mxu0
        %v8291 = vpop.f32.mrf.mxu0
        %v8292 = vadd.f32 0.0, %v8291
        %v8293 = vpop.f32.mrf.mxu0
        %8294 = vdwg.mxu0
        %8295 = vmatprep.subr.bf16.mxu0 0
        %8296 = vmatpush1.bf16.msra.mxu0 %v8109
        %8297 = vmatprep.subr.bf16.mxu0 0
        %8298 = vmatpush1.bf16.msra.mxu0 %v8108
        %8299 = vmatprep.subr.bf16.mxu0 0
        %8300 = vmatpush1.bf16.msra.mxu0 %v8107
        %8301 = vmatprep.subr.bf16.mxu0 0
        %8302 = vmatpush1.bf16.msra.mxu0 %v8106
        %8303 = vmatprep.subr.bf16.mxu0 0
        %8304 = vmatpush1.bf16.msra.mxu0 %v8105
        %8305 = vmatprep.subr.bf16.mxu0 0
        %8306 = vmatpush1.bf16.msra.mxu0 %v8104
        %8307 = vmatprep.subr.bf16.mxu0 0
        %8308 = vmatpush1.bf16.msra.mxu0 %v8103
        %8309 = vmatprep.subr.bf16.mxu0 0
        %8310 = vmatpush1.bf16.msra.mxu0 %v8102
        %8311 = vmatprep.subr.bf16.mxu0 0
        %8312 = vmatpush2.bf16.msra.mxu0 0
        %8313 = vmatprep.subr.bf16.mxu0 0
        %8314 = vmatpush2.bf16.msra.mxu0 0
        %8315 = vmatprep.subr.bf16.mxu0 0
        %8316 = vmatpush2.bf16.msra.mxu0 0
        %8317 = vmatprep.subr.bf16.mxu0 0
        %8318 = vmatpush2.bf16.msra.mxu0 0
        %8319 = vmatprep.subr.bf16.mxu0 0
        %8320 = vmatpush2.bf16.msra.mxu0 0
        %8321 = vmatprep.subr.bf16.mxu0 0
        %8322 = vmatpush2.bf16.msra.mxu0 0
        %8323 = vmatprep.subr.bf16.mxu0 0
        %8324 = vmatpush2.bf16.msra.mxu0 0
        %8325 = vmatprep.subr.bf16.mxu0 0
        %8326 = vmatpush2.bf16.msra.mxu0 0
        %8327 = vmatprep.mubr.bf16.mxu0 0
        %8328 = vmatmul.mubr.bf16.gmra.mxu0 %v7847
        %v8329 = vpop.f32.mrf.mxu0
        %v8330 = vadd.f32 %v8169, %v8329
        %v8331 = vpop.f32.mrf.mxu0
        %v8332 = vpop.f32.mrf.mxu0
        %v8333 = vadd.f32 %v8172, %v8332
        %v8334 = vpop.f32.mrf.mxu0
        %8335 = vmatprep.mubr.bf16.mxu0 0
        %8336 = vmatmul.mubr.bf16.gmra.mxu0 %v7850
        %v8337 = vpop.f32.mrf.mxu0
        %v8338 = vadd.f32 %v8177, %v8337
        %v8339 = vpop.f32.mrf.mxu0
        %v8340 = vpop.f32.mrf.mxu0
        %v8341 = vadd.f32 %v8180, %v8340
        %v8342 = vpop.f32.mrf.mxu0
        %8343 = vmatprep.mubr.bf16.mxu0 0
        %8344 = vmatmul.mubr.bf16.gmra.mxu0 %v7853
        %v8345 = vpop.f32.mrf.mxu0
        %v8346 = vadd.f32 %v8185, %v8345
        %v8347 = vpop.f32.mrf.mxu0
        %v8348 = vpop.f32.mrf.mxu0
        %v8349 = vadd.f32 %v8188, %v8348
        %v8350 = vpop.f32.mrf.mxu0
        %8351 = vmatprep.mubr.bf16.mxu0 0
        %8352 = vmatmul.mubr.bf16.gmra.mxu0 %v7856
        %v8353 = vpop.f32.mrf.mxu0
        %v8354 = vadd.f32 %v8193, %v8353
        %v8355 = vpop.f32.mrf.mxu0
        %v8356 = vpop.f32.mrf.mxu0
        %v8357 = vadd.f32 %v8196, %v8356
        %v8358 = vpop.f32.mrf.mxu0
        %8359 = vmatprep.mubr.bf16.mxu0 0
        %8360 = vmatmul.mubr.bf16.gmra.mxu0 %v7859
        %v8361 = vpop.f32.mrf.mxu0
        %v8362 = vadd.f32 %v8201, %v8361
        %v8363 = vpop.f32.mrf.mxu0
        %v8364 = vpop.f32.mrf.mxu0
        %v8365 = vadd.f32 %v8204, %v8364
        %v8366 = vpop.f32.mrf.mxu0
        %8367 = vmatprep.mubr.bf16.mxu0 0
        %8368 = vmatmul.mubr.bf16.gmra.mxu0 %v7862
        %v8369 = vpop.f32.mrf.mxu0
        %v8370 = vadd.f32 %v8209, %v8369
        %v8371 = vpop.f32.mrf.mxu0
        %v8372 = vpop.f32.mrf.mxu0
        %v8373 = vadd.f32 %v8212, %v8372
        %v8374 = vpop.f32.mrf.mxu0
        %8375 = vmatprep.mubr.bf16.mxu0 0
        %8376 = vmatmul.mubr.bf16.gmra.mxu0 %v7865
        %v8377 = vpop.f32.mrf.mxu0
        %v8378 = vadd.f32 %v8217, %v8377
        %v8379 = vpop.f32.mrf.mxu0
        %v8380 = vpop.f32.mrf.mxu0
        %v8381 = vadd.f32 %v8220, %v8380
        %v8382 = vpop.f32.mrf.mxu0
        %8383 = vmatprep.mubr.bf16.mxu0 0
        %8384 = vmatmul.mubr.bf16.gmra.mxu0 %v7868
        %v8385 = vpop.f32.mrf.mxu0
        %v8386 = vadd.f32 %v8225, %v8385
        %v8387 = vpop.f32.mrf.mxu0
        %v8388 = vpop.f32.mrf.mxu0
        %v8389 = vadd.f32 %v8228, %v8388
        %v8390 = vpop.f32.mrf.mxu0
        %8391 = vmatprep.mubr.bf16.mxu0 0
        %8392 = vmatmul.mubr.bf16.gmra.mxu0 %v7871
        %v8393 = vpop.f32.mrf.mxu0
        %v8394 = vadd.f32 %v8233, %v8393
        %v8395 = vpop.f32.mrf.mxu0
        %v8396 = vpop.f32.mrf.mxu0
        %v8397 = vadd.f32 %v8236, %v8396
        %v8398 = vpop.f32.mrf.mxu0
        %8399 = vmatprep.mubr.bf16.mxu0 0
        %8400 = vmatmul.mubr.bf16.gmra.mxu0 %v7874
        %v8401 = vpop.f32.mrf.mxu0
        %v8402 = vadd.f32 %v8241, %v8401
        %v8403 = vpop.f32.mrf.mxu0
        %v8404 = vpop.f32.mrf.mxu0
        %v8405 = vadd.f32 %v8244, %v8404
        %v8406 = vpop.f32.mrf.mxu0
        %8407 = vmatprep.mubr.bf16.mxu0 0
        %8408 = vmatmul.mubr.bf16.gmra.mxu0 %v7877
        %v8409 = vpop.f32.mrf.mxu0
        %v8410 = vadd.f32 %v8249, %v8409
        %v8411 = vpop.f32.mrf.mxu0
        %v8412 = vpop.f32.mrf.mxu0
        %v8413 = vadd.f32 %v8252, %v8412
        %v8414 = vpop.f32.mrf.mxu0
        %8415 = vmatprep.mubr.bf16.mxu0 0
        %8416 = vmatmul.mubr.bf16.gmra.mxu0 %v7880
        %v8417 = vpop.f32.mrf.mxu0
        %v8418 = vadd.f32 %v8257, %v8417
        %v8419 = vpop.f32.mrf.mxu0
        %v8420 = vpop.f32.mrf.mxu0
        %v8421 = vadd.f32 %v8260, %v8420
        %v8422 = vpop.f32.mrf.mxu0
        %8423 = vmatprep.mubr.bf16.mxu0 0
        %8424 = vmatmul.mubr.bf16.gmra.mxu0 %v7883
        %v8425 = vpop.f32.mrf.mxu0
        %v8426 = vadd.f32 %v8265, %v8425
        %v8427 = vpop.f32.mrf.mxu0
        %v8428 = vpop.f32.mrf.mxu0
        %v8429 = vadd.f32 %v8268, %v8428
        %v8430 = vpop.f32.mrf.mxu0
        %8431 = vmatprep.mubr.bf16.mxu0 0
        %8432 = vmatmul.mubr.bf16.gmra.mxu0 %v7886
        %v8433 = vpop.f32.mrf.mxu0
        %v8434 = vadd.f32 %v8273, %v8433
        %v8435 = vpop.f32.mrf.mxu0
        %v8436 = vpop.f32.mrf.mxu0
        %v8437 = vadd.f32 %v8276, %v8436
        %v8438 = vpop.f32.mrf.mxu0
        %8439 = vmatprep.mubr.bf16.mxu0 0
        %8440 = vmatmul.mubr.bf16.gmra.mxu0 %v7889
        %v8441 = vpop.f32.mrf.mxu0
        %v8442 = vadd.f32 %v8281, %v8441
        %v8443 = vpop.f32.mrf.mxu0
        %v8444 = vpop.f32.mrf.mxu0
        %v8445 = vadd.f32 %v8284, %v8444
        %v8446 = vpop.f32.mrf.mxu0
        %8447 = vmatprep.mubr.bf16.mxu0 0
        %8448 = vmatmul.mubr.bf16.gmra.mxu0 %v7892
        %v8449 = vpop.f32.mrf.mxu0
        %v8450 = vadd.f32 %v8289, %v8449
        %v8451 = vpop.f32.mrf.mxu0
        %v8452 = vpop.f32.mrf.mxu0
        %v8453 = vadd.f32 %v8292, %v8452
        %v8454 = vpop.f32.mrf.mxu0
        %8455 = vdwg.mxu0
        %v8456 = vadd.f32 %v7909, %v8330
        %v8457 = vadd.f32 %v7910, %v8333
        %v8458 = vadd.f32 %v7911, %v8338
        %v8459 = vadd.f32 %v7912, %v8341
        %v8460 = vadd.f32 %v7913, %v8346
        %v8461 = vadd.f32 %v7914, %v8349
        %v8462 = vadd.f32 %v7915, %v8354
        %v8463 = vadd.f32 %v7916, %v8357
        %v8464 = vadd.f32 %v7917, %v8362
        %v8465 = vadd.f32 %v7918, %v8365
        %v8466 = vadd.f32 %v7919, %v8370
        %v8467 = vadd.f32 %v7920, %v8373
        %v8468 = vadd.f32 %v7921, %v8378
        %v8469 = vadd.f32 %v7922, %v8381
        %v8470 = vadd.f32 %v7923, %v8386
        %v8471 = vadd.f32 %v7924, %v8389
        %v8472 = vadd.f32 %v7925, %v8394
        %v8473 = vadd.f32 %v7926, %v8397
        %v8474 = vadd.f32 %v7927, %v8402
        %v8475 = vadd.f32 %v7928, %v8405
        %v8476 = vadd.f32 %v7929, %v8410
        %v8477 = vadd.f32 %v7930, %v8413
        %v8478 = vadd.f32 %v7931, %v8418
        %v8479 = vadd.f32 %v7932, %v8421
        %v8480 = vadd.f32 %v7933, %v8426
        %v8481 = vadd.f32 %v7934, %v8429
        %v8482 = vadd.f32 %v7935, %v8434
        %v8483 = vadd.f32 %v7936, %v8437
        %v8484 = vadd.f32 %v7937, %v8442
        %v8485 = vadd.f32 %v7938, %v8445
        %v8486 = vadd.f32 %v7939, %v8450
        %v8487 = vadd.f32 %v7940, %v8453
        %8488 = vst [vmem:[#allocation4] sm:$0xff] %v8456
        %8489 = vst [vmem:[#allocation4 + $0x8] sm:$0xff] %v8457
        %8490 = vst [vmem:[#allocation4 + $0x10] sm:$0xff] %v8458
        %8491 = vst [vmem:[#allocation4 + $0x18] sm:$0xff] %v8459
        %8492 = vst [vmem:[#allocation4 + $0x20] sm:$0xff] %v8460
        %8493 = vst [vmem:[#allocation4 + $0x28] sm:$0xff] %v8461
        %8494 = vst [vmem:[#allocation4 + $0x30] sm:$0xff] %v8462
        %8495 = vst [vmem:[#allocation4 + $0x38] sm:$0xff] %v8463
        %8496 = vst [vmem:[#allocation4 + $0x40] sm:$0xff] %v8464
        %8497 = vst [vmem:[#allocation4 + $0x48] sm:$0xff] %v8465
        %8498 = vst [vmem:[#allocation4 + $0x50] sm:$0xff] %v8466
        %8499 = vst [vmem:[#allocation4 + $0x58] sm:$0xff] %v8467
        %8500 = vst [vmem:[#allocation4 + $0x60] sm:$0xff] %v8468
        %8501 = vst [vmem:[#allocation4 + $0x68] sm:$0xff] %v8469
        %8502 = vst [vmem:[#allocation4 + $0x70] sm:$0xff] %v8470
        %8503 = vst [vmem:[#allocation4 + $0x78] sm:$0xff] %v8471
        %8504 = vst [vmem:[#allocation4 + $0x80] sm:$0xff] %v8472
        %8505 = vst [vmem:[#allocation4 + $0x88] sm:$0xff] %v8473
        %8506 = vst [vmem:[#allocation4 + $0x90] sm:$0xff] %v8474
        %8507 = vst [vmem:[#allocation4 + $0x98] sm:$0xff] %v8475
        %8508 = vst [vmem:[#allocation4 + $0xa0] sm:$0xff] %v8476
        %8509 = vst [vmem:[#allocation4 + $0xa8] sm:$0xff] %v8477
        %8510 = vst [vmem:[#allocation4 + $0xb0] sm:$0xff] %v8478
        %8511 = vst [vmem:[#allocation4 + $0xb8] sm:$0xff] %v8479
        %8512 = vst [vmem:[#allocation4 + $0xc0] sm:$0xff] %v8480
        %8513 = vst [vmem:[#allocation4 + $0xc8] sm:$0xff] %v8481
        %8514 = vst [vmem:[#allocation4 + $0xd0] sm:$0xff] %v8482
        %8515 = vst [vmem:[#allocation4 + $0xd8] sm:$0xff] %v8483
        %8516 = vst [vmem:[#allocation4 + $0xe0] sm:$0xff] %v8484
        %8517 = vst [vmem:[#allocation4 + $0xe8] sm:$0xff] %v8485
        %8518 = vst [vmem:[#allocation4 + $0xf0] sm:$0xff] %v8486
        %8519 = vst [vmem:[#allocation4 + $0xf8] sm:$0xff] %v8487
        %v8520 = vld [vmem:[#allocation4] sm:$0xff]
        %v8521 = vld [vmem:[#allocation4 + $0x8] sm:$0xff]
        %v8522 = vld [vmem:[#allocation4 + $0x10] sm:$0xff]
        %v8523 = vld [vmem:[#allocation4 + $0x18] sm:$0xff]
        %v8524 = vld [vmem:[#allocation4 + $0x20] sm:$0xff]
        %v8525 = vld [vmem:[#allocation4 + $0x28] sm:$0xff]
        %v8526 = vld [vmem:[#allocation4 + $0x30] sm:$0xff]
        %v8527 = vld [vmem:[#allocation4 + $0x38] sm:$0xff]
        %v8528 = vld [vmem:[#allocation4 + $0x40] sm:$0xff]
        %v8529 = vld [vmem:[#allocation4 + $0x48] sm:$0xff]
        %v8530 = vld [vmem:[#allocation4 + $0x50] sm:$0xff]
        %v8531 = vld [vmem:[#allocation4 + $0x58] sm:$0xff]
        %v8532 = vld [vmem:[#allocation4 + $0x60] sm:$0xff]
        %v8533 = vld [vmem:[#allocation4 + $0x68] sm:$0xff]
        %v8534 = vld [vmem:[#allocation4 + $0x70] sm:$0xff]
        %v8535 = vld [vmem:[#allocation4 + $0x78] sm:$0xff]
        %v8536 = vld [vmem:[#allocation4 + $0x80] sm:$0xff]
        %v8537 = vld [vmem:[#allocation4 + $0x88] sm:$0xff]
        %v8538 = vld [vmem:[#allocation4 + $0x90] sm:$0xff]
        %v8539 = vld [vmem:[#allocation4 + $0x98] sm:$0xff]
        %v8540 = vld [vmem:[#allocation4 + $0xa0] sm:$0xff]
        %v8541 = vld [vmem:[#allocation4 + $0xa8] sm:$0xff]
        %v8542 = vld [vmem:[#allocation4 + $0xb0] sm:$0xff]
        %v8543 = vld [vmem:[#allocation4 + $0xb8] sm:$0xff]
        %v8544 = vld [vmem:[#allocation4 + $0xc0] sm:$0xff]
        %v8545 = vld [vmem:[#allocation4 + $0xc8] sm:$0xff]
        %v8546 = vld [vmem:[#allocation4 + $0xd0] sm:$0xff]
        %v8547 = vld [vmem:[#allocation4 + $0xd8] sm:$0xff]
        %v8548 = vld [vmem:[#allocation4 + $0xe0] sm:$0xff]
        %v8549 = vld [vmem:[#allocation4 + $0xe8] sm:$0xff]
        %v8550 = vld [vmem:[#allocation4 + $0xf0] sm:$0xff]
        %v8551 = vld [vmem:[#allocation4 + $0xf8] sm:$0xff]
        %v8552 = vld [vmem:[%s4] sm:$0x1]
        %v8554 = vlaneseq
        %v8555 = vshrl.u32 %v8554, 7
        %v8556 = vsub.s32 0, %v8555
        %v8557 = vrot.slane %v8552, %v8556
        %v8559 = vadd.f32 %v8520, %v8557
        %v8560 = vadd.f32 %v8521, %v8557
        %v8561 = vadd.f32 %v8522, %v8557
        %v8562 = vadd.f32 %v8523, %v8557
        %v8563 = vadd.f32 %v8524, %v8557
        %v8564 = vadd.f32 %v8525, %v8557
        %v8565 = vadd.f32 %v8526, %v8557
        %v8566 = vadd.f32 %v8527, %v8557
        %v8567 = vadd.f32 %v8528, %v8557
        %v8568 = vadd.f32 %v8529, %v8557
        %v8569 = vadd.f32 %v8530, %v8557
        %v8570 = vadd.f32 %v8531, %v8557
        %v8571 = vadd.f32 %v8532, %v8557
        %v8572 = vadd.f32 %v8533, %v8557
        %v8573 = vadd.f32 %v8534, %v8557
        %v8574 = vadd.f32 %v8535, %v8557
        %v8575 = vadd.f32 %v8536, %v8557
        %v8576 = vadd.f32 %v8537, %v8557
        %v8577 = vadd.f32 %v8538, %v8557
        %v8578 = vadd.f32 %v8539, %v8557
        %v8579 = vadd.f32 %v8540, %v8557
        %v8580 = vadd.f32 %v8541, %v8557
        %v8581 = vadd.f32 %v8542, %v8557
        %v8582 = vadd.f32 %v8543, %v8557
        %v8583 = vadd.f32 %v8544, %v8557
        %v8584 = vadd.f32 %v8545, %v8557
        %v8585 = vadd.f32 %v8546, %v8557
        %v8586 = vadd.f32 %v8547, %v8557
        %v8587 = vadd.f32 %v8548, %v8557
        %v8588 = vadd.f32 %v8549, %v8557
        %v8589 = vadd.f32 %v8550, %v8557
        %v8590 = vadd.f32 %v8551, %v8557
        %v8591 = vld [vmem:[%s266] sm:$0xff]
        %v8592 = vld [vmem:[%s266 + $0x8] sm:$0xff]
        %v8593 = vld [vmem:[%s266 + $0x10] sm:$0xff]
        %v8594 = vld [vmem:[%s266 + $0x18] sm:$0xff]
        %v8595 = vld [vmem:[%s266 + $0x20] sm:$0xff]
        %v8596 = vld [vmem:[%s266 + $0x28] sm:$0xff]
        %v8597 = vld [vmem:[%s266 + $0x30] sm:$0xff]
        %v8598 = vld [vmem:[%s266 + $0x38] sm:$0xff]
        %v8599 = vld [vmem:[%s266 + $0x40] sm:$0xff]
        %v8600 = vld [vmem:[%s266 + $0x48] sm:$0xff]
        %v8601 = vld [vmem:[%s266 + $0x50] sm:$0xff]
        %v8602 = vld [vmem:[%s266 + $0x58] sm:$0xff]
        %v8603 = vld [vmem:[%s266 + $0x60] sm:$0xff]
        %v8604 = vld [vmem:[%s266 + $0x68] sm:$0xff]
        %v8605 = vld [vmem:[%s266 + $0x70] sm:$0xff]
        %v8606 = vld [vmem:[%s266 + $0x78] sm:$0xff]
        %v8607 = vld [vmem:[%s266 + $0x80] sm:$0xff]
        %v8608 = vld [vmem:[%s266 + $0x88] sm:$0xff]
        %v8609 = vld [vmem:[%s266 + $0x90] sm:$0xff]
        %v8610 = vld [vmem:[%s266 + $0x98] sm:$0xff]
        %v8611 = vld [vmem:[%s266 + $0xa0] sm:$0xff]
        %v8612 = vld [vmem:[%s266 + $0xa8] sm:$0xff]
        %v8613 = vld [vmem:[%s266 + $0xb0] sm:$0xff]
        %v8614 = vld [vmem:[%s266 + $0xb8] sm:$0xff]
        %v8615 = vld [vmem:[%s266 + $0xc0] sm:$0xff]
        %v8616 = vld [vmem:[%s266 + $0xc8] sm:$0xff]
        %v8617 = vld [vmem:[%s266 + $0xd0] sm:$0xff]
        %v8618 = vld [vmem:[%s266 + $0xd8] sm:$0xff]
        %v8619 = vld [vmem:[%s266 + $0xe0] sm:$0xff]
        %v8620 = vld [vmem:[%s266 + $0xe8] sm:$0xff]
        %v8621 = vld [vmem:[%s266 + $0xf0] sm:$0xff]
        %v8622 = vld [vmem:[%s266 + $0xf8] sm:$0xff]
        %v8623 = vadd.f32 %v8559, %v8591
        %v8624 = vadd.f32 %v8560, %v8592
        %v8625 = vadd.f32 %v8561, %v8593
        %v8626 = vadd.f32 %v8562, %v8594
        %v8627 = vadd.f32 %v8563, %v8595
        %v8628 = vadd.f32 %v8564, %v8596
        %v8629 = vadd.f32 %v8565, %v8597
        %v8630 = vadd.f32 %v8566, %v8598
        %v8631 = vadd.f32 %v8567, %v8599
        %v8632 = vadd.f32 %v8568, %v8600
        %v8633 = vadd.f32 %v8569, %v8601
        %v8634 = vadd.f32 %v8570, %v8602
        %v8635 = vadd.f32 %v8571, %v8603
        %v8636 = vadd.f32 %v8572, %v8604
        %v8637 = vadd.f32 %v8573, %v8605
        %v8638 = vadd.f32 %v8574, %v8606
        %v8639 = vadd.f32 %v8575, %v8607
        %v8640 = vadd.f32 %v8576, %v8608
        %v8641 = vadd.f32 %v8577, %v8609
        %v8642 = vadd.f32 %v8578, %v8610
        %v8643 = vadd.f32 %v8579, %v8611
        %v8644 = vadd.f32 %v8580, %v8612
        %v8645 = vadd.f32 %v8581, %v8613
        %v8646 = vadd.f32 %v8582, %v8614
        %v8647 = vadd.f32 %v8583, %v8615
        %v8648 = vadd.f32 %v8584, %v8616
        %v8649 = vadd.f32 %v8585, %v8617
        %v8650 = vadd.f32 %v8586, %v8618
        %v8651 = vadd.f32 %v8587, %v8619
        %v8652 = vadd.f32 %v8588, %v8620
        %v8653 = vadd.f32 %v8589, %v8621
        %v8654 = vadd.f32 %v8590, %v8622
        %v8655 = vmax.f32 %v8623, 0.0
        %v8656 = vmax.f32 %v8624, 0.0
        %v8657 = vmax.f32 %v8625, 0.0
        %v8658 = vmax.f32 %v8626, 0.0
        %v8659 = vmax.f32 %v8627, 0.0
        %v8660 = vmax.f32 %v8628, 0.0
        %v8661 = vmax.f32 %v8629, 0.0
        %v8662 = vmax.f32 %v8630, 0.0
        %v8663 = vmax.f32 %v8631, 0.0
        %v8664 = vmax.f32 %v8632, 0.0
        %v8665 = vmax.f32 %v8633, 0.0
        %v8666 = vmax.f32 %v8634, 0.0
        %v8667 = vmax.f32 %v8635, 0.0
        %v8668 = vmax.f32 %v8636, 0.0
        %v8669 = vmax.f32 %v8637, 0.0
        %v8670 = vmax.f32 %v8638, 0.0
        %v8671 = vmax.f32 %v8639, 0.0
        %v8672 = vmax.f32 %v8640, 0.0
        %v8673 = vmax.f32 %v8641, 0.0
        %v8674 = vmax.f32 %v8642, 0.0
        %v8675 = vmax.f32 %v8643, 0.0
        %v8676 = vmax.f32 %v8644, 0.0
        %v8677 = vmax.f32 %v8645, 0.0
        %v8678 = vmax.f32 %v8646, 0.0
        %v8679 = vmax.f32 %v8647, 0.0
        %v8680 = vmax.f32 %v8648, 0.0
        %v8681 = vmax.f32 %v8649, 0.0
        %v8682 = vmax.f32 %v8650, 0.0
        %v8683 = vmax.f32 %v8651, 0.0
        %v8684 = vmax.f32 %v8652, 0.0
        %v8685 = vmax.f32 %v8653, 0.0
        %v8686 = vmax.f32 %v8654, 0.0
        %8687 = vst [vmem:[%s299] sm:$0xff] %v8655
        %8688 = vst [vmem:[%s299 + $0x8] sm:$0xff] %v8656
        %8689 = vst [vmem:[%s299 + $0x10] sm:$0xff] %v8657
        %8690 = vst [vmem:[%s299 + $0x18] sm:$0xff] %v8658
        %8691 = vst [vmem:[%s299 + $0x20] sm:$0xff] %v8659
        %8692 = vst [vmem:[%s299 + $0x28] sm:$0xff] %v8660
        %8693 = vst [vmem:[%s299 + $0x30] sm:$0xff] %v8661
        %8694 = vst [vmem:[%s299 + $0x38] sm:$0xff] %v8662
        %8695 = vst [vmem:[%s299 + $0x40] sm:$0xff] %v8663
        %8696 = vst [vmem:[%s299 + $0x48] sm:$0xff] %v8664
        %8697 = vst [vmem:[%s299 + $0x50] sm:$0xff] %v8665
        %8698 = vst [vmem:[%s299 + $0x58] sm:$0xff] %v8666
        %8699 = vst [vmem:[%s299 + $0x60] sm:$0xff] %v8667
        %8700 = vst [vmem:[%s299 + $0x68] sm:$0xff] %v8668
        %8701 = vst [vmem:[%s299 + $0x70] sm:$0xff] %v8669
        %8702 = vst [vmem:[%s299 + $0x78] sm:$0xff] %v8670
        %8703 = vst [vmem:[%s299 + $0x80] sm:$0xff] %v8671
        %8704 = vst [vmem:[%s299 + $0x88] sm:$0xff] %v8672
        %8705 = vst [vmem:[%s299 + $0x90] sm:$0xff] %v8673
        %8706 = vst [vmem:[%s299 + $0x98] sm:$0xff] %v8674
        %8707 = vst [vmem:[%s299 + $0xa0] sm:$0xff] %v8675
        %8708 = vst [vmem:[%s299 + $0xa8] sm:$0xff] %v8676
        %8709 = vst [vmem:[%s299 + $0xb0] sm:$0xff] %v8677
        %8710 = vst [vmem:[%s299 + $0xb8] sm:$0xff] %v8678
        %8711 = vst [vmem:[%s299 + $0xc0] sm:$0xff] %v8679
        %8712 = vst [vmem:[%s299 + $0xc8] sm:$0xff] %v8680
        %8713 = vst [vmem:[%s299 + $0xd0] sm:$0xff] %v8681
        %8714 = vst [vmem:[%s299 + $0xd8] sm:$0xff] %v8682
        %8715 = vst [vmem:[%s299 + $0xe0] sm:$0xff] %v8683
        %8716 = vst [vmem:[%s299 + $0xe8] sm:$0xff] %v8684
        %8717 = vst [vmem:[%s299 + $0xf0] sm:$0xff] %v8685
        %8718 = vst [vmem:[%s299 + $0xf8] sm:$0xff] %v8686
        %s8719 = sand.u32 %s168, 1
        %s8720 = scalar_lea.sflag [#allocation7], %s8719
        %s8721 = sand.u32 %s168, 1
        %s8722 = smul.addr %s8721, 256
        %s8723 = scalar_lea.vmem [#allocation10], %s8722
        // Predicated region
        $region53: #{tpu_custom_call.1} parent=43 // pred_check
          %p8724 = pneg %p178
        $region54: #{tpu_custom_call.1} parent=43 // pred_check_branch
          %8726 = sbr.rel (%p8724) target = $region56
        $region55: #{tpu_custom_call.1} parent=43 // pred_region
          %s8728 = ssub.s32 4096, 4096
          %8729 = vsyncadd %s8720, %s8728
          %s8730 = smul.addr %s24, 32
          %s8731 = smul.addr %s8730, 128
          %s8732 = scalar_lea.hbm %s6, %s8731
          %s8733 = sshll.u32 %s8723, 4
          %s8734 = int_to_ptr.vmem [resolvable:$true] %s8733
          %8739 = dma.vmem_to_hbm [thread:$0]  %s8734, 4096, %s8732, %s8720, 128, 128, 8
        $region56: #{tpu_custom_call.1} parent=43 // pred_fallthru
          _
      $region44: #{tpu_custom_call.1} parent=5 // pred_fallthru
        _
      %p8740 = scmp.le.s32.totalorder 2, %s19
      // Predicated region
      $region57: #{tpu_custom_call.1} parent=5 // pred_check
        %p8741 = pneg %p8740
      $region58: #{tpu_custom_call.1} parent=5 // pred_check_branch
        %8743 = sbr.rel (%p8741) target = $region60
      $region59: #{tpu_custom_call.1} parent=5 // pred_region
        %s8744 = ssub.s32 %s19, 2
        // Predicated region
        $region61: #{tpu_custom_call.1} parent=59 // pred_check
          %p8745 = pneg %p184
        $region62: #{tpu_custom_call.1} parent=59 // pred_check_branch
          %8747 = sbr.rel (%p8745) target = $region64
        $region63: #{tpu_custom_call.1} parent=59 // pred_region
          %s8748 = sand.u32 %s169, 1
          %s8749 = scalar_lea.sflag [#allocation7], %s8748
          %s8750 = sand.u32 %s169, 1
          %s8751 = smul.addr %s8750, 256
          %s8752 = scalar_lea.vmem [#allocation10], %s8751
          %8753 = dma.done %s8749, 4096
        $region64: #{tpu_custom_call.1} parent=59 // pred_fallthru
          _
      $region60: #{tpu_custom_call.1} parent=5 // pred_fallthru
        _
    $region6: #{tpu_custom_call.1} parent=1 // loop_footer
      %s23 = sadd.s32 1, %s19
    $region7: #{tpu_custom_call.1} parent=1 // loop_footer_branch
      %18 = sbr.rel target = $region3
    $region8: #{tpu_custom_call.1} parent=1 // loop_exit
      _
    %8754 = vsyncpa [#allocation6], 1
    %s8755 = scalar_lea.sflag [#allocation6], 1
    %8756 = vsyncpa %s8755, 1
    %8757 = vsyncpa [#allocation9], 1
    %s8758 = scalar_lea.sflag [#allocation9], 1
    %8759 = vsyncpa %s8758, 1
    %8760 = vsyncpa [#allocation7], 1
    %s8761 = scalar_lea.sflag [#allocation7], 1
    %8762 = vsyncpa %s8761, 1

</llo_original>
